<compile_context>
chip_gen: v7x
topology: tpu7x:2x2x1
jax: 0.10.0
libtpu: 0.0.40
codegen_flags: <defaults>
</compile_context>

<pallas_src>
import functools
import math

import jax
import jax.numpy as jnp
from jax.experimental import pallas as pl
from jax.experimental.pallas import tpu as pltpu


# ----------------------------------------------------------------------------
# Fused kernel: embedding + layer-0 projection + multi-layer GRU + output Linear
# ----------------------------------------------------------------------------
def _rnn_kernel(x_ref, h0_ref, we_ref, be_ref, wih0_ref, bih0_ref,
                whh_rz_ref, whh_n_ref, wih_rz_ref, wih_n_ref,
                b_rz_ref, b_in_ref, b_hn_ref, w_out_ref, b_out_ref,
                y_ref, hN_ref,
                h_state, h_stash,
                *, nl, tb, batch, hs, t_actual, t_padded):
    pid = pl.program_id(0)

    @pl.when(pid == 0)
    def _():
        h_state[...] = h0_ref[...]

    def dot32(a, b):
        return jnp.dot(a, b, preferred_element_type=jnp.float32)

    # --- Block slab: embedding Linear + ReLU + hoisted layer-0 gate projection ----
    # x block is (tb*B, nin) time-major rows; gi is (tb*B, 3*hs), columns [r | z | n].
    e = jnp.maximum(dot32(x_ref[...], we_ref[...]) + be_ref[...], 0.0)
    gi = dot32(e, wih0_ref[...]) + bih0_ref[...]

    # --- Small loop-invariant weights: load once per grid step, keep in vregs ------
    # (fine at hs=16; for hs >= 64 load per-use from VMEM instead to avoid spills)
    whh_rz = [whh_rz_ref[l] for l in range(nl)]            # (hs, 2*hs) each
    whh_n = [whh_n_ref[l] for l in range(nl)]              # (hs, hs)
    wih_rz = [wih_rz_ref[l] for l in range(nl - 1)]        # upper layers only
    wih_n = [wih_n_ref[l] for l in range(nl - 1)]
    # Hoisted bias broadcasts (JAX does not CSE broadcast_in_dim inside the unroll).
    b_rz = [jnp.broadcast_to(b_rz_ref[l], (batch, 2 * hs)) for l in range(nl)]
    b_hn = [jnp.broadcast_to(b_hn_ref[l], (batch, hs)) for l in range(nl)]
    b_in = [jnp.broadcast_to(b_in_ref[l], (batch, hs)) for l in range(nl - 1)]

    need_mask = (t_padded != t_actual)

    # Hidden state carried in vregs across the unrolled time block.
    h = [h_state[l] for l in range(nl)]

    for step in range(tb):
        r0 = step * batch
        x_rz = gi[r0:r0 + batch, :2 * hs]
        x_n = gi[r0:r0 + batch, 2 * hs:]
        if need_mask:
            valid = pid * tb + step < t_actual   # hoisted out of the layer loop

        for l in range(nl):
            h_prev = h[l]
            if l > 0:
                below = h[l - 1]
                x_rz = dot32(below, wih_rz[l - 1])
                x_n = dot32(below, wih_n[l - 1]) + b_in[l - 1]
            # Fused r/z gates: one matmul + one sigmoid over (B, 2*hs), then slice.
            g_rz = jax.nn.sigmoid(x_rz + dot32(h_prev, whh_rz[l]) + b_rz[l])
            r = g_rz[:, :hs]
            z = g_rz[:, hs:]
            # PyTorch GRU: n = tanh(W_in x + b_in + r * (W_hn h + b_hn))
            n = jnp.tanh(x_n + r * (dot32(h_prev, whh_n[l]) + b_hn[l]))
            h_new = (1.0 - z) * n + z * h_prev
            if need_mask:
                h_new = jnp.where(valid, h_new, h_prev)   # freeze padded tail
            h[l] = h_new

        # Stash last-layer hidden for the block-batched output Linear.
        h_stash[r0:r0 + batch, :] = h[nl - 1]

    # Carry hidden state across grid steps via VMEM scratch.
    for l in range(nl):
        h_state[l] = h[l]

    # Block-batched output Linear: one matmul + one wide store per time block.
    y_ref[...] = (dot32(h_stash[...], w_out_ref[...]) + b_out_ref[...]).astype(y_ref.dtype)

    @pl.when(pid == pl.num_programs(0) - 1)
    def _():
        hN_ref[...] = h_state[...].astype(hN_ref.dtype)


def _rnn_pallas_call(x2d, h0, kp, *, tb, t_actual, t_pad):
    n_rows, nin = x2d.shape
    nl, batch, hs = h0.shape
    es = kp["emb_w_t"].shape[1]
    nout = kp["out_w_t"].shape[1]
    n_wih = kp["wih_rz"].shape[0]

    rows = lambda i: (i, 0)
    c2 = lambda i: (0, 0)
    c3 = lambda i: (0, 0, 0)

    kernel = functools.partial(_rnn_kernel, nl=nl, tb=tb, batch=batch, hs=hs,
                               t_actual=t_actual, t_padded=t_pad)
    return pl.pallas_call(
        kernel,
        out_shape=(
            jax.ShapeDtypeStruct((n_rows, nout), jnp.float32),
            jax.ShapeDtypeStruct((nl, batch, hs), jnp.float32),
        ),
        grid=(t_pad // tb,),
        in_specs=[
            pl.BlockSpec((tb * batch, nin), rows),    # x, time-major rows
            pl.BlockSpec((nl, batch, hs), c3),        # h0
            pl.BlockSpec((nin, es), c2),              # embedding W (transposed)
            pl.BlockSpec((1, es), c2),                # embedding b
            pl.BlockSpec((es, 3 * hs), c2),           # layer-0 W_ih (cols r|z|n)
            pl.BlockSpec((1, 3 * hs), c2),            # layer-0 b_ih
            pl.BlockSpec((nl, hs, 2 * hs), c3),       # W_hh  r|z fused
            pl.BlockSpec((nl, hs, hs), c3),           # W_hh  n
            pl.BlockSpec((n_wih, hs, 2 * hs), c3),    # W_ih (layers >0) r|z fused
            pl.BlockSpec((n_wih, hs, hs), c3),        # W_ih (layers >0) n
            pl.BlockSpec((nl, 1, 2 * hs), c3),        # folded r|z biases
            pl.BlockSpec((n_wih, 1, hs), c3),         # b_in (layers >0)
            pl.BlockSpec((nl, 1, hs), c3),            # b_hn
            pl.BlockSpec((hs, nout), c2),             # output W (transposed)
            pl.BlockSpec((1, nout), c2),              # output b
        ],
        out_specs=(
            pl.BlockSpec((tb * batch, nout), rows),
            pl.BlockSpec((nl, batch, hs), c3),
        ),
        scratch_shapes=[
            pltpu.VMEM((nl, batch, hs), jnp.float32),       # carried hidden state
            pltpu.VMEM((tb * batch, hs), jnp.float32),      # last-layer h per step
        ],
        compiler_params=pltpu.CompilerParams(dimension_semantics=("arbitrary",)),
    )(x2d, h0, kp["emb_w_t"], kp["emb_b"], kp["wih0"], kp["bih0"],
      kp["whh_rz"], kp["whh_n"], kp["wih_rz"], kp["wih_n"],
      kp["b_rz"], kp["b_in"], kp["b_hn"], kp["out_w_t"], kp["out_b"])


# ----------------------------------------------------------------------------
# Parameter construction + kernel-layout preprocessing + forward wrapper
# ----------------------------------------------------------------------------
def init_rnn_params(key, nin, nout, es=16, hs=16, nl=3):
    ks = jax.random.split(key, 4 + 4 * nl)
    k_it = iter(ks)

    def unif(k, shape, bound):
        return jax.random.uniform(k, shape, jnp.float32, -bound, bound)

    p = {}
    be = 1.0 / jnp.sqrt(nin)
    p["emb_w_t"] = unif(next(k_it), (nin, es), be)     # Linear(nin, es), transposed
    p["emb_b"] = unif(next(k_it), (es,), be)
    bo = 1.0 / jnp.sqrt(hs)
    p["out_w_t"] = unif(next(k_it), (hs, nout), bo)    # Linear(hs, nout), transposed
    p["out_b"] = unif(next(k_it), (nout,), bo)
    bg = 1.0 / jnp.sqrt(hs)
    p["gru"] = []
    in_sz = es
    for _ in range(nl):
        p["gru"].append({
            "w_ih_t": unif(next(k_it), (in_sz, 3 * hs), bg),   # cols [r|z|n]
            "w_hh_t": unif(next(k_it), (hs, 3 * hs), bg),
            "b_ih": unif(next(k_it), (3 * hs,), bg),
            "b_hh": unif(next(k_it), (3 * hs,), bg),
        })
        in_sz = hs
    return p


def prepare_kernel_params(params):
    """Gate-split/fuse, bias-fold and stack params into the kernel layout."""
    nl = len(params["gru"])
    hs = params["gru"][0]["w_hh_t"].shape[0]

    def cols(w, a, b):
        return w[:, a * hs:b * hs]

    def vec(v, a, b):
        return v[a * hs:b * hs]

    kp = {
        "emb_w_t": params["emb_w_t"],
        "emb_b": params["emb_b"].reshape(1, -1),
        "out_w_t": params["out_w_t"],
        "out_b": params["out_b"].reshape(1, -1),
        # Layer-0 input projection is hoisted into the per-block slab; full 3-gate width,
        # b_ih(layer0) folded in here.
        "wih0": params["gru"][0]["w_ih_t"],
        "bih0": params["gru"][0]["b_ih"].reshape(1, -1),
    }

    whh_rz, whh_n = [], []
    wih_rz, wih_n = [], []
    b_rz, b_in, b_hn = [], [], []
    for l, lp in enumerate(params["gru"]):
        whh_rz.append(cols(lp["w_hh_t"], 0, 2))
        whh_n.append(cols(lp["w_hh_t"], 2, 3))
        bh_rz = vec(lp["b_hh"], 0, 2)
        if l == 0:
            b_rz.append(bh_rz)                               # b_ih lives in bih0
        else:
            b_rz.append(vec(lp["b_ih"], 0, 2) + bh_rz)       # fold input+hidden bias
            b_in.append(vec(lp["b_ih"], 2, 3))
            wih_rz.append(cols(lp["w_ih_t"], 0, 2))
            wih_n.append(cols(lp["w_ih_t"], 2, 3))
        b_hn.append(vec(lp["b_hh"], 2, 3))

    kp["whh_rz"] = jnp.stack(whh_rz)                         # (nl, hs, 2*hs)
    kp["whh_n"] = jnp.stack(whh_n)                           # (nl, hs, hs)
    if nl > 1:
        kp["wih_rz"] = jnp.stack(wih_rz)                     # (nl-1, hs, 2*hs)
        kp["wih_n"] = jnp.stack(wih_n)                       # (nl-1, hs, hs)
        kp["b_in"] = jnp.stack([v.reshape(1, hs) for v in b_in])
    else:
        # Dummies, never indexed when nl == 1.
        kp["wih_rz"] = jnp.zeros((1, hs, 2 * hs), jnp.float32)
        kp["wih_n"] = jnp.zeros((1, hs, hs), jnp.float32)
        kp["b_in"] = jnp.zeros((1, 1, hs), jnp.float32)
    kp["b_rz"] = jnp.stack([v.reshape(1, 2 * hs) for v in b_rz])   # (nl, 1, 2*hs)
    kp["b_hn"] = jnp.stack([v.reshape(1, hs) for v in b_hn])       # (nl, 1, hs)
    return kp


def _select_time_block(t, b, requested):
    """Pick a time-block so the 2D row block (tb*b) respects the sublane constraint."""
    tb = max(1, min(requested, t))
    if (tb * b) % 8 != 0:
        step = 8 // math.gcd(8, b)
        tb_rounded = ((tb + step - 1) // step) * step
        tb = t if tb_rounded >= t else tb_rounded   # single full block is always legal
    return tb


def rnn_forward(params, x, hidden=None, *, time_block=32):
    """x: (B, T, nin) -> (y (B, T, nout), hidden (nl, B, hs)). Mirrors RNN.forward."""
    b, t, nin = x.shape
    nl = len(params["gru"])
    hs = params["gru"][0]["w_hh_t"].shape[0]
    if hidden is None:
        hidden = jnp.zeros((nl, b, hs), jnp.float32)

    kp = prepare_kernel_params(params)

    tb = _select_time_block(t, b, time_block)
    t_pad = pl.cdiv(t, tb) * tb

    # Time-major rows: contiguous reshape gives (T*B, nin) with no in-kernel transpose.
    x_tm = jnp.transpose(x, (1, 0, 2)).reshape(t * b, nin)
    if t_pad != t:
        x_tm = jnp.pad(x_tm, ((0, (t_pad - t) * b), (0, 0)))

    y2d, hidden_out = _rnn_pallas_call(x_tm, hidden, kp, tb=tb, t_actual=t, t_pad=t_pad)
    y = y2d.reshape(t_pad, b, -1)[:t]
    y = jnp.transpose(y, (1, 0, 2))                          # back to batch-first
    return y, hidden_out


# ----------------------------------------------------------------------------
# Pure-JAX reference (for correctness check)
# ----------------------------------------------------------------------------
def rnn_reference(params, x, hidden=None):
    b, t, nin = x.shape
    hs = params["gru"][0]["w_hh_t"].shape[0]
    nl = len(params["gru"])
    if hidden is None:
        hidden = jnp.zeros((nl, b, hs), jnp.float32)

    e = jnp.maximum(x @ params["emb_w_t"] + params["emb_b"], 0.0)
    seq = e
    h_finals = []
    for l in range(nl):
        lp = params["gru"][l]

        def step(h, x_t, lp=lp):
            gi = x_t @ lp["w_ih_t"] + lp["b_ih"]
            gh = h @ lp["w_hh_t"] + lp["b_hh"]
            i_r, i_z, i_n = jnp.split(gi, 3, axis=-1)
            h_r, h_z, h_n = jnp.split(gh, 3, axis=-1)
            r = jax.nn.sigmoid(i_r + h_r)
            z = jax.nn.sigmoid(i_z + h_z)
            n = jnp.tanh(i_n + r * h_n)
            h_new = (1.0 - z) * n + z * h
            return h_new, h_new

        h_last, ys = jax.lax.scan(step, hidden[l], seq.transpose(1, 0, 2))
        seq = ys.transpose(1, 0, 2)
        h_finals.append(h_last)
    y = seq @ params["out_w_t"] + params["out_b"]
    return y, jnp.stack(h_finals, axis=0)


# ----------------------------------------------------------------------------
if __name__ == "__main__":
    # Small shapes consistent with RNN(nin, nout, es=16, hs=16, nl=3)
    B, T, NIN, NOUT, ES, HS, NL = 2, 8, 4, 2, 16, 16, 3

    key = jax.random.PRNGKey(0)
    k_param, k_x, k_x2 = jax.random.split(key, 3)
    params = init_rnn_params(k_param, NIN, NOUT, es=ES, hs=HS, nl=NL)
    x = jax.random.normal(k_x, (B, T, NIN), jnp.float32)

    # 1) Default path (single time block).
    y, hidden = rnn_forward(params, x)
    jax.block_until_ready((y, hidden))
    y_ref, hidden_ref = rnn_reference(params, x)
    assert y.shape == (B, T, NOUT) and hidden.shape == (NL, B, HS)
    assert jnp.allclose(y, y_ref, atol=1e-5, rtol=1e-5)
    assert jnp.allclose(hidden, hidden_ref, atol=1e-5, rtol=1e-5)

    # 2) Multi-block path (state carried across grid steps, no padding).
    y2, hidden2 = rnn_forward(params, x, time_block=4)
    jax.block_until_ready((y2, hidden2))
    assert jnp.allclose(y2, y_ref, atol=1e-5, rtol=1e-5)
    assert jnp.allclose(hidden2, hidden_ref, atol=1e-5, rtol=1e-5)

    # 3) Padded-tail path (block does not divide T; recurrence frozen on padding).
    T2 = 10
    x3 = jax.random.normal(k_x2, (B, T2, NIN), jnp.float32)
    y3, hidden3 = rnn_forward(params, x3, time_block=4)
    jax.block_until_ready((y3, hidden3))
    y3_ref, hidden3_ref = rnn_reference(params, x3)
    assert jnp.allclose(y3, y3_ref, atol=1e-5, rtol=1e-5)
    assert jnp.allclose(hidden3, hidden3_ref, atol=1e-5, rtol=1e-5)

    print("KERNEL_OK")
</pallas_src>

<mosaic_0001>
module attributes {stable_mosaic.version = 11 : i64} {
  func.func @_rnn_kernel(%arg0: i32, %arg1: memref<16x4xf32, #tpu.memory_space<vmem>>, %arg2: memref<3x2x16xf32, #tpu.memory_space<vmem>>, %arg3: memref<4x16xf32, #tpu.memory_space<vmem>>, %arg4: memref<1x16xf32, #tpu.memory_space<vmem>>, %arg5: memref<16x48xf32, #tpu.memory_space<vmem>>, %arg6: memref<1x48xf32, #tpu.memory_space<vmem>>, %arg7: memref<3x16x32xf32, #tpu.memory_space<vmem>>, %arg8: memref<3x16x16xf32, #tpu.memory_space<vmem>>, %arg9: memref<2x16x32xf32, #tpu.memory_space<vmem>>, %arg10: memref<2x16x16xf32, #tpu.memory_space<vmem>>, %arg11: memref<3x1x32xf32, #tpu.memory_space<vmem>>, %arg12: memref<2x1x16xf32, #tpu.memory_space<vmem>>, %arg13: memref<3x1x16xf32, #tpu.memory_space<vmem>>, %arg14: memref<16x2xf32, #tpu.memory_space<vmem>>, %arg15: memref<1x2xf32, #tpu.memory_space<vmem>>, %arg16: memref<16x2xf32, #tpu.memory_space<vmem>>, %arg17: memref<3x2x16xf32, #tpu.memory_space<vmem>>, %arg18: memref<3x2x16xf32, #tpu.memory_space<vmem>>, %arg19: memref<16x16xf32, #tpu.memory_space<vmem>>) attributes {dimension_semantics = [#tpu.dimension_semantics<arbitrary>], iteration_bounds = array<i64: 1>, scalar_prefetch = 0 : i64, scratch_operands = 2 : i64, tpu.core_type = #tpu.core_type<tc>, window_params = [{transform_indices = @transform_0, window_bounds = array<i64: 16, 4>}, {pipeline_mode = #tpu.pipeline_mode<synchronous>, transform_indices = @transform_1, window_bounds = array<i64: 3, 2, 16>}, {pipeline_mode = #tpu.pipeline_mode<synchronous>, transform_indices = @transform_2, window_bounds = array<i64: 4, 16>}, {pipeline_mode = #tpu.pipeline_mode<synchronous>, transform_indices = @transform_3, window_bounds = array<i64: 1, 16>}, {pipeline_mode = #tpu.pipeline_mode<synchronous>, transform_indices = @transform_4, window_bounds = array<i64: 16, 48>}, {pipeline_mode = #tpu.pipeline_mode<synchronous>, transform_indices = @transform_5, window_bounds = array<i64: 1, 48>}, {pipeline_mode = #tpu.pipeline_mode<synchronous>, transform_indices = @transform_6, window_bounds = array<i64: 3, 16, 32>}, {pipeline_mode = #tpu.pipeline_mode<synchronous>, transform_indices = @transform_7, window_bounds = array<i64: 3, 16, 16>}, {pipeline_mode = #tpu.pipeline_mode<synchronous>, transform_indices = @transform_8, window_bounds = array<i64: 2, 16, 32>}, {pipeline_mode = #tpu.pipeline_mode<synchronous>, transform_indices = @transform_9, window_bounds = array<i64: 2, 16, 16>}, {pipeline_mode = #tpu.pipeline_mode<synchronous>, transform_indices = @transform_10, window_bounds = array<i64: 3, 1, 32>}, {pipeline_mode = #tpu.pipeline_mode<synchronous>, transform_indices = @transform_11, window_bounds = array<i64: 2, 1, 16>}, {pipeline_mode = #tpu.pipeline_mode<synchronous>, transform_indices = @transform_12, window_bounds = array<i64: 3, 1, 16>}, {pipeline_mode = #tpu.pipeline_mode<synchronous>, transform_indices = @transform_13, window_bounds = array<i64: 16, 2>}, {pipeline_mode = #tpu.pipeline_mode<synchronous>, transform_indices = @transform_14, window_bounds = array<i64: 1, 2>}, {transform_indices = @transform_15, window_bounds = array<i64: 16, 2>}, {pipeline_mode = #tpu.pipeline_mode<synchronous>, transform_indices = @transform_16, window_bounds = array<i64: 3, 2, 16>}]} {
    %c0_i32 = arith.constant 0 : i32
    %0 = arith.cmpi eq, %arg0, %c0_i32 : i32
    %1 = arith.extui %0 : i1 to i32
    %c0_i32_0 = arith.constant 0 : i32
    %2 = arith.cmpi ne, %1, %c0_i32_0 : i32
    scf.if %2 {
      %c0_231 = arith.constant 0 : index
      %c0_232 = arith.constant 0 : index
      %c0_233 = arith.constant 0 : index
      %645 = vector.load %arg2[%c0_231, %c0_232, %c0_233] : memref<3x2x16xf32, #tpu.memory_space<vmem>>, vector<3x2x16xf32>
      %c0_234 = arith.constant 0 : index
      %c0_235 = arith.constant 0 : index
      %c0_236 = arith.constant 0 : index
      %646 = vector.load %arg18[%c0_234, %c0_235, %c0_236] : memref<3x2x16xf32, #tpu.memory_space<vmem>>, vector<3x2x16xf32>
      tpu.vector_store %arg18[%c0_234, %c0_235, %c0_236], %645 {strides = array<i32>} : memref<3x2x16xf32, #tpu.memory_space<vmem>>, vector<3x2x16xf32>,
    } else {
    }
    %c0 = arith.constant 0 : index
    %c0_1 = arith.constant 0 : index
    %3 = vector.load %arg1[%c0, %c0_1] : memref<16x4xf32, #tpu.memory_space<vmem>>, vector<16x4xf32>
    %c0_2 = arith.constant 0 : index
    %c0_3 = arith.constant 0 : index
    %4 = vector.load %arg3[%c0_2, %c0_3] : memref<4x16xf32, #tpu.memory_space<vmem>>, vector<4x16xf32>
    %cst = arith.constant dense<0.000000e+00> : vector<16x16xf32>
    %5 = tpu.matmul %3, %4, %cst {dimension_numbers = #tpu.dot_dimension_numbers<[1], [0], [0], [1], [0, 0, 1, 1], [], []>} : vector<16x4xf32>, vector<4x16xf32>, vector<16x16xf32> -> vector<16x16xf32>
    %c0_4 = arith.constant 0 : index
    %c0_5 = arith.constant 0 : index
    %6 = vector.load %arg4[%c0_4, %c0_5] : memref<1x16xf32, #tpu.memory_space<vmem>>, vector<1x16xf32>
    %7 = vector.broadcast %6 : vector<1x16xf32> to vector<16x16xf32>
    %8 = arith.addf %5, %7 : vector<16x16xf32>
    %cst_6 = arith.constant 0.000000e+00 : f32
    %9 = vector.broadcast %cst_6 : f32 to vector<16x16xf32>
    %10 = arith.maximumf %8, %9 : vector<16x16xf32>
    %c0_7 = arith.constant 0 : index
    %c0_8 = arith.constant 0 : index
    %11 = vector.load %arg5[%c0_7, %c0_8] : memref<16x48xf32, #tpu.memory_space<vmem>>, vector<16x48xf32>
    %cst_9 = arith.constant dense<0.000000e+00> : vector<16x48xf32>
    %12 = tpu.matmul %10, %11, %cst_9 {dimension_numbers = #tpu.dot_dimension_numbers<[1], [0], [0], [1], [0, 0, 1, 1], [], []>} : vector<16x16xf32>, vector<16x48xf32>, vector<16x48xf32> -> vector<16x48xf32>
    %c0_10 = arith.constant 0 : index
    %c0_11 = arith.constant 0 : index
    %13 = vector.load %arg6[%c0_10, %c0_11] : memref<1x48xf32, #tpu.memory_space<vmem>>, vector<1x48xf32>
    %14 = vector.broadcast %13 : vector<1x48xf32> to vector<16x48xf32>
    %15 = arith.addf %12, %14 : vector<16x48xf32>
    %c0_12 = arith.constant 0 : index
    %c0_13 = arith.constant 0 : index
    %c0_14 = arith.constant 0 : index
    %16 = vector.load %arg7[%c0_12, %c0_13, %c0_14] : memref<3x16x32xf32, #tpu.memory_space<vmem>>, vector<1x16x32xf32>
    %17 = vector.shape_cast %16 : vector<1x16x32xf32> to vector<16x32xf32>
    %c1 = arith.constant 1 : index
    %c0_15 = arith.constant 0 : index
    %c0_16 = arith.constant 0 : index
    %18 = vector.load %arg7[%c1, %c0_15, %c0_16] : memref<3x16x32xf32, #tpu.memory_space<vmem>>, vector<1x16x32xf32>
    %19 = vector.shape_cast %18 : vector<1x16x32xf32> to vector<16x32xf32>
    %c2 = arith.constant 2 : index
    %c0_17 = arith.constant 0 : index
    %c0_18 = arith.constant 0 : index
    %20 = vector.load %arg7[%c2, %c0_17, %c0_18] : memref<3x16x32xf32, #tpu.memory_space<vmem>>, vector<1x16x32xf32>
    %21 = vector.shape_cast %20 : vector<1x16x32xf32> to vector<16x32xf32>
    %c0_19 = arith.constant 0 : index
    %c0_20 = arith.constant 0 : index
    %c0_21 = arith.constant 0 : index
    %22 = vector.load %arg8[%c0_19, %c0_20, %c0_21] : memref<3x16x16xf32, #tpu.memory_space<vmem>>, vector<1x16x16xf32>
    %23 = vector.shape_cast %22 : vector<1x16x16xf32> to vector<16x16xf32>
    %c1_22 = arith.constant 1 : index
    %c0_23 = arith.constant 0 : index
    %c0_24 = arith.constant 0 : index
    %24 = vector.load %arg8[%c1_22, %c0_23, %c0_24] : memref<3x16x16xf32, #tpu.memory_space<vmem>>, vector<1x16x16xf32>
    %25 = vector.shape_cast %24 : vector<1x16x16xf32> to vector<16x16xf32>
    %c2_25 = arith.constant 2 : index
    %c0_26 = arith.constant 0 : index
    %c0_27 = arith.constant 0 : index
    %26 = vector.load %arg8[%c2_25, %c0_26, %c0_27] : memref<3x16x16xf32, #tpu.memory_space<vmem>>, vector<1x16x16xf32>
    %27 = vector.shape_cast %26 : vector<1x16x16xf32> to vector<16x16xf32>
    %c0_28 = arith.constant 0 : index
    %c0_29 = arith.constant 0 : index
    %c0_30 = arith.constant 0 : index
    %28 = vector.load %arg9[%c0_28, %c0_29, %c0_30] : memref<2x16x32xf32, #tpu.memory_space<vmem>>, vector<1x16x32xf32>
    %29 = vector.shape_cast %28 : vector<1x16x32xf32> to vector<16x32xf32>
    %c1_31 = arith.constant 1 : index
    %c0_32 = arith.constant 0 : index
    %c0_33 = arith.constant 0 : index
    %30 = vector.load %arg9[%c1_31, %c0_32, %c0_33] : memref<2x16x32xf32, #tpu.memory_space<vmem>>, vector<1x16x32xf32>
    %31 = vector.shape_cast %30 : vector<1x16x32xf32> to vector<16x32xf32>
    %c0_34 = arith.constant 0 : index
    %c0_35 = arith.constant 0 : index
    %c0_36 = arith.constant 0 : index
    %32 = vector.load %arg10[%c0_34, %c0_35, %c0_36] : memref<2x16x16xf32, #tpu.memory_space<vmem>>, vector<1x16x16xf32>
    %33 = vector.shape_cast %32 : vector<1x16x16xf32> to vector<16x16xf32>
    %c1_37 = arith.constant 1 : index
    %c0_38 = arith.constant 0 : index
    %c0_39 = arith.constant 0 : index
    %34 = vector.load %arg10[%c1_37, %c0_38, %c0_39] : memref<2x16x16xf32, #tpu.memory_space<vmem>>, vector<1x16x16xf32>
    %35 = vector.shape_cast %34 : vector<1x16x16xf32> to vector<16x16xf32>
    %c0_40 = arith.constant 0 : index
    %c0_41 = arith.constant 0 : index
    %c0_42 = arith.constant 0 : index
    %36 = vector.load %arg11[%c0_40, %c0_41, %c0_42] : memref<3x1x32xf32, #tpu.memory_space<vmem>>, vector<1x1x32xf32>
    %37 = vector.shape_cast %36 : vector<1x1x32xf32> to vector<1x32xf32>
    %38 = vector.shape_cast %37 : vector<1x32xf32> to vector<1x32xf32>
    %39 = vector.broadcast %38 : vector<1x32xf32> to vector<2x32xf32>
    %c1_43 = arith.constant 1 : index
    %c0_44 = arith.constant 0 : index
    %c0_45 = arith.constant 0 : index
    %40 = vector.load %arg11[%c1_43, %c0_44, %c0_45] : memref<3x1x32xf32, #tpu.memory_space<vmem>>, vector<1x1x32xf32>
    %41 = vector.shape_cast %40 : vector<1x1x32xf32> to vector<1x32xf32>
    %42 = vector.shape_cast %41 : vector<1x32xf32> to vector<1x32xf32>
    %43 = vector.broadcast %42 : vector<1x32xf32> to vector<2x32xf32>
    %c2_46 = arith.constant 2 : index
    %c0_47 = arith.constant 0 : index
    %c0_48 = arith.constant 0 : index
    %44 = vector.load %arg11[%c2_46, %c0_47, %c0_48] : memref<3x1x32xf32, #tpu.memory_space<vmem>>, vector<1x1x32xf32>
    %45 = vector.shape_cast %44 : vector<1x1x32xf32> to vector<1x32xf32>
    %46 = vector.shape_cast %45 : vector<1x32xf32> to vector<1x32xf32>
    %47 = vector.broadcast %46 : vector<1x32xf32> to vector<2x32xf32>
    %c0_49 = arith.constant 0 : index
    %c0_50 = arith.constant 0 : index
    %c0_51 = arith.constant 0 : index
    %48 = vector.load %arg13[%c0_49, %c0_50, %c0_51] : memref<3x1x16xf32, #tpu.memory_space<vmem>>, vector<1x1x16xf32>
    %49 = vector.shape_cast %48 : vector<1x1x16xf32> to vector<1x16xf32>
    %50 = vector.shape_cast %49 : vector<1x16xf32> to vector<1x16xf32>
    %51 = vector.broadcast %50 : vector<1x16xf32> to vector<2x16xf32>
    %c1_52 = arith.constant 1 : index
    %c0_53 = arith.constant 0 : index
    %c0_54 = arith.constant 0 : index
    %52 = vector.load %arg13[%c1_52, %c0_53, %c0_54] : memref<3x1x16xf32, #tpu.memory_space<vmem>>, vector<1x1x16xf32>
    %53 = vector.shape_cast %52 : vector<1x1x16xf32> to vector<1x16xf32>
    %54 = vector.shape_cast %53 : vector<1x16xf32> to vector<1x16xf32>
    %55 = vector.broadcast %54 : vector<1x16xf32> to vector<2x16xf32>
    %c2_55 = arith.constant 2 : index
    %c0_56 = arith.constant 0 : index
    %c0_57 = arith.constant 0 : index
    %56 = vector.load %arg13[%c2_55, %c0_56, %c0_57] : memref<3x1x16xf32, #tpu.memory_space<vmem>>, vector<1x1x16xf32>
    %57 = vector.shape_cast %56 : vector<1x1x16xf32> to vector<1x16xf32>
    %58 = vector.shape_cast %57 : vector<1x16xf32> to vector<1x16xf32>
    %59 = vector.broadcast %58 : vector<1x16xf32> to vector<2x16xf32>
    %c0_58 = arith.constant 0 : index
    %c0_59 = arith.constant 0 : index
    %c0_60 = arith.constant 0 : index
    %60 = vector.load %arg12[%c0_58, %c0_59, %c0_60] : memref<2x1x16xf32, #tpu.memory_space<vmem>>, vector<1x1x16xf32>
    %61 = vector.shape_cast %60 : vector<1x1x16xf32> to vector<1x16xf32>
    %62 = vector.shape_cast %61 : vector<1x16xf32> to vector<1x16xf32>
    %63 = vector.broadcast %62 : vector<1x16xf32> to vector<2x16xf32>
    %c1_61 = arith.constant 1 : index
    %c0_62 = arith.constant 0 : index
    %c0_63 = arith.constant 0 : index
    %64 = vector.load %arg12[%c1_61, %c0_62, %c0_63] : memref<2x1x16xf32, #tpu.memory_space<vmem>>, vector<1x1x16xf32>
    %65 = vector.shape_cast %64 : vector<1x1x16xf32> to vector<1x16xf32>
    %66 = vector.shape_cast %65 : vector<1x16xf32> to vector<1x16xf32>
    %67 = vector.broadcast %66 : vector<1x16xf32> to vector<2x16xf32>
    %c0_64 = arith.constant 0 : index
    %c0_65 = arith.constant 0 : index
    %c0_66 = arith.constant 0 : index
    %68 = vector.load %arg18[%c0_64, %c0_65, %c0_66] : memref<3x2x16xf32, #tpu.memory_space<vmem>>, vector<1x2x16xf32>
    %69 = vector.shape_cast %68 : vector<1x2x16xf32> to vector<2x16xf32>
    %c1_67 = arith.constant 1 : index
    %c0_68 = arith.constant 0 : index
    %c0_69 = arith.constant 0 : index
    %70 = vector.load %arg18[%c1_67, %c0_68, %c0_69] : memref<3x2x16xf32, #tpu.memory_space<vmem>>, vector<1x2x16xf32>
    %71 = vector.shape_cast %70 : vector<1x2x16xf32> to vector<2x16xf32>
    %c2_70 = arith.constant 2 : index
    %c0_71 = arith.constant 0 : index
    %c0_72 = arith.constant 0 : index
    %72 = vector.load %arg18[%c2_70, %c0_71, %c0_72] : memref<3x2x16xf32, #tpu.memory_space<vmem>>, vector<1x2x16xf32>
    %73 = vector.shape_cast %72 : vector<1x2x16xf32> to vector<2x16xf32>
    %74 = vector.extract_strided_slice %15 {offsets = [0, 0], sizes = [2, 32], strides = [1, 1]} : vector<16x48xf32> to vector<2x32xf32>
    %75 = vector.extract_strided_slice %15 {offsets = [0, 32], sizes = [2, 16], strides = [1, 1]} : vector<16x48xf32> to vector<2x16xf32>
    %cst_73 = arith.constant dense<0.000000e+00> : vector<2x32xf32>
    %76 = tpu.matmul %69, %17, %cst_73 {dimension_numbers = #tpu.dot_dimension_numbers<[1], [0], [0], [1], [0, 0, 1, 1], [], []>} : vector<2x16xf32>, vector<16x32xf32>, vector<2x32xf32> -> vector<2x32xf32>
    %77 = arith.addf %74, %76 : vector<2x32xf32>
    %78 = arith.addf %77, %39 : vector<2x32xf32>
    %79 = arith.negf %78 : vector<2x32xf32>
    %80 = math.exp %79 : vector<2x32xf32>
    %cst_74 = arith.constant 1.000000e+00 : f32
    %81 = vector.broadcast %cst_74 : f32 to vector<2x32xf32>
    %82 = arith.addf %81, %80 : vector<2x32xf32>
    %83 = arith.divf %81, %82 : vector<2x32xf32>
    %84 = vector.extract_strided_slice %83 {offsets = [0, 0], sizes = [2, 16], strides = [1, 1]} : vector<2x32xf32> to vector<2x16xf32>
    %85 = vector.extract_strided_slice %83 {offsets = [0, 16], sizes = [2, 16], strides = [1, 1]} : vector<2x32xf32> to vector<2x16xf32>
    %cst_75 = arith.constant dense<0.000000e+00> : vector<2x16xf32>
    %86 = tpu.matmul %69, %23, %cst_75 {dimension_numbers = #tpu.dot_dimension_numbers<[1], [0], [0], [1], [0, 0, 1, 1], [], []>} : vector<2x16xf32>, vector<16x16xf32>, vector<2x16xf32> -> vector<2x16xf32>
    %87 = arith.addf %86, %51 : vector<2x16xf32>
    %88 = arith.mulf %84, %87 : vector<2x16xf32>
    %89 = arith.addf %75, %88 : vector<2x16xf32>
    %90 = math.tanh %89 : vector<2x16xf32>
    %cst_76 = arith.constant 1.000000e+00 : f32
    %91 = vector.broadcast %cst_76 : f32 to vector<2x16xf32>
    %92 = arith.subf %91, %85 : vector<2x16xf32>
    %93 = arith.mulf %92, %90 : vector<2x16xf32>
    %94 = arith.mulf %85, %69 : vector<2x16xf32>
    %95 = arith.addf %93, %94 : vector<2x16xf32>
    %cst_77 = arith.constant dense<0.000000e+00> : vector<2x32xf32>
    %96 = tpu.matmul %95, %29, %cst_77 {dimension_numbers = #tpu.dot_dimension_numbers<[1], [0], [0], [1], [0, 0, 1, 1], [], []>} : vector<2x16xf32>, vector<16x32xf32>, vector<2x32xf32> -> vector<2x32xf32>
    %cst_78 = arith.constant dense<0.000000e+00> : vector<2x16xf32>
    %97 = tpu.matmul %95, %33, %cst_78 {dimension_numbers = #tpu.dot_dimension_numbers<[1], [0], [0], [1], [0, 0, 1, 1], [], []>} : vector<2x16xf32>, vector<16x16xf32>, vector<2x16xf32> -> vector<2x16xf32>
    %98 = arith.addf %97, %63 : vector<2x16xf32>
    %cst_79 = arith.constant dense<0.000000e+00> : vector<2x32xf32>
    %99 = tpu.matmul %71, %19, %cst_79 {dimension_numbers = #tpu.dot_dimension_numbers<[1], [0], [0], [1], [0, 0, 1, 1], [], []>} : vector<2x16xf32>, vector<16x32xf32>, vector<2x32xf32> -> vector<2x32xf32>
    %100 = arith.addf %96, %99 : vector<2x32xf32>
    %101 = arith.addf %100, %43 : vector<2x32xf32>
    %102 = arith.negf %101 : vector<2x32xf32>
    %103 = math.exp %102 : vector<2x32xf32>
    %cst_80 = arith.constant 1.000000e+00 : f32
    %104 = vector.broadcast %cst_80 : f32 to vector<2x32xf32>
    %105 = arith.addf %104, %103 : vector<2x32xf32>
    %106 = arith.divf %104, %105 : vector<2x32xf32>
    %107 = vector.extract_strided_slice %106 {offsets = [0, 0], sizes = [2, 16], strides = [1, 1]} : vector<2x32xf32> to vector<2x16xf32>
    %108 = vector.extract_strided_slice %106 {offsets = [0, 16], sizes = [2, 16], strides = [1, 1]} : vector<2x32xf32> to vector<2x16xf32>
    %cst_81 = arith.constant dense<0.000000e+00> : vector<2x16xf32>
    %109 = tpu.matmul %71, %25, %cst_81 {dimension_numbers = #tpu.dot_dimension_numbers<[1], [0], [0], [1], [0, 0, 1, 1], [], []>} : vector<2x16xf32>, vector<16x16xf32>, vector<2x16xf32> -> vector<2x16xf32>
    %110 = arith.addf %109, %55 : vector<2x16xf32>
    %111 = arith.mulf %107, %110 : vector<2x16xf32>
    %112 = arith.addf %98, %111 : vector<2x16xf32>
    %113 = math.tanh %112 : vector<2x16xf32>
    %cst_82 = arith.constant 1.000000e+00 : f32
    %114 = vector.broadcast %cst_82 : f32 to vector<2x16xf32>
    %115 = arith.subf %114, %108 : vector<2x16xf32>
    %116 = arith.mulf %115, %113 : vector<2x16xf32>
    %117 = arith.mulf %108, %71 : vector<2x16xf32>
    %118 = arith.addf %116, %117 : vector<2x16xf32>
    %cst_83 = arith.constant dense<0.000000e+00> : vector<2x32xf32>
    %119 = tpu.matmul %118, %31, %cst_83 {dimension_numbers = #tpu.dot_dimension_numbers<[1], [0], [0], [1], [0, 0, 1, 1], [], []>} : vector<2x16xf32>, vector<16x32xf32>, vector<2x32xf32> -> vector<2x32xf32>
    %cst_84 = arith.constant dense<0.000000e+00> : vector<2x16xf32>
    %120 = tpu.matmul %118, %35, %cst_84 {dimension_numbers = #tpu.dot_dimension_numbers<[1], [0], [0], [1], [0, 0, 1, 1], [], []>} : vector<2x16xf32>, vector<16x16xf32>, vector<2x16xf32> -> vector<2x16xf32>
    %121 = arith.addf %120, %67 : vector<2x16xf32>
    %cst_85 = arith.constant dense<0.000000e+00> : vector<2x32xf32>
    %122 = tpu.matmul %73, %21, %cst_85 {dimension_numbers = #tpu.dot_dimension_numbers<[1], [0], [0], [1], [0, 0, 1, 1], [], []>} : vector<2x16xf32>, vector<16x32xf32>, vector<2x32xf32> -> vector<2x32xf32>
    %123 = arith.addf %119, %122 : vector<2x32xf32>
    %124 = arith.addf %123, %47 : vector<2x32xf32>
    %125 = arith.negf %124 : vector<2x32xf32>
    %126 = math.exp %125 : vector<2x32xf32>
    %cst_86 = arith.constant 1.000000e+00 : f32
    %127 = vector.broadcast %cst_86 : f32 to vector<2x32xf32>
    %128 = arith.addf %127, %126 : vector<2x32xf32>
    %129 = arith.divf %127, %128 : vector<2x32xf32>
    %130 = vector.extract_strided_slice %129 {offsets = [0, 0], sizes = [2, 16], strides = [1, 1]} : vector<2x32xf32> to vector<2x16xf32>
    %131 = vector.extract_strided_slice %129 {offsets = [0, 16], sizes = [2, 16], strides = [1, 1]} : vector<2x32xf32> to vector<2x16xf32>
    %cst_87 = arith.constant dense<0.000000e+00> : vector<2x16xf32>
    %132 = tpu.matmul %73, %27, %cst_87 {dimension_numbers = #tpu.dot_dimension_numbers<[1], [0], [0], [1], [0, 0, 1, 1], [], []>} : vector<2x16xf32>, vector<16x16xf32>, vector<2x16xf32> -> vector<2x16xf32>
    %133 = arith.addf %132, %59 : vector<2x16xf32>
    %134 = arith.mulf %130, %133 : vector<2x16xf32>
    %135 = arith.addf %121, %134 : vector<2x16xf32>
    %136 = math.tanh %135 : vector<2x16xf32>
    %cst_88 = arith.constant 1.000000e+00 : f32
    %137 = vector.broadcast %cst_88 : f32 to vector<2x16xf32>
    %138 = arith.subf %137, %131 : vector<2x16xf32>
    %139 = arith.mulf %138, %136 : vector<2x16xf32>
    %140 = arith.mulf %131, %73 : vector<2x16xf32>
    %141 = arith.addf %139, %140 : vector<2x16xf32>
    %c0_89 = arith.constant 0 : index
    %c0_90 = arith.constant 0 : index
    %142 = vector.load %arg19[%c0_89, %c0_90] : memref<16x16xf32, #tpu.memory_space<vmem>>, vector<2x16xf32>
    tpu.vector_store %arg19[%c0_89, %c0_90], %141 {strides = array<i32>} : memref<16x16xf32, #tpu.memory_space<vmem>>, vector<2x16xf32>,
    %143 = vector.extract_strided_slice %15 {offsets = [2, 0], sizes = [2, 32], strides = [1, 1]} : vector<16x48xf32> to vector<2x32xf32>
    %144 = vector.extract_strided_slice %15 {offsets = [2, 32], sizes = [2, 16], strides = [1, 1]} : vector<16x48xf32> to vector<2x16xf32>
    %cst_91 = arith.constant dense<0.000000e+00> : vector<2x32xf32>
    %145 = tpu.matmul %95, %17, %cst_91 {dimension_numbers = #tpu.dot_dimension_numbers<[1], [0], [0], [1], [0, 0, 1, 1], [], []>} : vector<2x16xf32>, vector<16x32xf32>, vector<2x32xf32> -> vector<2x32xf32>
    %146 = arith.addf %143, %145 : vector<2x32xf32>
    %147 = arith.addf %146, %39 : vector<2x32xf32>
    %148 = arith.negf %147 : vector<2x32xf32>
    %149 = math.exp %148 : vector<2x32xf32>
    %cst_92 = arith.constant 1.000000e+00 : f32
    %150 = vector.broadcast %cst_92 : f32 to vector<2x32xf32>
    %151 = arith.addf %150, %149 : vector<2x32xf32>
    %152 = arith.divf %150, %151 : vector<2x32xf32>
    %153 = vector.extract_strided_slice %152 {offsets = [0, 0], sizes = [2, 16], strides = [1, 1]} : vector<2x32xf32> to vector<2x16xf32>
    %154 = vector.extract_strided_slice %152 {offsets = [0, 16], sizes = [2, 16], strides = [1, 1]} : vector<2x32xf32> to vector<2x16xf32>
    %cst_93 = arith.constant dense<0.000000e+00> : vector<2x16xf32>
    %155 = tpu.matmul %95, %23, %cst_93 {dimension_numbers = #tpu.dot_dimension_numbers<[1], [0], [0], [1], [0, 0, 1, 1], [], []>} : vector<2x16xf32>, vector<16x16xf32>, vector<2x16xf32> -> vector<2x16xf32>
    %156 = arith.addf %155, %51 : vector<2x16xf32>
    %157 = arith.mulf %153, %156 : vector<2x16xf32>
    %158 = arith.addf %144, %157 : vector<2x16xf32>
    %159 = math.tanh %158 : vector<2x16xf32>
    %cst_94 = arith.constant 1.000000e+00 : f32
    %160 = vector.broadcast %cst_94 : f32 to vector<2x16xf32>
    %161 = arith.subf %160, %154 : vector<2x16xf32>
    %162 = arith.mulf %161, %159 : vector<2x16xf32>
    %163 = arith.mulf %154, %95 : vector<2x16xf32>
    %164 = arith.addf %162, %163 : vector<2x16xf32>
    %cst_95 = arith.constant dense<0.000000e+00> : vector<2x32xf32>
    %165 = tpu.matmul %164, %29, %cst_95 {dimension_numbers = #tpu.dot_dimension_numbers<[1], [0], [0], [1], [0, 0, 1, 1], [], []>} : vector<2x16xf32>, vector<16x32xf32>, vector<2x32xf32> -> vector<2x32xf32>
    %cst_96 = arith.constant dense<0.000000e+00> : vector<2x16xf32>
    %166 = tpu.matmul %164, %33, %cst_96 {dimension_numbers = #tpu.dot_dimension_numbers<[1], [0], [0], [1], [0, 0, 1, 1], [], []>} : vector<2x16xf32>, vector<16x16xf32>, vector<2x16xf32> -> vector<2x16xf32>
    %167 = arith.addf %166, %63 : vector<2x16xf32>
    %cst_97 = arith.constant dense<0.000000e+00> : vector<2x32xf32>
    %168 = tpu.matmul %118, %19, %cst_97 {dimension_numbers = #tpu.dot_dimension_numbers<[1], [0], [0], [1], [0, 0, 1, 1], [], []>} : vector<2x16xf32>, vector<16x32xf32>, vector<2x32xf32> -> vector<2x32xf32>
    %169 = arith.addf %165, %168 : vector<2x32xf32>
    %170 = arith.addf %169, %43 : vector<2x32xf32>
    %171 = arith.negf %170 : vector<2x32xf32>
    %172 = math.exp %171 : vector<2x32xf32>
    %cst_98 = arith.constant 1.000000e+00 : f32
    %173 = vector.broadcast %cst_98 : f32 to vector<2x32xf32>
    %174 = arith.addf %173, %172 : vector<2x32xf32>
    %175 = arith.divf %173, %174 : vector<2x32xf32>
    %176 = vector.extract_strided_slice %175 {offsets = [0, 0], sizes = [2, 16], strides = [1, 1]} : vector<2x32xf32> to vector<2x16xf32>
    %177 = vector.extract_strided_slice %175 {offsets = [0, 16], sizes = [2, 16], strides = [1, 1]} : vector<2x32xf32> to vector<2x16xf32>
    %cst_99 = arith.constant dense<0.000000e+00> : vector<2x16xf32>
    %178 = tpu.matmul %118, %25, %cst_99 {dimension_numbers = #tpu.dot_dimension_numbers<[1], [0], [0], [1], [0, 0, 1, 1], [], []>} : vector<2x16xf32>, vector<16x16xf32>, vector<2x16xf32> -> vector<2x16xf32>
    %179 = arith.addf %178, %55 : vector<2x16xf32>
    %180 = arith.mulf %176, %179 : vector<2x16xf32>
    %181 = arith.addf %167, %180 : vector<2x16xf32>
    %182 = math.tanh %181 : vector<2x16xf32>
    %cst_100 = arith.constant 1.000000e+00 : f32
    %183 = vector.broadcast %cst_100 : f32 to vector<2x16xf32>
    %184 = arith.subf %183, %177 : vector<2x16xf32>
    %185 = arith.mulf %184, %182 : vector<2x16xf32>
    %186 = arith.mulf %177, %118 : vector<2x16xf32>
    %187 = arith.addf %185, %186 : vector<2x16xf32>
    %cst_101 = arith.constant dense<0.000000e+00> : vector<2x32xf32>
    %188 = tpu.matmul %187, %31, %cst_101 {dimension_numbers = #tpu.dot_dimension_numbers<[1], [0], [0], [1], [0, 0, 1, 1], [], []>} : vector<2x16xf32>, vector<16x32xf32>, vector<2x32xf32> -> vector<2x32xf32>
    %cst_102 = arith.constant dense<0.000000e+00> : vector<2x16xf32>
    %189 = tpu.matmul %187, %35, %cst_102 {dimension_numbers = #tpu.dot_dimension_numbers<[1], [0], [0], [1], [0, 0, 1, 1], [], []>} : vector<2x16xf32>, vector<16x16xf32>, vector<2x16xf32> -> vector<2x16xf32>
    %190 = arith.addf %189, %67 : vector<2x16xf32>
    %cst_103 = arith.constant dense<0.000000e+00> : vector<2x32xf32>
    %191 = tpu.matmul %141, %21, %cst_103 {dimension_numbers = #tpu.dot_dimension_numbers<[1], [0], [0], [1], [0, 0, 1, 1], [], []>} : vector<2x16xf32>, vector<16x32xf32>, vector<2x32xf32> -> vector<2x32xf32>
    %192 = arith.addf %188, %191 : vector<2x32xf32>
    %193 = arith.addf %192, %47 : vector<2x32xf32>
    %194 = arith.negf %193 : vector<2x32xf32>
    %195 = math.exp %194 : vector<2x32xf32>
    %cst_104 = arith.constant 1.000000e+00 : f32
    %196 = vector.broadcast %cst_104 : f32 to vector<2x32xf32>
    %197 = arith.addf %196, %195 : vector<2x32xf32>
    %198 = arith.divf %196, %197 : vector<2x32xf32>
    %199 = vector.extract_strided_slice %198 {offsets = [0, 0], sizes = [2, 16], strides = [1, 1]} : vector<2x32xf32> to vector<2x16xf32>
    %200 = vector.extract_strided_slice %198 {offsets = [0, 16], sizes = [2, 16], strides = [1, 1]} : vector<2x32xf32> to vector<2x16xf32>
    %cst_105 = arith.constant dense<0.000000e+00> : vector<2x16xf32>
    %201 = tpu.matmul %141, %27, %cst_105 {dimension_numbers = #tpu.dot_dimension_numbers<[1], [0], [0], [1], [0, 0, 1, 1], [], []>} : vector<2x16xf32>, vector<16x16xf32>, vector<2x16xf32> -> vector<2x16xf32>
    %202 = arith.addf %201, %59 : vector<2x16xf32>
    %203 = arith.mulf %199, %202 : vector<2x16xf32>
    %204 = arith.addf %190, %203 : vector<2x16xf32>
    %205 = math.tanh %204 : vector<2x16xf32>
    %cst_106 = arith.constant 1.000000e+00 : f32
    %206 = vector.broadcast %cst_106 : f32 to vector<2x16xf32>
    %207 = arith.subf %206, %200 : vector<2x16xf32>
    %208 = arith.mulf %207, %205 : vector<2x16xf32>
    %209 = arith.mulf %200, %141 : vector<2x16xf32>
    %210 = arith.addf %208, %209 : vector<2x16xf32>
    %c2_107 = arith.constant 2 : index
    %c0_108 = arith.constant 0 : index
    %211 = vector.load %arg19[%c2_107, %c0_108] : memref<16x16xf32, #tpu.memory_space<vmem>>, vector<2x16xf32>
    tpu.vector_store %arg19[%c2_107, %c0_108], %210 {strides = array<i32>} : memref<16x16xf32, #tpu.memory_space<vmem>>, vector<2x16xf32>,
    %212 = vector.extract_strided_slice %15 {offsets = [4, 0], sizes = [2, 32], strides = [1, 1]} : vector<16x48xf32> to vector<2x32xf32>
    %213 = vector.extract_strided_slice %15 {offsets = [4, 32], sizes = [2, 16], strides = [1, 1]} : vector<16x48xf32> to vector<2x16xf32>
    %cst_109 = arith.constant dense<0.000000e+00> : vector<2x32xf32>
    %214 = tpu.matmul %164, %17, %cst_109 {dimension_numbers = #tpu.dot_dimension_numbers<[1], [0], [0], [1], [0, 0, 1, 1], [], []>} : vector<2x16xf32>, vector<16x32xf32>, vector<2x32xf32> -> vector<2x32xf32>
    %215 = arith.addf %212, %214 : vector<2x32xf32>
    %216 = arith.addf %215, %39 : vector<2x32xf32>
    %217 = arith.negf %216 : vector<2x32xf32>
    %218 = math.exp %217 : vector<2x32xf32>
    %cst_110 = arith.constant 1.000000e+00 : f32
    %219 = vector.broadcast %cst_110 : f32 to vector<2x32xf32>
    %220 = arith.addf %219, %218 : vector<2x32xf32>
    %221 = arith.divf %219, %220 : vector<2x32xf32>
    %222 = vector.extract_strided_slice %221 {offsets = [0, 0], sizes = [2, 16], strides = [1, 1]} : vector<2x32xf32> to vector<2x16xf32>
    %223 = vector.extract_strided_slice %221 {offsets = [0, 16], sizes = [2, 16], strides = [1, 1]} : vector<2x32xf32> to vector<2x16xf32>
    %cst_111 = arith.constant dense<0.000000e+00> : vector<2x16xf32>
    %224 = tpu.matmul %164, %23, %cst_111 {dimension_numbers = #tpu.dot_dimension_numbers<[1], [0], [0], [1], [0, 0, 1, 1], [], []>} : vector<2x16xf32>, vector<16x16xf32>, vector<2x16xf32> -> vector<2x16xf32>
    %225 = arith.addf %224, %51 : vector<2x16xf32>
    %226 = arith.mulf %222, %225 : vector<2x16xf32>
    %227 = arith.addf %213, %226 : vector<2x16xf32>
    %228 = math.tanh %227 : vector<2x16xf32>
    %cst_112 = arith.constant 1.000000e+00 : f32
    %229 = vector.broadcast %cst_112 : f32 to vector<2x16xf32>
    %230 = arith.subf %229, %223 : vector<2x16xf32>
    %231 = arith.mulf %230, %228 : vector<2x16xf32>
    %232 = arith.mulf %223, %164 : vector<2x16xf32>
    %233 = arith.addf %231, %232 : vector<2x16xf32>
    %cst_113 = arith.constant dense<0.000000e+00> : vector<2x32xf32>
    %234 = tpu.matmul %233, %29, %cst_113 {dimension_numbers = #tpu.dot_dimension_numbers<[1], [0], [0], [1], [0, 0, 1, 1], [], []>} : vector<2x16xf32>, vector<16x32xf32>, vector<2x32xf32> -> vector<2x32xf32>
    %cst_114 = arith.constant dense<0.000000e+00> : vector<2x16xf32>
    %235 = tpu.matmul %233, %33, %cst_114 {dimension_numbers = #tpu.dot_dimension_numbers<[1], [0], [0], [1], [0, 0, 1, 1], [], []>} : vector<2x16xf32>, vector<16x16xf32>, vector<2x16xf32> -> vector<2x16xf32>
    %236 = arith.addf %235, %63 : vector<2x16xf32>
    %cst_115 = arith.constant dense<0.000000e+00> : vector<2x32xf32>
    %237 = tpu.matmul %187, %19, %cst_115 {dimension_numbers = #tpu.dot_dimension_numbers<[1], [0], [0], [1], [0, 0, 1, 1], [], []>} : vector<2x16xf32>, vector<16x32xf32>, vector<2x32xf32> -> vector<2x32xf32>
    %238 = arith.addf %234, %237 : vector<2x32xf32>
    %239 = arith.addf %238, %43 : vector<2x32xf32>
    %240 = arith.negf %239 : vector<2x32xf32>
    %241 = math.exp %240 : vector<2x32xf32>
    %cst_116 = arith.constant 1.000000e+00 : f32
    %242 = vector.broadcast %cst_116 : f32 to vector<2x32xf32>
    %243 = arith.addf %242, %241 : vector<2x32xf32>
    %244 = arith.divf %242, %243 : vector<2x32xf32>
    %245 = vector.extract_strided_slice %244 {offsets = [0, 0], sizes = [2, 16], strides = [1, 1]} : vector<2x32xf32> to vector<2x16xf32>
    %246 = vector.extract_strided_slice %244 {offsets = [0, 16], sizes = [2, 16], strides = [1, 1]} : vector<2x32xf32> to vector<2x16xf32>
    %cst_117 = arith.constant dense<0.000000e+00> : vector<2x16xf32>
    %247 = tpu.matmul %187, %25, %cst_117 {dimension_numbers = #tpu.dot_dimension_numbers<[1], [0], [0], [1], [0, 0, 1, 1], [], []>} : vector<2x16xf32>, vector<16x16xf32>, vector<2x16xf32> -> vector<2x16xf32>
    %248 = arith.addf %247, %55 : vector<2x16xf32>
    %249 = arith.mulf %245, %248 : vector<2x16xf32>
    %250 = arith.addf %236, %249 : vector<2x16xf32>
    %251 = math.tanh %250 : vector<2x16xf32>
    %cst_118 = arith.constant 1.000000e+00 : f32
    %252 = vector.broadcast %cst_118 : f32 to vector<2x16xf32>
    %253 = arith.subf %252, %246 : vector<2x16xf32>
    %254 = arith.mulf %253, %251 : vector<2x16xf32>
    %255 = arith.mulf %246, %187 : vector<2x16xf32>
    %256 = arith.addf %254, %255 : vector<2x16xf32>
    %cst_119 = arith.constant dense<0.000000e+00> : vector<2x32xf32>
    %257 = tpu.matmul %256, %31, %cst_119 {dimension_numbers = #tpu.dot_dimension_numbers<[1], [0], [0], [1], [0, 0, 1, 1], [], []>} : vector<2x16xf32>, vector<16x32xf32>, vector<2x32xf32> -> vector<2x32xf32>
    %cst_120 = arith.constant dense<0.000000e+00> : vector<2x16xf32>
    %258 = tpu.matmul %256, %35, %cst_120 {dimension_numbers = #tpu.dot_dimension_numbers<[1], [0], [0], [1], [0, 0, 1, 1], [], []>} : vector<2x16xf32>, vector<16x16xf32>, vector<2x16xf32> -> vector<2x16xf32>
    %259 = arith.addf %258, %67 : vector<2x16xf32>
    %cst_121 = arith.constant dense<0.000000e+00> : vector<2x32xf32>
    %260 = tpu.matmul %210, %21, %cst_121 {dimension_numbers = #tpu.dot_dimension_numbers<[1], [0], [0], [1], [0, 0, 1, 1], [], []>} : vector<2x16xf32>, vector<16x32xf32>, vector<2x32xf32> -> vector<2x32xf32>
    %261 = arith.addf %257, %260 : vector<2x32xf32>
    %262 = arith.addf %261, %47 : vector<2x32xf32>
    %263 = arith.negf %262 : vector<2x32xf32>
    %264 = math.exp %263 : vector<2x32xf32>
    %cst_122 = arith.constant 1.000000e+00 : f32
    %265 = vector.broadcast %cst_122 : f32 to vector<2x32xf32>
    %266 = arith.addf %265, %264 : vector<2x32xf32>
    %267 = arith.divf %265, %266 : vector<2x32xf32>
    %268 = vector.extract_strided_slice %267 {offsets = [0, 0], sizes = [2, 16], strides = [1, 1]} : vector<2x32xf32> to vector<2x16xf32>
    %269 = vector.extract_strided_slice %267 {offsets = [0, 16], sizes = [2, 16], strides = [1, 1]} : vector<2x32xf32> to vector<2x16xf32>
    %cst_123 = arith.constant dense<0.000000e+00> : vector<2x16xf32>
    %270 = tpu.matmul %210, %27, %cst_123 {dimension_numbers = #tpu.dot_dimension_numbers<[1], [0], [0], [1], [0, 0, 1, 1], [], []>} : vector<2x16xf32>, vector<16x16xf32>, vector<2x16xf32> -> vector<2x16xf32>
    %271 = arith.addf %270, %59 : vector<2x16xf32>
    %272 = arith.mulf %268, %271 : vector<2x16xf32>
    %273 = arith.addf %259, %272 : vector<2x16xf32>
    %274 = math.tanh %273 : vector<2x16xf32>
    %cst_124 = arith.constant 1.000000e+00 : f32
    %275 = vector.broadcast %cst_124 : f32 to vector<2x16xf32>
    %276 = arith.subf %275, %269 : vector<2x16xf32>
    %277 = arith.mulf %276, %274 : vector<2x16xf32>
    %278 = arith.mulf %269, %210 : vector<2x16xf32>
    %279 = arith.addf %277, %278 : vector<2x16xf32>
    %c4 = arith.constant 4 : index
    %c0_125 = arith.constant 0 : index
    %280 = vector.load %arg19[%c4, %c0_125] : memref<16x16xf32, #tpu.memory_space<vmem>>, vector<2x16xf32>
    tpu.vector_store %arg19[%c4, %c0_125], %279 {strides = array<i32>} : memref<16x16xf32, #tpu.memory_space<vmem>>, vector<2x16xf32>,
    %281 = vector.extract_strided_slice %15 {offsets = [6, 0], sizes = [2, 32], strides = [1, 1]} : vector<16x48xf32> to vector<2x32xf32>
    %282 = vector.extract_strided_slice %15 {offsets = [6, 32], sizes = [2, 16], strides = [1, 1]} : vector<16x48xf32> to vector<2x16xf32>
    %cst_126 = arith.constant dense<0.000000e+00> : vector<2x32xf32>
    %283 = tpu.matmul %233, %17, %cst_126 {dimension_numbers = #tpu.dot_dimension_numbers<[1], [0], [0], [1], [0, 0, 1, 1], [], []>} : vector<2x16xf32>, vector<16x32xf32>, vector<2x32xf32> -> vector<2x32xf32>
    %284 = arith.addf %281, %283 : vector<2x32xf32>
    %285 = arith.addf %284, %39 : vector<2x32xf32>
    %286 = arith.negf %285 : vector<2x32xf32>
    %287 = math.exp %286 : vector<2x32xf32>
    %cst_127 = arith.constant 1.000000e+00 : f32
    %288 = vector.broadcast %cst_127 : f32 to vector<2x32xf32>
    %289 = arith.addf %288, %287 : vector<2x32xf32>
    %290 = arith.divf %288, %289 : vector<2x32xf32>
    %291 = vector.extract_strided_slice %290 {offsets = [0, 0], sizes = [2, 16], strides = [1, 1]} : vector<2x32xf32> to vector<2x16xf32>
    %292 = vector.extract_strided_slice %290 {offsets = [0, 16], sizes = [2, 16], strides = [1, 1]} : vector<2x32xf32> to vector<2x16xf32>
    %cst_128 = arith.constant dense<0.000000e+00> : vector<2x16xf32>
    %293 = tpu.matmul %233, %23, %cst_128 {dimension_numbers = #tpu.dot_dimension_numbers<[1], [0], [0], [1], [0, 0, 1, 1], [], []>} : vector<2x16xf32>, vector<16x16xf32>, vector<2x16xf32> -> vector<2x16xf32>
    %294 = arith.addf %293, %51 : vector<2x16xf32>
    %295 = arith.mulf %291, %294 : vector<2x16xf32>
    %296 = arith.addf %282, %295 : vector<2x16xf32>
    %297 = math.tanh %296 : vector<2x16xf32>
    %cst_129 = arith.constant 1.000000e+00 : f32
    %298 = vector.broadcast %cst_129 : f32 to vector<2x16xf32>
    %299 = arith.subf %298, %292 : vector<2x16xf32>
    %300 = arith.mulf %299, %297 : vector<2x16xf32>
    %301 = arith.mulf %292, %233 : vector<2x16xf32>
    %302 = arith.addf %300, %301 : vector<2x16xf32>
    %cst_130 = arith.constant dense<0.000000e+00> : vector<2x32xf32>
    %303 = tpu.matmul %302, %29, %cst_130 {dimension_numbers = #tpu.dot_dimension_numbers<[1], [0], [0], [1], [0, 0, 1, 1], [], []>} : vector<2x16xf32>, vector<16x32xf32>, vector<2x32xf32> -> vector<2x32xf32>
    %cst_131 = arith.constant dense<0.000000e+00> : vector<2x16xf32>
    %304 = tpu.matmul %302, %33, %cst_131 {dimension_numbers = #tpu.dot_dimension_numbers<[1], [0], [0], [1], [0, 0, 1, 1], [], []>} : vector<2x16xf32>, vector<16x16xf32>, vector<2x16xf32> -> vector<2x16xf32>
    %305 = arith.addf %304, %63 : vector<2x16xf32>
    %cst_132 = arith.constant dense<0.000000e+00> : vector<2x32xf32>
    %306 = tpu.matmul %256, %19, %cst_132 {dimension_numbers = #tpu.dot_dimension_numbers<[1], [0], [0], [1], [0, 0, 1, 1], [], []>} : vector<2x16xf32>, vector<16x32xf32>, vector<2x32xf32> -> vector<2x32xf32>
    %307 = arith.addf %303, %306 : vector<2x32xf32>
    %308 = arith.addf %307, %43 : vector<2x32xf32>
    %309 = arith.negf %308 : vector<2x32xf32>
    %310 = math.exp %309 : vector<2x32xf32>
    %cst_133 = arith.constant 1.000000e+00 : f32
    %311 = vector.broadcast %cst_133 : f32 to vector<2x32xf32>
    %312 = arith.addf %311, %310 : vector<2x32xf32>
    %313 = arith.divf %311, %312 : vector<2x32xf32>
    %314 = vector.extract_strided_slice %313 {offsets = [0, 0], sizes = [2, 16], strides = [1, 1]} : vector<2x32xf32> to vector<2x16xf32>
    %315 = vector.extract_strided_slice %313 {offsets = [0, 16], sizes = [2, 16], strides = [1, 1]} : vector<2x32xf32> to vector<2x16xf32>
    %cst_134 = arith.constant dense<0.000000e+00> : vector<2x16xf32>
    %316 = tpu.matmul %256, %25, %cst_134 {dimension_numbers = #tpu.dot_dimension_numbers<[1], [0], [0], [1], [0, 0, 1, 1], [], []>} : vector<2x16xf32>, vector<16x16xf32>, vector<2x16xf32> -> vector<2x16xf32>
    %317 = arith.addf %316, %55 : vector<2x16xf32>
    %318 = arith.mulf %314, %317 : vector<2x16xf32>
    %319 = arith.addf %305, %318 : vector<2x16xf32>
    %320 = math.tanh %319 : vector<2x16xf32>
    %cst_135 = arith.constant 1.000000e+00 : f32
    %321 = vector.broadcast %cst_135 : f32 to vector<2x16xf32>
    %322 = arith.subf %321, %315 : vector<2x16xf32>
    %323 = arith.mulf %322, %320 : vector<2x16xf32>
    %324 = arith.mulf %315, %256 : vector<2x16xf32>
    %325 = arith.addf %323, %324 : vector<2x16xf32>
    %cst_136 = arith.constant dense<0.000000e+00> : vector<2x32xf32>
    %326 = tpu.matmul %325, %31, %cst_136 {dimension_numbers = #tpu.dot_dimension_numbers<[1], [0], [0], [1], [0, 0, 1, 1], [], []>} : vector<2x16xf32>, vector<16x32xf32>, vector<2x32xf32> -> vector<2x32xf32>
    %cst_137 = arith.constant dense<0.000000e+00> : vector<2x16xf32>
    %327 = tpu.matmul %325, %35, %cst_137 {dimension_numbers = #tpu.dot_dimension_numbers<[1], [0], [0], [1], [0, 0, 1, 1], [], []>} : vector<2x16xf32>, vector<16x16xf32>, vector<2x16xf32> -> vector<2x16xf32>
    %328 = arith.addf %327, %67 : vector<2x16xf32>
    %cst_138 = arith.constant dense<0.000000e+00> : vector<2x32xf32>
    %329 = tpu.matmul %279, %21, %cst_138 {dimension_numbers = #tpu.dot_dimension_numbers<[1], [0], [0], [1], [0, 0, 1, 1], [], []>} : vector<2x16xf32>, vector<16x32xf32>, vector<2x32xf32> -> vector<2x32xf32>
    %330 = arith.addf %326, %329 : vector<2x32xf32>
    %331 = arith.addf %330, %47 : vector<2x32xf32>
    %332 = arith.negf %331 : vector<2x32xf32>
    %333 = math.exp %332 : vector<2x32xf32>
    %cst_139 = arith.constant 1.000000e+00 : f32
    %334 = vector.broadcast %cst_139 : f32 to vector<2x32xf32>
    %335 = arith.addf %334, %333 : vector<2x32xf32>
    %336 = arith.divf %334, %335 : vector<2x32xf32>
    %337 = vector.extract_strided_slice %336 {offsets = [0, 0], sizes = [2, 16], strides = [1, 1]} : vector<2x32xf32> to vector<2x16xf32>
    %338 = vector.extract_strided_slice %336 {offsets = [0, 16], sizes = [2, 16], strides = [1, 1]} : vector<2x32xf32> to vector<2x16xf32>
    %cst_140 = arith.constant dense<0.000000e+00> : vector<2x16xf32>
    %339 = tpu.matmul %279, %27, %cst_140 {dimension_numbers = #tpu.dot_dimension_numbers<[1], [0], [0], [1], [0, 0, 1, 1], [], []>} : vector<2x16xf32>, vector<16x16xf32>, vector<2x16xf32> -> vector<2x16xf32>
    %340 = arith.addf %339, %59 : vector<2x16xf32>
    %341 = arith.mulf %337, %340 : vector<2x16xf32>
    %342 = arith.addf %328, %341 : vector<2x16xf32>
    %343 = math.tanh %342 : vector<2x16xf32>
    %cst_141 = arith.constant 1.000000e+00 : f32
    %344 = vector.broadcast %cst_141 : f32 to vector<2x16xf32>
    %345 = arith.subf %344, %338 : vector<2x16xf32>
    %346 = arith.mulf %345, %343 : vector<2x16xf32>
    %347 = arith.mulf %338, %279 : vector<2x16xf32>
    %348 = arith.addf %346, %347 : vector<2x16xf32>
    %c6 = arith.constant 6 : index
    %c0_142 = arith.constant 0 : index
    %349 = vector.load %arg19[%c6, %c0_142] : memref<16x16xf32, #tpu.memory_space<vmem>>, vector<2x16xf32>
    tpu.vector_store %arg19[%c6, %c0_142], %348 {strides = array<i32>} : memref<16x16xf32, #tpu.memory_space<vmem>>, vector<2x16xf32>,
    %350 = vector.extract_strided_slice %15 {offsets = [8, 0], sizes = [2, 32], strides = [1, 1]} : vector<16x48xf32> to vector<2x32xf32>
    %351 = vector.extract_strided_slice %15 {offsets = [8, 32], sizes = [2, 16], strides = [1, 1]} : vector<16x48xf32> to vector<2x16xf32>
    %cst_143 = arith.constant dense<0.000000e+00> : vector<2x32xf32>
    %352 = tpu.matmul %302, %17, %cst_143 {dimension_numbers = #tpu.dot_dimension_numbers<[1], [0], [0], [1], [0, 0, 1, 1], [], []>} : vector<2x16xf32>, vector<16x32xf32>, vector<2x32xf32> -> vector<2x32xf32>
    %353 = arith.addf %350, %352 : vector<2x32xf32>
    %354 = arith.addf %353, %39 : vector<2x32xf32>
    %355 = arith.negf %354 : vector<2x32xf32>
    %356 = math.exp %355 : vector<2x32xf32>
    %cst_144 = arith.constant 1.000000e+00 : f32
    %357 = vector.broadcast %cst_144 : f32 to vector<2x32xf32>
    %358 = arith.addf %357, %356 : vector<2x32xf32>
    %359 = arith.divf %357, %358 : vector<2x32xf32>
    %360 = vector.extract_strided_slice %359 {offsets = [0, 0], sizes = [2, 16], strides = [1, 1]} : vector<2x32xf32> to vector<2x16xf32>
    %361 = vector.extract_strided_slice %359 {offsets = [0, 16], sizes = [2, 16], strides = [1, 1]} : vector<2x32xf32> to vector<2x16xf32>
    %cst_145 = arith.constant dense<0.000000e+00> : vector<2x16xf32>
    %362 = tpu.matmul %302, %23, %cst_145 {dimension_numbers = #tpu.dot_dimension_numbers<[1], [0], [0], [1], [0, 0, 1, 1], [], []>} : vector<2x16xf32>, vector<16x16xf32>, vector<2x16xf32> -> vector<2x16xf32>
    %363 = arith.addf %362, %51 : vector<2x16xf32>
    %364 = arith.mulf %360, %363 : vector<2x16xf32>
    %365 = arith.addf %351, %364 : vector<2x16xf32>
    %366 = math.tanh %365 : vector<2x16xf32>
    %cst_146 = arith.constant 1.000000e+00 : f32
    %367 = vector.broadcast %cst_146 : f32 to vector<2x16xf32>
    %368 = arith.subf %367, %361 : vector<2x16xf32>
    %369 = arith.mulf %368, %366 : vector<2x16xf32>
    %370 = arith.mulf %361, %302 : vector<2x16xf32>
    %371 = arith.addf %369, %370 : vector<2x16xf32>
    %cst_147 = arith.constant dense<0.000000e+00> : vector<2x32xf32>
    %372 = tpu.matmul %371, %29, %cst_147 {dimension_numbers = #tpu.dot_dimension_numbers<[1], [0], [0], [1], [0, 0, 1, 1], [], []>} : vector<2x16xf32>, vector<16x32xf32>, vector<2x32xf32> -> vector<2x32xf32>
    %cst_148 = arith.constant dense<0.000000e+00> : vector<2x16xf32>
    %373 = tpu.matmul %371, %33, %cst_148 {dimension_numbers = #tpu.dot_dimension_numbers<[1], [0], [0], [1], [0, 0, 1, 1], [], []>} : vector<2x16xf32>, vector<16x16xf32>, vector<2x16xf32> -> vector<2x16xf32>
    %374 = arith.addf %373, %63 : vector<2x16xf32>
    %cst_149 = arith.constant dense<0.000000e+00> : vector<2x32xf32>
    %375 = tpu.matmul %325, %19, %cst_149 {dimension_numbers = #tpu.dot_dimension_numbers<[1], [0], [0], [1], [0, 0, 1, 1], [], []>} : vector<2x16xf32>, vector<16x32xf32>, vector<2x32xf32> -> vector<2x32xf32>
    %376 = arith.addf %372, %375 : vector<2x32xf32>
    %377 = arith.addf %376, %43 : vector<2x32xf32>
    %378 = arith.negf %377 : vector<2x32xf32>
    %379 = math.exp %378 : vector<2x32xf32>
    %cst_150 = arith.constant 1.000000e+00 : f32
    %380 = vector.broadcast %cst_150 : f32 to vector<2x32xf32>
    %381 = arith.addf %380, %379 : vector<2x32xf32>
    %382 = arith.divf %380, %381 : vector<2x32xf32>
    %383 = vector.extract_strided_slice %382 {offsets = [0, 0], sizes = [2, 16], strides = [1, 1]} : vector<2x32xf32> to vector<2x16xf32>
    %384 = vector.extract_strided_slice %382 {offsets = [0, 16], sizes = [2, 16], strides = [1, 1]} : vector<2x32xf32> to vector<2x16xf32>
    %cst_151 = arith.constant dense<0.000000e+00> : vector<2x16xf32>
    %385 = tpu.matmul %325, %25, %cst_151 {dimension_numbers = #tpu.dot_dimension_numbers<[1], [0], [0], [1], [0, 0, 1, 1], [], []>} : vector<2x16xf32>, vector<16x16xf32>, vector<2x16xf32> -> vector<2x16xf32>
    %386 = arith.addf %385, %55 : vector<2x16xf32>
    %387 = arith.mulf %383, %386 : vector<2x16xf32>
    %388 = arith.addf %374, %387 : vector<2x16xf32>
    %389 = math.tanh %388 : vector<2x16xf32>
    %cst_152 = arith.constant 1.000000e+00 : f32
    %390 = vector.broadcast %cst_152 : f32 to vector<2x16xf32>
    %391 = arith.subf %390, %384 : vector<2x16xf32>
    %392 = arith.mulf %391, %389 : vector<2x16xf32>
    %393 = arith.mulf %384, %325 : vector<2x16xf32>
    %394 = arith.addf %392, %393 : vector<2x16xf32>
    %cst_153 = arith.constant dense<0.000000e+00> : vector<2x32xf32>
    %395 = tpu.matmul %394, %31, %cst_153 {dimension_numbers = #tpu.dot_dimension_numbers<[1], [0], [0], [1], [0, 0, 1, 1], [], []>} : vector<2x16xf32>, vector<16x32xf32>, vector<2x32xf32> -> vector<2x32xf32>
    %cst_154 = arith.constant dense<0.000000e+00> : vector<2x16xf32>
    %396 = tpu.matmul %394, %35, %cst_154 {dimension_numbers = #tpu.dot_dimension_numbers<[1], [0], [0], [1], [0, 0, 1, 1], [], []>} : vector<2x16xf32>, vector<16x16xf32>, vector<2x16xf32> -> vector<2x16xf32>
    %397 = arith.addf %396, %67 : vector<2x16xf32>
    %cst_155 = arith.constant dense<0.000000e+00> : vector<2x32xf32>
    %398 = tpu.matmul %348, %21, %cst_155 {dimension_numbers = #tpu.dot_dimension_numbers<[1], [0], [0], [1], [0, 0, 1, 1], [], []>} : vector<2x16xf32>, vector<16x32xf32>, vector<2x32xf32> -> vector<2x32xf32>
    %399 = arith.addf %395, %398 : vector<2x32xf32>
    %400 = arith.addf %399, %47 : vector<2x32xf32>
    %401 = arith.negf %400 : vector<2x32xf32>
    %402 = math.exp %401 : vector<2x32xf32>
    %cst_156 = arith.constant 1.000000e+00 : f32
    %403 = vector.broadcast %cst_156 : f32 to vector<2x32xf32>
    %404 = arith.addf %403, %402 : vector<2x32xf32>
    %405 = arith.divf %403, %404 : vector<2x32xf32>
    %406 = vector.extract_strided_slice %405 {offsets = [0, 0], sizes = [2, 16], strides = [1, 1]} : vector<2x32xf32> to vector<2x16xf32>
    %407 = vector.extract_strided_slice %405 {offsets = [0, 16], sizes = [2, 16], strides = [1, 1]} : vector<2x32xf32> to vector<2x16xf32>
    %cst_157 = arith.constant dense<0.000000e+00> : vector<2x16xf32>
    %408 = tpu.matmul %348, %27, %cst_157 {dimension_numbers = #tpu.dot_dimension_numbers<[1], [0], [0], [1], [0, 0, 1, 1], [], []>} : vector<2x16xf32>, vector<16x16xf32>, vector<2x16xf32> -> vector<2x16xf32>
    %409 = arith.addf %408, %59 : vector<2x16xf32>
    %410 = arith.mulf %406, %409 : vector<2x16xf32>
    %411 = arith.addf %397, %410 : vector<2x16xf32>
    %412 = math.tanh %411 : vector<2x16xf32>
    %cst_158 = arith.constant 1.000000e+00 : f32
    %413 = vector.broadcast %cst_158 : f32 to vector<2x16xf32>
    %414 = arith.subf %413, %407 : vector<2x16xf32>
    %415 = arith.mulf %414, %412 : vector<2x16xf32>
    %416 = arith.mulf %407, %348 : vector<2x16xf32>
    %417 = arith.addf %415, %416 : vector<2x16xf32>
    %c8 = arith.constant 8 : index
    %c0_159 = arith.constant 0 : index
    %418 = vector.load %arg19[%c8, %c0_159] : memref<16x16xf32, #tpu.memory_space<vmem>>, vector<2x16xf32>
    tpu.vector_store %arg19[%c8, %c0_159], %417 {strides = array<i32>} : memref<16x16xf32, #tpu.memory_space<vmem>>, vector<2x16xf32>,
    %419 = vector.extract_strided_slice %15 {offsets = [10, 0], sizes = [2, 32], strides = [1, 1]} : vector<16x48xf32> to vector<2x32xf32>
    %420 = vector.extract_strided_slice %15 {offsets = [10, 32], sizes = [2, 16], strides = [1, 1]} : vector<16x48xf32> to vector<2x16xf32>
    %cst_160 = arith.constant dense<0.000000e+00> : vector<2x32xf32>
    %421 = tpu.matmul %371, %17, %cst_160 {dimension_numbers = #tpu.dot_dimension_numbers<[1], [0], [0], [1], [0, 0, 1, 1], [], []>} : vector<2x16xf32>, vector<16x32xf32>, vector<2x32xf32> -> vector<2x32xf32>
    %422 = arith.addf %419, %421 : vector<2x32xf32>
    %423 = arith.addf %422, %39 : vector<2x32xf32>
    %424 = arith.negf %423 : vector<2x32xf32>
    %425 = math.exp %424 : vector<2x32xf32>
    %cst_161 = arith.constant 1.000000e+00 : f32
    %426 = vector.broadcast %cst_161 : f32 to vector<2x32xf32>
    %427 = arith.addf %426, %425 : vector<2x32xf32>
    %428 = arith.divf %426, %427 : vector<2x32xf32>
    %429 = vector.extract_strided_slice %428 {offsets = [0, 0], sizes = [2, 16], strides = [1, 1]} : vector<2x32xf32> to vector<2x16xf32>
    %430 = vector.extract_strided_slice %428 {offsets = [0, 16], sizes = [2, 16], strides = [1, 1]} : vector<2x32xf32> to vector<2x16xf32>
    %cst_162 = arith.constant dense<0.000000e+00> : vector<2x16xf32>
    %431 = tpu.matmul %371, %23, %cst_162 {dimension_numbers = #tpu.dot_dimension_numbers<[1], [0], [0], [1], [0, 0, 1, 1], [], []>} : vector<2x16xf32>, vector<16x16xf32>, vector<2x16xf32> -> vector<2x16xf32>
    %432 = arith.addf %431, %51 : vector<2x16xf32>
    %433 = arith.mulf %429, %432 : vector<2x16xf32>
    %434 = arith.addf %420, %433 : vector<2x16xf32>
    %435 = math.tanh %434 : vector<2x16xf32>
    %cst_163 = arith.constant 1.000000e+00 : f32
    %436 = vector.broadcast %cst_163 : f32 to vector<2x16xf32>
    %437 = arith.subf %436, %430 : vector<2x16xf32>
    %438 = arith.mulf %437, %435 : vector<2x16xf32>
    %439 = arith.mulf %430, %371 : vector<2x16xf32>
    %440 = arith.addf %438, %439 : vector<2x16xf32>
    %cst_164 = arith.constant dense<0.000000e+00> : vector<2x32xf32>
    %441 = tpu.matmul %440, %29, %cst_164 {dimension_numbers = #tpu.dot_dimension_numbers<[1], [0], [0], [1], [0, 0, 1, 1], [], []>} : vector<2x16xf32>, vector<16x32xf32>, vector<2x32xf32> -> vector<2x32xf32>
    %cst_165 = arith.constant dense<0.000000e+00> : vector<2x16xf32>
    %442 = tpu.matmul %440, %33, %cst_165 {dimension_numbers = #tpu.dot_dimension_numbers<[1], [0], [0], [1], [0, 0, 1, 1], [], []>} : vector<2x16xf32>, vector<16x16xf32>, vector<2x16xf32> -> vector<2x16xf32>
    %443 = arith.addf %442, %63 : vector<2x16xf32>
    %cst_166 = arith.constant dense<0.000000e+00> : vector<2x32xf32>
    %444 = tpu.matmul %394, %19, %cst_166 {dimension_numbers = #tpu.dot_dimension_numbers<[1], [0], [0], [1], [0, 0, 1, 1], [], []>} : vector<2x16xf32>, vector<16x32xf32>, vector<2x32xf32> -> vector<2x32xf32>
    %445 = arith.addf %441, %444 : vector<2x32xf32>
    %446 = arith.addf %445, %43 : vector<2x32xf32>
    %447 = arith.negf %446 : vector<2x32xf32>
    %448 = math.exp %447 : vector<2x32xf32>
    %cst_167 = arith.constant 1.000000e+00 : f32
    %449 = vector.broadcast %cst_167 : f32 to vector<2x32xf32>
    %450 = arith.addf %449, %448 : vector<2x32xf32>
    %451 = arith.divf %449, %450 : vector<2x32xf32>
    %452 = vector.extract_strided_slice %451 {offsets = [0, 0], sizes = [2, 16], strides = [1, 1]} : vector<2x32xf32> to vector<2x16xf32>
    %453 = vector.extract_strided_slice %451 {offsets = [0, 16], sizes = [2, 16], strides = [1, 1]} : vector<2x32xf32> to vector<2x16xf32>
    %cst_168 = arith.constant dense<0.000000e+00> : vector<2x16xf32>
    %454 = tpu.matmul %394, %25, %cst_168 {dimension_numbers = #tpu.dot_dimension_numbers<[1], [0], [0], [1], [0, 0, 1, 1], [], []>} : vector<2x16xf32>, vector<16x16xf32>, vector<2x16xf32> -> vector<2x16xf32>
    %455 = arith.addf %454, %55 : vector<2x16xf32>
    %456 = arith.mulf %452, %455 : vector<2x16xf32>
    %457 = arith.addf %443, %456 : vector<2x16xf32>
    %458 = math.tanh %457 : vector<2x16xf32>
    %cst_169 = arith.constant 1.000000e+00 : f32
    %459 = vector.broadcast %cst_169 : f32 to vector<2x16xf32>
    %460 = arith.subf %459, %453 : vector<2x16xf32>
    %461 = arith.mulf %460, %458 : vector<2x16xf32>
    %462 = arith.mulf %453, %394 : vector<2x16xf32>
    %463 = arith.addf %461, %462 : vector<2x16xf32>
    %cst_170 = arith.constant dense<0.000000e+00> : vector<2x32xf32>
    %464 = tpu.matmul %463, %31, %cst_170 {dimension_numbers = #tpu.dot_dimension_numbers<[1], [0], [0], [1], [0, 0, 1, 1], [], []>} : vector<2x16xf32>, vector<16x32xf32>, vector<2x32xf32> -> vector<2x32xf32>
    %cst_171 = arith.constant dense<0.000000e+00> : vector<2x16xf32>
    %465 = tpu.matmul %463, %35, %cst_171 {dimension_numbers = #tpu.dot_dimension_numbers<[1], [0], [0], [1], [0, 0, 1, 1], [], []>} : vector<2x16xf32>, vector<16x16xf32>, vector<2x16xf32> -> vector<2x16xf32>
    %466 = arith.addf %465, %67 : vector<2x16xf32>
    %cst_172 = arith.constant dense<0.000000e+00> : vector<2x32xf32>
    %467 = tpu.matmul %417, %21, %cst_172 {dimension_numbers = #tpu.dot_dimension_numbers<[1], [0], [0], [1], [0, 0, 1, 1], [], []>} : vector<2x16xf32>, vector<16x32xf32>, vector<2x32xf32> -> vector<2x32xf32>
    %468 = arith.addf %464, %467 : vector<2x32xf32>
    %469 = arith.addf %468, %47 : vector<2x32xf32>
    %470 = arith.negf %469 : vector<2x32xf32>
    %471 = math.exp %470 : vector<2x32xf32>
    %cst_173 = arith.constant 1.000000e+00 : f32
    %472 = vector.broadcast %cst_173 : f32 to vector<2x32xf32>
    %473 = arith.addf %472, %471 : vector<2x32xf32>
    %474 = arith.divf %472, %473 : vector<2x32xf32>
    %475 = vector.extract_strided_slice %474 {offsets = [0, 0], sizes = [2, 16], strides = [1, 1]} : vector<2x32xf32> to vector<2x16xf32>
    %476 = vector.extract_strided_slice %474 {offsets = [0, 16], sizes = [2, 16], strides = [1, 1]} : vector<2x32xf32> to vector<2x16xf32>
    %cst_174 = arith.constant dense<0.000000e+00> : vector<2x16xf32>
    %477 = tpu.matmul %417, %27, %cst_174 {dimension_numbers = #tpu.dot_dimension_numbers<[1], [0], [0], [1], [0, 0, 1, 1], [], []>} : vector<2x16xf32>, vector<16x16xf32>, vector<2x16xf32> -> vector<2x16xf32>
    %478 = arith.addf %477, %59 : vector<2x16xf32>
    %479 = arith.mulf %475, %478 : vector<2x16xf32>
    %480 = arith.addf %466, %479 : vector<2x16xf32>
    %481 = math.tanh %480 : vector<2x16xf32>
    %cst_175 = arith.constant 1.000000e+00 : f32
    %482 = vector.broadcast %cst_175 : f32 to vector<2x16xf32>
    %483 = arith.subf %482, %476 : vector<2x16xf32>
    %484 = arith.mulf %483, %481 : vector<2x16xf32>
    %485 = arith.mulf %476, %417 : vector<2x16xf32>
    %486 = arith.addf %484, %485 : vector<2x16xf32>
    %c10 = arith.constant 10 : index
    %c0_176 = arith.constant 0 : index
    %487 = vector.load %arg19[%c10, %c0_176] : memref<16x16xf32, #tpu.memory_space<vmem>>, vector<2x16xf32>
    tpu.vector_store %arg19[%c10, %c0_176], %486 {strides = array<i32>} : memref<16x16xf32, #tpu.memory_space<vmem>>, vector<2x16xf32>,
    %488 = vector.extract_strided_slice %15 {offsets = [12, 0], sizes = [2, 32], strides = [1, 1]} : vector<16x48xf32> to vector<2x32xf32>
    %489 = vector.extract_strided_slice %15 {offsets = [12, 32], sizes = [2, 16], strides = [1, 1]} : vector<16x48xf32> to vector<2x16xf32>
    %cst_177 = arith.constant dense<0.000000e+00> : vector<2x32xf32>
    %490 = tpu.matmul %440, %17, %cst_177 {dimension_numbers = #tpu.dot_dimension_numbers<[1], [0], [0], [1], [0, 0, 1, 1], [], []>} : vector<2x16xf32>, vector<16x32xf32>, vector<2x32xf32> -> vector<2x32xf32>
    %491 = arith.addf %488, %490 : vector<2x32xf32>
    %492 = arith.addf %491, %39 : vector<2x32xf32>
    %493 = arith.negf %492 : vector<2x32xf32>
    %494 = math.exp %493 : vector<2x32xf32>
    %cst_178 = arith.constant 1.000000e+00 : f32
    %495 = vector.broadcast %cst_178 : f32 to vector<2x32xf32>
    %496 = arith.addf %495, %494 : vector<2x32xf32>
    %497 = arith.divf %495, %496 : vector<2x32xf32>
    %498 = vector.extract_strided_slice %497 {offsets = [0, 0], sizes = [2, 16], strides = [1, 1]} : vector<2x32xf32> to vector<2x16xf32>
    %499 = vector.extract_strided_slice %497 {offsets = [0, 16], sizes = [2, 16], strides = [1, 1]} : vector<2x32xf32> to vector<2x16xf32>
    %cst_179 = arith.constant dense<0.000000e+00> : vector<2x16xf32>
    %500 = tpu.matmul %440, %23, %cst_179 {dimension_numbers = #tpu.dot_dimension_numbers<[1], [0], [0], [1], [0, 0, 1, 1], [], []>} : vector<2x16xf32>, vector<16x16xf32>, vector<2x16xf32> -> vector<2x16xf32>
    %501 = arith.addf %500, %51 : vector<2x16xf32>
    %502 = arith.mulf %498, %501 : vector<2x16xf32>
    %503 = arith.addf %489, %502 : vector<2x16xf32>
    %504 = math.tanh %503 : vector<2x16xf32>
    %cst_180 = arith.constant 1.000000e+00 : f32
    %505 = vector.broadcast %cst_180 : f32 to vector<2x16xf32>
    %506 = arith.subf %505, %499 : vector<2x16xf32>
    %507 = arith.mulf %506, %504 : vector<2x16xf32>
    %508 = arith.mulf %499, %440 : vector<2x16xf32>
    %509 = arith.addf %507, %508 : vector<2x16xf32>
    %cst_181 = arith.constant dense<0.000000e+00> : vector<2x32xf32>
    %510 = tpu.matmul %509, %29, %cst_181 {dimension_numbers = #tpu.dot_dimension_numbers<[1], [0], [0], [1], [0, 0, 1, 1], [], []>} : vector<2x16xf32>, vector<16x32xf32>, vector<2x32xf32> -> vector<2x32xf32>
    %cst_182 = arith.constant dense<0.000000e+00> : vector<2x16xf32>
    %511 = tpu.matmul %509, %33, %cst_182 {dimension_numbers = #tpu.dot_dimension_numbers<[1], [0], [0], [1], [0, 0, 1, 1], [], []>} : vector<2x16xf32>, vector<16x16xf32>, vector<2x16xf32> -> vector<2x16xf32>
    %512 = arith.addf %511, %63 : vector<2x16xf32>
    %cst_183 = arith.constant dense<0.000000e+00> : vector<2x32xf32>
    %513 = tpu.matmul %463, %19, %cst_183 {dimension_numbers = #tpu.dot_dimension_numbers<[1], [0], [0], [1], [0, 0, 1, 1], [], []>} : vector<2x16xf32>, vector<16x32xf32>, vector<2x32xf32> -> vector<2x32xf32>
    %514 = arith.addf %510, %513 : vector<2x32xf32>
    %515 = arith.addf %514, %43 : vector<2x32xf32>
    %516 = arith.negf %515 : vector<2x32xf32>
    %517 = math.exp %516 : vector<2x32xf32>
    %cst_184 = arith.constant 1.000000e+00 : f32
    %518 = vector.broadcast %cst_184 : f32 to vector<2x32xf32>
    %519 = arith.addf %518, %517 : vector<2x32xf32>
    %520 = arith.divf %518, %519 : vector<2x32xf32>
    %521 = vector.extract_strided_slice %520 {offsets = [0, 0], sizes = [2, 16], strides = [1, 1]} : vector<2x32xf32> to vector<2x16xf32>
    %522 = vector.extract_strided_slice %520 {offsets = [0, 16], sizes = [2, 16], strides = [1, 1]} : vector<2x32xf32> to vector<2x16xf32>
    %cst_185 = arith.constant dense<0.000000e+00> : vector<2x16xf32>
    %523 = tpu.matmul %463, %25, %cst_185 {dimension_numbers = #tpu.dot_dimension_numbers<[1], [0], [0], [1], [0, 0, 1, 1], [], []>} : vector<2x16xf32>, vector<16x16xf32>, vector<2x16xf32> -> vector<2x16xf32>
    %524 = arith.addf %523, %55 : vector<2x16xf32>
    %525 = arith.mulf %521, %524 : vector<2x16xf32>
    %526 = arith.addf %512, %525 : vector<2x16xf32>
    %527 = math.tanh %526 : vector<2x16xf32>
    %cst_186 = arith.constant 1.000000e+00 : f32
    %528 = vector.broadcast %cst_186 : f32 to vector<2x16xf32>
    %529 = arith.subf %528, %522 : vector<2x16xf32>
    %530 = arith.mulf %529, %527 : vector<2x16xf32>
    %531 = arith.mulf %522, %463 : vector<2x16xf32>
    %532 = arith.addf %530, %531 : vector<2x16xf32>
    %cst_187 = arith.constant dense<0.000000e+00> : vector<2x32xf32>
    %533 = tpu.matmul %532, %31, %cst_187 {dimension_numbers = #tpu.dot_dimension_numbers<[1], [0], [0], [1], [0, 0, 1, 1], [], []>} : vector<2x16xf32>, vector<16x32xf32>, vector<2x32xf32> -> vector<2x32xf32>
    %cst_188 = arith.constant dense<0.000000e+00> : vector<2x16xf32>
    %534 = tpu.matmul %532, %35, %cst_188 {dimension_numbers = #tpu.dot_dimension_numbers<[1], [0], [0], [1], [0, 0, 1, 1], [], []>} : vector<2x16xf32>, vector<16x16xf32>, vector<2x16xf32> -> vector<2x16xf32>
    %535 = arith.addf %534, %67 : vector<2x16xf32>
    %cst_189 = arith.constant dense<0.000000e+00> : vector<2x32xf32>
    %536 = tpu.matmul %486, %21, %cst_189 {dimension_numbers = #tpu.dot_dimension_numbers<[1], [0], [0], [1], [0, 0, 1, 1], [], []>} : vector<2x16xf32>, vector<16x32xf32>, vector<2x32xf32> -> vector<2x32xf32>
    %537 = arith.addf %533, %536 : vector<2x32xf32>
    %538 = arith.addf %537, %47 : vector<2x32xf32>
    %539 = arith.negf %538 : vector<2x32xf32>
    %540 = math.exp %539 : vector<2x32xf32>
    %cst_190 = arith.constant 1.000000e+00 : f32
    %541 = vector.broadcast %cst_190 : f32 to vector<2x32xf32>
    %542 = arith.addf %541, %540 : vector<2x32xf32>
    %543 = arith.divf %541, %542 : vector<2x32xf32>
    %544 = vector.extract_strided_slice %543 {offsets = [0, 0], sizes = [2, 16], strides = [1, 1]} : vector<2x32xf32> to vector<2x16xf32>
    %545 = vector.extract_strided_slice %543 {offsets = [0, 16], sizes = [2, 16], strides = [1, 1]} : vector<2x32xf32> to vector<2x16xf32>
    %cst_191 = arith.constant dense<0.000000e+00> : vector<2x16xf32>
    %546 = tpu.matmul %486, %27, %cst_191 {dimension_numbers = #tpu.dot_dimension_numbers<[1], [0], [0], [1], [0, 0, 1, 1], [], []>} : vector<2x16xf32>, vector<16x16xf32>, vector<2x16xf32> -> vector<2x16xf32>
    %547 = arith.addf %546, %59 : vector<2x16xf32>
    %548 = arith.mulf %544, %547 : vector<2x16xf32>
    %549 = arith.addf %535, %548 : vector<2x16xf32>
    %550 = math.tanh %549 : vector<2x16xf32>
    %cst_192 = arith.constant 1.000000e+00 : f32
    %551 = vector.broadcast %cst_192 : f32 to vector<2x16xf32>
    %552 = arith.subf %551, %545 : vector<2x16xf32>
    %553 = arith.mulf %552, %550 : vector<2x16xf32>
    %554 = arith.mulf %545, %486 : vector<2x16xf32>
    %555 = arith.addf %553, %554 : vector<2x16xf32>
    %c12 = arith.constant 12 : index
    %c0_193 = arith.constant 0 : index
    %556 = vector.load %arg19[%c12, %c0_193] : memref<16x16xf32, #tpu.memory_space<vmem>>, vector<2x16xf32>
    tpu.vector_store %arg19[%c12, %c0_193], %555 {strides = array<i32>} : memref<16x16xf32, #tpu.memory_space<vmem>>, vector<2x16xf32>,
    %557 = vector.extract_strided_slice %15 {offsets = [14, 0], sizes = [2, 32], strides = [1, 1]} : vector<16x48xf32> to vector<2x32xf32>
    %558 = vector.extract_strided_slice %15 {offsets = [14, 32], sizes = [2, 16], strides = [1, 1]} : vector<16x48xf32> to vector<2x16xf32>
    %cst_194 = arith.constant dense<0.000000e+00> : vector<2x32xf32>
    %559 = tpu.matmul %509, %17, %cst_194 {dimension_numbers = #tpu.dot_dimension_numbers<[1], [0], [0], [1], [0, 0, 1, 1], [], []>} : vector<2x16xf32>, vector<16x32xf32>, vector<2x32xf32> -> vector<2x32xf32>
    %560 = arith.addf %557, %559 : vector<2x32xf32>
    %561 = arith.addf %560, %39 : vector<2x32xf32>
    %562 = arith.negf %561 : vector<2x32xf32>
    %563 = math.exp %562 : vector<2x32xf32>
    %cst_195 = arith.constant 1.000000e+00 : f32
    %564 = vector.broadcast %cst_195 : f32 to vector<2x32xf32>
    %565 = arith.addf %564, %563 : vector<2x32xf32>
    %566 = arith.divf %564, %565 : vector<2x32xf32>
    %567 = vector.extract_strided_slice %566 {offsets = [0, 0], sizes = [2, 16], strides = [1, 1]} : vector<2x32xf32> to vector<2x16xf32>
    %568 = vector.extract_strided_slice %566 {offsets = [0, 16], sizes = [2, 16], strides = [1, 1]} : vector<2x32xf32> to vector<2x16xf32>
    %cst_196 = arith.constant dense<0.000000e+00> : vector<2x16xf32>
    %569 = tpu.matmul %509, %23, %cst_196 {dimension_numbers = #tpu.dot_dimension_numbers<[1], [0], [0], [1], [0, 0, 1, 1], [], []>} : vector<2x16xf32>, vector<16x16xf32>, vector<2x16xf32> -> vector<2x16xf32>
    %570 = arith.addf %569, %51 : vector<2x16xf32>
    %571 = arith.mulf %567, %570 : vector<2x16xf32>
    %572 = arith.addf %558, %571 : vector<2x16xf32>
    %573 = math.tanh %572 : vector<2x16xf32>
    %cst_197 = arith.constant 1.000000e+00 : f32
    %574 = vector.broadcast %cst_197 : f32 to vector<2x16xf32>
    %575 = arith.subf %574, %568 : vector<2x16xf32>
    %576 = arith.mulf %575, %573 : vector<2x16xf32>
    %577 = arith.mulf %568, %509 : vector<2x16xf32>
    %578 = arith.addf %576, %577 : vector<2x16xf32>
    %cst_198 = arith.constant dense<0.000000e+00> : vector<2x32xf32>
    %579 = tpu.matmul %578, %29, %cst_198 {dimension_numbers = #tpu.dot_dimension_numbers<[1], [0], [0], [1], [0, 0, 1, 1], [], []>} : vector<2x16xf32>, vector<16x32xf32>, vector<2x32xf32> -> vector<2x32xf32>
    %cst_199 = arith.constant dense<0.000000e+00> : vector<2x16xf32>
    %580 = tpu.matmul %578, %33, %cst_199 {dimension_numbers = #tpu.dot_dimension_numbers<[1], [0], [0], [1], [0, 0, 1, 1], [], []>} : vector<2x16xf32>, vector<16x16xf32>, vector<2x16xf32> -> vector<2x16xf32>
    %581 = arith.addf %580, %63 : vector<2x16xf32>
    %cst_200 = arith.constant dense<0.000000e+00> : vector<2x32xf32>
    %582 = tpu.matmul %532, %19, %cst_200 {dimension_numbers = #tpu.dot_dimension_numbers<[1], [0], [0], [1], [0, 0, 1, 1], [], []>} : vector<2x16xf32>, vector<16x32xf32>, vector<2x32xf32> -> vector<2x32xf32>
    %583 = arith.addf %579, %582 : vector<2x32xf32>
    %584 = arith.addf %583, %43 : vector<2x32xf32>
    %585 = arith.negf %584 : vector<2x32xf32>
    %586 = math.exp %585 : vector<2x32xf32>
    %cst_201 = arith.constant 1.000000e+00 : f32
    %587 = vector.broadcast %cst_201 : f32 to vector<2x32xf32>
    %588 = arith.addf %587, %586 : vector<2x32xf32>
    %589 = arith.divf %587, %588 : vector<2x32xf32>
    %590 = vector.extract_strided_slice %589 {offsets = [0, 0], sizes = [2, 16], strides = [1, 1]} : vector<2x32xf32> to vector<2x16xf32>
    %591 = vector.extract_strided_slice %589 {offsets = [0, 16], sizes = [2, 16], strides = [1, 1]} : vector<2x32xf32> to vector<2x16xf32>
    %cst_202 = arith.constant dense<0.000000e+00> : vector<2x16xf32>
    %592 = tpu.matmul %532, %25, %cst_202 {dimension_numbers = #tpu.dot_dimension_numbers<[1], [0], [0], [1], [0, 0, 1, 1], [], []>} : vector<2x16xf32>, vector<16x16xf32>, vector<2x16xf32> -> vector<2x16xf32>
    %593 = arith.addf %592, %55 : vector<2x16xf32>
    %594 = arith.mulf %590, %593 : vector<2x16xf32>
    %595 = arith.addf %581, %594 : vector<2x16xf32>
    %596 = math.tanh %595 : vector<2x16xf32>
    %cst_203 = arith.constant 1.000000e+00 : f32
    %597 = vector.broadcast %cst_203 : f32 to vector<2x16xf32>
    %598 = arith.subf %597, %591 : vector<2x16xf32>
    %599 = arith.mulf %598, %596 : vector<2x16xf32>
    %600 = arith.mulf %591, %532 : vector<2x16xf32>
    %601 = arith.addf %599, %600 : vector<2x16xf32>
    %cst_204 = arith.constant dense<0.000000e+00> : vector<2x32xf32>
    %602 = tpu.matmul %601, %31, %cst_204 {dimension_numbers = #tpu.dot_dimension_numbers<[1], [0], [0], [1], [0, 0, 1, 1], [], []>} : vector<2x16xf32>, vector<16x32xf32>, vector<2x32xf32> -> vector<2x32xf32>
    %cst_205 = arith.constant dense<0.000000e+00> : vector<2x16xf32>
    %603 = tpu.matmul %601, %35, %cst_205 {dimension_numbers = #tpu.dot_dimension_numbers<[1], [0], [0], [1], [0, 0, 1, 1], [], []>} : vector<2x16xf32>, vector<16x16xf32>, vector<2x16xf32> -> vector<2x16xf32>
    %604 = arith.addf %603, %67 : vector<2x16xf32>
    %cst_206 = arith.constant dense<0.000000e+00> : vector<2x32xf32>
    %605 = tpu.matmul %555, %21, %cst_206 {dimension_numbers = #tpu.dot_dimension_numbers<[1], [0], [0], [1], [0, 0, 1, 1], [], []>} : vector<2x16xf32>, vector<16x32xf32>, vector<2x32xf32> -> vector<2x32xf32>
    %606 = arith.addf %602, %605 : vector<2x32xf32>
    %607 = arith.addf %606, %47 : vector<2x32xf32>
    %608 = arith.negf %607 : vector<2x32xf32>
    %609 = math.exp %608 : vector<2x32xf32>
    %cst_207 = arith.constant 1.000000e+00 : f32
    %610 = vector.broadcast %cst_207 : f32 to vector<2x32xf32>
    %611 = arith.addf %610, %609 : vector<2x32xf32>
    %612 = arith.divf %610, %611 : vector<2x32xf32>
    %613 = vector.extract_strided_slice %612 {offsets = [0, 0], sizes = [2, 16], strides = [1, 1]} : vector<2x32xf32> to vector<2x16xf32>
    %614 = vector.extract_strided_slice %612 {offsets = [0, 16], sizes = [2, 16], strides = [1, 1]} : vector<2x32xf32> to vector<2x16xf32>
    %cst_208 = arith.constant dense<0.000000e+00> : vector<2x16xf32>
    %615 = tpu.matmul %555, %27, %cst_208 {dimension_numbers = #tpu.dot_dimension_numbers<[1], [0], [0], [1], [0, 0, 1, 1], [], []>} : vector<2x16xf32>, vector<16x16xf32>, vector<2x16xf32> -> vector<2x16xf32>
    %616 = arith.addf %615, %59 : vector<2x16xf32>
    %617 = arith.mulf %613, %616 : vector<2x16xf32>
    %618 = arith.addf %604, %617 : vector<2x16xf32>
    %619 = math.tanh %618 : vector<2x16xf32>
    %cst_209 = arith.constant 1.000000e+00 : f32
    %620 = vector.broadcast %cst_209 : f32 to vector<2x16xf32>
    %621 = arith.subf %620, %614 : vector<2x16xf32>
    %622 = arith.mulf %621, %619 : vector<2x16xf32>
    %623 = arith.mulf %614, %555 : vector<2x16xf32>
    %624 = arith.addf %622, %623 : vector<2x16xf32>
    %c14 = arith.constant 14 : index
    %c0_210 = arith.constant 0 : index
    %625 = vector.load %arg19[%c14, %c0_210] : memref<16x16xf32, #tpu.memory_space<vmem>>, vector<2x16xf32>
    tpu.vector_store %arg19[%c14, %c0_210], %624 {strides = array<i32>} : memref<16x16xf32, #tpu.memory_space<vmem>>, vector<2x16xf32>,
    %c0_211 = arith.constant 0 : index
    %c0_212 = arith.constant 0 : index
    %c0_213 = arith.constant 0 : index
    %626 = vector.load %arg18[%c0_211, %c0_212, %c0_213] : memref<3x2x16xf32, #tpu.memory_space<vmem>>, vector<1x2x16xf32>
    %627 = vector.shape_cast %626 : vector<1x2x16xf32> to vector<2x16xf32>
    %628 = vector.shape_cast %578 : vector<2x16xf32> to vector<1x2x16xf32>
    tpu.vector_store %arg18[%c0_211, %c0_212, %c0_213], %628 {strides = array<i32>} : memref<3x2x16xf32, #tpu.memory_space<vmem>>, vector<1x2x16xf32>,
    %c1_214 = arith.constant 1 : index
    %c0_215 = arith.constant 0 : index
    %c0_216 = arith.constant 0 : index
    %629 = vector.load %arg18[%c1_214, %c0_215, %c0_216] : memref<3x2x16xf32, #tpu.memory_space<vmem>>, vector<1x2x16xf32>
    %630 = vector.shape_cast %629 : vector<1x2x16xf32> to vector<2x16xf32>
    %631 = vector.shape_cast %601 : vector<2x16xf32> to vector<1x2x16xf32>
    tpu.vector_store %arg18[%c1_214, %c0_215, %c0_216], %631 {strides = array<i32>} : memref<3x2x16xf32, #tpu.memory_space<vmem>>, vector<1x2x16xf32>,
    %c2_217 = arith.constant 2 : index
    %c0_218 = arith.constant 0 : index
    %c0_219 = arith.constant 0 : index
    %632 = vector.load %arg18[%c2_217, %c0_218, %c0_219] : memref<3x2x16xf32, #tpu.memory_space<vmem>>, vector<1x2x16xf32>
    %633 = vector.shape_cast %632 : vector<1x2x16xf32> to vector<2x16xf32>
    %634 = vector.shape_cast %624 : vector<2x16xf32> to vector<1x2x16xf32>
    tpu.vector_store %arg18[%c2_217, %c0_218, %c0_219], %634 {strides = array<i32>} : memref<3x2x16xf32, #tpu.memory_space<vmem>>, vector<1x2x16xf32>,
    %c0_220 = arith.constant 0 : index
    %c0_221 = arith.constant 0 : index
    %635 = vector.load %arg19[%c0_220, %c0_221] : memref<16x16xf32, #tpu.memory_space<vmem>>, vector<16x16xf32>
    %c0_222 = arith.constant 0 : index
    %c0_223 = arith.constant 0 : index
    %636 = vector.load %arg14[%c0_222, %c0_223] : memref<16x2xf32, #tpu.memory_space<vmem>>, vector<16x2xf32>
    %cst_224 = arith.constant dense<0.000000e+00> : vector<16x2xf32>
    %637 = tpu.matmul %635, %636, %cst_224 {dimension_numbers = #tpu.dot_dimension_numbers<[1], [0], [0], [1], [0, 0, 1, 1], [], []>} : vector<16x16xf32>, vector<16x2xf32>, vector<16x2xf32> -> vector<16x2xf32>
    %c0_225 = arith.constant 0 : index
    %c0_226 = arith.constant 0 : index
    %638 = vector.load %arg15[%c0_225, %c0_226] : memref<1x2xf32, #tpu.memory_space<vmem>>, vector<1x2xf32>
    %639 = vector.broadcast %638 : vector<1x2xf32> to vector<16x2xf32>
    %640 = arith.addf %637, %639 : vector<16x2xf32>
    %c0_227 = arith.constant 0 : index
    %c0_228 = arith.constant 0 : index
    %641 = vector.load %arg16[%c0_227, %c0_228] : memref<16x2xf32, #tpu.memory_space<vmem>>, vector<16x2xf32>
    tpu.vector_store %arg16[%c0_227, %c0_228], %640 {strides = array<i32>} : memref<16x2xf32, #tpu.memory_space<vmem>>, vector<16x2xf32>,
    %c0_i32_229 = arith.constant 0 : i32
    %642 = arith.cmpi eq, %arg0, %c0_i32_229 : i32
    %643 = arith.extui %642 : i1 to i32
    %c0_i32_230 = arith.constant 0 : i32
    %644 = arith.cmpi ne, %643, %c0_i32_230 : i32
    scf.if %644 {
      %c0_231 = arith.constant 0 : index
      %c0_232 = arith.constant 0 : index
      %c0_233 = arith.constant 0 : index
      %645 = vector.load %arg18[%c0_231, %c0_232, %c0_233] : memref<3x2x16xf32, #tpu.memory_space<vmem>>, vector<3x2x16xf32>
      %c0_234 = arith.constant 0 : index
      %c0_235 = arith.constant 0 : index
      %c0_236 = arith.constant 0 : index
      %646 = vector.load %arg17[%c0_234, %c0_235, %c0_236] : memref<3x2x16xf32, #tpu.memory_space<vmem>>, vector<3x2x16xf32>
      tpu.vector_store %arg17[%c0_234, %c0_235, %c0_236], %645 {strides = array<i32>} : memref<3x2x16xf32, #tpu.memory_space<vmem>>, vector<3x2x16xf32>,
    } else {
    }
    return
  }
  func.func @transform_0(%arg0: i32) -> (i32, i32) {
    %c0_i32 = arith.constant 0 : i32
    %c0_i32_0 = arith.constant 0 : i32
    return %arg0, %c0_i32 : i32, i32
  }
  func.func @transform_1(%arg0: i32) -> (i32, i32, i32) {
    %c0_i32 = arith.constant 0 : i32
    %c0_i32_0 = arith.constant 0 : i32
    %c0_i32_1 = arith.constant 0 : i32
    %c0_i32_2 = arith.constant 0 : i32
    return %c0_i32, %c0_i32_0, %c0_i32_1 : i32, i32, i32
  }
  func.func @transform_2(%arg0: i32) -> (i32, i32) {
    %c0_i32 = arith.constant 0 : i32
    %c0_i32_0 = arith.constant 0 : i32
    %c0_i32_1 = arith.constant 0 : i32
    return %c0_i32, %c0_i32_0 : i32, i32
  }
  func.func @transform_3(%arg0: i32) -> (i32, i32) {
    %c0_i32 = arith.constant 0 : i32
    %c0_i32_0 = arith.constant 0 : i32
    %c0_i32_1 = arith.constant 0 : i32
    return %c0_i32, %c0_i32_0 : i32, i32
  }
  func.func @transform_4(%arg0: i32) -> (i32, i32) {
    %c0_i32 = arith.constant 0 : i32
    %c0_i32_0 = arith.constant 0 : i32
    %c0_i32_1 = arith.constant 0 : i32
    return %c0_i32, %c0_i32_0 : i32, i32
  }
  func.func @transform_5(%arg0: i32) -> (i32, i32) {
    %c0_i32 = arith.constant 0 : i32
    %c0_i32_0 = arith.constant 0 : i32
    %c0_i32_1 = arith.constant 0 : i32
    return %c0_i32, %c0_i32_0 : i32, i32
  }
  func.func @transform_6(%arg0: i32) -> (i32, i32, i32) {
    %c0_i32 = arith.constant 0 : i32
    %c0_i32_0 = arith.constant 0 : i32
    %c0_i32_1 = arith.constant 0 : i32
    %c0_i32_2 = arith.constant 0 : i32
    return %c0_i32, %c0_i32_0, %c0_i32_1 : i32, i32, i32
  }
  func.func @transform_7(%arg0: i32) -> (i32, i32, i32) {
    %c0_i32 = arith.constant 0 : i32
    %c0_i32_0 = arith.constant 0 : i32
    %c0_i32_1 = arith.constant 0 : i32
    %c0_i32_2 = arith.constant 0 : i32
    return %c0_i32, %c0_i32_0, %c0_i32_1 : i32, i32, i32
  }
  func.func @transform_8(%arg0: i32) -> (i32, i32, i32) {
    %c0_i32 = arith.constant 0 : i32
    %c0_i32_0 = arith.constant 0 : i32
    %c0_i32_1 = arith.constant 0 : i32
    %c0_i32_2 = arith.constant 0 : i32
    return %c0_i32, %c0_i32_0, %c0_i32_1 : i32, i32, i32
  }
  func.func @transform_9(%arg0: i32) -> (i32, i32, i32) {
    %c0_i32 = arith.constant 0 : i32
    %c0_i32_0 = arith.constant 0 : i32
    %c0_i32_1 = arith.constant 0 : i32
    %c0_i32_2 = arith.constant 0 : i32
    return %c0_i32, %c0_i32_0, %c0_i32_1 : i32, i32, i32
  }
  func.func @transform_10(%arg0: i32) -> (i32, i32, i32) {
    %c0_i32 = arith.constant 0 : i32
    %c0_i32_0 = arith.constant 0 : i32
    %c0_i32_1 = arith.constant 0 : i32
    %c0_i32_2 = arith.constant 0 : i32
    return %c0_i32, %c0_i32_0, %c0_i32_1 : i32, i32, i32
  }
  func.func @transform_11(%arg0: i32) -> (i32, i32, i32) {
    %c0_i32 = arith.constant 0 : i32
    %c0_i32_0 = arith.constant 0 : i32
    %c0_i32_1 = arith.constant 0 : i32
    %c0_i32_2 = arith.constant 0 : i32
    return %c0_i32, %c0_i32_0, %c0_i32_1 : i32, i32, i32
  }
  func.func @transform_12(%arg0: i32) -> (i32, i32, i32) {
    %c0_i32 = arith.constant 0 : i32
    %c0_i32_0 = arith.constant 0 : i32
    %c0_i32_1 = arith.constant 0 : i32
    %c0_i32_2 = arith.constant 0 : i32
    return %c0_i32, %c0_i32_0, %c0_i32_1 : i32, i32, i32
  }
  func.func @transform_13(%arg0: i32) -> (i32, i32) {
    %c0_i32 = arith.constant 0 : i32
    %c0_i32_0 = arith.constant 0 : i32
    %c0_i32_1 = arith.constant 0 : i32
    return %c0_i32, %c0_i32_0 : i32, i32
  }
  func.func @transform_14(%arg0: i32) -> (i32, i32) {
    %c0_i32 = arith.constant 0 : i32
    %c0_i32_0 = arith.constant 0 : i32
    %c0_i32_1 = arith.constant 0 : i32
    return %c0_i32, %c0_i32_0 : i32, i32
  }
  func.func @transform_15(%arg0: i32) -> (i32, i32) {
    %c0_i32 = arith.constant 0 : i32
    %c0_i32_0 = arith.constant 0 : i32
    return %arg0, %c0_i32 : i32, i32
  }
  func.func @transform_16(%arg0: i32) -> (i32, i32, i32) {
    %c0_i32 = arith.constant 0 : i32
    %c0_i32_0 = arith.constant 0 : i32
    %c0_i32_1 = arith.constant 0 : i32
    %c0_i32_2 = arith.constant 0 : i32
    return %c0_i32, %c0_i32_0, %c0_i32_1 : i32, i32, i32
  }
}

</mosaic_0001>

<llo_original>
// kernel: tpu_custom_call.1
$region0: #{tpu_custom_call.1}
  #allocation0 [shape = 'u32[]', space=smem, size = 0x4, offset = 0x4, fixed_abs, tag = 'smem constant byte address 0x4 - core index']
  #allocation1 [shape = 'u32[144,128]{1,0:T(1,128)}', space=vmem, size = 0x12000, scoped, tag = 'internal scratch']
  #allocation2 [shape = 'f32[3,2,16]{2,1,0:T(2,128)}', space=vmem, size = 0xc00, scoped, tag = 'scratch operand']
  #allocation3 [shape = 'f32[16,16]{1,0:T(8,128)}', space=vmem, size = 0x2000, scoped, tag = 'scratch operand']
  %s0 = inlined_call_operand.vmem [shape: f32[16,4], index: 0, kind: input, shape index: {}]
  %s1 = inlined_call_operand.vmem [shape: f32[3,2,16], index: 1, kind: input, shape index: {}]
  %s2 = inlined_call_operand.vmem [shape: f32[4,16], index: 2, kind: input, shape index: {}]
  %s3 = inlined_call_operand.hbm [shape: f32[1,16], index: 3, kind: input, shape index: {}]
  %s4 = inlined_call_operand.hbm [shape: f32[16,48], index: 4, kind: input, shape index: {}]
  %s5 = inlined_call_operand.hbm [shape: f32[1,48], index: 5, kind: input, shape index: {}]
  %s6 = inlined_call_operand.vmem [shape: f32[3,16,32], index: 6, kind: input, shape index: {}]
  %s7 = inlined_call_operand.hbm [shape: f32[3,16,16], index: 7, kind: input, shape index: {}]
  %s8 = inlined_call_operand.hbm [shape: f32[2,16,32], index: 8, kind: input, shape index: {}]
  %s9 = inlined_call_operand.hbm [shape: f32[2,16,16], index: 9, kind: input, shape index: {}]
  %s10 = inlined_call_operand.vmem [shape: f32[3,1,32], index: 10, kind: input, shape index: {}]
  %s11 = inlined_call_operand.vmem [shape: f32[2,1,16], index: 11, kind: input, shape index: {}]
  %s12 = inlined_call_operand.vmem [shape: f32[3,1,16], index: 12, kind: input, shape index: {}]
  %s13 = inlined_call_operand.vmem [shape: f32[16,2], index: 13, kind: input, shape index: {}]
  %s14 = inlined_call_operand.vmem [shape: f32[1,2], index: 14, kind: input, shape index: {}]
  %s15 = inlined_call_operand.vmem [shape: f32[16,2], index: 15, kind: output, shape index: {0}]
  %s16 = inlined_call_operand.hbm [shape: f32[3,2,16], index: 16, kind: output, shape index: {1}]
  %17 = xla_tuple %s15, %s16
  %s18 = sld [smem:[#allocation0]]
  $region110: #{tpu_custom_call.1} parent=0
    _
  %s20 = ssub.s32 1, %s18
  %s21 = scalar_select 0, %s20, %s18
  $region1: #{tpu_custom_call.1} parent=0
    #allocation4 [shape = 'u8[512]{0}', space=vmem, size = 0x400, scoped, tag = 'input window, operand 3, single buffered']
    #allocation5 [shape = 's32[1]{0}', space=sflag, size = 0x4, scoped, tag = 'scoped memory for tpu_custom_call.1']
    #allocation6 [shape = 's32[1]{0}', space=sflag, size = 0x4, scoped, tag = 'scoped memory for tpu_custom_call.1']
    #allocation7 [shape = 'u8[8192]{0}', space=vmem, size = 0x2000, scoped, tag = 'input window, operand 4, single buffered']
    #allocation8 [shape = 's32[1]{0}', space=sflag, size = 0x4, scoped, tag = 'scoped memory for tpu_custom_call.1']
    #allocation9 [shape = 'u8[512]{0}', space=vmem, size = 0x400, scoped, tag = 'input window, operand 5, single buffered']
    #allocation10 [shape = 'u8[24576]{0}', space=vmem, size = 0x6000, scoped, tag = 'input window, operand 7, single buffered']
    #allocation11 [shape = 's32[1]{0}', space=sflag, size = 0x4, scoped, tag = 'scoped memory for tpu_custom_call.1']
    #allocation12 [shape = 'u8[16384]{0}', space=vmem, size = 0x4000, scoped, tag = 'input window, operand 8, single buffered']
    #allocation13 [shape = 'u8[16384]{0}', space=vmem, size = 0x4000, scoped, tag = 'input window, operand 9, single buffered']
    #allocation14 [shape = 's32[1]{0}', space=sflag, size = 0x4, scoped, tag = 'scoped memory for tpu_custom_call.1']
    #allocation15 [shape = 'u8[3072]{0}', space=vmem, size = 0xc00, scoped, tag = 'output window, operand 1, single buffered']
    %22 = vsyncpa [#allocation5], 0
    %23 = vsyncpa [#allocation8], 0
    %24 = vsyncpa [#allocation11], 0
    %25 = vsyncpa [#allocation14], 0
    %26 = vsyncpa [#allocation6], 0
    // Predicated region
    $region2: #{tpu_custom_call.1} parent=1 // pred_check
      _
    $region3: #{tpu_custom_call.1} parent=1 // pred_check_branch
      %28 = sbr.rel (0) target = $region5
    $region4: #{tpu_custom_call.1} parent=1 // pred_region
      _
    $region5: #{tpu_custom_call.1} parent=1 // pred_fallthru
      _
    // Predicated region
    $region6: #{tpu_custom_call.1} parent=1 // pred_check
      _
    $region7: #{tpu_custom_call.1} parent=1 // pred_check_branch
      %30 = sbr.rel (0) target = $region9
    $region8: #{tpu_custom_call.1} parent=1 // pred_region
      _
    $region9: #{tpu_custom_call.1} parent=1 // pred_fallthru
      _
    // Predicated region
    $region10: #{tpu_custom_call.1} parent=1 // pred_check
      _
    $region11: #{tpu_custom_call.1} parent=1 // pred_check_branch
      %32 = sbr.rel (0) target = $region13
    $region12: #{tpu_custom_call.1} parent=1 // pred_region
      _
    $region13: #{tpu_custom_call.1} parent=1 // pred_fallthru
      _
    // Predicated region
    $region14: #{tpu_custom_call.1} parent=1 // pred_check
      _
    $region15: #{tpu_custom_call.1} parent=1 // pred_check_branch
      %34 = sbr.rel (0) target = $region17
    $region16: #{tpu_custom_call.1} parent=1 // pred_region
      %s36 = ssub.s32 16, 16
      %37 = vsyncadd [#allocation5], %s36
      %s39 = sshll.u32 [#allocation4], 4
      %s40 = int_to_ptr.vmem [resolvable:$true] %s39
      %42 = dma.hbm_to_vmem [thread:$0]  %s3, 16, %s40, [#allocation5]
    $region17: #{tpu_custom_call.1} parent=1 // pred_fallthru
      _
    // Predicated region
    $region18: #{tpu_custom_call.1} parent=1 // pred_check
      _
    $region19: #{tpu_custom_call.1} parent=1 // pred_check_branch
      %44 = sbr.rel (0) target = $region21
    $region20: #{tpu_custom_call.1} parent=1 // pred_region
      %s46 = ssub.s32 256, 256
      %47 = vsyncadd [#allocation8], %s46
      %s48 = sshll.u32 [#allocation7], 4
      %s49 = int_to_ptr.vmem [resolvable:$true] %s48
      %54 = dma.hbm_to_vmem [thread:$0]  %s4, 256, %s49, [#allocation8], 128, 128, 8
    $region21: #{tpu_custom_call.1} parent=1 // pred_fallthru
      _
    // Predicated region
    $region22: #{tpu_custom_call.1} parent=1 // pred_check
      _
    $region23: #{tpu_custom_call.1} parent=1 // pred_check_branch
      %56 = sbr.rel (0) target = $region25
    $region24: #{tpu_custom_call.1} parent=1 // pred_region
      %s58 = ssub.s32 16, 16
      %59 = vsyncadd [#allocation8], %s58
      %s61 = sshll.u32 [#allocation9], 4
      %s62 = int_to_ptr.vmem [resolvable:$true] %s61
      %64 = dma.hbm_to_vmem [thread:$0]  %s5, 16, %s62, [#allocation8]
    $region25: #{tpu_custom_call.1} parent=1 // pred_fallthru
      _
    // Predicated region
    $region26: #{tpu_custom_call.1} parent=1 // pred_check
      _
    $region27: #{tpu_custom_call.1} parent=1 // pred_check_branch
      %66 = sbr.rel (0) target = $region29
    $region28: #{tpu_custom_call.1} parent=1 // pred_region
      _
    $region29: #{tpu_custom_call.1} parent=1 // pred_fallthru
      _
    // Predicated region
    $region30: #{tpu_custom_call.1} parent=1 // pred_check
      _
    $region31: #{tpu_custom_call.1} parent=1 // pred_check_branch
      %68 = sbr.rel (0) target = $region33
    $region32: #{tpu_custom_call.1} parent=1 // pred_region
      %s70 = ssub.s32 768, 768
      %71 = vsyncadd [#allocation11], %s70
      %s72 = sshll.u32 [#allocation10], 4
      %s73 = int_to_ptr.vmem [resolvable:$true] %s72
      %78 = dma.hbm_to_vmem [thread:$0]  %s7, 768, %s73, [#allocation11], 128, 128, 8
    $region33: #{tpu_custom_call.1} parent=1 // pred_fallthru
      _
    // Predicated region
    $region34: #{tpu_custom_call.1} parent=1 // pred_check
      _
    $region35: #{tpu_custom_call.1} parent=1 // pred_check_branch
      %80 = sbr.rel (0) target = $region37
    $region36: #{tpu_custom_call.1} parent=1 // pred_region
      %s82 = ssub.s32 512, 512
      %83 = vsyncadd [#allocation11], %s82
      %s84 = sshll.u32 [#allocation12], 4
      %s85 = int_to_ptr.vmem [resolvable:$true] %s84
      %90 = dma.hbm_to_vmem [thread:$0]  %s8, 512, %s85, [#allocation11], 128, 128, 8
    $region37: #{tpu_custom_call.1} parent=1 // pred_fallthru
      _
    // Predicated region
    $region38: #{tpu_custom_call.1} parent=1 // pred_check
      _
    $region39: #{tpu_custom_call.1} parent=1 // pred_check_branch
      %92 = sbr.rel (0) target = $region41
    $region40: #{tpu_custom_call.1} parent=1 // pred_region
      %s94 = ssub.s32 512, 512
      %95 = vsyncadd [#allocation14], %s94
      %s96 = sshll.u32 [#allocation13], 4
      %s97 = int_to_ptr.vmem [resolvable:$true] %s96
      %102 = dma.hbm_to_vmem [thread:$0]  %s9, 512, %s97, [#allocation14], 128, 128, 8
    $region41: #{tpu_custom_call.1} parent=1 // pred_fallthru
      _
    // Predicated region
    $region42: #{tpu_custom_call.1} parent=1 // pred_check
      _
    $region43: #{tpu_custom_call.1} parent=1 // pred_check_branch
      %104 = sbr.rel (0) target = $region45
    $region44: #{tpu_custom_call.1} parent=1 // pred_region
      _
    $region45: #{tpu_custom_call.1} parent=1 // pred_fallthru
      _
    // Predicated region
    $region46: #{tpu_custom_call.1} parent=1 // pred_check
      _
    $region47: #{tpu_custom_call.1} parent=1 // pred_check_branch
      %106 = sbr.rel (0) target = $region49
    $region48: #{tpu_custom_call.1} parent=1 // pred_region
      _
    $region49: #{tpu_custom_call.1} parent=1 // pred_fallthru
      _
    // Predicated region
    $region50: #{tpu_custom_call.1} parent=1 // pred_check
      _
    $region51: #{tpu_custom_call.1} parent=1 // pred_check_branch
      %108 = sbr.rel (0) target = $region53
    $region52: #{tpu_custom_call.1} parent=1 // pred_region
      _
    $region53: #{tpu_custom_call.1} parent=1 // pred_fallthru
      _
    // Predicated region
    $region54: #{tpu_custom_call.1} parent=1 // pred_check
      _
    $region55: #{tpu_custom_call.1} parent=1 // pred_check_branch
      %110 = sbr.rel (0) target = $region57
    $region56: #{tpu_custom_call.1} parent=1 // pred_region
      _
    $region57: #{tpu_custom_call.1} parent=1 // pred_fallthru
      _
    // Predicated region
    $region58: #{tpu_custom_call.1} parent=1 // pred_check
      _
    $region59: #{tpu_custom_call.1} parent=1 // pred_check_branch
      %112 = sbr.rel (0) target = $region61
    $region60: #{tpu_custom_call.1} parent=1 // pred_region
      _
    $region61: #{tpu_custom_call.1} parent=1 // pred_fallthru
      _
    // Predicated region
    $region62: #{tpu_custom_call.1} parent=1 // pred_check
      _
    $region63: #{tpu_custom_call.1} parent=1 // pred_check_branch
      %114 = sbr.rel (0) target = $region65
    $region64: #{tpu_custom_call.1} parent=1 // pred_region
      %115 = dma.done [#allocation5], 16
    $region65: #{tpu_custom_call.1} parent=1 // pred_fallthru
      _
    // Predicated region
    $region66: #{tpu_custom_call.1} parent=1 // pred_check
      _
    $region67: #{tpu_custom_call.1} parent=1 // pred_check_branch
      %117 = sbr.rel (0) target = $region69
    $region68: #{tpu_custom_call.1} parent=1 // pred_region
      %118 = dma.done [#allocation8], 256
    $region69: #{tpu_custom_call.1} parent=1 // pred_fallthru
      _
    // Predicated region
    $region70: #{tpu_custom_call.1} parent=1 // pred_check
      _
    $region71: #{tpu_custom_call.1} parent=1 // pred_check_branch
      %120 = sbr.rel (0) target = $region73
    $region72: #{tpu_custom_call.1} parent=1 // pred_region
      %121 = dma.done [#allocation8], 16
    $region73: #{tpu_custom_call.1} parent=1 // pred_fallthru
      _
    // Predicated region
    $region74: #{tpu_custom_call.1} parent=1 // pred_check
      _
    $region75: #{tpu_custom_call.1} parent=1 // pred_check_branch
      %123 = sbr.rel (0) target = $region77
    $region76: #{tpu_custom_call.1} parent=1 // pred_region
      %124 = dma.done [#allocation11], 768
    $region77: #{tpu_custom_call.1} parent=1 // pred_fallthru
      _
    // Predicated region
    $region78: #{tpu_custom_call.1} parent=1 // pred_check
      _
    $region79: #{tpu_custom_call.1} parent=1 // pred_check_branch
      %126 = sbr.rel (0) target = $region81
    $region80: #{tpu_custom_call.1} parent=1 // pred_region
      %127 = dma.done [#allocation11], 512
    $region81: #{tpu_custom_call.1} parent=1 // pred_fallthru
      _
    // Predicated region
    $region82: #{tpu_custom_call.1} parent=1 // pred_check
      _
    $region83: #{tpu_custom_call.1} parent=1 // pred_check_branch
      %129 = sbr.rel (0) target = $region85
    $region84: #{tpu_custom_call.1} parent=1 // pred_region
      %130 = dma.done [#allocation14], 512
    $region85: #{tpu_custom_call.1} parent=1 // pred_fallthru
      _
    %p131 = scmp.eq.s32.totalorder 0, 0
    // Predicated region
    $region86: #{tpu_custom_call.1} parent=1 // pred_check
      %p132 = pneg %p131
    $region87: #{tpu_custom_call.1} parent=1 // pred_check_branch
      %134 = sbr.rel (%p132) target = $region89
    $region88: #{tpu_custom_call.1} parent=1 // pred_region
      %v135 = vld [vmem:[%s1] sm:$0x3]
      %v136 = vld [vmem:[%s1 + $0x2] sm:$0x3]
      %v137 = vld [vmem:[%s1 + $0x4] sm:$0x3]
      %vm138 = vcmask 123904
      %139 = vst.msk [vmem:[#allocation2] sm:$0x3] %vm138, %v135
      %140 = vst.msk [vmem:[#allocation2 + $0x2] sm:$0x3] %vm138, %v136
      %141 = vst.msk [vmem:[#allocation2 + $0x4] sm:$0x3] %vm138, %v137
    $region89: #{tpu_custom_call.1} parent=1 // pred_fallthru
      _
    %v142 = vld [vmem:[%s0] sm:$0xff]
    %v143 = vld [vmem:[%s0 + $0x8] sm:$0xff]
    %v144 = vld [vmem:[%s2] sm:$0xf]
    %v145 = vld [vmem:[#allocation4] sm:$0x1]
    %v147 = vlaneseq
    %v148 = vshrl.u32 %v147, 7
    %v149 = vsub.s32 0, %v148
    %v150 = vrot.slane %v145, %v149
    %vm152 = vcmask 31744
    %v154 = vsel %vm152, %v142, 0
    %v157 = vsel %vm152, %v143, 0
    %vm159 = vcmask 1043456
    %v161 = vsel %vm159, %v144, 0
    %163 = vmatprep.subr.mxu0 0.0
    %164 = vmatpush1.msra.mxu0 %v161
    %165 = vmatprep.subr.mxu0 0.0
    %166 = vmatpush1.msra.mxu0 0.0
    %167 = vmatprep.subr.mxu0 0.0
    %168 = vmatpush1.msra.mxu0 0.0
    %169 = vmatprep.subr.mxu0 0.0
    %170 = vmatpush1.msra.mxu0 0.0
    %171 = vmatprep.subr.mxu0 0.0
    %172 = vmatpush1.msra.mxu0 0.0
    %173 = vmatprep.subr.mxu0 0.0
    %174 = vmatpush1.msra.mxu0 0.0
    %175 = vmatprep.subr.mxu0 0.0
    %176 = vmatpush1.msra.mxu0 0.0
    %177 = vmatprep.subr.mxu0 0.0
    %178 = vmatpush1.msra.mxu0 0.0
    %179 = vmatprep.subr.mxu0 0.0
    %180 = vmatpush1.msra.mxu0 0.0
    %181 = vmatprep.subr.mxu0 0.0
    %182 = vmatpush1.msra.mxu0 0.0
    %183 = vmatprep.subr.mxu0 0.0
    %184 = vmatpush1.msra.mxu0 0.0
    %185 = vmatprep.subr.mxu0 0.0
    %186 = vmatpush1.msra.mxu0 0.0
    %187 = vmatprep.subr.mxu0 0.0
    %188 = vmatpush1.msra.mxu0 0.0
    %189 = vmatprep.subr.mxu0 0.0
    %190 = vmatpush1.msra.mxu0 0.0
    %191 = vmatprep.subr.mxu0 0.0
    %192 = vmatpush1.msra.mxu0 0.0
    %193 = vmatprep.subr.mxu0 0.0
    %194 = vmatpush1.msra.mxu0 0.0
    %195 = vmatprep.subr.mxu0 0.0
    %196 = vmatpush1.msra.mxu0 0.0
    %197 = vmatprep.subr.mxu0 0.0
    %198 = vmatpush1.msra.mxu0 0.0
    %199 = vmatprep.subr.mxu0 0.0
    %200 = vmatpush1.msra.mxu0 0.0
    %201 = vmatprep.subr.mxu0 0.0
    %202 = vmatpush1.msra.mxu0 0.0
    %203 = vmatprep.subr.mxu0 0.0
    %204 = vmatpush1.msra.mxu0 0.0
    %205 = vmatprep.subr.mxu0 0.0
    %206 = vmatpush1.msra.mxu0 0.0
    %207 = vmatprep.subr.mxu0 0.0
    %208 = vmatpush1.msra.mxu0 0.0
    %209 = vmatprep.subr.mxu0 0.0
    %210 = vmatpush1.msra.mxu0 0.0
    %211 = vmatprep.subr.mxu0 0.0
    %212 = vmatpush1.msra.mxu0 0.0
    %213 = vmatprep.subr.mxu0 0.0
    %214 = vmatpush1.msra.mxu0 0.0
    %215 = vmatprep.subr.mxu0 0.0
    %216 = vmatpush1.msra.mxu0 0.0
    %217 = vmatprep.subr.mxu0 0.0
    %218 = vmatpush1.msra.mxu0 0.0
    %219 = vmatprep.subr.mxu0 0.0
    %220 = vmatpush1.msra.mxu0 0.0
    %221 = vmatprep.subr.mxu0 0.0
    %222 = vmatpush1.msra.mxu0 0.0
    %223 = vmatprep.subr.mxu0 0.0
    %224 = vmatpush1.msra.mxu0 0.0
    %225 = vmatprep.subr.mxu0 0.0
    %226 = vmatpush1.msra.mxu0 0.0
    %227 = vmatprep.mubr.f32.mxu0 0.0
    %228 = vmatmul.mubr.f32.gmra.mrb[0].mxu0 %v154
    %v229 = vpop.f32.mrb[0].mxu0
    %v230 = vadd.f32 %v150, %v229
    %v231 = vpop.f32.mrb[0].mxu0
    %232 = vmatprep.mubr.f32.mxu0 0.0
    %233 = vmatmul.mubr.f32.gmra.mrb[0].mxu0 %v157
    %v234 = vpop.f32.mrb[0].mxu0
    %v235 = vadd.f32 %v150, %v234
    %v236 = vpop.f32.mrb[0].mxu0
    %237 = vdwg.mxu0
    %v238 = vmax.f32 %v230, 0.0
    %v239 = vmax.f32 %v235, 0.0
    %v240 = vld [vmem:[#allocation7] sm:$0xff]
    %v241 = vld [vmem:[#allocation7 + $0x8] sm:$0xff]
    %v242 = vld [vmem:[#allocation9] sm:$0x1]
    %v244 = vlaneseq
    %v245 = vshrl.u32 %v244, 7
    %v246 = vsub.s32 0, %v245
    %v247 = vrot.slane %v242, %v246
    %vm249 = vcmask 130048
    %v251 = vsel %vm249, %v238, 0
    %v254 = vsel %vm249, %v239, 0
    %256 = vmatprep.subr.mxu0 0.0
    %257 = vmatpush1.msra.mxu0 %v240
    %258 = vmatprep.subr.mxu0 0.0
    %259 = vmatpush1.msra.mxu0 %v241
    %260 = vmatprep.subr.mxu0 0.0
    %261 = vmatpush1.msra.mxu0 0.0
    %262 = vmatprep.subr.mxu0 0.0
    %263 = vmatpush1.msra.mxu0 0.0
    %264 = vmatprep.subr.mxu0 0.0
    %265 = vmatpush1.msra.mxu0 0.0
    %266 = vmatprep.subr.mxu0 0.0
    %267 = vmatpush1.msra.mxu0 0.0
    %268 = vmatprep.subr.mxu0 0.0
    %269 = vmatpush1.msra.mxu0 0.0
    %270 = vmatprep.subr.mxu0 0.0
    %271 = vmatpush1.msra.mxu0 0.0
    %272 = vmatprep.subr.mxu0 0.0
    %273 = vmatpush1.msra.mxu0 0.0
    %274 = vmatprep.subr.mxu0 0.0
    %275 = vmatpush1.msra.mxu0 0.0
    %276 = vmatprep.subr.mxu0 0.0
    %277 = vmatpush1.msra.mxu0 0.0
    %278 = vmatprep.subr.mxu0 0.0
    %279 = vmatpush1.msra.mxu0 0.0
    %280 = vmatprep.subr.mxu0 0.0
    %281 = vmatpush1.msra.mxu0 0.0
    %282 = vmatprep.subr.mxu0 0.0
    %283 = vmatpush1.msra.mxu0 0.0
    %284 = vmatprep.subr.mxu0 0.0
    %285 = vmatpush1.msra.mxu0 0.0
    %286 = vmatprep.subr.mxu0 0.0
    %287 = vmatpush1.msra.mxu0 0.0
    %288 = vmatprep.subr.mxu0 0.0
    %289 = vmatpush1.msra.mxu0 0.0
    %290 = vmatprep.subr.mxu0 0.0
    %291 = vmatpush1.msra.mxu0 0.0
    %292 = vmatprep.subr.mxu0 0.0
    %293 = vmatpush1.msra.mxu0 0.0
    %294 = vmatprep.subr.mxu0 0.0
    %295 = vmatpush1.msra.mxu0 0.0
    %296 = vmatprep.subr.mxu0 0.0
    %297 = vmatpush1.msra.mxu0 0.0
    %298 = vmatprep.subr.mxu0 0.0
    %299 = vmatpush1.msra.mxu0 0.0
    %300 = vmatprep.subr.mxu0 0.0
    %301 = vmatpush1.msra.mxu0 0.0
    %302 = vmatprep.subr.mxu0 0.0
    %303 = vmatpush1.msra.mxu0 0.0
    %304 = vmatprep.subr.mxu0 0.0
    %305 = vmatpush1.msra.mxu0 0.0
    %306 = vmatprep.subr.mxu0 0.0
    %307 = vmatpush1.msra.mxu0 0.0
    %308 = vmatprep.subr.mxu0 0.0
    %309 = vmatpush1.msra.mxu0 0.0
    %310 = vmatprep.subr.mxu0 0.0
    %311 = vmatpush1.msra.mxu0 0.0
    %312 = vmatprep.subr.mxu0 0.0
    %313 = vmatpush1.msra.mxu0 0.0
    %314 = vmatprep.subr.mxu0 0.0
    %315 = vmatpush1.msra.mxu0 0.0
    %316 = vmatprep.subr.mxu0 0.0
    %317 = vmatpush1.msra.mxu0 0.0
    %318 = vmatprep.subr.mxu0 0.0
    %319 = vmatpush1.msra.mxu0 0.0
    %320 = vmatprep.mubr.f32.mxu0 0.0
    %321 = vmatmul.mubr.f32.gmra.mrb[0].mxu0 %v251
    %v322 = vpop.f32.mrb[0].mxu0
    %v323 = vadd.f32 %v247, %v322
    %v324 = vpop.f32.mrb[0].mxu0
    %325 = vmatprep.mubr.f32.mxu0 0.0
    %326 = vmatmul.mubr.f32.gmra.mrb[0].mxu0 %v254
    %v327 = vpop.f32.mrb[0].mxu0
    %v328 = vadd.f32 %v247, %v327
    %v329 = vpop.f32.mrb[0].mxu0
    %330 = vdwg.mxu0
    %v331 = vld [vmem:[%s6] sm:$0xff]
    %v332 = vld [vmem:[%s6 + $0x8] sm:$0xff]
    %s333 = scalar_lea.vmem %s6, 16
    %v334 = vld [vmem:[%s333] sm:$0xff]
    %v335 = vld [vmem:[%s333 + $0x8] sm:$0xff]
    %s336 = scalar_lea.vmem %s6, 32
    %v337 = vld [vmem:[%s336] sm:$0xff]
    %v338 = vld [vmem:[%s336 + $0x8] sm:$0xff]
    %v339 = vld [vmem:[#allocation10] sm:$0xff]
    %v340 = vld [vmem:[#allocation10 + $0x8] sm:$0xff]
    %s341 = scalar_lea.vmem [#allocation10], 16
    %v342 = vld [vmem:[%s341] sm:$0xff]
    %v343 = vld [vmem:[%s341 + $0x8] sm:$0xff]
    %s344 = scalar_lea.vmem [#allocation10], 32
    %v345 = vld [vmem:[%s344] sm:$0xff]
    %v346 = vld [vmem:[%s344 + $0x8] sm:$0xff]
    %v347 = vld [vmem:[#allocation12] sm:$0xff]
    %v348 = vld [vmem:[#allocation12 + $0x8] sm:$0xff]
    %s349 = scalar_lea.vmem [#allocation12], 16
    %v350 = vld [vmem:[%s349] sm:$0xff]
    %v351 = vld [vmem:[%s349 + $0x8] sm:$0xff]
    %v352 = vld [vmem:[#allocation13] sm:$0xff]
    %v353 = vld [vmem:[#allocation13 + $0x8] sm:$0xff]
    %s354 = scalar_lea.vmem [#allocation13], 16
    %v355 = vld [vmem:[%s354] sm:$0xff]
    %v356 = vld [vmem:[%s354 + $0x8] sm:$0xff]
    %v357 = vld [vmem:[%s10] sm:$0x1]
    %v359 = vlaneseq
    %v360 = vshrl.u32 %v359, 7
    %v361 = vsub.s32 0, %v360
    %v362 = vrot.slane %v357, %v361
    %s364 = scalar_lea.vmem %s10, 1
    %v365 = vld [vmem:[%s364] sm:$0x1]
    %v367 = vlaneseq
    %v368 = vshrl.u32 %v367, 7
    %v369 = vsub.s32 0, %v368
    %v370 = vrot.slane %v365, %v369
    %s372 = scalar_lea.vmem %s10, 2
    %v373 = vld [vmem:[%s372] sm:$0x1]
    %v375 = vlaneseq
    %v376 = vshrl.u32 %v375, 7
    %v377 = vsub.s32 0, %v376
    %v378 = vrot.slane %v373, %v377
    %v380 = vld [vmem:[%s12] sm:$0x1]
    %v382 = vlaneseq
    %v383 = vshrl.u32 %v382, 7
    %v384 = vsub.s32 0, %v383
    %v385 = vrot.slane %v380, %v384
    %s387 = scalar_lea.vmem %s12, 1
    %v388 = vld [vmem:[%s387] sm:$0x1]
    %v390 = vlaneseq
    %v391 = vshrl.u32 %v390, 7
    %v392 = vsub.s32 0, %v391
    %v393 = vrot.slane %v388, %v392
    %s395 = scalar_lea.vmem %s12, 2
    %v396 = vld [vmem:[%s395] sm:$0x1]
    %v398 = vlaneseq
    %v399 = vshrl.u32 %v398, 7
    %v400 = vsub.s32 0, %v399
    %v401 = vrot.slane %v396, %v400
    %v403 = vld [vmem:[%s11] sm:$0x1]
    %v405 = vlaneseq
    %v406 = vshrl.u32 %v405, 7
    %v407 = vsub.s32 0, %v406
    %v408 = vrot.slane %v403, %v407
    %s410 = scalar_lea.vmem %s11, 1
    %v411 = vld [vmem:[%s410] sm:$0x1]
    %v413 = vlaneseq
    %v414 = vshrl.u32 %v413, 7
    %v415 = vsub.s32 0, %v414
    %v416 = vrot.slane %v411, %v415
    %v418 = vld [vmem:[#allocation2] sm:$0x3]
    %s419 = scalar_lea.vmem [#allocation2], 2
    %v420 = vld [vmem:[%s419] sm:$0x3]
    %s421 = scalar_lea.vmem [#allocation2], 4
    %v422 = vld [vmem:[%s421] sm:$0x3]
    %v424 = vsel %vm249, %v418, 0
    %426 = vmatprep.subr.mxu0 0.0
    %427 = vmatpush1.msra.mxu0 %v331
    %428 = vmatprep.subr.mxu0 0.0
    %429 = vmatpush1.msra.mxu0 %v332
    %430 = vmatprep.subr.mxu0 0.0
    %431 = vmatpush1.msra.mxu0 0.0
    %432 = vmatprep.subr.mxu0 0.0
    %433 = vmatpush1.msra.mxu0 0.0
    %434 = vmatprep.subr.mxu0 0.0
    %435 = vmatpush1.msra.mxu0 0.0
    %436 = vmatprep.subr.mxu0 0.0
    %437 = vmatpush1.msra.mxu0 0.0
    %438 = vmatprep.subr.mxu0 0.0
    %439 = vmatpush1.msra.mxu0 0.0
    %440 = vmatprep.subr.mxu0 0.0
    %441 = vmatpush1.msra.mxu0 0.0
    %442 = vmatprep.subr.mxu0 0.0
    %443 = vmatpush1.msra.mxu0 0.0
    %444 = vmatprep.subr.mxu0 0.0
    %445 = vmatpush1.msra.mxu0 0.0
    %446 = vmatprep.subr.mxu0 0.0
    %447 = vmatpush1.msra.mxu0 0.0
    %448 = vmatprep.subr.mxu0 0.0
    %449 = vmatpush1.msra.mxu0 0.0
    %450 = vmatprep.subr.mxu0 0.0
    %451 = vmatpush1.msra.mxu0 0.0
    %452 = vmatprep.subr.mxu0 0.0
    %453 = vmatpush1.msra.mxu0 0.0
    %454 = vmatprep.subr.mxu0 0.0
    %455 = vmatpush1.msra.mxu0 0.0
    %456 = vmatprep.subr.mxu0 0.0
    %457 = vmatpush1.msra.mxu0 0.0
    %458 = vmatprep.subr.mxu0 0.0
    %459 = vmatpush1.msra.mxu0 0.0
    %460 = vmatprep.subr.mxu0 0.0
    %461 = vmatpush1.msra.mxu0 0.0
    %462 = vmatprep.subr.mxu0 0.0
    %463 = vmatpush1.msra.mxu0 0.0
    %464 = vmatprep.subr.mxu0 0.0
    %465 = vmatpush1.msra.mxu0 0.0
    %466 = vmatprep.subr.mxu0 0.0
    %467 = vmatpush1.msra.mxu0 0.0
    %468 = vmatprep.subr.mxu0 0.0
    %469 = vmatpush1.msra.mxu0 0.0
    %470 = vmatprep.subr.mxu0 0.0
    %471 = vmatpush1.msra.mxu0 0.0
    %472 = vmatprep.subr.mxu0 0.0
    %473 = vmatpush1.msra.mxu0 0.0
    %474 = vmatprep.subr.mxu0 0.0
    %475 = vmatpush1.msra.mxu0 0.0
    %476 = vmatprep.subr.mxu0 0.0
    %477 = vmatpush1.msra.mxu0 0.0
    %478 = vmatprep.subr.mxu0 0.0
    %479 = vmatpush1.msra.mxu0 0.0
    %480 = vmatprep.subr.mxu0 0.0
    %481 = vmatpush1.msra.mxu0 0.0
    %482 = vmatprep.subr.mxu0 0.0
    %483 = vmatpush1.msra.mxu0 0.0
    %484 = vmatprep.subr.mxu0 0.0
    %485 = vmatpush1.msra.mxu0 0.0
    %486 = vmatprep.subr.mxu0 0.0
    %487 = vmatpush1.msra.mxu0 0.0
    %488 = vmatprep.subr.mxu0 0.0
    %489 = vmatpush1.msra.mxu0 0.0
    %490 = vmatprep.mubr.f32.mxu0 0.0
    %491 = vmatmul.mubr.f32.gmra.mrb[0].mxu0 %v424
    %v492 = vpop.f32.mrb[0].mxu0
    %v493 = vadd.f32 0.0, %v492
    %v494 = vpop.f32.mrb[0].mxu0
    %495 = vdwg.mxu0
    %v496 = vadd.f32 %v323, %v493
    %v497 = vadd.f32 %v496, %v362
    %v498 = vxor.u32 %v497, 2147483648
    %v499 = vmul.f32 %v498, 1.442695
    %v500 = vpow.pop %v499
    %v501 = vadd.f32 %v500, 1.0
    %v502 = vrcp.pop %v501
    %v503 = vmul.f32 1.0, %v502
    %504 = vmatprep.subr.mxu0 0.0
    %505 = vmatpush1.msra.mxu0 %v339
    %506 = vmatprep.subr.mxu0 0.0
    %507 = vmatpush1.msra.mxu0 %v340
    %508 = vmatprep.subr.mxu0 0.0
    %509 = vmatpush1.msra.mxu0 0.0
    %510 = vmatprep.subr.mxu0 0.0
    %511 = vmatpush1.msra.mxu0 0.0
    %512 = vmatprep.subr.mxu0 0.0
    %513 = vmatpush1.msra.mxu0 0.0
    %514 = vmatprep.subr.mxu0 0.0
    %515 = vmatpush1.msra.mxu0 0.0
    %516 = vmatprep.subr.mxu0 0.0
    %517 = vmatpush1.msra.mxu0 0.0
    %518 = vmatprep.subr.mxu0 0.0
    %519 = vmatpush1.msra.mxu0 0.0
    %520 = vmatprep.subr.mxu0 0.0
    %521 = vmatpush1.msra.mxu0 0.0
    %522 = vmatprep.subr.mxu0 0.0
    %523 = vmatpush1.msra.mxu0 0.0
    %524 = vmatprep.subr.mxu0 0.0
    %525 = vmatpush1.msra.mxu0 0.0
    %526 = vmatprep.subr.mxu0 0.0
    %527 = vmatpush1.msra.mxu0 0.0
    %528 = vmatprep.subr.mxu0 0.0
    %529 = vmatpush1.msra.mxu0 0.0
    %530 = vmatprep.subr.mxu0 0.0
    %531 = vmatpush1.msra.mxu0 0.0
    %532 = vmatprep.subr.mxu0 0.0
    %533 = vmatpush1.msra.mxu0 0.0
    %534 = vmatprep.subr.mxu0 0.0
    %535 = vmatpush1.msra.mxu0 0.0
    %536 = vmatprep.subr.mxu0 0.0
    %537 = vmatpush1.msra.mxu0 0.0
    %538 = vmatprep.subr.mxu0 0.0
    %539 = vmatpush1.msra.mxu0 0.0
    %540 = vmatprep.subr.mxu0 0.0
    %541 = vmatpush1.msra.mxu0 0.0
    %542 = vmatprep.subr.mxu0 0.0
    %543 = vmatpush1.msra.mxu0 0.0
    %544 = vmatprep.subr.mxu0 0.0
    %545 = vmatpush1.msra.mxu0 0.0
    %546 = vmatprep.subr.mxu0 0.0
    %547 = vmatpush1.msra.mxu0 0.0
    %548 = vmatprep.subr.mxu0 0.0
    %549 = vmatpush1.msra.mxu0 0.0
    %550 = vmatprep.subr.mxu0 0.0
    %551 = vmatpush1.msra.mxu0 0.0
    %552 = vmatprep.subr.mxu0 0.0
    %553 = vmatpush1.msra.mxu0 0.0
    %554 = vmatprep.subr.mxu0 0.0
    %555 = vmatpush1.msra.mxu0 0.0
    %556 = vmatprep.subr.mxu0 0.0
    %557 = vmatpush1.msra.mxu0 0.0
    %558 = vmatprep.subr.mxu0 0.0
    %559 = vmatpush1.msra.mxu0 0.0
    %560 = vmatprep.subr.mxu0 0.0
    %561 = vmatpush1.msra.mxu0 0.0
    %562 = vmatprep.subr.mxu0 0.0
    %563 = vmatpush1.msra.mxu0 0.0
    %564 = vmatprep.subr.mxu0 0.0
    %565 = vmatpush1.msra.mxu0 0.0
    %566 = vmatprep.subr.mxu0 0.0
    %567 = vmatpush1.msra.mxu0 0.0
    %568 = vmatprep.mubr.f32.mxu0 0.0
    %569 = vmatmul.mubr.f32.gmra.mrb[0].mxu0 %v424
    %v570 = vpop.f32.mrb[0].mxu0
    %v571 = vadd.f32 %v385, %v570
    %v572 = vpop.f32.mrb[0].mxu0
    %573 = vdwg.mxu0
    %v574 = vmul.f32 %v503, %v571
    %576 = vrot.lane.b32.xlu0 %v574, 32
    %v577 = vpop.permute.xlu0 %576
    %v579 = vadd.f32 %v323, %v577
    %v580 = vtanh.pop %v579
    %v581 = vsub.f32 1.0, %v503
    %583 = vrot.lane.b32.xlu0 %v580, 112
    %v584 = vpop.permute.xlu0 %583
    %v586 = vmul.f32 %v581, %v584
    %587 = vrot.lane.b32.xlu0 %v418, 16
    %v588 = vpop.permute.xlu0 %587
    %v590 = vmul.f32 %v503, %v588
    %v591 = vadd.f32 %v586, %v590
    %593 = vrot.lane.b32.xlu0 %v591, 112
    %v594 = vpop.permute.xlu0 %593
    %v595 = vsel %vm249, %v594, 0
    %597 = vmatprep.subr.mxu0 0.0
    %598 = vmatpush1.msra.mxu0 %v352
    %599 = vmatprep.subr.mxu0 0.0
    %600 = vmatpush1.msra.mxu0 %v353
    %601 = vmatprep.subr.mxu0 0.0
    %602 = vmatpush1.msra.mxu0 0.0
    %603 = vmatprep.subr.mxu0 0.0
    %604 = vmatpush1.msra.mxu0 0.0
    %605 = vmatprep.subr.mxu0 0.0
    %606 = vmatpush1.msra.mxu0 0.0
    %607 = vmatprep.subr.mxu0 0.0
    %608 = vmatpush1.msra.mxu0 0.0
    %609 = vmatprep.subr.mxu0 0.0
    %610 = vmatpush1.msra.mxu0 0.0
    %611 = vmatprep.subr.mxu0 0.0
    %612 = vmatpush1.msra.mxu0 0.0
    %613 = vmatprep.subr.mxu0 0.0
    %614 = vmatpush1.msra.mxu0 0.0
    %615 = vmatprep.subr.mxu0 0.0
    %616 = vmatpush1.msra.mxu0 0.0
    %617 = vmatprep.subr.mxu0 0.0
    %618 = vmatpush1.msra.mxu0 0.0
    %619 = vmatprep.subr.mxu0 0.0
    %620 = vmatpush1.msra.mxu0 0.0
    %621 = vmatprep.subr.mxu0 0.0
    %622 = vmatpush1.msra.mxu0 0.0
    %623 = vmatprep.subr.mxu0 0.0
    %624 = vmatpush1.msra.mxu0 0.0
    %625 = vmatprep.subr.mxu0 0.0
    %626 = vmatpush1.msra.mxu0 0.0
    %627 = vmatprep.subr.mxu0 0.0
    %628 = vmatpush1.msra.mxu0 0.0
    %629 = vmatprep.subr.mxu0 0.0
    %630 = vmatpush1.msra.mxu0 0.0
    %631 = vmatprep.subr.mxu0 0.0
    %632 = vmatpush1.msra.mxu0 0.0
    %633 = vmatprep.subr.mxu0 0.0
    %634 = vmatpush1.msra.mxu0 0.0
    %635 = vmatprep.subr.mxu0 0.0
    %636 = vmatpush1.msra.mxu0 0.0
    %637 = vmatprep.subr.mxu0 0.0
    %638 = vmatpush1.msra.mxu0 0.0
    %639 = vmatprep.subr.mxu0 0.0
    %640 = vmatpush1.msra.mxu0 0.0
    %641 = vmatprep.subr.mxu0 0.0
    %642 = vmatpush1.msra.mxu0 0.0
    %643 = vmatprep.subr.mxu0 0.0
    %644 = vmatpush1.msra.mxu0 0.0
    %645 = vmatprep.subr.mxu0 0.0
    %646 = vmatpush1.msra.mxu0 0.0
    %647 = vmatprep.subr.mxu0 0.0
    %648 = vmatpush1.msra.mxu0 0.0
    %649 = vmatprep.subr.mxu0 0.0
    %650 = vmatpush1.msra.mxu0 0.0
    %651 = vmatprep.subr.mxu0 0.0
    %652 = vmatpush1.msra.mxu0 0.0
    %653 = vmatprep.subr.mxu0 0.0
    %654 = vmatpush1.msra.mxu0 0.0
    %655 = vmatprep.subr.mxu0 0.0
    %656 = vmatpush1.msra.mxu0 0.0
    %657 = vmatprep.subr.mxu0 0.0
    %658 = vmatpush1.msra.mxu0 0.0
    %659 = vmatprep.subr.mxu0 0.0
    %660 = vmatpush1.msra.mxu0 0.0
    %661 = vmatprep.mubr.f32.mxu0 0.0
    %662 = vmatmul.mubr.f32.gmra.mrb[0].mxu0 %v595
    %v663 = vpop.f32.mrb[0].mxu0
    %v664 = vadd.f32 %v408, %v663
    %v665 = vpop.f32.mrb[0].mxu0
    %666 = vdwg.mxu0
    %v668 = vsel %vm249, %v420, 0
    %670 = vmatprep.subr.mxu0 0.0
    %671 = vmatpush1.msra.mxu0 %v334
    %672 = vmatprep.subr.mxu0 0.0
    %673 = vmatpush1.msra.mxu0 %v335
    %674 = vmatprep.subr.mxu0 0.0
    %675 = vmatpush1.msra.mxu0 0.0
    %676 = vmatprep.subr.mxu0 0.0
    %677 = vmatpush1.msra.mxu0 0.0
    %678 = vmatprep.subr.mxu0 0.0
    %679 = vmatpush1.msra.mxu0 0.0
    %680 = vmatprep.subr.mxu0 0.0
    %681 = vmatpush1.msra.mxu0 0.0
    %682 = vmatprep.subr.mxu0 0.0
    %683 = vmatpush1.msra.mxu0 0.0
    %684 = vmatprep.subr.mxu0 0.0
    %685 = vmatpush1.msra.mxu0 0.0
    %686 = vmatprep.subr.mxu0 0.0
    %687 = vmatpush1.msra.mxu0 0.0
    %688 = vmatprep.subr.mxu0 0.0
    %689 = vmatpush1.msra.mxu0 0.0
    %690 = vmatprep.subr.mxu0 0.0
    %691 = vmatpush1.msra.mxu0 0.0
    %692 = vmatprep.subr.mxu0 0.0
    %693 = vmatpush1.msra.mxu0 0.0
    %694 = vmatprep.subr.mxu0 0.0
    %695 = vmatpush1.msra.mxu0 0.0
    %696 = vmatprep.subr.mxu0 0.0
    %697 = vmatpush1.msra.mxu0 0.0
    %698 = vmatprep.subr.mxu0 0.0
    %699 = vmatpush1.msra.mxu0 0.0
    %700 = vmatprep.subr.mxu0 0.0
    %701 = vmatpush1.msra.mxu0 0.0
    %702 = vmatprep.subr.mxu0 0.0
    %703 = vmatpush1.msra.mxu0 0.0
    %704 = vmatprep.subr.mxu0 0.0
    %705 = vmatpush1.msra.mxu0 0.0
    %706 = vmatprep.subr.mxu0 0.0
    %707 = vmatpush1.msra.mxu0 0.0
    %708 = vmatprep.subr.mxu0 0.0
    %709 = vmatpush1.msra.mxu0 0.0
    %710 = vmatprep.subr.mxu0 0.0
    %711 = vmatpush1.msra.mxu0 0.0
    %712 = vmatprep.subr.mxu0 0.0
    %713 = vmatpush1.msra.mxu0 0.0
    %714 = vmatprep.subr.mxu0 0.0
    %715 = vmatpush1.msra.mxu0 0.0
    %716 = vmatprep.subr.mxu0 0.0
    %717 = vmatpush1.msra.mxu0 0.0
    %718 = vmatprep.subr.mxu0 0.0
    %719 = vmatpush1.msra.mxu0 0.0
    %720 = vmatprep.subr.mxu0 0.0
    %721 = vmatpush1.msra.mxu0 0.0
    %722 = vmatprep.subr.mxu0 0.0
    %723 = vmatpush1.msra.mxu0 0.0
    %724 = vmatprep.subr.mxu0 0.0
    %725 = vmatpush1.msra.mxu0 0.0
    %726 = vmatprep.subr.mxu0 0.0
    %727 = vmatpush1.msra.mxu0 0.0
    %728 = vmatprep.subr.mxu0 0.0
    %729 = vmatpush1.msra.mxu0 0.0
    %730 = vmatprep.subr.mxu0 0.0
    %731 = vmatpush1.msra.mxu0 0.0
    %732 = vmatprep.subr.mxu0 0.0
    %733 = vmatpush1.msra.mxu0 0.0
    %734 = vmatprep.mubr.f32.mxu0 0.0
    %735 = vmatmul.mubr.f32.gmra.mrb[0].mxu0 %v668
    %v736 = vpop.f32.mrb[0].mxu0
    %v737 = vadd.f32 0.0, %v736
    %v738 = vpop.f32.mrb[0].mxu0
    %739 = vdwg.mxu0
    %740 = vmatprep.subr.mxu0 0.0
    %741 = vmatpush1.msra.mxu0 %v347
    %742 = vmatprep.subr.mxu0 0.0
    %743 = vmatpush1.msra.mxu0 %v348
    %744 = vmatprep.subr.mxu0 0.0
    %745 = vmatpush1.msra.mxu0 0.0
    %746 = vmatprep.subr.mxu0 0.0
    %747 = vmatpush1.msra.mxu0 0.0
    %748 = vmatprep.subr.mxu0 0.0
    %749 = vmatpush1.msra.mxu0 0.0
    %750 = vmatprep.subr.mxu0 0.0
    %751 = vmatpush1.msra.mxu0 0.0
    %752 = vmatprep.subr.mxu0 0.0
    %753 = vmatpush1.msra.mxu0 0.0
    %754 = vmatprep.subr.mxu0 0.0
    %755 = vmatpush1.msra.mxu0 0.0
    %756 = vmatprep.subr.mxu0 0.0
    %757 = vmatpush1.msra.mxu0 0.0
    %758 = vmatprep.subr.mxu0 0.0
    %759 = vmatpush1.msra.mxu0 0.0
    %760 = vmatprep.subr.mxu0 0.0
    %761 = vmatpush1.msra.mxu0 0.0
    %762 = vmatprep.subr.mxu0 0.0
    %763 = vmatpush1.msra.mxu0 0.0
    %764 = vmatprep.subr.mxu0 0.0
    %765 = vmatpush1.msra.mxu0 0.0
    %766 = vmatprep.subr.mxu0 0.0
    %767 = vmatpush1.msra.mxu0 0.0
    %768 = vmatprep.subr.mxu0 0.0
    %769 = vmatpush1.msra.mxu0 0.0
    %770 = vmatprep.subr.mxu0 0.0
    %771 = vmatpush1.msra.mxu0 0.0
    %772 = vmatprep.subr.mxu0 0.0
    %773 = vmatpush1.msra.mxu0 0.0
    %774 = vmatprep.subr.mxu0 0.0
    %775 = vmatpush1.msra.mxu0 0.0
    %776 = vmatprep.subr.mxu0 0.0
    %777 = vmatpush1.msra.mxu0 0.0
    %778 = vmatprep.subr.mxu0 0.0
    %779 = vmatpush1.msra.mxu0 0.0
    %780 = vmatprep.subr.mxu0 0.0
    %781 = vmatpush1.msra.mxu0 0.0
    %782 = vmatprep.subr.mxu0 0.0
    %783 = vmatpush1.msra.mxu0 0.0
    %784 = vmatprep.subr.mxu0 0.0
    %785 = vmatpush1.msra.mxu0 0.0
    %786 = vmatprep.subr.mxu0 0.0
    %787 = vmatpush1.msra.mxu0 0.0
    %788 = vmatprep.subr.mxu0 0.0
    %789 = vmatpush1.msra.mxu0 0.0
    %790 = vmatprep.subr.mxu0 0.0
    %791 = vmatpush1.msra.mxu0 0.0
    %792 = vmatprep.subr.mxu0 0.0
    %793 = vmatpush1.msra.mxu0 0.0
    %794 = vmatprep.subr.mxu0 0.0
    %795 = vmatpush1.msra.mxu0 0.0
    %796 = vmatprep.subr.mxu0 0.0
    %797 = vmatpush1.msra.mxu0 0.0
    %798 = vmatprep.subr.mxu0 0.0
    %799 = vmatpush1.msra.mxu0 0.0
    %800 = vmatprep.subr.mxu0 0.0
    %801 = vmatpush1.msra.mxu0 0.0
    %802 = vmatprep.subr.mxu0 0.0
    %803 = vmatpush1.msra.mxu0 0.0
    %804 = vmatprep.mubr.f32.mxu0 0.0
    %805 = vmatmul.mubr.f32.gmra.mrb[0].mxu0 %v595
    %v806 = vpop.f32.mrb[0].mxu0
    %v807 = vadd.f32 %v737, %v806
    %v808 = vpop.f32.mrb[0].mxu0
    %809 = vdwg.mxu0
    %v810 = vadd.f32 %v807, %v370
    %v811 = vxor.u32 %v810, 2147483648
    %v812 = vmul.f32 %v811, 1.442695
    %v813 = vpow.pop %v812
    %v814 = vadd.f32 %v813, 1.0
    %v815 = vrcp.pop %v814
    %v816 = vmul.f32 1.0, %v815
    %817 = vmatprep.subr.mxu0 0.0
    %818 = vmatpush1.msra.mxu0 %v342
    %819 = vmatprep.subr.mxu0 0.0
    %820 = vmatpush1.msra.mxu0 %v343
    %821 = vmatprep.subr.mxu0 0.0
    %822 = vmatpush1.msra.mxu0 0.0
    %823 = vmatprep.subr.mxu0 0.0
    %824 = vmatpush1.msra.mxu0 0.0
    %825 = vmatprep.subr.mxu0 0.0
    %826 = vmatpush1.msra.mxu0 0.0
    %827 = vmatprep.subr.mxu0 0.0
    %828 = vmatpush1.msra.mxu0 0.0
    %829 = vmatprep.subr.mxu0 0.0
    %830 = vmatpush1.msra.mxu0 0.0
    %831 = vmatprep.subr.mxu0 0.0
    %832 = vmatpush1.msra.mxu0 0.0
    %833 = vmatprep.subr.mxu0 0.0
    %834 = vmatpush1.msra.mxu0 0.0
    %835 = vmatprep.subr.mxu0 0.0
    %836 = vmatpush1.msra.mxu0 0.0
    %837 = vmatprep.subr.mxu0 0.0
    %838 = vmatpush1.msra.mxu0 0.0
    %839 = vmatprep.subr.mxu0 0.0
    %840 = vmatpush1.msra.mxu0 0.0
    %841 = vmatprep.subr.mxu0 0.0
    %842 = vmatpush1.msra.mxu0 0.0
    %843 = vmatprep.subr.mxu0 0.0
    %844 = vmatpush1.msra.mxu0 0.0
    %845 = vmatprep.subr.mxu0 0.0
    %846 = vmatpush1.msra.mxu0 0.0
    %847 = vmatprep.subr.mxu0 0.0
    %848 = vmatpush1.msra.mxu0 0.0
    %849 = vmatprep.subr.mxu0 0.0
    %850 = vmatpush1.msra.mxu0 0.0
    %851 = vmatprep.subr.mxu0 0.0
    %852 = vmatpush1.msra.mxu0 0.0
    %853 = vmatprep.subr.mxu0 0.0
    %854 = vmatpush1.msra.mxu0 0.0
    %855 = vmatprep.subr.mxu0 0.0
    %856 = vmatpush1.msra.mxu0 0.0
    %857 = vmatprep.subr.mxu0 0.0
    %858 = vmatpush1.msra.mxu0 0.0
    %859 = vmatprep.subr.mxu0 0.0
    %860 = vmatpush1.msra.mxu0 0.0
    %861 = vmatprep.subr.mxu0 0.0
    %862 = vmatpush1.msra.mxu0 0.0
    %863 = vmatprep.subr.mxu0 0.0
    %864 = vmatpush1.msra.mxu0 0.0
    %865 = vmatprep.subr.mxu0 0.0
    %866 = vmatpush1.msra.mxu0 0.0
    %867 = vmatprep.subr.mxu0 0.0
    %868 = vmatpush1.msra.mxu0 0.0
    %869 = vmatprep.subr.mxu0 0.0
    %870 = vmatpush1.msra.mxu0 0.0
    %871 = vmatprep.subr.mxu0 0.0
    %872 = vmatpush1.msra.mxu0 0.0
    %873 = vmatprep.subr.mxu0 0.0
    %874 = vmatpush1.msra.mxu0 0.0
    %875 = vmatprep.subr.mxu0 0.0
    %876 = vmatpush1.msra.mxu0 0.0
    %877 = vmatprep.subr.mxu0 0.0
    %878 = vmatpush1.msra.mxu0 0.0
    %879 = vmatprep.subr.mxu0 0.0
    %880 = vmatpush1.msra.mxu0 0.0
    %881 = vmatprep.mubr.f32.mxu0 0.0
    %882 = vmatmul.mubr.f32.gmra.mrb[0].mxu0 %v668
    %v883 = vpop.f32.mrb[0].mxu0
    %v884 = vadd.f32 %v393, %v883
    %v885 = vpop.f32.mrb[0].mxu0
    %886 = vdwg.mxu0
    %v887 = vmul.f32 %v816, %v884
    %v888 = vadd.f32 %v664, %v887
    %v889 = vtanh.pop %v888
    %v890 = vsub.f32 1.0, %v816
    %892 = vrot.lane.b32.xlu0 %v889, 16
    %v893 = vpop.permute.xlu0 %892
    %v895 = vmul.f32 %v890, %v893
    %896 = vrot.lane.b32.xlu0 %v420, 16
    %v897 = vpop.permute.xlu0 %896
    %v899 = vmul.f32 %v816, %v897
    %v900 = vadd.f32 %v895, %v899
    %902 = vrot.lane.b32.xlu0 %v900, 112
    %v903 = vpop.permute.xlu0 %902
    %v904 = vsel %vm249, %v903, 0
    %906 = vmatprep.subr.mxu0 0.0
    %907 = vmatpush1.msra.mxu0 %v355
    %908 = vmatprep.subr.mxu0 0.0
    %909 = vmatpush1.msra.mxu0 %v356
    %910 = vmatprep.subr.mxu0 0.0
    %911 = vmatpush1.msra.mxu0 0.0
    %912 = vmatprep.subr.mxu0 0.0
    %913 = vmatpush1.msra.mxu0 0.0
    %914 = vmatprep.subr.mxu0 0.0
    %915 = vmatpush1.msra.mxu0 0.0
    %916 = vmatprep.subr.mxu0 0.0
    %917 = vmatpush1.msra.mxu0 0.0
    %918 = vmatprep.subr.mxu0 0.0
    %919 = vmatpush1.msra.mxu0 0.0
    %920 = vmatprep.subr.mxu0 0.0
    %921 = vmatpush1.msra.mxu0 0.0
    %922 = vmatprep.subr.mxu0 0.0
    %923 = vmatpush1.msra.mxu0 0.0
    %924 = vmatprep.subr.mxu0 0.0
    %925 = vmatpush1.msra.mxu0 0.0
    %926 = vmatprep.subr.mxu0 0.0
    %927 = vmatpush1.msra.mxu0 0.0
    %928 = vmatprep.subr.mxu0 0.0
    %929 = vmatpush1.msra.mxu0 0.0
    %930 = vmatprep.subr.mxu0 0.0
    %931 = vmatpush1.msra.mxu0 0.0
    %932 = vmatprep.subr.mxu0 0.0
    %933 = vmatpush1.msra.mxu0 0.0
    %934 = vmatprep.subr.mxu0 0.0
    %935 = vmatpush1.msra.mxu0 0.0
    %936 = vmatprep.subr.mxu0 0.0
    %937 = vmatpush1.msra.mxu0 0.0
    %938 = vmatprep.subr.mxu0 0.0
    %939 = vmatpush1.msra.mxu0 0.0
    %940 = vmatprep.subr.mxu0 0.0
    %941 = vmatpush1.msra.mxu0 0.0
    %942 = vmatprep.subr.mxu0 0.0
    %943 = vmatpush1.msra.mxu0 0.0
    %944 = vmatprep.subr.mxu0 0.0
    %945 = vmatpush1.msra.mxu0 0.0
    %946 = vmatprep.subr.mxu0 0.0
    %947 = vmatpush1.msra.mxu0 0.0
    %948 = vmatprep.subr.mxu0 0.0
    %949 = vmatpush1.msra.mxu0 0.0
    %950 = vmatprep.subr.mxu0 0.0
    %951 = vmatpush1.msra.mxu0 0.0
    %952 = vmatprep.subr.mxu0 0.0
    %953 = vmatpush1.msra.mxu0 0.0
    %954 = vmatprep.subr.mxu0 0.0
    %955 = vmatpush1.msra.mxu0 0.0
    %956 = vmatprep.subr.mxu0 0.0
    %957 = vmatpush1.msra.mxu0 0.0
    %958 = vmatprep.subr.mxu0 0.0
    %959 = vmatpush1.msra.mxu0 0.0
    %960 = vmatprep.subr.mxu0 0.0
    %961 = vmatpush1.msra.mxu0 0.0
    %962 = vmatprep.subr.mxu0 0.0
    %963 = vmatpush1.msra.mxu0 0.0
    %964 = vmatprep.subr.mxu0 0.0
    %965 = vmatpush1.msra.mxu0 0.0
    %966 = vmatprep.subr.mxu0 0.0
    %967 = vmatpush1.msra.mxu0 0.0
    %968 = vmatprep.subr.mxu0 0.0
    %969 = vmatpush1.msra.mxu0 0.0
    %970 = vmatprep.mubr.f32.mxu0 0.0
    %971 = vmatmul.mubr.f32.gmra.mrb[0].mxu0 %v904
    %v972 = vpop.f32.mrb[0].mxu0
    %v973 = vadd.f32 %v416, %v972
    %v974 = vpop.f32.mrb[0].mxu0
    %975 = vdwg.mxu0
    %v977 = vsel %vm249, %v422, 0
    %979 = vmatprep.subr.mxu0 0.0
    %980 = vmatpush1.msra.mxu0 %v337
    %981 = vmatprep.subr.mxu0 0.0
    %982 = vmatpush1.msra.mxu0 %v338
    %983 = vmatprep.subr.mxu0 0.0
    %984 = vmatpush1.msra.mxu0 0.0
    %985 = vmatprep.subr.mxu0 0.0
    %986 = vmatpush1.msra.mxu0 0.0
    %987 = vmatprep.subr.mxu0 0.0
    %988 = vmatpush1.msra.mxu0 0.0
    %989 = vmatprep.subr.mxu0 0.0
    %990 = vmatpush1.msra.mxu0 0.0
    %991 = vmatprep.subr.mxu0 0.0
    %992 = vmatpush1.msra.mxu0 0.0
    %993 = vmatprep.subr.mxu0 0.0
    %994 = vmatpush1.msra.mxu0 0.0
    %995 = vmatprep.subr.mxu0 0.0
    %996 = vmatpush1.msra.mxu0 0.0
    %997 = vmatprep.subr.mxu0 0.0
    %998 = vmatpush1.msra.mxu0 0.0
    %999 = vmatprep.subr.mxu0 0.0
    %1000 = vmatpush1.msra.mxu0 0.0
    %1001 = vmatprep.subr.mxu0 0.0
    %1002 = vmatpush1.msra.mxu0 0.0
    %1003 = vmatprep.subr.mxu0 0.0
    %1004 = vmatpush1.msra.mxu0 0.0
    %1005 = vmatprep.subr.mxu0 0.0
    %1006 = vmatpush1.msra.mxu0 0.0
    %1007 = vmatprep.subr.mxu0 0.0
    %1008 = vmatpush1.msra.mxu0 0.0
    %1009 = vmatprep.subr.mxu0 0.0
    %1010 = vmatpush1.msra.mxu0 0.0
    %1011 = vmatprep.subr.mxu0 0.0
    %1012 = vmatpush1.msra.mxu0 0.0
    %1013 = vmatprep.subr.mxu0 0.0
    %1014 = vmatpush1.msra.mxu0 0.0
    %1015 = vmatprep.subr.mxu0 0.0
    %1016 = vmatpush1.msra.mxu0 0.0
    %1017 = vmatprep.subr.mxu0 0.0
    %1018 = vmatpush1.msra.mxu0 0.0
    %1019 = vmatprep.subr.mxu0 0.0
    %1020 = vmatpush1.msra.mxu0 0.0
    %1021 = vmatprep.subr.mxu0 0.0
    %1022 = vmatpush1.msra.mxu0 0.0
    %1023 = vmatprep.subr.mxu0 0.0
    %1024 = vmatpush1.msra.mxu0 0.0
    %1025 = vmatprep.subr.mxu0 0.0
    %1026 = vmatpush1.msra.mxu0 0.0
    %1027 = vmatprep.subr.mxu0 0.0
    %1028 = vmatpush1.msra.mxu0 0.0
    %1029 = vmatprep.subr.mxu0 0.0
    %1030 = vmatpush1.msra.mxu0 0.0
    %1031 = vmatprep.subr.mxu0 0.0
    %1032 = vmatpush1.msra.mxu0 0.0
    %1033 = vmatprep.subr.mxu0 0.0
    %1034 = vmatpush1.msra.mxu0 0.0
    %1035 = vmatprep.subr.mxu0 0.0
    %1036 = vmatpush1.msra.mxu0 0.0
    %1037 = vmatprep.subr.mxu0 0.0
    %1038 = vmatpush1.msra.mxu0 0.0
    %1039 = vmatprep.subr.mxu0 0.0
    %1040 = vmatpush1.msra.mxu0 0.0
    %1041 = vmatprep.subr.mxu0 0.0
    %1042 = vmatpush1.msra.mxu0 0.0
    %1043 = vmatprep.mubr.f32.mxu0 0.0
    %1044 = vmatmul.mubr.f32.gmra.mrb[0].mxu0 %v977
    %v1045 = vpop.f32.mrb[0].mxu0
    %v1046 = vadd.f32 0.0, %v1045
    %v1047 = vpop.f32.mrb[0].mxu0
    %1048 = vdwg.mxu0
    %1049 = vmatprep.subr.mxu0 0.0
    %1050 = vmatpush1.msra.mxu0 %v350
    %1051 = vmatprep.subr.mxu0 0.0
    %1052 = vmatpush1.msra.mxu0 %v351
    %1053 = vmatprep.subr.mxu0 0.0
    %1054 = vmatpush1.msra.mxu0 0.0
    %1055 = vmatprep.subr.mxu0 0.0
    %1056 = vmatpush1.msra.mxu0 0.0
    %1057 = vmatprep.subr.mxu0 0.0
    %1058 = vmatpush1.msra.mxu0 0.0
    %1059 = vmatprep.subr.mxu0 0.0
    %1060 = vmatpush1.msra.mxu0 0.0
    %1061 = vmatprep.subr.mxu0 0.0
    %1062 = vmatpush1.msra.mxu0 0.0
    %1063 = vmatprep.subr.mxu0 0.0
    %1064 = vmatpush1.msra.mxu0 0.0
    %1065 = vmatprep.subr.mxu0 0.0
    %1066 = vmatpush1.msra.mxu0 0.0
    %1067 = vmatprep.subr.mxu0 0.0
    %1068 = vmatpush1.msra.mxu0 0.0
    %1069 = vmatprep.subr.mxu0 0.0
    %1070 = vmatpush1.msra.mxu0 0.0
    %1071 = vmatprep.subr.mxu0 0.0
    %1072 = vmatpush1.msra.mxu0 0.0
    %1073 = vmatprep.subr.mxu0 0.0
    %1074 = vmatpush1.msra.mxu0 0.0
    %1075 = vmatprep.subr.mxu0 0.0
    %1076 = vmatpush1.msra.mxu0 0.0
    %1077 = vmatprep.subr.mxu0 0.0
    %1078 = vmatpush1.msra.mxu0 0.0
    %1079 = vmatprep.subr.mxu0 0.0
    %1080 = vmatpush1.msra.mxu0 0.0
    %1081 = vmatprep.subr.mxu0 0.0
    %1082 = vmatpush1.msra.mxu0 0.0
    %1083 = vmatprep.subr.mxu0 0.0
    %1084 = vmatpush1.msra.mxu0 0.0
    %1085 = vmatprep.subr.mxu0 0.0
    %1086 = vmatpush1.msra.mxu0 0.0
    %1087 = vmatprep.subr.mxu0 0.0
    %1088 = vmatpush1.msra.mxu0 0.0
    %1089 = vmatprep.subr.mxu0 0.0
    %1090 = vmatpush1.msra.mxu0 0.0
    %1091 = vmatprep.subr.mxu0 0.0
    %1092 = vmatpush1.msra.mxu0 0.0
    %1093 = vmatprep.subr.mxu0 0.0
    %1094 = vmatpush1.msra.mxu0 0.0
    %1095 = vmatprep.subr.mxu0 0.0
    %1096 = vmatpush1.msra.mxu0 0.0
    %1097 = vmatprep.subr.mxu0 0.0
    %1098 = vmatpush1.msra.mxu0 0.0
    %1099 = vmatprep.subr.mxu0 0.0
    %1100 = vmatpush1.msra.mxu0 0.0
    %1101 = vmatprep.subr.mxu0 0.0
    %1102 = vmatpush1.msra.mxu0 0.0
    %1103 = vmatprep.subr.mxu0 0.0
    %1104 = vmatpush1.msra.mxu0 0.0
    %1105 = vmatprep.subr.mxu0 0.0
    %1106 = vmatpush1.msra.mxu0 0.0
    %1107 = vmatprep.subr.mxu0 0.0
    %1108 = vmatpush1.msra.mxu0 0.0
    %1109 = vmatprep.subr.mxu0 0.0
    %1110 = vmatpush1.msra.mxu0 0.0
    %1111 = vmatprep.subr.mxu0 0.0
    %1112 = vmatpush1.msra.mxu0 0.0
    %1113 = vmatprep.mubr.f32.mxu0 0.0
    %1114 = vmatmul.mubr.f32.gmra.mrb[0].mxu0 %v904
    %v1115 = vpop.f32.mrb[0].mxu0
    %v1116 = vadd.f32 %v1046, %v1115
    %v1117 = vpop.f32.mrb[0].mxu0
    %1118 = vdwg.mxu0
    %v1119 = vadd.f32 %v1116, %v378
    %v1120 = vxor.u32 %v1119, 2147483648
    %v1121 = vmul.f32 %v1120, 1.442695
    %v1122 = vpow.pop %v1121
    %v1123 = vadd.f32 %v1122, 1.0
    %v1124 = vrcp.pop %v1123
    %v1125 = vmul.f32 1.0, %v1124
    %1126 = vmatprep.subr.mxu0 0.0
    %1127 = vmatpush1.msra.mxu0 %v345
    %1128 = vmatprep.subr.mxu0 0.0
    %1129 = vmatpush1.msra.mxu0 %v346
    %1130 = vmatprep.subr.mxu0 0.0
    %1131 = vmatpush1.msra.mxu0 0.0
    %1132 = vmatprep.subr.mxu0 0.0
    %1133 = vmatpush1.msra.mxu0 0.0
    %1134 = vmatprep.subr.mxu0 0.0
    %1135 = vmatpush1.msra.mxu0 0.0
    %1136 = vmatprep.subr.mxu0 0.0
    %1137 = vmatpush1.msra.mxu0 0.0
    %1138 = vmatprep.subr.mxu0 0.0
    %1139 = vmatpush1.msra.mxu0 0.0
    %1140 = vmatprep.subr.mxu0 0.0
    %1141 = vmatpush1.msra.mxu0 0.0
    %1142 = vmatprep.subr.mxu0 0.0
    %1143 = vmatpush1.msra.mxu0 0.0
    %1144 = vmatprep.subr.mxu0 0.0
    %1145 = vmatpush1.msra.mxu0 0.0
    %1146 = vmatprep.subr.mxu0 0.0
    %1147 = vmatpush1.msra.mxu0 0.0
    %1148 = vmatprep.subr.mxu0 0.0
    %1149 = vmatpush1.msra.mxu0 0.0
    %1150 = vmatprep.subr.mxu0 0.0
    %1151 = vmatpush1.msra.mxu0 0.0
    %1152 = vmatprep.subr.mxu0 0.0
    %1153 = vmatpush1.msra.mxu0 0.0
    %1154 = vmatprep.subr.mxu0 0.0
    %1155 = vmatpush1.msra.mxu0 0.0
    %1156 = vmatprep.subr.mxu0 0.0
    %1157 = vmatpush1.msra.mxu0 0.0
    %1158 = vmatprep.subr.mxu0 0.0
    %1159 = vmatpush1.msra.mxu0 0.0
    %1160 = vmatprep.subr.mxu0 0.0
    %1161 = vmatpush1.msra.mxu0 0.0
    %1162 = vmatprep.subr.mxu0 0.0
    %1163 = vmatpush1.msra.mxu0 0.0
    %1164 = vmatprep.subr.mxu0 0.0
    %1165 = vmatpush1.msra.mxu0 0.0
    %1166 = vmatprep.subr.mxu0 0.0
    %1167 = vmatpush1.msra.mxu0 0.0
    %1168 = vmatprep.subr.mxu0 0.0
    %1169 = vmatpush1.msra.mxu0 0.0
    %1170 = vmatprep.subr.mxu0 0.0
    %1171 = vmatpush1.msra.mxu0 0.0
    %1172 = vmatprep.subr.mxu0 0.0
    %1173 = vmatpush1.msra.mxu0 0.0
    %1174 = vmatprep.subr.mxu0 0.0
    %1175 = vmatpush1.msra.mxu0 0.0
    %1176 = vmatprep.subr.mxu0 0.0
    %1177 = vmatpush1.msra.mxu0 0.0
    %1178 = vmatprep.subr.mxu0 0.0
    %1179 = vmatpush1.msra.mxu0 0.0
    %1180 = vmatprep.subr.mxu0 0.0
    %1181 = vmatpush1.msra.mxu0 0.0
    %1182 = vmatprep.subr.mxu0 0.0
    %1183 = vmatpush1.msra.mxu0 0.0
    %1184 = vmatprep.subr.mxu0 0.0
    %1185 = vmatpush1.msra.mxu0 0.0
    %1186 = vmatprep.subr.mxu0 0.0
    %1187 = vmatpush1.msra.mxu0 0.0
    %1188 = vmatprep.subr.mxu0 0.0
    %1189 = vmatpush1.msra.mxu0 0.0
    %1190 = vmatprep.mubr.f32.mxu0 0.0
    %1191 = vmatmul.mubr.f32.gmra.mrb[0].mxu0 %v977
    %v1192 = vpop.f32.mrb[0].mxu0
    %v1193 = vadd.f32 %v401, %v1192
    %v1194 = vpop.f32.mrb[0].mxu0
    %1195 = vdwg.mxu0
    %v1196 = vmul.f32 %v1125, %v1193
    %v1197 = vadd.f32 %v973, %v1196
    %v1198 = vtanh.pop %v1197
    %v1199 = vsub.f32 1.0, %v1125
    %1201 = vrot.lane.b32.xlu0 %v1198, 16
    %v1202 = vpop.permute.xlu0 %1201
    %v1204 = vmul.f32 %v1199, %v1202
    %1205 = vrot.lane.b32.xlu0 %v422, 16
    %v1206 = vpop.permute.xlu0 %1205
    %v1208 = vmul.f32 %v1125, %v1206
    %v1209 = vadd.f32 %v1204, %v1208
    %1211 = vrot.lane.b32.xlu0 %v1209, 112
    %v1212 = vpop.permute.xlu0 %1211
    %vm1214 = vcmask 123904
    %1215 = vst.msk [vmem:[#allocation3] sm:$0x3] %vm1214, %v1212
    %1216 = vmatprep.subr.mxu0 0.0
    %1217 = vmatpush1.msra.mxu0 %v331
    %1218 = vmatprep.subr.mxu0 0.0
    %1219 = vmatpush1.msra.mxu0 %v332
    %1220 = vmatprep.subr.mxu0 0.0
    %1221 = vmatpush1.msra.mxu0 0.0
    %1222 = vmatprep.subr.mxu0 0.0
    %1223 = vmatpush1.msra.mxu0 0.0
    %1224 = vmatprep.subr.mxu0 0.0
    %1225 = vmatpush1.msra.mxu0 0.0
    %1226 = vmatprep.subr.mxu0 0.0
    %1227 = vmatpush1.msra.mxu0 0.0
    %1228 = vmatprep.subr.mxu0 0.0
    %1229 = vmatpush1.msra.mxu0 0.0
    %1230 = vmatprep.subr.mxu0 0.0
    %1231 = vmatpush1.msra.mxu0 0.0
    %1232 = vmatprep.subr.mxu0 0.0
    %1233 = vmatpush1.msra.mxu0 0.0
    %1234 = vmatprep.subr.mxu0 0.0
    %1235 = vmatpush1.msra.mxu0 0.0
    %1236 = vmatprep.subr.mxu0 0.0
    %1237 = vmatpush1.msra.mxu0 0.0
    %1238 = vmatprep.subr.mxu0 0.0
    %1239 = vmatpush1.msra.mxu0 0.0
    %1240 = vmatprep.subr.mxu0 0.0
    %1241 = vmatpush1.msra.mxu0 0.0
    %1242 = vmatprep.subr.mxu0 0.0
    %1243 = vmatpush1.msra.mxu0 0.0
    %1244 = vmatprep.subr.mxu0 0.0
    %1245 = vmatpush1.msra.mxu0 0.0
    %1246 = vmatprep.subr.mxu0 0.0
    %1247 = vmatpush1.msra.mxu0 0.0
    %1248 = vmatprep.subr.mxu0 0.0
    %1249 = vmatpush1.msra.mxu0 0.0
    %1250 = vmatprep.subr.mxu0 0.0
    %1251 = vmatpush1.msra.mxu0 0.0
    %1252 = vmatprep.subr.mxu0 0.0
    %1253 = vmatpush1.msra.mxu0 0.0
    %1254 = vmatprep.subr.mxu0 0.0
    %1255 = vmatpush1.msra.mxu0 0.0
    %1256 = vmatprep.subr.mxu0 0.0
    %1257 = vmatpush1.msra.mxu0 0.0
    %1258 = vmatprep.subr.mxu0 0.0
    %1259 = vmatpush1.msra.mxu0 0.0
    %1260 = vmatprep.subr.mxu0 0.0
    %1261 = vmatpush1.msra.mxu0 0.0
    %1262 = vmatprep.subr.mxu0 0.0
    %1263 = vmatpush1.msra.mxu0 0.0
    %1264 = vmatprep.subr.mxu0 0.0
    %1265 = vmatpush1.msra.mxu0 0.0
    %1266 = vmatprep.subr.mxu0 0.0
    %1267 = vmatpush1.msra.mxu0 0.0
    %1268 = vmatprep.subr.mxu0 0.0
    %1269 = vmatpush1.msra.mxu0 0.0
    %1270 = vmatprep.subr.mxu0 0.0
    %1271 = vmatpush1.msra.mxu0 0.0
    %1272 = vmatprep.subr.mxu0 0.0
    %1273 = vmatpush1.msra.mxu0 0.0
    %1274 = vmatprep.subr.mxu0 0.0
    %1275 = vmatpush1.msra.mxu0 0.0
    %1276 = vmatprep.subr.mxu0 0.0
    %1277 = vmatpush1.msra.mxu0 0.0
    %1278 = vmatprep.subr.mxu0 0.0
    %1279 = vmatpush1.msra.mxu0 0.0
    %1280 = vmatprep.mubr.f32.mxu0 0.0
    %1281 = vmatmul.mubr.f32.gmra.mrb[0].mxu0 %v595
    %v1282 = vpop.f32.mrb[0].mxu0
    %v1283 = vadd.f32 0.0, %v1282
    %v1284 = vpop.f32.mrb[0].mxu0
    %1285 = vdwg.mxu0
    %v1287 = vrot.slane %v1283, 6
    %v1289 = vadd.f32 %v323, %v1287
    %v1290 = vadd.f32 %v1289, %v362
    %v1291 = vxor.u32 %v1290, 2147483648
    %v1292 = vmul.f32 %v1291, 1.442695
    %v1293 = vpow.pop %v1292
    %v1294 = vadd.f32 %v1293, 1.0
    %v1295 = vrcp.pop %v1294
    %v1296 = vmul.f32 1.0, %v1295
    %1297 = vmatprep.subr.mxu0 0.0
    %1298 = vmatpush1.msra.mxu0 %v339
    %1299 = vmatprep.subr.mxu0 0.0
    %1300 = vmatpush1.msra.mxu0 %v340
    %1301 = vmatprep.subr.mxu0 0.0
    %1302 = vmatpush1.msra.mxu0 0.0
    %1303 = vmatprep.subr.mxu0 0.0
    %1304 = vmatpush1.msra.mxu0 0.0
    %1305 = vmatprep.subr.mxu0 0.0
    %1306 = vmatpush1.msra.mxu0 0.0
    %1307 = vmatprep.subr.mxu0 0.0
    %1308 = vmatpush1.msra.mxu0 0.0
    %1309 = vmatprep.subr.mxu0 0.0
    %1310 = vmatpush1.msra.mxu0 0.0
    %1311 = vmatprep.subr.mxu0 0.0
    %1312 = vmatpush1.msra.mxu0 0.0
    %1313 = vmatprep.subr.mxu0 0.0
    %1314 = vmatpush1.msra.mxu0 0.0
    %1315 = vmatprep.subr.mxu0 0.0
    %1316 = vmatpush1.msra.mxu0 0.0
    %1317 = vmatprep.subr.mxu0 0.0
    %1318 = vmatpush1.msra.mxu0 0.0
    %1319 = vmatprep.subr.mxu0 0.0
    %1320 = vmatpush1.msra.mxu0 0.0
    %1321 = vmatprep.subr.mxu0 0.0
    %1322 = vmatpush1.msra.mxu0 0.0
    %1323 = vmatprep.subr.mxu0 0.0
    %1324 = vmatpush1.msra.mxu0 0.0
    %1325 = vmatprep.subr.mxu0 0.0
    %1326 = vmatpush1.msra.mxu0 0.0
    %1327 = vmatprep.subr.mxu0 0.0
    %1328 = vmatpush1.msra.mxu0 0.0
    %1329 = vmatprep.subr.mxu0 0.0
    %1330 = vmatpush1.msra.mxu0 0.0
    %1331 = vmatprep.subr.mxu0 0.0
    %1332 = vmatpush1.msra.mxu0 0.0
    %1333 = vmatprep.subr.mxu0 0.0
    %1334 = vmatpush1.msra.mxu0 0.0
    %1335 = vmatprep.subr.mxu0 0.0
    %1336 = vmatpush1.msra.mxu0 0.0
    %1337 = vmatprep.subr.mxu0 0.0
    %1338 = vmatpush1.msra.mxu0 0.0
    %1339 = vmatprep.subr.mxu0 0.0
    %1340 = vmatpush1.msra.mxu0 0.0
    %1341 = vmatprep.subr.mxu0 0.0
    %1342 = vmatpush1.msra.mxu0 0.0
    %1343 = vmatprep.subr.mxu0 0.0
    %1344 = vmatpush1.msra.mxu0 0.0
    %1345 = vmatprep.subr.mxu0 0.0
    %1346 = vmatpush1.msra.mxu0 0.0
    %1347 = vmatprep.subr.mxu0 0.0
    %1348 = vmatpush1.msra.mxu0 0.0
    %1349 = vmatprep.subr.mxu0 0.0
    %1350 = vmatpush1.msra.mxu0 0.0
    %1351 = vmatprep.subr.mxu0 0.0
    %1352 = vmatpush1.msra.mxu0 0.0
    %1353 = vmatprep.subr.mxu0 0.0
    %1354 = vmatpush1.msra.mxu0 0.0
    %1355 = vmatprep.subr.mxu0 0.0
    %1356 = vmatpush1.msra.mxu0 0.0
    %1357 = vmatprep.subr.mxu0 0.0
    %1358 = vmatpush1.msra.mxu0 0.0
    %1359 = vmatprep.subr.mxu0 0.0
    %1360 = vmatpush1.msra.mxu0 0.0
    %1361 = vmatprep.mubr.f32.mxu0 0.0
    %1362 = vmatmul.mubr.f32.gmra.mrb[0].mxu0 %v595
    %v1363 = vpop.f32.mrb[0].mxu0
    %v1364 = vadd.f32 %v385, %v1363
    %v1365 = vpop.f32.mrb[0].mxu0
    %1366 = vdwg.mxu0
    %v1368 = vrot.slane %v1364, 6
    %v1370 = vmul.f32 %v1296, %v1368
    %1372 = vrot.lane.b32.xlu0 %v1370, 32
    %v1373 = vpop.permute.xlu0 %1372
    %v1375 = vadd.f32 %v323, %v1373
    %v1376 = vtanh.pop %v1375
    %v1377 = vsub.f32 1.0, %v1296
    %1379 = vrot.lane.b32.xlu0 %v1376, 112
    %v1380 = vpop.permute.xlu0 %1379
    %v1382 = vmul.f32 %v1377, %v1380
    %v1383 = vrot.slane %v591, 6
    %v1385 = vmul.f32 %v1296, %v1383
    %v1386 = vadd.f32 %v1382, %v1385
    %v1388 = vrot.slane %v1386, 2
    %1389 = vrot.lane.b32.xlu0 %v1388, 112
    %v1390 = vpop.permute.xlu0 %1389
    %v1391 = vsel %vm249, %v1390, 0
    %1393 = vmatprep.subr.mxu0 0.0
    %1394 = vmatpush1.msra.mxu0 %v352
    %1395 = vmatprep.subr.mxu0 0.0
    %1396 = vmatpush1.msra.mxu0 %v353
    %1397 = vmatprep.subr.mxu0 0.0
    %1398 = vmatpush1.msra.mxu0 0.0
    %1399 = vmatprep.subr.mxu0 0.0
    %1400 = vmatpush1.msra.mxu0 0.0
    %1401 = vmatprep.subr.mxu0 0.0
    %1402 = vmatpush1.msra.mxu0 0.0
    %1403 = vmatprep.subr.mxu0 0.0
    %1404 = vmatpush1.msra.mxu0 0.0
    %1405 = vmatprep.subr.mxu0 0.0
    %1406 = vmatpush1.msra.mxu0 0.0
    %1407 = vmatprep.subr.mxu0 0.0
    %1408 = vmatpush1.msra.mxu0 0.0
    %1409 = vmatprep.subr.mxu0 0.0
    %1410 = vmatpush1.msra.mxu0 0.0
    %1411 = vmatprep.subr.mxu0 0.0
    %1412 = vmatpush1.msra.mxu0 0.0
    %1413 = vmatprep.subr.mxu0 0.0
    %1414 = vmatpush1.msra.mxu0 0.0
    %1415 = vmatprep.subr.mxu0 0.0
    %1416 = vmatpush1.msra.mxu0 0.0
    %1417 = vmatprep.subr.mxu0 0.0
    %1418 = vmatpush1.msra.mxu0 0.0
    %1419 = vmatprep.subr.mxu0 0.0
    %1420 = vmatpush1.msra.mxu0 0.0
    %1421 = vmatprep.subr.mxu0 0.0
    %1422 = vmatpush1.msra.mxu0 0.0
    %1423 = vmatprep.subr.mxu0 0.0
    %1424 = vmatpush1.msra.mxu0 0.0
    %1425 = vmatprep.subr.mxu0 0.0
    %1426 = vmatpush1.msra.mxu0 0.0
    %1427 = vmatprep.subr.mxu0 0.0
    %1428 = vmatpush1.msra.mxu0 0.0
    %1429 = vmatprep.subr.mxu0 0.0
    %1430 = vmatpush1.msra.mxu0 0.0
    %1431 = vmatprep.subr.mxu0 0.0
    %1432 = vmatpush1.msra.mxu0 0.0
    %1433 = vmatprep.subr.mxu0 0.0
    %1434 = vmatpush1.msra.mxu0 0.0
    %1435 = vmatprep.subr.mxu0 0.0
    %1436 = vmatpush1.msra.mxu0 0.0
    %1437 = vmatprep.subr.mxu0 0.0
    %1438 = vmatpush1.msra.mxu0 0.0
    %1439 = vmatprep.subr.mxu0 0.0
    %1440 = vmatpush1.msra.mxu0 0.0
    %1441 = vmatprep.subr.mxu0 0.0
    %1442 = vmatpush1.msra.mxu0 0.0
    %1443 = vmatprep.subr.mxu0 0.0
    %1444 = vmatpush1.msra.mxu0 0.0
    %1445 = vmatprep.subr.mxu0 0.0
    %1446 = vmatpush1.msra.mxu0 0.0
    %1447 = vmatprep.subr.mxu0 0.0
    %1448 = vmatpush1.msra.mxu0 0.0
    %1449 = vmatprep.subr.mxu0 0.0
    %1450 = vmatpush1.msra.mxu0 0.0
    %1451 = vmatprep.subr.mxu0 0.0
    %1452 = vmatpush1.msra.mxu0 0.0
    %1453 = vmatprep.subr.mxu0 0.0
    %1454 = vmatpush1.msra.mxu0 0.0
    %1455 = vmatprep.subr.mxu0 0.0
    %1456 = vmatpush1.msra.mxu0 0.0
    %1457 = vmatprep.mubr.f32.mxu0 0.0
    %1458 = vmatmul.mubr.f32.gmra.mrb[0].mxu0 %v1391
    %v1459 = vpop.f32.mrb[0].mxu0
    %v1460 = vadd.f32 %v408, %v1459
    %v1461 = vpop.f32.mrb[0].mxu0
    %1462 = vdwg.mxu0
    %1463 = vmatprep.subr.mxu0 0.0
    %1464 = vmatpush1.msra.mxu0 %v334
    %1465 = vmatprep.subr.mxu0 0.0
    %1466 = vmatpush1.msra.mxu0 %v335
    %1467 = vmatprep.subr.mxu0 0.0
    %1468 = vmatpush1.msra.mxu0 0.0
    %1469 = vmatprep.subr.mxu0 0.0
    %1470 = vmatpush1.msra.mxu0 0.0
    %1471 = vmatprep.subr.mxu0 0.0
    %1472 = vmatpush1.msra.mxu0 0.0
    %1473 = vmatprep.subr.mxu0 0.0
    %1474 = vmatpush1.msra.mxu0 0.0
    %1475 = vmatprep.subr.mxu0 0.0
    %1476 = vmatpush1.msra.mxu0 0.0
    %1477 = vmatprep.subr.mxu0 0.0
    %1478 = vmatpush1.msra.mxu0 0.0
    %1479 = vmatprep.subr.mxu0 0.0
    %1480 = vmatpush1.msra.mxu0 0.0
    %1481 = vmatprep.subr.mxu0 0.0
    %1482 = vmatpush1.msra.mxu0 0.0
    %1483 = vmatprep.subr.mxu0 0.0
    %1484 = vmatpush1.msra.mxu0 0.0
    %1485 = vmatprep.subr.mxu0 0.0
    %1486 = vmatpush1.msra.mxu0 0.0
    %1487 = vmatprep.subr.mxu0 0.0
    %1488 = vmatpush1.msra.mxu0 0.0
    %1489 = vmatprep.subr.mxu0 0.0
    %1490 = vmatpush1.msra.mxu0 0.0
    %1491 = vmatprep.subr.mxu0 0.0
    %1492 = vmatpush1.msra.mxu0 0.0
    %1493 = vmatprep.subr.mxu0 0.0
    %1494 = vmatpush1.msra.mxu0 0.0
    %1495 = vmatprep.subr.mxu0 0.0
    %1496 = vmatpush1.msra.mxu0 0.0
    %1497 = vmatprep.subr.mxu0 0.0
    %1498 = vmatpush1.msra.mxu0 0.0
    %1499 = vmatprep.subr.mxu0 0.0
    %1500 = vmatpush1.msra.mxu0 0.0
    %1501 = vmatprep.subr.mxu0 0.0
    %1502 = vmatpush1.msra.mxu0 0.0
    %1503 = vmatprep.subr.mxu0 0.0
    %1504 = vmatpush1.msra.mxu0 0.0
    %1505 = vmatprep.subr.mxu0 0.0
    %1506 = vmatpush1.msra.mxu0 0.0
    %1507 = vmatprep.subr.mxu0 0.0
    %1508 = vmatpush1.msra.mxu0 0.0
    %1509 = vmatprep.subr.mxu0 0.0
    %1510 = vmatpush1.msra.mxu0 0.0
    %1511 = vmatprep.subr.mxu0 0.0
    %1512 = vmatpush1.msra.mxu0 0.0
    %1513 = vmatprep.subr.mxu0 0.0
    %1514 = vmatpush1.msra.mxu0 0.0
    %1515 = vmatprep.subr.mxu0 0.0
    %1516 = vmatpush1.msra.mxu0 0.0
    %1517 = vmatprep.subr.mxu0 0.0
    %1518 = vmatpush1.msra.mxu0 0.0
    %1519 = vmatprep.subr.mxu0 0.0
    %1520 = vmatpush1.msra.mxu0 0.0
    %1521 = vmatprep.subr.mxu0 0.0
    %1522 = vmatpush1.msra.mxu0 0.0
    %1523 = vmatprep.subr.mxu0 0.0
    %1524 = vmatpush1.msra.mxu0 0.0
    %1525 = vmatprep.subr.mxu0 0.0
    %1526 = vmatpush1.msra.mxu0 0.0
    %1527 = vmatprep.mubr.f32.mxu0 0.0
    %1528 = vmatmul.mubr.f32.gmra.mrb[0].mxu0 %v904
    %v1529 = vpop.f32.mrb[0].mxu0
    %v1530 = vadd.f32 0.0, %v1529
    %v1531 = vpop.f32.mrb[0].mxu0
    %1532 = vdwg.mxu0
    %1533 = vmatprep.subr.mxu0 0.0
    %1534 = vmatpush1.msra.mxu0 %v347
    %1535 = vmatprep.subr.mxu0 0.0
    %1536 = vmatpush1.msra.mxu0 %v348
    %1537 = vmatprep.subr.mxu0 0.0
    %1538 = vmatpush1.msra.mxu0 0.0
    %1539 = vmatprep.subr.mxu0 0.0
    %1540 = vmatpush1.msra.mxu0 0.0
    %1541 = vmatprep.subr.mxu0 0.0
    %1542 = vmatpush1.msra.mxu0 0.0
    %1543 = vmatprep.subr.mxu0 0.0
    %1544 = vmatpush1.msra.mxu0 0.0
    %1545 = vmatprep.subr.mxu0 0.0
    %1546 = vmatpush1.msra.mxu0 0.0
    %1547 = vmatprep.subr.mxu0 0.0
    %1548 = vmatpush1.msra.mxu0 0.0
    %1549 = vmatprep.subr.mxu0 0.0
    %1550 = vmatpush1.msra.mxu0 0.0
    %1551 = vmatprep.subr.mxu0 0.0
    %1552 = vmatpush1.msra.mxu0 0.0
    %1553 = vmatprep.subr.mxu0 0.0
    %1554 = vmatpush1.msra.mxu0 0.0
    %1555 = vmatprep.subr.mxu0 0.0
    %1556 = vmatpush1.msra.mxu0 0.0
    %1557 = vmatprep.subr.mxu0 0.0
    %1558 = vmatpush1.msra.mxu0 0.0
    %1559 = vmatprep.subr.mxu0 0.0
    %1560 = vmatpush1.msra.mxu0 0.0
    %1561 = vmatprep.subr.mxu0 0.0
    %1562 = vmatpush1.msra.mxu0 0.0
    %1563 = vmatprep.subr.mxu0 0.0
    %1564 = vmatpush1.msra.mxu0 0.0
    %1565 = vmatprep.subr.mxu0 0.0
    %1566 = vmatpush1.msra.mxu0 0.0
    %1567 = vmatprep.subr.mxu0 0.0
    %1568 = vmatpush1.msra.mxu0 0.0
    %1569 = vmatprep.subr.mxu0 0.0
    %1570 = vmatpush1.msra.mxu0 0.0
    %1571 = vmatprep.subr.mxu0 0.0
    %1572 = vmatpush1.msra.mxu0 0.0
    %1573 = vmatprep.subr.mxu0 0.0
    %1574 = vmatpush1.msra.mxu0 0.0
    %1575 = vmatprep.subr.mxu0 0.0
    %1576 = vmatpush1.msra.mxu0 0.0
    %1577 = vmatprep.subr.mxu0 0.0
    %1578 = vmatpush1.msra.mxu0 0.0
    %1579 = vmatprep.subr.mxu0 0.0
    %1580 = vmatpush1.msra.mxu0 0.0
    %1581 = vmatprep.subr.mxu0 0.0
    %1582 = vmatpush1.msra.mxu0 0.0
    %1583 = vmatprep.subr.mxu0 0.0
    %1584 = vmatpush1.msra.mxu0 0.0
    %1585 = vmatprep.subr.mxu0 0.0
    %1586 = vmatpush1.msra.mxu0 0.0
    %1587 = vmatprep.subr.mxu0 0.0
    %1588 = vmatpush1.msra.mxu0 0.0
    %1589 = vmatprep.subr.mxu0 0.0
    %1590 = vmatpush1.msra.mxu0 0.0
    %1591 = vmatprep.subr.mxu0 0.0
    %1592 = vmatpush1.msra.mxu0 0.0
    %1593 = vmatprep.subr.mxu0 0.0
    %1594 = vmatpush1.msra.mxu0 0.0
    %1595 = vmatprep.subr.mxu0 0.0
    %1596 = vmatpush1.msra.mxu0 0.0
    %1597 = vmatprep.mubr.f32.mxu0 0.0
    %1598 = vmatmul.mubr.f32.gmra.mrb[0].mxu0 %v1391
    %v1599 = vpop.f32.mrb[0].mxu0
    %v1600 = vadd.f32 %v1530, %v1599
    %v1601 = vpop.f32.mrb[0].mxu0
    %1602 = vdwg.mxu0
    %v1603 = vadd.f32 %v1600, %v370
    %v1604 = vxor.u32 %v1603, 2147483648
    %v1605 = vmul.f32 %v1604, 1.442695
    %v1606 = vpow.pop %v1605
    %v1607 = vadd.f32 %v1606, 1.0
    %v1608 = vrcp.pop %v1607
    %v1609 = vmul.f32 1.0, %v1608
    %1610 = vmatprep.subr.mxu0 0.0
    %1611 = vmatpush1.msra.mxu0 %v342
    %1612 = vmatprep.subr.mxu0 0.0
    %1613 = vmatpush1.msra.mxu0 %v343
    %1614 = vmatprep.subr.mxu0 0.0
    %1615 = vmatpush1.msra.mxu0 0.0
    %1616 = vmatprep.subr.mxu0 0.0
    %1617 = vmatpush1.msra.mxu0 0.0
    %1618 = vmatprep.subr.mxu0 0.0
    %1619 = vmatpush1.msra.mxu0 0.0
    %1620 = vmatprep.subr.mxu0 0.0
    %1621 = vmatpush1.msra.mxu0 0.0
    %1622 = vmatprep.subr.mxu0 0.0
    %1623 = vmatpush1.msra.mxu0 0.0
    %1624 = vmatprep.subr.mxu0 0.0
    %1625 = vmatpush1.msra.mxu0 0.0
    %1626 = vmatprep.subr.mxu0 0.0
    %1627 = vmatpush1.msra.mxu0 0.0
    %1628 = vmatprep.subr.mxu0 0.0
    %1629 = vmatpush1.msra.mxu0 0.0
    %1630 = vmatprep.subr.mxu0 0.0
    %1631 = vmatpush1.msra.mxu0 0.0
    %1632 = vmatprep.subr.mxu0 0.0
    %1633 = vmatpush1.msra.mxu0 0.0
    %1634 = vmatprep.subr.mxu0 0.0
    %1635 = vmatpush1.msra.mxu0 0.0
    %1636 = vmatprep.subr.mxu0 0.0
    %1637 = vmatpush1.msra.mxu0 0.0
    %1638 = vmatprep.subr.mxu0 0.0
    %1639 = vmatpush1.msra.mxu0 0.0
    %1640 = vmatprep.subr.mxu0 0.0
    %1641 = vmatpush1.msra.mxu0 0.0
    %1642 = vmatprep.subr.mxu0 0.0
    %1643 = vmatpush1.msra.mxu0 0.0
    %1644 = vmatprep.subr.mxu0 0.0
    %1645 = vmatpush1.msra.mxu0 0.0
    %1646 = vmatprep.subr.mxu0 0.0
    %1647 = vmatpush1.msra.mxu0 0.0
    %1648 = vmatprep.subr.mxu0 0.0
    %1649 = vmatpush1.msra.mxu0 0.0
    %1650 = vmatprep.subr.mxu0 0.0
    %1651 = vmatpush1.msra.mxu0 0.0
    %1652 = vmatprep.subr.mxu0 0.0
    %1653 = vmatpush1.msra.mxu0 0.0
    %1654 = vmatprep.subr.mxu0 0.0
    %1655 = vmatpush1.msra.mxu0 0.0
    %1656 = vmatprep.subr.mxu0 0.0
    %1657 = vmatpush1.msra.mxu0 0.0
    %1658 = vmatprep.subr.mxu0 0.0
    %1659 = vmatpush1.msra.mxu0 0.0
    %1660 = vmatprep.subr.mxu0 0.0
    %1661 = vmatpush1.msra.mxu0 0.0
    %1662 = vmatprep.subr.mxu0 0.0
    %1663 = vmatpush1.msra.mxu0 0.0
    %1664 = vmatprep.subr.mxu0 0.0
    %1665 = vmatpush1.msra.mxu0 0.0
    %1666 = vmatprep.subr.mxu0 0.0
    %1667 = vmatpush1.msra.mxu0 0.0
    %1668 = vmatprep.subr.mxu0 0.0
    %1669 = vmatpush1.msra.mxu0 0.0
    %1670 = vmatprep.subr.mxu0 0.0
    %1671 = vmatpush1.msra.mxu0 0.0
    %1672 = vmatprep.subr.mxu0 0.0
    %1673 = vmatpush1.msra.mxu0 0.0
    %1674 = vmatprep.mubr.f32.mxu0 0.0
    %1675 = vmatmul.mubr.f32.gmra.mrb[0].mxu0 %v904
    %v1676 = vpop.f32.mrb[0].mxu0
    %v1677 = vadd.f32 %v393, %v1676
    %v1678 = vpop.f32.mrb[0].mxu0
    %1679 = vdwg.mxu0
    %v1680 = vmul.f32 %v1609, %v1677
    %v1681 = vadd.f32 %v1460, %v1680
    %v1682 = vtanh.pop %v1681
    %v1683 = vsub.f32 1.0, %v1609
    %1685 = vrot.lane.b32.xlu0 %v1682, 16
    %v1686 = vpop.permute.xlu0 %1685
    %v1688 = vmul.f32 %v1683, %v1686
    %v1689 = vmul.f32 %v1609, %v900
    %v1690 = vadd.f32 %v1688, %v1689
    %1692 = vrot.lane.b32.xlu0 %v1690, 112
    %v1693 = vpop.permute.xlu0 %1692
    %v1694 = vsel %vm249, %v1693, 0
    %1696 = vmatprep.subr.mxu0 0.0
    %1697 = vmatpush1.msra.mxu0 %v355
    %1698 = vmatprep.subr.mxu0 0.0
    %1699 = vmatpush1.msra.mxu0 %v356
    %1700 = vmatprep.subr.mxu0 0.0
    %1701 = vmatpush1.msra.mxu0 0.0
    %1702 = vmatprep.subr.mxu0 0.0
    %1703 = vmatpush1.msra.mxu0 0.0
    %1704 = vmatprep.subr.mxu0 0.0
    %1705 = vmatpush1.msra.mxu0 0.0
    %1706 = vmatprep.subr.mxu0 0.0
    %1707 = vmatpush1.msra.mxu0 0.0
    %1708 = vmatprep.subr.mxu0 0.0
    %1709 = vmatpush1.msra.mxu0 0.0
    %1710 = vmatprep.subr.mxu0 0.0
    %1711 = vmatpush1.msra.mxu0 0.0
    %1712 = vmatprep.subr.mxu0 0.0
    %1713 = vmatpush1.msra.mxu0 0.0
    %1714 = vmatprep.subr.mxu0 0.0
    %1715 = vmatpush1.msra.mxu0 0.0
    %1716 = vmatprep.subr.mxu0 0.0
    %1717 = vmatpush1.msra.mxu0 0.0
    %1718 = vmatprep.subr.mxu0 0.0
    %1719 = vmatpush1.msra.mxu0 0.0
    %1720 = vmatprep.subr.mxu0 0.0
    %1721 = vmatpush1.msra.mxu0 0.0
    %1722 = vmatprep.subr.mxu0 0.0
    %1723 = vmatpush1.msra.mxu0 0.0
    %1724 = vmatprep.subr.mxu0 0.0
    %1725 = vmatpush1.msra.mxu0 0.0
    %1726 = vmatprep.subr.mxu0 0.0
    %1727 = vmatpush1.msra.mxu0 0.0
    %1728 = vmatprep.subr.mxu0 0.0
    %1729 = vmatpush1.msra.mxu0 0.0
    %1730 = vmatprep.subr.mxu0 0.0
    %1731 = vmatpush1.msra.mxu0 0.0
    %1732 = vmatprep.subr.mxu0 0.0
    %1733 = vmatpush1.msra.mxu0 0.0
    %1734 = vmatprep.subr.mxu0 0.0
    %1735 = vmatpush1.msra.mxu0 0.0
    %1736 = vmatprep.subr.mxu0 0.0
    %1737 = vmatpush1.msra.mxu0 0.0
    %1738 = vmatprep.subr.mxu0 0.0
    %1739 = vmatpush1.msra.mxu0 0.0
    %1740 = vmatprep.subr.mxu0 0.0
    %1741 = vmatpush1.msra.mxu0 0.0
    %1742 = vmatprep.subr.mxu0 0.0
    %1743 = vmatpush1.msra.mxu0 0.0
    %1744 = vmatprep.subr.mxu0 0.0
    %1745 = vmatpush1.msra.mxu0 0.0
    %1746 = vmatprep.subr.mxu0 0.0
    %1747 = vmatpush1.msra.mxu0 0.0
    %1748 = vmatprep.subr.mxu0 0.0
    %1749 = vmatpush1.msra.mxu0 0.0
    %1750 = vmatprep.subr.mxu0 0.0
    %1751 = vmatpush1.msra.mxu0 0.0
    %1752 = vmatprep.subr.mxu0 0.0
    %1753 = vmatpush1.msra.mxu0 0.0
    %1754 = vmatprep.subr.mxu0 0.0
    %1755 = vmatpush1.msra.mxu0 0.0
    %1756 = vmatprep.subr.mxu0 0.0
    %1757 = vmatpush1.msra.mxu0 0.0
    %1758 = vmatprep.subr.mxu0 0.0
    %1759 = vmatpush1.msra.mxu0 0.0
    %1760 = vmatprep.mubr.f32.mxu0 0.0
    %1761 = vmatmul.mubr.f32.gmra.mrb[0].mxu0 %v1694
    %v1762 = vpop.f32.mrb[0].mxu0
    %v1763 = vadd.f32 %v416, %v1762
    %v1764 = vpop.f32.mrb[0].mxu0
    %1765 = vdwg.mxu0
    %v1766 = vsel %vm249, %v1212, 0
    %1768 = vmatprep.subr.mxu0 0.0
    %1769 = vmatpush1.msra.mxu0 %v337
    %1770 = vmatprep.subr.mxu0 0.0
    %1771 = vmatpush1.msra.mxu0 %v338
    %1772 = vmatprep.subr.mxu0 0.0
    %1773 = vmatpush1.msra.mxu0 0.0
    %1774 = vmatprep.subr.mxu0 0.0
    %1775 = vmatpush1.msra.mxu0 0.0
    %1776 = vmatprep.subr.mxu0 0.0
    %1777 = vmatpush1.msra.mxu0 0.0
    %1778 = vmatprep.subr.mxu0 0.0
    %1779 = vmatpush1.msra.mxu0 0.0
    %1780 = vmatprep.subr.mxu0 0.0
    %1781 = vmatpush1.msra.mxu0 0.0
    %1782 = vmatprep.subr.mxu0 0.0
    %1783 = vmatpush1.msra.mxu0 0.0
    %1784 = vmatprep.subr.mxu0 0.0
    %1785 = vmatpush1.msra.mxu0 0.0
    %1786 = vmatprep.subr.mxu0 0.0
    %1787 = vmatpush1.msra.mxu0 0.0
    %1788 = vmatprep.subr.mxu0 0.0
    %1789 = vmatpush1.msra.mxu0 0.0
    %1790 = vmatprep.subr.mxu0 0.0
    %1791 = vmatpush1.msra.mxu0 0.0
    %1792 = vmatprep.subr.mxu0 0.0
    %1793 = vmatpush1.msra.mxu0 0.0
    %1794 = vmatprep.subr.mxu0 0.0
    %1795 = vmatpush1.msra.mxu0 0.0
    %1796 = vmatprep.subr.mxu0 0.0
    %1797 = vmatpush1.msra.mxu0 0.0
    %1798 = vmatprep.subr.mxu0 0.0
    %1799 = vmatpush1.msra.mxu0 0.0
    %1800 = vmatprep.subr.mxu0 0.0
    %1801 = vmatpush1.msra.mxu0 0.0
    %1802 = vmatprep.subr.mxu0 0.0
    %1803 = vmatpush1.msra.mxu0 0.0
    %1804 = vmatprep.subr.mxu0 0.0
    %1805 = vmatpush1.msra.mxu0 0.0
    %1806 = vmatprep.subr.mxu0 0.0
    %1807 = vmatpush1.msra.mxu0 0.0
    %1808 = vmatprep.subr.mxu0 0.0
    %1809 = vmatpush1.msra.mxu0 0.0
    %1810 = vmatprep.subr.mxu0 0.0
    %1811 = vmatpush1.msra.mxu0 0.0
    %1812 = vmatprep.subr.mxu0 0.0
    %1813 = vmatpush1.msra.mxu0 0.0
    %1814 = vmatprep.subr.mxu0 0.0
    %1815 = vmatpush1.msra.mxu0 0.0
    %1816 = vmatprep.subr.mxu0 0.0
    %1817 = vmatpush1.msra.mxu0 0.0
    %1818 = vmatprep.subr.mxu0 0.0
    %1819 = vmatpush1.msra.mxu0 0.0
    %1820 = vmatprep.subr.mxu0 0.0
    %1821 = vmatpush1.msra.mxu0 0.0
    %1822 = vmatprep.subr.mxu0 0.0
    %1823 = vmatpush1.msra.mxu0 0.0
    %1824 = vmatprep.subr.mxu0 0.0
    %1825 = vmatpush1.msra.mxu0 0.0
    %1826 = vmatprep.subr.mxu0 0.0
    %1827 = vmatpush1.msra.mxu0 0.0
    %1828 = vmatprep.subr.mxu0 0.0
    %1829 = vmatpush1.msra.mxu0 0.0
    %1830 = vmatprep.subr.mxu0 0.0
    %1831 = vmatpush1.msra.mxu0 0.0
    %1832 = vmatprep.mubr.f32.mxu0 0.0
    %1833 = vmatmul.mubr.f32.gmra.mrb[0].mxu0 %v1766
    %v1834 = vpop.f32.mrb[0].mxu0
    %v1835 = vadd.f32 0.0, %v1834
    %v1836 = vpop.f32.mrb[0].mxu0
    %1837 = vdwg.mxu0
    %1838 = vmatprep.subr.mxu0 0.0
    %1839 = vmatpush1.msra.mxu0 %v350
    %1840 = vmatprep.subr.mxu0 0.0
    %1841 = vmatpush1.msra.mxu0 %v351
    %1842 = vmatprep.subr.mxu0 0.0
    %1843 = vmatpush1.msra.mxu0 0.0
    %1844 = vmatprep.subr.mxu0 0.0
    %1845 = vmatpush1.msra.mxu0 0.0
    %1846 = vmatprep.subr.mxu0 0.0
    %1847 = vmatpush1.msra.mxu0 0.0
    %1848 = vmatprep.subr.mxu0 0.0
    %1849 = vmatpush1.msra.mxu0 0.0
    %1850 = vmatprep.subr.mxu0 0.0
    %1851 = vmatpush1.msra.mxu0 0.0
    %1852 = vmatprep.subr.mxu0 0.0
    %1853 = vmatpush1.msra.mxu0 0.0
    %1854 = vmatprep.subr.mxu0 0.0
    %1855 = vmatpush1.msra.mxu0 0.0
    %1856 = vmatprep.subr.mxu0 0.0
    %1857 = vmatpush1.msra.mxu0 0.0
    %1858 = vmatprep.subr.mxu0 0.0
    %1859 = vmatpush1.msra.mxu0 0.0
    %1860 = vmatprep.subr.mxu0 0.0
    %1861 = vmatpush1.msra.mxu0 0.0
    %1862 = vmatprep.subr.mxu0 0.0
    %1863 = vmatpush1.msra.mxu0 0.0
    %1864 = vmatprep.subr.mxu0 0.0
    %1865 = vmatpush1.msra.mxu0 0.0
    %1866 = vmatprep.subr.mxu0 0.0
    %1867 = vmatpush1.msra.mxu0 0.0
    %1868 = vmatprep.subr.mxu0 0.0
    %1869 = vmatpush1.msra.mxu0 0.0
    %1870 = vmatprep.subr.mxu0 0.0
    %1871 = vmatpush1.msra.mxu0 0.0
    %1872 = vmatprep.subr.mxu0 0.0
    %1873 = vmatpush1.msra.mxu0 0.0
    %1874 = vmatprep.subr.mxu0 0.0
    %1875 = vmatpush1.msra.mxu0 0.0
    %1876 = vmatprep.subr.mxu0 0.0
    %1877 = vmatpush1.msra.mxu0 0.0
    %1878 = vmatprep.subr.mxu0 0.0
    %1879 = vmatpush1.msra.mxu0 0.0
    %1880 = vmatprep.subr.mxu0 0.0
    %1881 = vmatpush1.msra.mxu0 0.0
    %1882 = vmatprep.subr.mxu0 0.0
    %1883 = vmatpush1.msra.mxu0 0.0
    %1884 = vmatprep.subr.mxu0 0.0
    %1885 = vmatpush1.msra.mxu0 0.0
    %1886 = vmatprep.subr.mxu0 0.0
    %1887 = vmatpush1.msra.mxu0 0.0
    %1888 = vmatprep.subr.mxu0 0.0
    %1889 = vmatpush1.msra.mxu0 0.0
    %1890 = vmatprep.subr.mxu0 0.0
    %1891 = vmatpush1.msra.mxu0 0.0
    %1892 = vmatprep.subr.mxu0 0.0
    %1893 = vmatpush1.msra.mxu0 0.0
    %1894 = vmatprep.subr.mxu0 0.0
    %1895 = vmatpush1.msra.mxu0 0.0
    %1896 = vmatprep.subr.mxu0 0.0
    %1897 = vmatpush1.msra.mxu0 0.0
    %1898 = vmatprep.subr.mxu0 0.0
    %1899 = vmatpush1.msra.mxu0 0.0
    %1900 = vmatprep.subr.mxu0 0.0
    %1901 = vmatpush1.msra.mxu0 0.0
    %1902 = vmatprep.mubr.f32.mxu0 0.0
    %1903 = vmatmul.mubr.f32.gmra.mrb[0].mxu0 %v1694
    %v1904 = vpop.f32.mrb[0].mxu0
    %v1905 = vadd.f32 %v1835, %v1904
    %v1906 = vpop.f32.mrb[0].mxu0
    %1907 = vdwg.mxu0
    %v1908 = vadd.f32 %v1905, %v378
    %v1909 = vxor.u32 %v1908, 2147483648
    %v1910 = vmul.f32 %v1909, 1.442695
    %v1911 = vpow.pop %v1910
    %v1912 = vadd.f32 %v1911, 1.0
    %v1913 = vrcp.pop %v1912
    %v1914 = vmul.f32 1.0, %v1913
    %1915 = vmatprep.subr.mxu0 0.0
    %1916 = vmatpush1.msra.mxu0 %v345
    %1917 = vmatprep.subr.mxu0 0.0
    %1918 = vmatpush1.msra.mxu0 %v346
    %1919 = vmatprep.subr.mxu0 0.0
    %1920 = vmatpush1.msra.mxu0 0.0
    %1921 = vmatprep.subr.mxu0 0.0
    %1922 = vmatpush1.msra.mxu0 0.0
    %1923 = vmatprep.subr.mxu0 0.0
    %1924 = vmatpush1.msra.mxu0 0.0
    %1925 = vmatprep.subr.mxu0 0.0
    %1926 = vmatpush1.msra.mxu0 0.0
    %1927 = vmatprep.subr.mxu0 0.0
    %1928 = vmatpush1.msra.mxu0 0.0
    %1929 = vmatprep.subr.mxu0 0.0
    %1930 = vmatpush1.msra.mxu0 0.0
    %1931 = vmatprep.subr.mxu0 0.0
    %1932 = vmatpush1.msra.mxu0 0.0
    %1933 = vmatprep.subr.mxu0 0.0
    %1934 = vmatpush1.msra.mxu0 0.0
    %1935 = vmatprep.subr.mxu0 0.0
    %1936 = vmatpush1.msra.mxu0 0.0
    %1937 = vmatprep.subr.mxu0 0.0
    %1938 = vmatpush1.msra.mxu0 0.0
    %1939 = vmatprep.subr.mxu0 0.0
    %1940 = vmatpush1.msra.mxu0 0.0
    %1941 = vmatprep.subr.mxu0 0.0
    %1942 = vmatpush1.msra.mxu0 0.0
    %1943 = vmatprep.subr.mxu0 0.0
    %1944 = vmatpush1.msra.mxu0 0.0
    %1945 = vmatprep.subr.mxu0 0.0
    %1946 = vmatpush1.msra.mxu0 0.0
    %1947 = vmatprep.subr.mxu0 0.0
    %1948 = vmatpush1.msra.mxu0 0.0
    %1949 = vmatprep.subr.mxu0 0.0
    %1950 = vmatpush1.msra.mxu0 0.0
    %1951 = vmatprep.subr.mxu0 0.0
    %1952 = vmatpush1.msra.mxu0 0.0
    %1953 = vmatprep.subr.mxu0 0.0
    %1954 = vmatpush1.msra.mxu0 0.0
    %1955 = vmatprep.subr.mxu0 0.0
    %1956 = vmatpush1.msra.mxu0 0.0
    %1957 = vmatprep.subr.mxu0 0.0
    %1958 = vmatpush1.msra.mxu0 0.0
    %1959 = vmatprep.subr.mxu0 0.0
    %1960 = vmatpush1.msra.mxu0 0.0
    %1961 = vmatprep.subr.mxu0 0.0
    %1962 = vmatpush1.msra.mxu0 0.0
    %1963 = vmatprep.subr.mxu0 0.0
    %1964 = vmatpush1.msra.mxu0 0.0
    %1965 = vmatprep.subr.mxu0 0.0
    %1966 = vmatpush1.msra.mxu0 0.0
    %1967 = vmatprep.subr.mxu0 0.0
    %1968 = vmatpush1.msra.mxu0 0.0
    %1969 = vmatprep.subr.mxu0 0.0
    %1970 = vmatpush1.msra.mxu0 0.0
    %1971 = vmatprep.subr.mxu0 0.0
    %1972 = vmatpush1.msra.mxu0 0.0
    %1973 = vmatprep.subr.mxu0 0.0
    %1974 = vmatpush1.msra.mxu0 0.0
    %1975 = vmatprep.subr.mxu0 0.0
    %1976 = vmatpush1.msra.mxu0 0.0
    %1977 = vmatprep.subr.mxu0 0.0
    %1978 = vmatpush1.msra.mxu0 0.0
    %1979 = vmatprep.mubr.f32.mxu0 0.0
    %1980 = vmatmul.mubr.f32.gmra.mrb[0].mxu0 %v1766
    %v1981 = vpop.f32.mrb[0].mxu0
    %v1982 = vadd.f32 %v401, %v1981
    %v1983 = vpop.f32.mrb[0].mxu0
    %1984 = vdwg.mxu0
    %v1985 = vmul.f32 %v1914, %v1982
    %v1986 = vadd.f32 %v1763, %v1985
    %v1987 = vtanh.pop %v1986
    %v1988 = vsub.f32 1.0, %v1914
    %1990 = vrot.lane.b32.xlu0 %v1987, 16
    %v1991 = vpop.permute.xlu0 %1990
    %v1993 = vmul.f32 %v1988, %v1991
    %v1994 = vmul.f32 %v1914, %v1209
    %v1995 = vadd.f32 %v1993, %v1994
    %1997 = vrot.lane.b32.xlu0 %v1995, 112
    %v1998 = vpop.permute.xlu0 %1997
    %2000 = vst.msk [vmem:[#allocation3 + $0x2] sm:$0x3] %vm1214, %v1998
    %2001 = vmatprep.subr.mxu0 0.0
    %2002 = vmatpush1.msra.mxu0 %v331
    %2003 = vmatprep.subr.mxu0 0.0
    %2004 = vmatpush1.msra.mxu0 %v332
    %2005 = vmatprep.subr.mxu0 0.0
    %2006 = vmatpush1.msra.mxu0 0.0
    %2007 = vmatprep.subr.mxu0 0.0
    %2008 = vmatpush1.msra.mxu0 0.0
    %2009 = vmatprep.subr.mxu0 0.0
    %2010 = vmatpush1.msra.mxu0 0.0
    %2011 = vmatprep.subr.mxu0 0.0
    %2012 = vmatpush1.msra.mxu0 0.0
    %2013 = vmatprep.subr.mxu0 0.0
    %2014 = vmatpush1.msra.mxu0 0.0
    %2015 = vmatprep.subr.mxu0 0.0
    %2016 = vmatpush1.msra.mxu0 0.0
    %2017 = vmatprep.subr.mxu0 0.0
    %2018 = vmatpush1.msra.mxu0 0.0
    %2019 = vmatprep.subr.mxu0 0.0
    %2020 = vmatpush1.msra.mxu0 0.0
    %2021 = vmatprep.subr.mxu0 0.0
    %2022 = vmatpush1.msra.mxu0 0.0
    %2023 = vmatprep.subr.mxu0 0.0
    %2024 = vmatpush1.msra.mxu0 0.0
    %2025 = vmatprep.subr.mxu0 0.0
    %2026 = vmatpush1.msra.mxu0 0.0
    %2027 = vmatprep.subr.mxu0 0.0
    %2028 = vmatpush1.msra.mxu0 0.0
    %2029 = vmatprep.subr.mxu0 0.0
    %2030 = vmatpush1.msra.mxu0 0.0
    %2031 = vmatprep.subr.mxu0 0.0
    %2032 = vmatpush1.msra.mxu0 0.0
    %2033 = vmatprep.subr.mxu0 0.0
    %2034 = vmatpush1.msra.mxu0 0.0
    %2035 = vmatprep.subr.mxu0 0.0
    %2036 = vmatpush1.msra.mxu0 0.0
    %2037 = vmatprep.subr.mxu0 0.0
    %2038 = vmatpush1.msra.mxu0 0.0
    %2039 = vmatprep.subr.mxu0 0.0
    %2040 = vmatpush1.msra.mxu0 0.0
    %2041 = vmatprep.subr.mxu0 0.0
    %2042 = vmatpush1.msra.mxu0 0.0
    %2043 = vmatprep.subr.mxu0 0.0
    %2044 = vmatpush1.msra.mxu0 0.0
    %2045 = vmatprep.subr.mxu0 0.0
    %2046 = vmatpush1.msra.mxu0 0.0
    %2047 = vmatprep.subr.mxu0 0.0
    %2048 = vmatpush1.msra.mxu0 0.0
    %2049 = vmatprep.subr.mxu0 0.0
    %2050 = vmatpush1.msra.mxu0 0.0
    %2051 = vmatprep.subr.mxu0 0.0
    %2052 = vmatpush1.msra.mxu0 0.0
    %2053 = vmatprep.subr.mxu0 0.0
    %2054 = vmatpush1.msra.mxu0 0.0
    %2055 = vmatprep.subr.mxu0 0.0
    %2056 = vmatpush1.msra.mxu0 0.0
    %2057 = vmatprep.subr.mxu0 0.0
    %2058 = vmatpush1.msra.mxu0 0.0
    %2059 = vmatprep.subr.mxu0 0.0
    %2060 = vmatpush1.msra.mxu0 0.0
    %2061 = vmatprep.subr.mxu0 0.0
    %2062 = vmatpush1.msra.mxu0 0.0
    %2063 = vmatprep.subr.mxu0 0.0
    %2064 = vmatpush1.msra.mxu0 0.0
    %2065 = vmatprep.mubr.f32.mxu0 0.0
    %2066 = vmatmul.mubr.f32.gmra.mrb[0].mxu0 %v1391
    %v2067 = vpop.f32.mrb[0].mxu0
    %v2068 = vadd.f32 0.0, %v2067
    %v2069 = vpop.f32.mrb[0].mxu0
    %2070 = vdwg.mxu0
    %v2072 = vrot.slane %v2068, 4
    %v2074 = vadd.f32 %v323, %v2072
    %v2075 = vadd.f32 %v2074, %v362
    %v2076 = vxor.u32 %v2075, 2147483648
    %v2077 = vmul.f32 %v2076, 1.442695
    %v2078 = vpow.pop %v2077
    %v2079 = vadd.f32 %v2078, 1.0
    %v2080 = vrcp.pop %v2079
    %v2081 = vmul.f32 1.0, %v2080
    %2082 = vmatprep.subr.mxu0 0.0
    %2083 = vmatpush1.msra.mxu0 %v339
    %2084 = vmatprep.subr.mxu0 0.0
    %2085 = vmatpush1.msra.mxu0 %v340
    %2086 = vmatprep.subr.mxu0 0.0
    %2087 = vmatpush1.msra.mxu0 0.0
    %2088 = vmatprep.subr.mxu0 0.0
    %2089 = vmatpush1.msra.mxu0 0.0
    %2090 = vmatprep.subr.mxu0 0.0
    %2091 = vmatpush1.msra.mxu0 0.0
    %2092 = vmatprep.subr.mxu0 0.0
    %2093 = vmatpush1.msra.mxu0 0.0
    %2094 = vmatprep.subr.mxu0 0.0
    %2095 = vmatpush1.msra.mxu0 0.0
    %2096 = vmatprep.subr.mxu0 0.0
    %2097 = vmatpush1.msra.mxu0 0.0
    %2098 = vmatprep.subr.mxu0 0.0
    %2099 = vmatpush1.msra.mxu0 0.0
    %2100 = vmatprep.subr.mxu0 0.0
    %2101 = vmatpush1.msra.mxu0 0.0
    %2102 = vmatprep.subr.mxu0 0.0
    %2103 = vmatpush1.msra.mxu0 0.0
    %2104 = vmatprep.subr.mxu0 0.0
    %2105 = vmatpush1.msra.mxu0 0.0
    %2106 = vmatprep.subr.mxu0 0.0
    %2107 = vmatpush1.msra.mxu0 0.0
    %2108 = vmatprep.subr.mxu0 0.0
    %2109 = vmatpush1.msra.mxu0 0.0
    %2110 = vmatprep.subr.mxu0 0.0
    %2111 = vmatpush1.msra.mxu0 0.0
    %2112 = vmatprep.subr.mxu0 0.0
    %2113 = vmatpush1.msra.mxu0 0.0
    %2114 = vmatprep.subr.mxu0 0.0
    %2115 = vmatpush1.msra.mxu0 0.0
    %2116 = vmatprep.subr.mxu0 0.0
    %2117 = vmatpush1.msra.mxu0 0.0
    %2118 = vmatprep.subr.mxu0 0.0
    %2119 = vmatpush1.msra.mxu0 0.0
    %2120 = vmatprep.subr.mxu0 0.0
    %2121 = vmatpush1.msra.mxu0 0.0
    %2122 = vmatprep.subr.mxu0 0.0
    %2123 = vmatpush1.msra.mxu0 0.0
    %2124 = vmatprep.subr.mxu0 0.0
    %2125 = vmatpush1.msra.mxu0 0.0
    %2126 = vmatprep.subr.mxu0 0.0
    %2127 = vmatpush1.msra.mxu0 0.0
    %2128 = vmatprep.subr.mxu0 0.0
    %2129 = vmatpush1.msra.mxu0 0.0
    %2130 = vmatprep.subr.mxu0 0.0
    %2131 = vmatpush1.msra.mxu0 0.0
    %2132 = vmatprep.subr.mxu0 0.0
    %2133 = vmatpush1.msra.mxu0 0.0
    %2134 = vmatprep.subr.mxu0 0.0
    %2135 = vmatpush1.msra.mxu0 0.0
    %2136 = vmatprep.subr.mxu0 0.0
    %2137 = vmatpush1.msra.mxu0 0.0
    %2138 = vmatprep.subr.mxu0 0.0
    %2139 = vmatpush1.msra.mxu0 0.0
    %2140 = vmatprep.subr.mxu0 0.0
    %2141 = vmatpush1.msra.mxu0 0.0
    %2142 = vmatprep.subr.mxu0 0.0
    %2143 = vmatpush1.msra.mxu0 0.0
    %2144 = vmatprep.subr.mxu0 0.0
    %2145 = vmatpush1.msra.mxu0 0.0
    %2146 = vmatprep.mubr.f32.mxu0 0.0
    %2147 = vmatmul.mubr.f32.gmra.mrb[0].mxu0 %v1391
    %v2148 = vpop.f32.mrb[0].mxu0
    %v2149 = vadd.f32 %v385, %v2148
    %v2150 = vpop.f32.mrb[0].mxu0
    %2151 = vdwg.mxu0
    %v2153 = vrot.slane %v2149, 4
    %v2155 = vmul.f32 %v2081, %v2153
    %2157 = vrot.lane.b32.xlu0 %v2155, 32
    %v2158 = vpop.permute.xlu0 %2157
    %v2160 = vadd.f32 %v323, %v2158
    %v2161 = vtanh.pop %v2160
    %v2162 = vsub.f32 1.0, %v2081
    %2164 = vrot.lane.b32.xlu0 %v2161, 112
    %v2165 = vpop.permute.xlu0 %2164
    %v2167 = vmul.f32 %v2162, %v2165
    %v2168 = vrot.slane %v1386, 6
    %v2170 = vmul.f32 %v2081, %v2168
    %v2171 = vadd.f32 %v2167, %v2170
    %v2173 = vrot.slane %v2171, 4
    %2174 = vrot.lane.b32.xlu0 %v2173, 112
    %v2175 = vpop.permute.xlu0 %2174
    %v2176 = vsel %vm249, %v2175, 0
    %2178 = vmatprep.subr.mxu0 0.0
    %2179 = vmatpush1.msra.mxu0 %v352
    %2180 = vmatprep.subr.mxu0 0.0
    %2181 = vmatpush1.msra.mxu0 %v353
    %2182 = vmatprep.subr.mxu0 0.0
    %2183 = vmatpush1.msra.mxu0 0.0
    %2184 = vmatprep.subr.mxu0 0.0
    %2185 = vmatpush1.msra.mxu0 0.0
    %2186 = vmatprep.subr.mxu0 0.0
    %2187 = vmatpush1.msra.mxu0 0.0
    %2188 = vmatprep.subr.mxu0 0.0
    %2189 = vmatpush1.msra.mxu0 0.0
    %2190 = vmatprep.subr.mxu0 0.0
    %2191 = vmatpush1.msra.mxu0 0.0
    %2192 = vmatprep.subr.mxu0 0.0
    %2193 = vmatpush1.msra.mxu0 0.0
    %2194 = vmatprep.subr.mxu0 0.0
    %2195 = vmatpush1.msra.mxu0 0.0
    %2196 = vmatprep.subr.mxu0 0.0
    %2197 = vmatpush1.msra.mxu0 0.0
    %2198 = vmatprep.subr.mxu0 0.0
    %2199 = vmatpush1.msra.mxu0 0.0
    %2200 = vmatprep.subr.mxu0 0.0
    %2201 = vmatpush1.msra.mxu0 0.0
    %2202 = vmatprep.subr.mxu0 0.0
    %2203 = vmatpush1.msra.mxu0 0.0
    %2204 = vmatprep.subr.mxu0 0.0
    %2205 = vmatpush1.msra.mxu0 0.0
    %2206 = vmatprep.subr.mxu0 0.0
    %2207 = vmatpush1.msra.mxu0 0.0
    %2208 = vmatprep.subr.mxu0 0.0
    %2209 = vmatpush1.msra.mxu0 0.0
    %2210 = vmatprep.subr.mxu0 0.0
    %2211 = vmatpush1.msra.mxu0 0.0
    %2212 = vmatprep.subr.mxu0 0.0
    %2213 = vmatpush1.msra.mxu0 0.0
    %2214 = vmatprep.subr.mxu0 0.0
    %2215 = vmatpush1.msra.mxu0 0.0
    %2216 = vmatprep.subr.mxu0 0.0
    %2217 = vmatpush1.msra.mxu0 0.0
    %2218 = vmatprep.subr.mxu0 0.0
    %2219 = vmatpush1.msra.mxu0 0.0
    %2220 = vmatprep.subr.mxu0 0.0
    %2221 = vmatpush1.msra.mxu0 0.0
    %2222 = vmatprep.subr.mxu0 0.0
    %2223 = vmatpush1.msra.mxu0 0.0
    %2224 = vmatprep.subr.mxu0 0.0
    %2225 = vmatpush1.msra.mxu0 0.0
    %2226 = vmatprep.subr.mxu0 0.0
    %2227 = vmatpush1.msra.mxu0 0.0
    %2228 = vmatprep.subr.mxu0 0.0
    %2229 = vmatpush1.msra.mxu0 0.0
    %2230 = vmatprep.subr.mxu0 0.0
    %2231 = vmatpush1.msra.mxu0 0.0
    %2232 = vmatprep.subr.mxu0 0.0
    %2233 = vmatpush1.msra.mxu0 0.0
    %2234 = vmatprep.subr.mxu0 0.0
    %2235 = vmatpush1.msra.mxu0 0.0
    %2236 = vmatprep.subr.mxu0 0.0
    %2237 = vmatpush1.msra.mxu0 0.0
    %2238 = vmatprep.subr.mxu0 0.0
    %2239 = vmatpush1.msra.mxu0 0.0
    %2240 = vmatprep.subr.mxu0 0.0
    %2241 = vmatpush1.msra.mxu0 0.0
    %2242 = vmatprep.mubr.f32.mxu0 0.0
    %2243 = vmatmul.mubr.f32.gmra.mrb[0].mxu0 %v2176
    %v2244 = vpop.f32.mrb[0].mxu0
    %v2245 = vadd.f32 %v408, %v2244
    %v2246 = vpop.f32.mrb[0].mxu0
    %2247 = vdwg.mxu0
    %2248 = vmatprep.subr.mxu0 0.0
    %2249 = vmatpush1.msra.mxu0 %v334
    %2250 = vmatprep.subr.mxu0 0.0
    %2251 = vmatpush1.msra.mxu0 %v335
    %2252 = vmatprep.subr.mxu0 0.0
    %2253 = vmatpush1.msra.mxu0 0.0
    %2254 = vmatprep.subr.mxu0 0.0
    %2255 = vmatpush1.msra.mxu0 0.0
    %2256 = vmatprep.subr.mxu0 0.0
    %2257 = vmatpush1.msra.mxu0 0.0
    %2258 = vmatprep.subr.mxu0 0.0
    %2259 = vmatpush1.msra.mxu0 0.0
    %2260 = vmatprep.subr.mxu0 0.0
    %2261 = vmatpush1.msra.mxu0 0.0
    %2262 = vmatprep.subr.mxu0 0.0
    %2263 = vmatpush1.msra.mxu0 0.0
    %2264 = vmatprep.subr.mxu0 0.0
    %2265 = vmatpush1.msra.mxu0 0.0
    %2266 = vmatprep.subr.mxu0 0.0
    %2267 = vmatpush1.msra.mxu0 0.0
    %2268 = vmatprep.subr.mxu0 0.0
    %2269 = vmatpush1.msra.mxu0 0.0
    %2270 = vmatprep.subr.mxu0 0.0
    %2271 = vmatpush1.msra.mxu0 0.0
    %2272 = vmatprep.subr.mxu0 0.0
    %2273 = vmatpush1.msra.mxu0 0.0
    %2274 = vmatprep.subr.mxu0 0.0
    %2275 = vmatpush1.msra.mxu0 0.0
    %2276 = vmatprep.subr.mxu0 0.0
    %2277 = vmatpush1.msra.mxu0 0.0
    %2278 = vmatprep.subr.mxu0 0.0
    %2279 = vmatpush1.msra.mxu0 0.0
    %2280 = vmatprep.subr.mxu0 0.0
    %2281 = vmatpush1.msra.mxu0 0.0
    %2282 = vmatprep.subr.mxu0 0.0
    %2283 = vmatpush1.msra.mxu0 0.0
    %2284 = vmatprep.subr.mxu0 0.0
    %2285 = vmatpush1.msra.mxu0 0.0
    %2286 = vmatprep.subr.mxu0 0.0
    %2287 = vmatpush1.msra.mxu0 0.0
    %2288 = vmatprep.subr.mxu0 0.0
    %2289 = vmatpush1.msra.mxu0 0.0
    %2290 = vmatprep.subr.mxu0 0.0
    %2291 = vmatpush1.msra.mxu0 0.0
    %2292 = vmatprep.subr.mxu0 0.0
    %2293 = vmatpush1.msra.mxu0 0.0
    %2294 = vmatprep.subr.mxu0 0.0
    %2295 = vmatpush1.msra.mxu0 0.0
    %2296 = vmatprep.subr.mxu0 0.0
    %2297 = vmatpush1.msra.mxu0 0.0
    %2298 = vmatprep.subr.mxu0 0.0
    %2299 = vmatpush1.msra.mxu0 0.0
    %2300 = vmatprep.subr.mxu0 0.0
    %2301 = vmatpush1.msra.mxu0 0.0
    %2302 = vmatprep.subr.mxu0 0.0
    %2303 = vmatpush1.msra.mxu0 0.0
    %2304 = vmatprep.subr.mxu0 0.0
    %2305 = vmatpush1.msra.mxu0 0.0
    %2306 = vmatprep.subr.mxu0 0.0
    %2307 = vmatpush1.msra.mxu0 0.0
    %2308 = vmatprep.subr.mxu0 0.0
    %2309 = vmatpush1.msra.mxu0 0.0
    %2310 = vmatprep.subr.mxu0 0.0
    %2311 = vmatpush1.msra.mxu0 0.0
    %2312 = vmatprep.mubr.f32.mxu0 0.0
    %2313 = vmatmul.mubr.f32.gmra.mrb[0].mxu0 %v1694
    %v2314 = vpop.f32.mrb[0].mxu0
    %v2315 = vadd.f32 0.0, %v2314
    %v2316 = vpop.f32.mrb[0].mxu0
    %2317 = vdwg.mxu0
    %2318 = vmatprep.subr.mxu0 0.0
    %2319 = vmatpush1.msra.mxu0 %v347
    %2320 = vmatprep.subr.mxu0 0.0
    %2321 = vmatpush1.msra.mxu0 %v348
    %2322 = vmatprep.subr.mxu0 0.0
    %2323 = vmatpush1.msra.mxu0 0.0
    %2324 = vmatprep.subr.mxu0 0.0
    %2325 = vmatpush1.msra.mxu0 0.0
    %2326 = vmatprep.subr.mxu0 0.0
    %2327 = vmatpush1.msra.mxu0 0.0
    %2328 = vmatprep.subr.mxu0 0.0
    %2329 = vmatpush1.msra.mxu0 0.0
    %2330 = vmatprep.subr.mxu0 0.0
    %2331 = vmatpush1.msra.mxu0 0.0
    %2332 = vmatprep.subr.mxu0 0.0
    %2333 = vmatpush1.msra.mxu0 0.0
    %2334 = vmatprep.subr.mxu0 0.0
    %2335 = vmatpush1.msra.mxu0 0.0
    %2336 = vmatprep.subr.mxu0 0.0
    %2337 = vmatpush1.msra.mxu0 0.0
    %2338 = vmatprep.subr.mxu0 0.0
    %2339 = vmatpush1.msra.mxu0 0.0
    %2340 = vmatprep.subr.mxu0 0.0
    %2341 = vmatpush1.msra.mxu0 0.0
    %2342 = vmatprep.subr.mxu0 0.0
    %2343 = vmatpush1.msra.mxu0 0.0
    %2344 = vmatprep.subr.mxu0 0.0
    %2345 = vmatpush1.msra.mxu0 0.0
    %2346 = vmatprep.subr.mxu0 0.0
    %2347 = vmatpush1.msra.mxu0 0.0
    %2348 = vmatprep.subr.mxu0 0.0
    %2349 = vmatpush1.msra.mxu0 0.0
    %2350 = vmatprep.subr.mxu0 0.0
    %2351 = vmatpush1.msra.mxu0 0.0
    %2352 = vmatprep.subr.mxu0 0.0
    %2353 = vmatpush1.msra.mxu0 0.0
    %2354 = vmatprep.subr.mxu0 0.0
    %2355 = vmatpush1.msra.mxu0 0.0
    %2356 = vmatprep.subr.mxu0 0.0
    %2357 = vmatpush1.msra.mxu0 0.0
    %2358 = vmatprep.subr.mxu0 0.0
    %2359 = vmatpush1.msra.mxu0 0.0
    %2360 = vmatprep.subr.mxu0 0.0
    %2361 = vmatpush1.msra.mxu0 0.0
    %2362 = vmatprep.subr.mxu0 0.0
    %2363 = vmatpush1.msra.mxu0 0.0
    %2364 = vmatprep.subr.mxu0 0.0
    %2365 = vmatpush1.msra.mxu0 0.0
    %2366 = vmatprep.subr.mxu0 0.0
    %2367 = vmatpush1.msra.mxu0 0.0
    %2368 = vmatprep.subr.mxu0 0.0
    %2369 = vmatpush1.msra.mxu0 0.0
    %2370 = vmatprep.subr.mxu0 0.0
    %2371 = vmatpush1.msra.mxu0 0.0
    %2372 = vmatprep.subr.mxu0 0.0
    %2373 = vmatpush1.msra.mxu0 0.0
    %2374 = vmatprep.subr.mxu0 0.0
    %2375 = vmatpush1.msra.mxu0 0.0
    %2376 = vmatprep.subr.mxu0 0.0
    %2377 = vmatpush1.msra.mxu0 0.0
    %2378 = vmatprep.subr.mxu0 0.0
    %2379 = vmatpush1.msra.mxu0 0.0
    %2380 = vmatprep.subr.mxu0 0.0
    %2381 = vmatpush1.msra.mxu0 0.0
    %2382 = vmatprep.mubr.f32.mxu0 0.0
    %2383 = vmatmul.mubr.f32.gmra.mrb[0].mxu0 %v2176
    %v2384 = vpop.f32.mrb[0].mxu0
    %v2385 = vadd.f32 %v2315, %v2384
    %v2386 = vpop.f32.mrb[0].mxu0
    %2387 = vdwg.mxu0
    %v2388 = vadd.f32 %v2385, %v370
    %v2389 = vxor.u32 %v2388, 2147483648
    %v2390 = vmul.f32 %v2389, 1.442695
    %v2391 = vpow.pop %v2390
    %v2392 = vadd.f32 %v2391, 1.0
    %v2393 = vrcp.pop %v2392
    %v2394 = vmul.f32 1.0, %v2393
    %2395 = vmatprep.subr.mxu0 0.0
    %2396 = vmatpush1.msra.mxu0 %v342
    %2397 = vmatprep.subr.mxu0 0.0
    %2398 = vmatpush1.msra.mxu0 %v343
    %2399 = vmatprep.subr.mxu0 0.0
    %2400 = vmatpush1.msra.mxu0 0.0
    %2401 = vmatprep.subr.mxu0 0.0
    %2402 = vmatpush1.msra.mxu0 0.0
    %2403 = vmatprep.subr.mxu0 0.0
    %2404 = vmatpush1.msra.mxu0 0.0
    %2405 = vmatprep.subr.mxu0 0.0
    %2406 = vmatpush1.msra.mxu0 0.0
    %2407 = vmatprep.subr.mxu0 0.0
    %2408 = vmatpush1.msra.mxu0 0.0
    %2409 = vmatprep.subr.mxu0 0.0
    %2410 = vmatpush1.msra.mxu0 0.0
    %2411 = vmatprep.subr.mxu0 0.0
    %2412 = vmatpush1.msra.mxu0 0.0
    %2413 = vmatprep.subr.mxu0 0.0
    %2414 = vmatpush1.msra.mxu0 0.0
    %2415 = vmatprep.subr.mxu0 0.0
    %2416 = vmatpush1.msra.mxu0 0.0
    %2417 = vmatprep.subr.mxu0 0.0
    %2418 = vmatpush1.msra.mxu0 0.0
    %2419 = vmatprep.subr.mxu0 0.0
    %2420 = vmatpush1.msra.mxu0 0.0
    %2421 = vmatprep.subr.mxu0 0.0
    %2422 = vmatpush1.msra.mxu0 0.0
    %2423 = vmatprep.subr.mxu0 0.0
    %2424 = vmatpush1.msra.mxu0 0.0
    %2425 = vmatprep.subr.mxu0 0.0
    %2426 = vmatpush1.msra.mxu0 0.0
    %2427 = vmatprep.subr.mxu0 0.0
    %2428 = vmatpush1.msra.mxu0 0.0
    %2429 = vmatprep.subr.mxu0 0.0
    %2430 = vmatpush1.msra.mxu0 0.0
    %2431 = vmatprep.subr.mxu0 0.0
    %2432 = vmatpush1.msra.mxu0 0.0
    %2433 = vmatprep.subr.mxu0 0.0
    %2434 = vmatpush1.msra.mxu0 0.0
    %2435 = vmatprep.subr.mxu0 0.0
    %2436 = vmatpush1.msra.mxu0 0.0
    %2437 = vmatprep.subr.mxu0 0.0
    %2438 = vmatpush1.msra.mxu0 0.0
    %2439 = vmatprep.subr.mxu0 0.0
    %2440 = vmatpush1.msra.mxu0 0.0
    %2441 = vmatprep.subr.mxu0 0.0
    %2442 = vmatpush1.msra.mxu0 0.0
    %2443 = vmatprep.subr.mxu0 0.0
    %2444 = vmatpush1.msra.mxu0 0.0
    %2445 = vmatprep.subr.mxu0 0.0
    %2446 = vmatpush1.msra.mxu0 0.0
    %2447 = vmatprep.subr.mxu0 0.0
    %2448 = vmatpush1.msra.mxu0 0.0
    %2449 = vmatprep.subr.mxu0 0.0
    %2450 = vmatpush1.msra.mxu0 0.0
    %2451 = vmatprep.subr.mxu0 0.0
    %2452 = vmatpush1.msra.mxu0 0.0
    %2453 = vmatprep.subr.mxu0 0.0
    %2454 = vmatpush1.msra.mxu0 0.0
    %2455 = vmatprep.subr.mxu0 0.0
    %2456 = vmatpush1.msra.mxu0 0.0
    %2457 = vmatprep.subr.mxu0 0.0
    %2458 = vmatpush1.msra.mxu0 0.0
    %2459 = vmatprep.mubr.f32.mxu0 0.0
    %2460 = vmatmul.mubr.f32.gmra.mrb[0].mxu0 %v1694
    %v2461 = vpop.f32.mrb[0].mxu0
    %v2462 = vadd.f32 %v393, %v2461
    %v2463 = vpop.f32.mrb[0].mxu0
    %2464 = vdwg.mxu0
    %v2465 = vmul.f32 %v2394, %v2462
    %v2466 = vadd.f32 %v2245, %v2465
    %v2467 = vtanh.pop %v2466
    %v2468 = vsub.f32 1.0, %v2394
    %2470 = vrot.lane.b32.xlu0 %v2467, 16
    %v2471 = vpop.permute.xlu0 %2470
    %v2473 = vmul.f32 %v2468, %v2471
    %v2474 = vmul.f32 %v2394, %v1690
    %v2475 = vadd.f32 %v2473, %v2474
    %2477 = vrot.lane.b32.xlu0 %v2475, 112
    %v2478 = vpop.permute.xlu0 %2477
    %v2479 = vsel %vm249, %v2478, 0
    %2481 = vmatprep.subr.mxu0 0.0
    %2482 = vmatpush1.msra.mxu0 %v355
    %2483 = vmatprep.subr.mxu0 0.0
    %2484 = vmatpush1.msra.mxu0 %v356
    %2485 = vmatprep.subr.mxu0 0.0
    %2486 = vmatpush1.msra.mxu0 0.0
    %2487 = vmatprep.subr.mxu0 0.0
    %2488 = vmatpush1.msra.mxu0 0.0
    %2489 = vmatprep.subr.mxu0 0.0
    %2490 = vmatpush1.msra.mxu0 0.0
    %2491 = vmatprep.subr.mxu0 0.0
    %2492 = vmatpush1.msra.mxu0 0.0
    %2493 = vmatprep.subr.mxu0 0.0
    %2494 = vmatpush1.msra.mxu0 0.0
    %2495 = vmatprep.subr.mxu0 0.0
    %2496 = vmatpush1.msra.mxu0 0.0
    %2497 = vmatprep.subr.mxu0 0.0
    %2498 = vmatpush1.msra.mxu0 0.0
    %2499 = vmatprep.subr.mxu0 0.0
    %2500 = vmatpush1.msra.mxu0 0.0
    %2501 = vmatprep.subr.mxu0 0.0
    %2502 = vmatpush1.msra.mxu0 0.0
    %2503 = vmatprep.subr.mxu0 0.0
    %2504 = vmatpush1.msra.mxu0 0.0
    %2505 = vmatprep.subr.mxu0 0.0
    %2506 = vmatpush1.msra.mxu0 0.0
    %2507 = vmatprep.subr.mxu0 0.0
    %2508 = vmatpush1.msra.mxu0 0.0
    %2509 = vmatprep.subr.mxu0 0.0
    %2510 = vmatpush1.msra.mxu0 0.0
    %2511 = vmatprep.subr.mxu0 0.0
    %2512 = vmatpush1.msra.mxu0 0.0
    %2513 = vmatprep.subr.mxu0 0.0
    %2514 = vmatpush1.msra.mxu0 0.0
    %2515 = vmatprep.subr.mxu0 0.0
    %2516 = vmatpush1.msra.mxu0 0.0
    %2517 = vmatprep.subr.mxu0 0.0
    %2518 = vmatpush1.msra.mxu0 0.0
    %2519 = vmatprep.subr.mxu0 0.0
    %2520 = vmatpush1.msra.mxu0 0.0
    %2521 = vmatprep.subr.mxu0 0.0
    %2522 = vmatpush1.msra.mxu0 0.0
    %2523 = vmatprep.subr.mxu0 0.0
    %2524 = vmatpush1.msra.mxu0 0.0
    %2525 = vmatprep.subr.mxu0 0.0
    %2526 = vmatpush1.msra.mxu0 0.0
    %2527 = vmatprep.subr.mxu0 0.0
    %2528 = vmatpush1.msra.mxu0 0.0
    %2529 = vmatprep.subr.mxu0 0.0
    %2530 = vmatpush1.msra.mxu0 0.0
    %2531 = vmatprep.subr.mxu0 0.0
    %2532 = vmatpush1.msra.mxu0 0.0
    %2533 = vmatprep.subr.mxu0 0.0
    %2534 = vmatpush1.msra.mxu0 0.0
    %2535 = vmatprep.subr.mxu0 0.0
    %2536 = vmatpush1.msra.mxu0 0.0
    %2537 = vmatprep.subr.mxu0 0.0
    %2538 = vmatpush1.msra.mxu0 0.0
    %2539 = vmatprep.subr.mxu0 0.0
    %2540 = vmatpush1.msra.mxu0 0.0
    %2541 = vmatprep.subr.mxu0 0.0
    %2542 = vmatpush1.msra.mxu0 0.0
    %2543 = vmatprep.subr.mxu0 0.0
    %2544 = vmatpush1.msra.mxu0 0.0
    %2545 = vmatprep.mubr.f32.mxu0 0.0
    %2546 = vmatmul.mubr.f32.gmra.mrb[0].mxu0 %v2479
    %v2547 = vpop.f32.mrb[0].mxu0
    %v2548 = vadd.f32 %v416, %v2547
    %v2549 = vpop.f32.mrb[0].mxu0
    %2550 = vdwg.mxu0
    %v2551 = vsel %vm249, %v1998, 0
    %2553 = vmatprep.subr.mxu0 0.0
    %2554 = vmatpush1.msra.mxu0 %v337
    %2555 = vmatprep.subr.mxu0 0.0
    %2556 = vmatpush1.msra.mxu0 %v338
    %2557 = vmatprep.subr.mxu0 0.0
    %2558 = vmatpush1.msra.mxu0 0.0
    %2559 = vmatprep.subr.mxu0 0.0
    %2560 = vmatpush1.msra.mxu0 0.0
    %2561 = vmatprep.subr.mxu0 0.0
    %2562 = vmatpush1.msra.mxu0 0.0
    %2563 = vmatprep.subr.mxu0 0.0
    %2564 = vmatpush1.msra.mxu0 0.0
    %2565 = vmatprep.subr.mxu0 0.0
    %2566 = vmatpush1.msra.mxu0 0.0
    %2567 = vmatprep.subr.mxu0 0.0
    %2568 = vmatpush1.msra.mxu0 0.0
    %2569 = vmatprep.subr.mxu0 0.0
    %2570 = vmatpush1.msra.mxu0 0.0
    %2571 = vmatprep.subr.mxu0 0.0
    %2572 = vmatpush1.msra.mxu0 0.0
    %2573 = vmatprep.subr.mxu0 0.0
    %2574 = vmatpush1.msra.mxu0 0.0
    %2575 = vmatprep.subr.mxu0 0.0
    %2576 = vmatpush1.msra.mxu0 0.0
    %2577 = vmatprep.subr.mxu0 0.0
    %2578 = vmatpush1.msra.mxu0 0.0
    %2579 = vmatprep.subr.mxu0 0.0
    %2580 = vmatpush1.msra.mxu0 0.0
    %2581 = vmatprep.subr.mxu0 0.0
    %2582 = vmatpush1.msra.mxu0 0.0
    %2583 = vmatprep.subr.mxu0 0.0
    %2584 = vmatpush1.msra.mxu0 0.0
    %2585 = vmatprep.subr.mxu0 0.0
    %2586 = vmatpush1.msra.mxu0 0.0
    %2587 = vmatprep.subr.mxu0 0.0
    %2588 = vmatpush1.msra.mxu0 0.0
    %2589 = vmatprep.subr.mxu0 0.0
    %2590 = vmatpush1.msra.mxu0 0.0
    %2591 = vmatprep.subr.mxu0 0.0
    %2592 = vmatpush1.msra.mxu0 0.0
    %2593 = vmatprep.subr.mxu0 0.0
    %2594 = vmatpush1.msra.mxu0 0.0
    %2595 = vmatprep.subr.mxu0 0.0
    %2596 = vmatpush1.msra.mxu0 0.0
    %2597 = vmatprep.subr.mxu0 0.0
    %2598 = vmatpush1.msra.mxu0 0.0
    %2599 = vmatprep.subr.mxu0 0.0
    %2600 = vmatpush1.msra.mxu0 0.0
    %2601 = vmatprep.subr.mxu0 0.0
    %2602 = vmatpush1.msra.mxu0 0.0
    %2603 = vmatprep.subr.mxu0 0.0
    %2604 = vmatpush1.msra.mxu0 0.0
    %2605 = vmatprep.subr.mxu0 0.0
    %2606 = vmatpush1.msra.mxu0 0.0
    %2607 = vmatprep.subr.mxu0 0.0
    %2608 = vmatpush1.msra.mxu0 0.0
    %2609 = vmatprep.subr.mxu0 0.0
    %2610 = vmatpush1.msra.mxu0 0.0
    %2611 = vmatprep.subr.mxu0 0.0
    %2612 = vmatpush1.msra.mxu0 0.0
    %2613 = vmatprep.subr.mxu0 0.0
    %2614 = vmatpush1.msra.mxu0 0.0
    %2615 = vmatprep.subr.mxu0 0.0
    %2616 = vmatpush1.msra.mxu0 0.0
    %2617 = vmatprep.mubr.f32.mxu0 0.0
    %2618 = vmatmul.mubr.f32.gmra.mrb[0].mxu0 %v2551
    %v2619 = vpop.f32.mrb[0].mxu0
    %v2620 = vadd.f32 0.0, %v2619
    %v2621 = vpop.f32.mrb[0].mxu0
    %2622 = vdwg.mxu0
    %2623 = vmatprep.subr.mxu0 0.0
    %2624 = vmatpush1.msra.mxu0 %v350
    %2625 = vmatprep.subr.mxu0 0.0
    %2626 = vmatpush1.msra.mxu0 %v351
    %2627 = vmatprep.subr.mxu0 0.0
    %2628 = vmatpush1.msra.mxu0 0.0
    %2629 = vmatprep.subr.mxu0 0.0
    %2630 = vmatpush1.msra.mxu0 0.0
    %2631 = vmatprep.subr.mxu0 0.0
    %2632 = vmatpush1.msra.mxu0 0.0
    %2633 = vmatprep.subr.mxu0 0.0
    %2634 = vmatpush1.msra.mxu0 0.0
    %2635 = vmatprep.subr.mxu0 0.0
    %2636 = vmatpush1.msra.mxu0 0.0
    %2637 = vmatprep.subr.mxu0 0.0
    %2638 = vmatpush1.msra.mxu0 0.0
    %2639 = vmatprep.subr.mxu0 0.0
    %2640 = vmatpush1.msra.mxu0 0.0
    %2641 = vmatprep.subr.mxu0 0.0
    %2642 = vmatpush1.msra.mxu0 0.0
    %2643 = vmatprep.subr.mxu0 0.0
    %2644 = vmatpush1.msra.mxu0 0.0
    %2645 = vmatprep.subr.mxu0 0.0
    %2646 = vmatpush1.msra.mxu0 0.0
    %2647 = vmatprep.subr.mxu0 0.0
    %2648 = vmatpush1.msra.mxu0 0.0
    %2649 = vmatprep.subr.mxu0 0.0
    %2650 = vmatpush1.msra.mxu0 0.0
    %2651 = vmatprep.subr.mxu0 0.0
    %2652 = vmatpush1.msra.mxu0 0.0
    %2653 = vmatprep.subr.mxu0 0.0
    %2654 = vmatpush1.msra.mxu0 0.0
    %2655 = vmatprep.subr.mxu0 0.0
    %2656 = vmatpush1.msra.mxu0 0.0
    %2657 = vmatprep.subr.mxu0 0.0
    %2658 = vmatpush1.msra.mxu0 0.0
    %2659 = vmatprep.subr.mxu0 0.0
    %2660 = vmatpush1.msra.mxu0 0.0
    %2661 = vmatprep.subr.mxu0 0.0
    %2662 = vmatpush1.msra.mxu0 0.0
    %2663 = vmatprep.subr.mxu0 0.0
    %2664 = vmatpush1.msra.mxu0 0.0
    %2665 = vmatprep.subr.mxu0 0.0
    %2666 = vmatpush1.msra.mxu0 0.0
    %2667 = vmatprep.subr.mxu0 0.0
    %2668 = vmatpush1.msra.mxu0 0.0
    %2669 = vmatprep.subr.mxu0 0.0
    %2670 = vmatpush1.msra.mxu0 0.0
    %2671 = vmatprep.subr.mxu0 0.0
    %2672 = vmatpush1.msra.mxu0 0.0
    %2673 = vmatprep.subr.mxu0 0.0
    %2674 = vmatpush1.msra.mxu0 0.0
    %2675 = vmatprep.subr.mxu0 0.0
    %2676 = vmatpush1.msra.mxu0 0.0
    %2677 = vmatprep.subr.mxu0 0.0
    %2678 = vmatpush1.msra.mxu0 0.0
    %2679 = vmatprep.subr.mxu0 0.0
    %2680 = vmatpush1.msra.mxu0 0.0
    %2681 = vmatprep.subr.mxu0 0.0
    %2682 = vmatpush1.msra.mxu0 0.0
    %2683 = vmatprep.subr.mxu0 0.0
    %2684 = vmatpush1.msra.mxu0 0.0
    %2685 = vmatprep.subr.mxu0 0.0
    %2686 = vmatpush1.msra.mxu0 0.0
    %2687 = vmatprep.mubr.f32.mxu0 0.0
    %2688 = vmatmul.mubr.f32.gmra.mrb[0].mxu0 %v2479
    %v2689 = vpop.f32.mrb[0].mxu0
    %v2690 = vadd.f32 %v2620, %v2689
    %v2691 = vpop.f32.mrb[0].mxu0
    %2692 = vdwg.mxu0
    %v2693 = vadd.f32 %v2690, %v378
    %v2694 = vxor.u32 %v2693, 2147483648
    %v2695 = vmul.f32 %v2694, 1.442695
    %v2696 = vpow.pop %v2695
    %v2697 = vadd.f32 %v2696, 1.0
    %v2698 = vrcp.pop %v2697
    %v2699 = vmul.f32 1.0, %v2698
    %2700 = vmatprep.subr.mxu0 0.0
    %2701 = vmatpush1.msra.mxu0 %v345
    %2702 = vmatprep.subr.mxu0 0.0
    %2703 = vmatpush1.msra.mxu0 %v346
    %2704 = vmatprep.subr.mxu0 0.0
    %2705 = vmatpush1.msra.mxu0 0.0
    %2706 = vmatprep.subr.mxu0 0.0
    %2707 = vmatpush1.msra.mxu0 0.0
    %2708 = vmatprep.subr.mxu0 0.0
    %2709 = vmatpush1.msra.mxu0 0.0
    %2710 = vmatprep.subr.mxu0 0.0
    %2711 = vmatpush1.msra.mxu0 0.0
    %2712 = vmatprep.subr.mxu0 0.0
    %2713 = vmatpush1.msra.mxu0 0.0
    %2714 = vmatprep.subr.mxu0 0.0
    %2715 = vmatpush1.msra.mxu0 0.0
    %2716 = vmatprep.subr.mxu0 0.0
    %2717 = vmatpush1.msra.mxu0 0.0
    %2718 = vmatprep.subr.mxu0 0.0
    %2719 = vmatpush1.msra.mxu0 0.0
    %2720 = vmatprep.subr.mxu0 0.0
    %2721 = vmatpush1.msra.mxu0 0.0
    %2722 = vmatprep.subr.mxu0 0.0
    %2723 = vmatpush1.msra.mxu0 0.0
    %2724 = vmatprep.subr.mxu0 0.0
    %2725 = vmatpush1.msra.mxu0 0.0
    %2726 = vmatprep.subr.mxu0 0.0
    %2727 = vmatpush1.msra.mxu0 0.0
    %2728 = vmatprep.subr.mxu0 0.0
    %2729 = vmatpush1.msra.mxu0 0.0
    %2730 = vmatprep.subr.mxu0 0.0
    %2731 = vmatpush1.msra.mxu0 0.0
    %2732 = vmatprep.subr.mxu0 0.0
    %2733 = vmatpush1.msra.mxu0 0.0
    %2734 = vmatprep.subr.mxu0 0.0
    %2735 = vmatpush1.msra.mxu0 0.0
    %2736 = vmatprep.subr.mxu0 0.0
    %2737 = vmatpush1.msra.mxu0 0.0
    %2738 = vmatprep.subr.mxu0 0.0
    %2739 = vmatpush1.msra.mxu0 0.0
    %2740 = vmatprep.subr.mxu0 0.0
    %2741 = vmatpush1.msra.mxu0 0.0
    %2742 = vmatprep.subr.mxu0 0.0
    %2743 = vmatpush1.msra.mxu0 0.0
    %2744 = vmatprep.subr.mxu0 0.0
    %2745 = vmatpush1.msra.mxu0 0.0
    %2746 = vmatprep.subr.mxu0 0.0
    %2747 = vmatpush1.msra.mxu0 0.0
    %2748 = vmatprep.subr.mxu0 0.0
    %2749 = vmatpush1.msra.mxu0 0.0
    %2750 = vmatprep.subr.mxu0 0.0
    %2751 = vmatpush1.msra.mxu0 0.0
    %2752 = vmatprep.subr.mxu0 0.0
    %2753 = vmatpush1.msra.mxu0 0.0
    %2754 = vmatprep.subr.mxu0 0.0
    %2755 = vmatpush1.msra.mxu0 0.0
    %2756 = vmatprep.subr.mxu0 0.0
    %2757 = vmatpush1.msra.mxu0 0.0
    %2758 = vmatprep.subr.mxu0 0.0
    %2759 = vmatpush1.msra.mxu0 0.0
    %2760 = vmatprep.subr.mxu0 0.0
    %2761 = vmatpush1.msra.mxu0 0.0
    %2762 = vmatprep.subr.mxu0 0.0
    %2763 = vmatpush1.msra.mxu0 0.0
    %2764 = vmatprep.mubr.f32.mxu0 0.0
    %2765 = vmatmul.mubr.f32.gmra.mrb[0].mxu0 %v2551
    %v2766 = vpop.f32.mrb[0].mxu0
    %v2767 = vadd.f32 %v401, %v2766
    %v2768 = vpop.f32.mrb[0].mxu0
    %2769 = vdwg.mxu0
    %v2770 = vmul.f32 %v2699, %v2767
    %v2771 = vadd.f32 %v2548, %v2770
    %v2772 = vtanh.pop %v2771
    %v2773 = vsub.f32 1.0, %v2699
    %2775 = vrot.lane.b32.xlu0 %v2772, 16
    %v2776 = vpop.permute.xlu0 %2775
    %v2778 = vmul.f32 %v2773, %v2776
    %v2779 = vmul.f32 %v2699, %v1995
    %v2780 = vadd.f32 %v2778, %v2779
    %2782 = vrot.lane.b32.xlu0 %v2780, 112
    %v2783 = vpop.permute.xlu0 %2782
    %2785 = vst.msk [vmem:[#allocation3 + $0x4] sm:$0x3] %vm1214, %v2783
    %2786 = vmatprep.subr.mxu0 0.0
    %2787 = vmatpush1.msra.mxu0 %v331
    %2788 = vmatprep.subr.mxu0 0.0
    %2789 = vmatpush1.msra.mxu0 %v332
    %2790 = vmatprep.subr.mxu0 0.0
    %2791 = vmatpush1.msra.mxu0 0.0
    %2792 = vmatprep.subr.mxu0 0.0
    %2793 = vmatpush1.msra.mxu0 0.0
    %2794 = vmatprep.subr.mxu0 0.0
    %2795 = vmatpush1.msra.mxu0 0.0
    %2796 = vmatprep.subr.mxu0 0.0
    %2797 = vmatpush1.msra.mxu0 0.0
    %2798 = vmatprep.subr.mxu0 0.0
    %2799 = vmatpush1.msra.mxu0 0.0
    %2800 = vmatprep.subr.mxu0 0.0
    %2801 = vmatpush1.msra.mxu0 0.0
    %2802 = vmatprep.subr.mxu0 0.0
    %2803 = vmatpush1.msra.mxu0 0.0
    %2804 = vmatprep.subr.mxu0 0.0
    %2805 = vmatpush1.msra.mxu0 0.0
    %2806 = vmatprep.subr.mxu0 0.0
    %2807 = vmatpush1.msra.mxu0 0.0
    %2808 = vmatprep.subr.mxu0 0.0
    %2809 = vmatpush1.msra.mxu0 0.0
    %2810 = vmatprep.subr.mxu0 0.0
    %2811 = vmatpush1.msra.mxu0 0.0
    %2812 = vmatprep.subr.mxu0 0.0
    %2813 = vmatpush1.msra.mxu0 0.0
    %2814 = vmatprep.subr.mxu0 0.0
    %2815 = vmatpush1.msra.mxu0 0.0
    %2816 = vmatprep.subr.mxu0 0.0
    %2817 = vmatpush1.msra.mxu0 0.0
    %2818 = vmatprep.subr.mxu0 0.0
    %2819 = vmatpush1.msra.mxu0 0.0
    %2820 = vmatprep.subr.mxu0 0.0
    %2821 = vmatpush1.msra.mxu0 0.0
    %2822 = vmatprep.subr.mxu0 0.0
    %2823 = vmatpush1.msra.mxu0 0.0
    %2824 = vmatprep.subr.mxu0 0.0
    %2825 = vmatpush1.msra.mxu0 0.0
    %2826 = vmatprep.subr.mxu0 0.0
    %2827 = vmatpush1.msra.mxu0 0.0
    %2828 = vmatprep.subr.mxu0 0.0
    %2829 = vmatpush1.msra.mxu0 0.0
    %2830 = vmatprep.subr.mxu0 0.0
    %2831 = vmatpush1.msra.mxu0 0.0
    %2832 = vmatprep.subr.mxu0 0.0
    %2833 = vmatpush1.msra.mxu0 0.0
    %2834 = vmatprep.subr.mxu0 0.0
    %2835 = vmatpush1.msra.mxu0 0.0
    %2836 = vmatprep.subr.mxu0 0.0
    %2837 = vmatpush1.msra.mxu0 0.0
    %2838 = vmatprep.subr.mxu0 0.0
    %2839 = vmatpush1.msra.mxu0 0.0
    %2840 = vmatprep.subr.mxu0 0.0
    %2841 = vmatpush1.msra.mxu0 0.0
    %2842 = vmatprep.subr.mxu0 0.0
    %2843 = vmatpush1.msra.mxu0 0.0
    %2844 = vmatprep.subr.mxu0 0.0
    %2845 = vmatpush1.msra.mxu0 0.0
    %2846 = vmatprep.subr.mxu0 0.0
    %2847 = vmatpush1.msra.mxu0 0.0
    %2848 = vmatprep.subr.mxu0 0.0
    %2849 = vmatpush1.msra.mxu0 0.0
    %2850 = vmatprep.mubr.f32.mxu0 0.0
    %2851 = vmatmul.mubr.f32.gmra.mrb[0].mxu0 %v2176
    %v2852 = vpop.f32.mrb[0].mxu0
    %v2853 = vadd.f32 0.0, %v2852
    %v2854 = vpop.f32.mrb[0].mxu0
    %2855 = vdwg.mxu0
    %v2857 = vrot.slane %v2853, 2
    %v2859 = vadd.f32 %v323, %v2857
    %v2860 = vadd.f32 %v2859, %v362
    %v2861 = vxor.u32 %v2860, 2147483648
    %v2862 = vmul.f32 %v2861, 1.442695
    %v2863 = vpow.pop %v2862
    %v2864 = vadd.f32 %v2863, 1.0
    %v2865 = vrcp.pop %v2864
    %v2866 = vmul.f32 1.0, %v2865
    %2867 = vmatprep.subr.mxu0 0.0
    %2868 = vmatpush1.msra.mxu0 %v339
    %2869 = vmatprep.subr.mxu0 0.0
    %2870 = vmatpush1.msra.mxu0 %v340
    %2871 = vmatprep.subr.mxu0 0.0
    %2872 = vmatpush1.msra.mxu0 0.0
    %2873 = vmatprep.subr.mxu0 0.0
    %2874 = vmatpush1.msra.mxu0 0.0
    %2875 = vmatprep.subr.mxu0 0.0
    %2876 = vmatpush1.msra.mxu0 0.0
    %2877 = vmatprep.subr.mxu0 0.0
    %2878 = vmatpush1.msra.mxu0 0.0
    %2879 = vmatprep.subr.mxu0 0.0
    %2880 = vmatpush1.msra.mxu0 0.0
    %2881 = vmatprep.subr.mxu0 0.0
    %2882 = vmatpush1.msra.mxu0 0.0
    %2883 = vmatprep.subr.mxu0 0.0
    %2884 = vmatpush1.msra.mxu0 0.0
    %2885 = vmatprep.subr.mxu0 0.0
    %2886 = vmatpush1.msra.mxu0 0.0
    %2887 = vmatprep.subr.mxu0 0.0
    %2888 = vmatpush1.msra.mxu0 0.0
    %2889 = vmatprep.subr.mxu0 0.0
    %2890 = vmatpush1.msra.mxu0 0.0
    %2891 = vmatprep.subr.mxu0 0.0
    %2892 = vmatpush1.msra.mxu0 0.0
    %2893 = vmatprep.subr.mxu0 0.0
    %2894 = vmatpush1.msra.mxu0 0.0
    %2895 = vmatprep.subr.mxu0 0.0
    %2896 = vmatpush1.msra.mxu0 0.0
    %2897 = vmatprep.subr.mxu0 0.0
    %2898 = vmatpush1.msra.mxu0 0.0
    %2899 = vmatprep.subr.mxu0 0.0
    %2900 = vmatpush1.msra.mxu0 0.0
    %2901 = vmatprep.subr.mxu0 0.0
    %2902 = vmatpush1.msra.mxu0 0.0
    %2903 = vmatprep.subr.mxu0 0.0
    %2904 = vmatpush1.msra.mxu0 0.0
    %2905 = vmatprep.subr.mxu0 0.0
    %2906 = vmatpush1.msra.mxu0 0.0
    %2907 = vmatprep.subr.mxu0 0.0
    %2908 = vmatpush1.msra.mxu0 0.0
    %2909 = vmatprep.subr.mxu0 0.0
    %2910 = vmatpush1.msra.mxu0 0.0
    %2911 = vmatprep.subr.mxu0 0.0
    %2912 = vmatpush1.msra.mxu0 0.0
    %2913 = vmatprep.subr.mxu0 0.0
    %2914 = vmatpush1.msra.mxu0 0.0
    %2915 = vmatprep.subr.mxu0 0.0
    %2916 = vmatpush1.msra.mxu0 0.0
    %2917 = vmatprep.subr.mxu0 0.0
    %2918 = vmatpush1.msra.mxu0 0.0
    %2919 = vmatprep.subr.mxu0 0.0
    %2920 = vmatpush1.msra.mxu0 0.0
    %2921 = vmatprep.subr.mxu0 0.0
    %2922 = vmatpush1.msra.mxu0 0.0
    %2923 = vmatprep.subr.mxu0 0.0
    %2924 = vmatpush1.msra.mxu0 0.0
    %2925 = vmatprep.subr.mxu0 0.0
    %2926 = vmatpush1.msra.mxu0 0.0
    %2927 = vmatprep.subr.mxu0 0.0
    %2928 = vmatpush1.msra.mxu0 0.0
    %2929 = vmatprep.subr.mxu0 0.0
    %2930 = vmatpush1.msra.mxu0 0.0
    %2931 = vmatprep.mubr.f32.mxu0 0.0
    %2932 = vmatmul.mubr.f32.gmra.mrb[0].mxu0 %v2176
    %v2933 = vpop.f32.mrb[0].mxu0
    %v2934 = vadd.f32 %v385, %v2933
    %v2935 = vpop.f32.mrb[0].mxu0
    %2936 = vdwg.mxu0
    %v2938 = vrot.slane %v2934, 2
    %v2940 = vmul.f32 %v2866, %v2938
    %2942 = vrot.lane.b32.xlu0 %v2940, 32
    %v2943 = vpop.permute.xlu0 %2942
    %v2945 = vadd.f32 %v323, %v2943
    %v2946 = vtanh.pop %v2945
    %v2947 = vsub.f32 1.0, %v2866
    %2949 = vrot.lane.b32.xlu0 %v2946, 112
    %v2950 = vpop.permute.xlu0 %2949
    %v2952 = vmul.f32 %v2947, %v2950
    %v2953 = vrot.slane %v2171, 6
    %v2955 = vmul.f32 %v2866, %v2953
    %v2956 = vadd.f32 %v2952, %v2955
    %v2958 = vrot.slane %v2956, 6
    %2959 = vrot.lane.b32.xlu0 %v2958, 112
    %v2960 = vpop.permute.xlu0 %2959
    %v2961 = vsel %vm249, %v2960, 0
    %2963 = vmatprep.subr.mxu0 0.0
    %2964 = vmatpush1.msra.mxu0 %v352
    %2965 = vmatprep.subr.mxu0 0.0
    %2966 = vmatpush1.msra.mxu0 %v353
    %2967 = vmatprep.subr.mxu0 0.0
    %2968 = vmatpush1.msra.mxu0 0.0
    %2969 = vmatprep.subr.mxu0 0.0
    %2970 = vmatpush1.msra.mxu0 0.0
    %2971 = vmatprep.subr.mxu0 0.0
    %2972 = vmatpush1.msra.mxu0 0.0
    %2973 = vmatprep.subr.mxu0 0.0
    %2974 = vmatpush1.msra.mxu0 0.0
    %2975 = vmatprep.subr.mxu0 0.0
    %2976 = vmatpush1.msra.mxu0 0.0
    %2977 = vmatprep.subr.mxu0 0.0
    %2978 = vmatpush1.msra.mxu0 0.0
    %2979 = vmatprep.subr.mxu0 0.0
    %2980 = vmatpush1.msra.mxu0 0.0
    %2981 = vmatprep.subr.mxu0 0.0
    %2982 = vmatpush1.msra.mxu0 0.0
    %2983 = vmatprep.subr.mxu0 0.0
    %2984 = vmatpush1.msra.mxu0 0.0
    %2985 = vmatprep.subr.mxu0 0.0
    %2986 = vmatpush1.msra.mxu0 0.0
    %2987 = vmatprep.subr.mxu0 0.0
    %2988 = vmatpush1.msra.mxu0 0.0
    %2989 = vmatprep.subr.mxu0 0.0
    %2990 = vmatpush1.msra.mxu0 0.0
    %2991 = vmatprep.subr.mxu0 0.0
    %2992 = vmatpush1.msra.mxu0 0.0
    %2993 = vmatprep.subr.mxu0 0.0
    %2994 = vmatpush1.msra.mxu0 0.0
    %2995 = vmatprep.subr.mxu0 0.0
    %2996 = vmatpush1.msra.mxu0 0.0
    %2997 = vmatprep.subr.mxu0 0.0
    %2998 = vmatpush1.msra.mxu0 0.0
    %2999 = vmatprep.subr.mxu0 0.0
    %3000 = vmatpush1.msra.mxu0 0.0
    %3001 = vmatprep.subr.mxu0 0.0
    %3002 = vmatpush1.msra.mxu0 0.0
    %3003 = vmatprep.subr.mxu0 0.0
    %3004 = vmatpush1.msra.mxu0 0.0
    %3005 = vmatprep.subr.mxu0 0.0
    %3006 = vmatpush1.msra.mxu0 0.0
    %3007 = vmatprep.subr.mxu0 0.0
    %3008 = vmatpush1.msra.mxu0 0.0
    %3009 = vmatprep.subr.mxu0 0.0
    %3010 = vmatpush1.msra.mxu0 0.0
    %3011 = vmatprep.subr.mxu0 0.0
    %3012 = vmatpush1.msra.mxu0 0.0
    %3013 = vmatprep.subr.mxu0 0.0
    %3014 = vmatpush1.msra.mxu0 0.0
    %3015 = vmatprep.subr.mxu0 0.0
    %3016 = vmatpush1.msra.mxu0 0.0
    %3017 = vmatprep.subr.mxu0 0.0
    %3018 = vmatpush1.msra.mxu0 0.0
    %3019 = vmatprep.subr.mxu0 0.0
    %3020 = vmatpush1.msra.mxu0 0.0
    %3021 = vmatprep.subr.mxu0 0.0
    %3022 = vmatpush1.msra.mxu0 0.0
    %3023 = vmatprep.subr.mxu0 0.0
    %3024 = vmatpush1.msra.mxu0 0.0
    %3025 = vmatprep.subr.mxu0 0.0
    %3026 = vmatpush1.msra.mxu0 0.0
    %3027 = vmatprep.mubr.f32.mxu0 0.0
    %3028 = vmatmul.mubr.f32.gmra.mrb[0].mxu0 %v2961
    %v3029 = vpop.f32.mrb[0].mxu0
    %v3030 = vadd.f32 %v408, %v3029
    %v3031 = vpop.f32.mrb[0].mxu0
    %3032 = vdwg.mxu0
    %3033 = vmatprep.subr.mxu0 0.0
    %3034 = vmatpush1.msra.mxu0 %v334
    %3035 = vmatprep.subr.mxu0 0.0
    %3036 = vmatpush1.msra.mxu0 %v335
    %3037 = vmatprep.subr.mxu0 0.0
    %3038 = vmatpush1.msra.mxu0 0.0
    %3039 = vmatprep.subr.mxu0 0.0
    %3040 = vmatpush1.msra.mxu0 0.0
    %3041 = vmatprep.subr.mxu0 0.0
    %3042 = vmatpush1.msra.mxu0 0.0
    %3043 = vmatprep.subr.mxu0 0.0
    %3044 = vmatpush1.msra.mxu0 0.0
    %3045 = vmatprep.subr.mxu0 0.0
    %3046 = vmatpush1.msra.mxu0 0.0
    %3047 = vmatprep.subr.mxu0 0.0
    %3048 = vmatpush1.msra.mxu0 0.0
    %3049 = vmatprep.subr.mxu0 0.0
    %3050 = vmatpush1.msra.mxu0 0.0
    %3051 = vmatprep.subr.mxu0 0.0
    %3052 = vmatpush1.msra.mxu0 0.0
    %3053 = vmatprep.subr.mxu0 0.0
    %3054 = vmatpush1.msra.mxu0 0.0
    %3055 = vmatprep.subr.mxu0 0.0
    %3056 = vmatpush1.msra.mxu0 0.0
    %3057 = vmatprep.subr.mxu0 0.0
    %3058 = vmatpush1.msra.mxu0 0.0
    %3059 = vmatprep.subr.mxu0 0.0
    %3060 = vmatpush1.msra.mxu0 0.0
    %3061 = vmatprep.subr.mxu0 0.0
    %3062 = vmatpush1.msra.mxu0 0.0
    %3063 = vmatprep.subr.mxu0 0.0
    %3064 = vmatpush1.msra.mxu0 0.0
    %3065 = vmatprep.subr.mxu0 0.0
    %3066 = vmatpush1.msra.mxu0 0.0
    %3067 = vmatprep.subr.mxu0 0.0
    %3068 = vmatpush1.msra.mxu0 0.0
    %3069 = vmatprep.subr.mxu0 0.0
    %3070 = vmatpush1.msra.mxu0 0.0
    %3071 = vmatprep.subr.mxu0 0.0
    %3072 = vmatpush1.msra.mxu0 0.0
    %3073 = vmatprep.subr.mxu0 0.0
    %3074 = vmatpush1.msra.mxu0 0.0
    %3075 = vmatprep.subr.mxu0 0.0
    %3076 = vmatpush1.msra.mxu0 0.0
    %3077 = vmatprep.subr.mxu0 0.0
    %3078 = vmatpush1.msra.mxu0 0.0
    %3079 = vmatprep.subr.mxu0 0.0
    %3080 = vmatpush1.msra.mxu0 0.0
    %3081 = vmatprep.subr.mxu0 0.0
    %3082 = vmatpush1.msra.mxu0 0.0
    %3083 = vmatprep.subr.mxu0 0.0
    %3084 = vmatpush1.msra.mxu0 0.0
    %3085 = vmatprep.subr.mxu0 0.0
    %3086 = vmatpush1.msra.mxu0 0.0
    %3087 = vmatprep.subr.mxu0 0.0
    %3088 = vmatpush1.msra.mxu0 0.0
    %3089 = vmatprep.subr.mxu0 0.0
    %3090 = vmatpush1.msra.mxu0 0.0
    %3091 = vmatprep.subr.mxu0 0.0
    %3092 = vmatpush1.msra.mxu0 0.0
    %3093 = vmatprep.subr.mxu0 0.0
    %3094 = vmatpush1.msra.mxu0 0.0
    %3095 = vmatprep.subr.mxu0 0.0
    %3096 = vmatpush1.msra.mxu0 0.0
    %3097 = vmatprep.mubr.f32.mxu0 0.0
    %3098 = vmatmul.mubr.f32.gmra.mrb[0].mxu0 %v2479
    %v3099 = vpop.f32.mrb[0].mxu0
    %v3100 = vadd.f32 0.0, %v3099
    %v3101 = vpop.f32.mrb[0].mxu0
    %3102 = vdwg.mxu0
    %3103 = vmatprep.subr.mxu0 0.0
    %3104 = vmatpush1.msra.mxu0 %v347
    %3105 = vmatprep.subr.mxu0 0.0
    %3106 = vmatpush1.msra.mxu0 %v348
    %3107 = vmatprep.subr.mxu0 0.0
    %3108 = vmatpush1.msra.mxu0 0.0
    %3109 = vmatprep.subr.mxu0 0.0
    %3110 = vmatpush1.msra.mxu0 0.0
    %3111 = vmatprep.subr.mxu0 0.0
    %3112 = vmatpush1.msra.mxu0 0.0
    %3113 = vmatprep.subr.mxu0 0.0
    %3114 = vmatpush1.msra.mxu0 0.0
    %3115 = vmatprep.subr.mxu0 0.0
    %3116 = vmatpush1.msra.mxu0 0.0
    %3117 = vmatprep.subr.mxu0 0.0
    %3118 = vmatpush1.msra.mxu0 0.0
    %3119 = vmatprep.subr.mxu0 0.0
    %3120 = vmatpush1.msra.mxu0 0.0
    %3121 = vmatprep.subr.mxu0 0.0
    %3122 = vmatpush1.msra.mxu0 0.0
    %3123 = vmatprep.subr.mxu0 0.0
    %3124 = vmatpush1.msra.mxu0 0.0
    %3125 = vmatprep.subr.mxu0 0.0
    %3126 = vmatpush1.msra.mxu0 0.0
    %3127 = vmatprep.subr.mxu0 0.0
    %3128 = vmatpush1.msra.mxu0 0.0
    %3129 = vmatprep.subr.mxu0 0.0
    %3130 = vmatpush1.msra.mxu0 0.0
    %3131 = vmatprep.subr.mxu0 0.0
    %3132 = vmatpush1.msra.mxu0 0.0
    %3133 = vmatprep.subr.mxu0 0.0
    %3134 = vmatpush1.msra.mxu0 0.0
    %3135 = vmatprep.subr.mxu0 0.0
    %3136 = vmatpush1.msra.mxu0 0.0
    %3137 = vmatprep.subr.mxu0 0.0
    %3138 = vmatpush1.msra.mxu0 0.0
    %3139 = vmatprep.subr.mxu0 0.0
    %3140 = vmatpush1.msra.mxu0 0.0
    %3141 = vmatprep.subr.mxu0 0.0
    %3142 = vmatpush1.msra.mxu0 0.0
    %3143 = vmatprep.subr.mxu0 0.0
    %3144 = vmatpush1.msra.mxu0 0.0
    %3145 = vmatprep.subr.mxu0 0.0
    %3146 = vmatpush1.msra.mxu0 0.0
    %3147 = vmatprep.subr.mxu0 0.0
    %3148 = vmatpush1.msra.mxu0 0.0
    %3149 = vmatprep.subr.mxu0 0.0
    %3150 = vmatpush1.msra.mxu0 0.0
    %3151 = vmatprep.subr.mxu0 0.0
    %3152 = vmatpush1.msra.mxu0 0.0
    %3153 = vmatprep.subr.mxu0 0.0
    %3154 = vmatpush1.msra.mxu0 0.0
    %3155 = vmatprep.subr.mxu0 0.0
    %3156 = vmatpush1.msra.mxu0 0.0
    %3157 = vmatprep.subr.mxu0 0.0
    %3158 = vmatpush1.msra.mxu0 0.0
    %3159 = vmatprep.subr.mxu0 0.0
    %3160 = vmatpush1.msra.mxu0 0.0
    %3161 = vmatprep.subr.mxu0 0.0
    %3162 = vmatpush1.msra.mxu0 0.0
    %3163 = vmatprep.subr.mxu0 0.0
    %3164 = vmatpush1.msra.mxu0 0.0
    %3165 = vmatprep.subr.mxu0 0.0
    %3166 = vmatpush1.msra.mxu0 0.0
    %3167 = vmatprep.mubr.f32.mxu0 0.0
    %3168 = vmatmul.mubr.f32.gmra.mrb[0].mxu0 %v2961
    %v3169 = vpop.f32.mrb[0].mxu0
    %v3170 = vadd.f32 %v3100, %v3169
    %v3171 = vpop.f32.mrb[0].mxu0
    %3172 = vdwg.mxu0
    %v3173 = vadd.f32 %v3170, %v370
    %v3174 = vxor.u32 %v3173, 2147483648
    %v3175 = vmul.f32 %v3174, 1.442695
    %v3176 = vpow.pop %v3175
    %v3177 = vadd.f32 %v3176, 1.0
    %v3178 = vrcp.pop %v3177
    %v3179 = vmul.f32 1.0, %v3178
    %3180 = vmatprep.subr.mxu0 0.0
    %3181 = vmatpush1.msra.mxu0 %v342
    %3182 = vmatprep.subr.mxu0 0.0
    %3183 = vmatpush1.msra.mxu0 %v343
    %3184 = vmatprep.subr.mxu0 0.0
    %3185 = vmatpush1.msra.mxu0 0.0
    %3186 = vmatprep.subr.mxu0 0.0
    %3187 = vmatpush1.msra.mxu0 0.0
    %3188 = vmatprep.subr.mxu0 0.0
    %3189 = vmatpush1.msra.mxu0 0.0
    %3190 = vmatprep.subr.mxu0 0.0
    %3191 = vmatpush1.msra.mxu0 0.0
    %3192 = vmatprep.subr.mxu0 0.0
    %3193 = vmatpush1.msra.mxu0 0.0
    %3194 = vmatprep.subr.mxu0 0.0
    %3195 = vmatpush1.msra.mxu0 0.0
    %3196 = vmatprep.subr.mxu0 0.0
    %3197 = vmatpush1.msra.mxu0 0.0
    %3198 = vmatprep.subr.mxu0 0.0
    %3199 = vmatpush1.msra.mxu0 0.0
    %3200 = vmatprep.subr.mxu0 0.0
    %3201 = vmatpush1.msra.mxu0 0.0
    %3202 = vmatprep.subr.mxu0 0.0
    %3203 = vmatpush1.msra.mxu0 0.0
    %3204 = vmatprep.subr.mxu0 0.0
    %3205 = vmatpush1.msra.mxu0 0.0
    %3206 = vmatprep.subr.mxu0 0.0
    %3207 = vmatpush1.msra.mxu0 0.0
    %3208 = vmatprep.subr.mxu0 0.0
    %3209 = vmatpush1.msra.mxu0 0.0
    %3210 = vmatprep.subr.mxu0 0.0
    %3211 = vmatpush1.msra.mxu0 0.0
    %3212 = vmatprep.subr.mxu0 0.0
    %3213 = vmatpush1.msra.mxu0 0.0
    %3214 = vmatprep.subr.mxu0 0.0
    %3215 = vmatpush1.msra.mxu0 0.0
    %3216 = vmatprep.subr.mxu0 0.0
    %3217 = vmatpush1.msra.mxu0 0.0
    %3218 = vmatprep.subr.mxu0 0.0
    %3219 = vmatpush1.msra.mxu0 0.0
    %3220 = vmatprep.subr.mxu0 0.0
    %3221 = vmatpush1.msra.mxu0 0.0
    %3222 = vmatprep.subr.mxu0 0.0
    %3223 = vmatpush1.msra.mxu0 0.0
    %3224 = vmatprep.subr.mxu0 0.0
    %3225 = vmatpush1.msra.mxu0 0.0
    %3226 = vmatprep.subr.mxu0 0.0
    %3227 = vmatpush1.msra.mxu0 0.0
    %3228 = vmatprep.subr.mxu0 0.0
    %3229 = vmatpush1.msra.mxu0 0.0
    %3230 = vmatprep.subr.mxu0 0.0
    %3231 = vmatpush1.msra.mxu0 0.0
    %3232 = vmatprep.subr.mxu0 0.0
    %3233 = vmatpush1.msra.mxu0 0.0
    %3234 = vmatprep.subr.mxu0 0.0
    %3235 = vmatpush1.msra.mxu0 0.0
    %3236 = vmatprep.subr.mxu0 0.0
    %3237 = vmatpush1.msra.mxu0 0.0
    %3238 = vmatprep.subr.mxu0 0.0
    %3239 = vmatpush1.msra.mxu0 0.0
    %3240 = vmatprep.subr.mxu0 0.0
    %3241 = vmatpush1.msra.mxu0 0.0
    %3242 = vmatprep.subr.mxu0 0.0
    %3243 = vmatpush1.msra.mxu0 0.0
    %3244 = vmatprep.mubr.f32.mxu0 0.0
    %3245 = vmatmul.mubr.f32.gmra.mrb[0].mxu0 %v2479
    %v3246 = vpop.f32.mrb[0].mxu0
    %v3247 = vadd.f32 %v393, %v3246
    %v3248 = vpop.f32.mrb[0].mxu0
    %3249 = vdwg.mxu0
    %v3250 = vmul.f32 %v3179, %v3247
    %v3251 = vadd.f32 %v3030, %v3250
    %v3252 = vtanh.pop %v3251
    %v3253 = vsub.f32 1.0, %v3179
    %3255 = vrot.lane.b32.xlu0 %v3252, 16
    %v3256 = vpop.permute.xlu0 %3255
    %v3258 = vmul.f32 %v3253, %v3256
    %v3259 = vmul.f32 %v3179, %v2475
    %v3260 = vadd.f32 %v3258, %v3259
    %3262 = vrot.lane.b32.xlu0 %v3260, 112
    %v3263 = vpop.permute.xlu0 %3262
    %v3264 = vsel %vm249, %v3263, 0
    %3266 = vmatprep.subr.mxu0 0.0
    %3267 = vmatpush1.msra.mxu0 %v355
    %3268 = vmatprep.subr.mxu0 0.0
    %3269 = vmatpush1.msra.mxu0 %v356
    %3270 = vmatprep.subr.mxu0 0.0
    %3271 = vmatpush1.msra.mxu0 0.0
    %3272 = vmatprep.subr.mxu0 0.0
    %3273 = vmatpush1.msra.mxu0 0.0
    %3274 = vmatprep.subr.mxu0 0.0
    %3275 = vmatpush1.msra.mxu0 0.0
    %3276 = vmatprep.subr.mxu0 0.0
    %3277 = vmatpush1.msra.mxu0 0.0
    %3278 = vmatprep.subr.mxu0 0.0
    %3279 = vmatpush1.msra.mxu0 0.0
    %3280 = vmatprep.subr.mxu0 0.0
    %3281 = vmatpush1.msra.mxu0 0.0
    %3282 = vmatprep.subr.mxu0 0.0
    %3283 = vmatpush1.msra.mxu0 0.0
    %3284 = vmatprep.subr.mxu0 0.0
    %3285 = vmatpush1.msra.mxu0 0.0
    %3286 = vmatprep.subr.mxu0 0.0
    %3287 = vmatpush1.msra.mxu0 0.0
    %3288 = vmatprep.subr.mxu0 0.0
    %3289 = vmatpush1.msra.mxu0 0.0
    %3290 = vmatprep.subr.mxu0 0.0
    %3291 = vmatpush1.msra.mxu0 0.0
    %3292 = vmatprep.subr.mxu0 0.0
    %3293 = vmatpush1.msra.mxu0 0.0
    %3294 = vmatprep.subr.mxu0 0.0
    %3295 = vmatpush1.msra.mxu0 0.0
    %3296 = vmatprep.subr.mxu0 0.0
    %3297 = vmatpush1.msra.mxu0 0.0
    %3298 = vmatprep.subr.mxu0 0.0
    %3299 = vmatpush1.msra.mxu0 0.0
    %3300 = vmatprep.subr.mxu0 0.0
    %3301 = vmatpush1.msra.mxu0 0.0
    %3302 = vmatprep.subr.mxu0 0.0
    %3303 = vmatpush1.msra.mxu0 0.0
    %3304 = vmatprep.subr.mxu0 0.0
    %3305 = vmatpush1.msra.mxu0 0.0
    %3306 = vmatprep.subr.mxu0 0.0
    %3307 = vmatpush1.msra.mxu0 0.0
    %3308 = vmatprep.subr.mxu0 0.0
    %3309 = vmatpush1.msra.mxu0 0.0
    %3310 = vmatprep.subr.mxu0 0.0
    %3311 = vmatpush1.msra.mxu0 0.0
    %3312 = vmatprep.subr.mxu0 0.0
    %3313 = vmatpush1.msra.mxu0 0.0
    %3314 = vmatprep.subr.mxu0 0.0
    %3315 = vmatpush1.msra.mxu0 0.0
    %3316 = vmatprep.subr.mxu0 0.0
    %3317 = vmatpush1.msra.mxu0 0.0
    %3318 = vmatprep.subr.mxu0 0.0
    %3319 = vmatpush1.msra.mxu0 0.0
    %3320 = vmatprep.subr.mxu0 0.0
    %3321 = vmatpush1.msra.mxu0 0.0
    %3322 = vmatprep.subr.mxu0 0.0
    %3323 = vmatpush1.msra.mxu0 0.0
    %3324 = vmatprep.subr.mxu0 0.0
    %3325 = vmatpush1.msra.mxu0 0.0
    %3326 = vmatprep.subr.mxu0 0.0
    %3327 = vmatpush1.msra.mxu0 0.0
    %3328 = vmatprep.subr.mxu0 0.0
    %3329 = vmatpush1.msra.mxu0 0.0
    %3330 = vmatprep.mubr.f32.mxu0 0.0
    %3331 = vmatmul.mubr.f32.gmra.mrb[0].mxu0 %v3264
    %v3332 = vpop.f32.mrb[0].mxu0
    %v3333 = vadd.f32 %v416, %v3332
    %v3334 = vpop.f32.mrb[0].mxu0
    %3335 = vdwg.mxu0
    %v3336 = vsel %vm249, %v2783, 0
    %3338 = vmatprep.subr.mxu0 0.0
    %3339 = vmatpush1.msra.mxu0 %v337
    %3340 = vmatprep.subr.mxu0 0.0
    %3341 = vmatpush1.msra.mxu0 %v338
    %3342 = vmatprep.subr.mxu0 0.0
    %3343 = vmatpush1.msra.mxu0 0.0
    %3344 = vmatprep.subr.mxu0 0.0
    %3345 = vmatpush1.msra.mxu0 0.0
    %3346 = vmatprep.subr.mxu0 0.0
    %3347 = vmatpush1.msra.mxu0 0.0
    %3348 = vmatprep.subr.mxu0 0.0
    %3349 = vmatpush1.msra.mxu0 0.0
    %3350 = vmatprep.subr.mxu0 0.0
    %3351 = vmatpush1.msra.mxu0 0.0
    %3352 = vmatprep.subr.mxu0 0.0
    %3353 = vmatpush1.msra.mxu0 0.0
    %3354 = vmatprep.subr.mxu0 0.0
    %3355 = vmatpush1.msra.mxu0 0.0
    %3356 = vmatprep.subr.mxu0 0.0
    %3357 = vmatpush1.msra.mxu0 0.0
    %3358 = vmatprep.subr.mxu0 0.0
    %3359 = vmatpush1.msra.mxu0 0.0
    %3360 = vmatprep.subr.mxu0 0.0
    %3361 = vmatpush1.msra.mxu0 0.0
    %3362 = vmatprep.subr.mxu0 0.0
    %3363 = vmatpush1.msra.mxu0 0.0
    %3364 = vmatprep.subr.mxu0 0.0
    %3365 = vmatpush1.msra.mxu0 0.0
    %3366 = vmatprep.subr.mxu0 0.0
    %3367 = vmatpush1.msra.mxu0 0.0
    %3368 = vmatprep.subr.mxu0 0.0
    %3369 = vmatpush1.msra.mxu0 0.0
    %3370 = vmatprep.subr.mxu0 0.0
    %3371 = vmatpush1.msra.mxu0 0.0
    %3372 = vmatprep.subr.mxu0 0.0
    %3373 = vmatpush1.msra.mxu0 0.0
    %3374 = vmatprep.subr.mxu0 0.0
    %3375 = vmatpush1.msra.mxu0 0.0
    %3376 = vmatprep.subr.mxu0 0.0
    %3377 = vmatpush1.msra.mxu0 0.0
    %3378 = vmatprep.subr.mxu0 0.0
    %3379 = vmatpush1.msra.mxu0 0.0
    %3380 = vmatprep.subr.mxu0 0.0
    %3381 = vmatpush1.msra.mxu0 0.0
    %3382 = vmatprep.subr.mxu0 0.0
    %3383 = vmatpush1.msra.mxu0 0.0
    %3384 = vmatprep.subr.mxu0 0.0
    %3385 = vmatpush1.msra.mxu0 0.0
    %3386 = vmatprep.subr.mxu0 0.0
    %3387 = vmatpush1.msra.mxu0 0.0
    %3388 = vmatprep.subr.mxu0 0.0
    %3389 = vmatpush1.msra.mxu0 0.0
    %3390 = vmatprep.subr.mxu0 0.0
    %3391 = vmatpush1.msra.mxu0 0.0
    %3392 = vmatprep.subr.mxu0 0.0
    %3393 = vmatpush1.msra.mxu0 0.0
    %3394 = vmatprep.subr.mxu0 0.0
    %3395 = vmatpush1.msra.mxu0 0.0
    %3396 = vmatprep.subr.mxu0 0.0
    %3397 = vmatpush1.msra.mxu0 0.0
    %3398 = vmatprep.subr.mxu0 0.0
    %3399 = vmatpush1.msra.mxu0 0.0
    %3400 = vmatprep.subr.mxu0 0.0
    %3401 = vmatpush1.msra.mxu0 0.0
    %3402 = vmatprep.mubr.f32.mxu0 0.0
    %3403 = vmatmul.mubr.f32.gmra.mrb[0].mxu0 %v3336
    %v3404 = vpop.f32.mrb[0].mxu0
    %v3405 = vadd.f32 0.0, %v3404
    %v3406 = vpop.f32.mrb[0].mxu0
    %3407 = vdwg.mxu0
    %3408 = vmatprep.subr.mxu0 0.0
    %3409 = vmatpush1.msra.mxu0 %v350
    %3410 = vmatprep.subr.mxu0 0.0
    %3411 = vmatpush1.msra.mxu0 %v351
    %3412 = vmatprep.subr.mxu0 0.0
    %3413 = vmatpush1.msra.mxu0 0.0
    %3414 = vmatprep.subr.mxu0 0.0
    %3415 = vmatpush1.msra.mxu0 0.0
    %3416 = vmatprep.subr.mxu0 0.0
    %3417 = vmatpush1.msra.mxu0 0.0
    %3418 = vmatprep.subr.mxu0 0.0
    %3419 = vmatpush1.msra.mxu0 0.0
    %3420 = vmatprep.subr.mxu0 0.0
    %3421 = vmatpush1.msra.mxu0 0.0
    %3422 = vmatprep.subr.mxu0 0.0
    %3423 = vmatpush1.msra.mxu0 0.0
    %3424 = vmatprep.subr.mxu0 0.0
    %3425 = vmatpush1.msra.mxu0 0.0
    %3426 = vmatprep.subr.mxu0 0.0
    %3427 = vmatpush1.msra.mxu0 0.0
    %3428 = vmatprep.subr.mxu0 0.0
    %3429 = vmatpush1.msra.mxu0 0.0
    %3430 = vmatprep.subr.mxu0 0.0
    %3431 = vmatpush1.msra.mxu0 0.0
    %3432 = vmatprep.subr.mxu0 0.0
    %3433 = vmatpush1.msra.mxu0 0.0
    %3434 = vmatprep.subr.mxu0 0.0
    %3435 = vmatpush1.msra.mxu0 0.0
    %3436 = vmatprep.subr.mxu0 0.0
    %3437 = vmatpush1.msra.mxu0 0.0
    %3438 = vmatprep.subr.mxu0 0.0
    %3439 = vmatpush1.msra.mxu0 0.0
    %3440 = vmatprep.subr.mxu0 0.0
    %3441 = vmatpush1.msra.mxu0 0.0
    %3442 = vmatprep.subr.mxu0 0.0
    %3443 = vmatpush1.msra.mxu0 0.0
    %3444 = vmatprep.subr.mxu0 0.0
    %3445 = vmatpush1.msra.mxu0 0.0
    %3446 = vmatprep.subr.mxu0 0.0
    %3447 = vmatpush1.msra.mxu0 0.0
    %3448 = vmatprep.subr.mxu0 0.0
    %3449 = vmatpush1.msra.mxu0 0.0
    %3450 = vmatprep.subr.mxu0 0.0
    %3451 = vmatpush1.msra.mxu0 0.0
    %3452 = vmatprep.subr.mxu0 0.0
    %3453 = vmatpush1.msra.mxu0 0.0
    %3454 = vmatprep.subr.mxu0 0.0
    %3455 = vmatpush1.msra.mxu0 0.0
    %3456 = vmatprep.subr.mxu0 0.0
    %3457 = vmatpush1.msra.mxu0 0.0
    %3458 = vmatprep.subr.mxu0 0.0
    %3459 = vmatpush1.msra.mxu0 0.0
    %3460 = vmatprep.subr.mxu0 0.0
    %3461 = vmatpush1.msra.mxu0 0.0
    %3462 = vmatprep.subr.mxu0 0.0
    %3463 = vmatpush1.msra.mxu0 0.0
    %3464 = vmatprep.subr.mxu0 0.0
    %3465 = vmatpush1.msra.mxu0 0.0
    %3466 = vmatprep.subr.mxu0 0.0
    %3467 = vmatpush1.msra.mxu0 0.0
    %3468 = vmatprep.subr.mxu0 0.0
    %3469 = vmatpush1.msra.mxu0 0.0
    %3470 = vmatprep.subr.mxu0 0.0
    %3471 = vmatpush1.msra.mxu0 0.0
    %3472 = vmatprep.mubr.f32.mxu0 0.0
    %3473 = vmatmul.mubr.f32.gmra.mrb[0].mxu0 %v3264
    %v3474 = vpop.f32.mrb[0].mxu0
    %v3475 = vadd.f32 %v3405, %v3474
    %v3476 = vpop.f32.mrb[0].mxu0
    %3477 = vdwg.mxu0
    %v3478 = vadd.f32 %v3475, %v378
    %v3479 = vxor.u32 %v3478, 2147483648
    %v3480 = vmul.f32 %v3479, 1.442695
    %v3481 = vpow.pop %v3480
    %v3482 = vadd.f32 %v3481, 1.0
    %v3483 = vrcp.pop %v3482
    %v3484 = vmul.f32 1.0, %v3483
    %3485 = vmatprep.subr.mxu0 0.0
    %3486 = vmatpush1.msra.mxu0 %v345
    %3487 = vmatprep.subr.mxu0 0.0
    %3488 = vmatpush1.msra.mxu0 %v346
    %3489 = vmatprep.subr.mxu0 0.0
    %3490 = vmatpush1.msra.mxu0 0.0
    %3491 = vmatprep.subr.mxu0 0.0
    %3492 = vmatpush1.msra.mxu0 0.0
    %3493 = vmatprep.subr.mxu0 0.0
    %3494 = vmatpush1.msra.mxu0 0.0
    %3495 = vmatprep.subr.mxu0 0.0
    %3496 = vmatpush1.msra.mxu0 0.0
    %3497 = vmatprep.subr.mxu0 0.0
    %3498 = vmatpush1.msra.mxu0 0.0
    %3499 = vmatprep.subr.mxu0 0.0
    %3500 = vmatpush1.msra.mxu0 0.0
    %3501 = vmatprep.subr.mxu0 0.0
    %3502 = vmatpush1.msra.mxu0 0.0
    %3503 = vmatprep.subr.mxu0 0.0
    %3504 = vmatpush1.msra.mxu0 0.0
    %3505 = vmatprep.subr.mxu0 0.0
    %3506 = vmatpush1.msra.mxu0 0.0
    %3507 = vmatprep.subr.mxu0 0.0
    %3508 = vmatpush1.msra.mxu0 0.0
    %3509 = vmatprep.subr.mxu0 0.0
    %3510 = vmatpush1.msra.mxu0 0.0
    %3511 = vmatprep.subr.mxu0 0.0
    %3512 = vmatpush1.msra.mxu0 0.0
    %3513 = vmatprep.subr.mxu0 0.0
    %3514 = vmatpush1.msra.mxu0 0.0
    %3515 = vmatprep.subr.mxu0 0.0
    %3516 = vmatpush1.msra.mxu0 0.0
    %3517 = vmatprep.subr.mxu0 0.0
    %3518 = vmatpush1.msra.mxu0 0.0
    %3519 = vmatprep.subr.mxu0 0.0
    %3520 = vmatpush1.msra.mxu0 0.0
    %3521 = vmatprep.subr.mxu0 0.0
    %3522 = vmatpush1.msra.mxu0 0.0
    %3523 = vmatprep.subr.mxu0 0.0
    %3524 = vmatpush1.msra.mxu0 0.0
    %3525 = vmatprep.subr.mxu0 0.0
    %3526 = vmatpush1.msra.mxu0 0.0
    %3527 = vmatprep.subr.mxu0 0.0
    %3528 = vmatpush1.msra.mxu0 0.0
    %3529 = vmatprep.subr.mxu0 0.0
    %3530 = vmatpush1.msra.mxu0 0.0
    %3531 = vmatprep.subr.mxu0 0.0
    %3532 = vmatpush1.msra.mxu0 0.0
    %3533 = vmatprep.subr.mxu0 0.0
    %3534 = vmatpush1.msra.mxu0 0.0
    %3535 = vmatprep.subr.mxu0 0.0
    %3536 = vmatpush1.msra.mxu0 0.0
    %3537 = vmatprep.subr.mxu0 0.0
    %3538 = vmatpush1.msra.mxu0 0.0
    %3539 = vmatprep.subr.mxu0 0.0
    %3540 = vmatpush1.msra.mxu0 0.0
    %3541 = vmatprep.subr.mxu0 0.0
    %3542 = vmatpush1.msra.mxu0 0.0
    %3543 = vmatprep.subr.mxu0 0.0
    %3544 = vmatpush1.msra.mxu0 0.0
    %3545 = vmatprep.subr.mxu0 0.0
    %3546 = vmatpush1.msra.mxu0 0.0
    %3547 = vmatprep.subr.mxu0 0.0
    %3548 = vmatpush1.msra.mxu0 0.0
    %3549 = vmatprep.mubr.f32.mxu0 0.0
    %3550 = vmatmul.mubr.f32.gmra.mrb[0].mxu0 %v3336
    %v3551 = vpop.f32.mrb[0].mxu0
    %v3552 = vadd.f32 %v401, %v3551
    %v3553 = vpop.f32.mrb[0].mxu0
    %3554 = vdwg.mxu0
    %v3555 = vmul.f32 %v3484, %v3552
    %v3556 = vadd.f32 %v3333, %v3555
    %v3557 = vtanh.pop %v3556
    %v3558 = vsub.f32 1.0, %v3484
    %3560 = vrot.lane.b32.xlu0 %v3557, 16
    %v3561 = vpop.permute.xlu0 %3560
    %v3563 = vmul.f32 %v3558, %v3561
    %v3564 = vmul.f32 %v3484, %v2780
    %v3565 = vadd.f32 %v3563, %v3564
    %3567 = vrot.lane.b32.xlu0 %v3565, 112
    %v3568 = vpop.permute.xlu0 %3567
    %3570 = vst.msk [vmem:[#allocation3 + $0x6] sm:$0x3] %vm1214, %v3568
    %3571 = vmatprep.subr.mxu0 0.0
    %3572 = vmatpush1.msra.mxu0 %v331
    %3573 = vmatprep.subr.mxu0 0.0
    %3574 = vmatpush1.msra.mxu0 %v332
    %3575 = vmatprep.subr.mxu0 0.0
    %3576 = vmatpush1.msra.mxu0 0.0
    %3577 = vmatprep.subr.mxu0 0.0
    %3578 = vmatpush1.msra.mxu0 0.0
    %3579 = vmatprep.subr.mxu0 0.0
    %3580 = vmatpush1.msra.mxu0 0.0
    %3581 = vmatprep.subr.mxu0 0.0
    %3582 = vmatpush1.msra.mxu0 0.0
    %3583 = vmatprep.subr.mxu0 0.0
    %3584 = vmatpush1.msra.mxu0 0.0
    %3585 = vmatprep.subr.mxu0 0.0
    %3586 = vmatpush1.msra.mxu0 0.0
    %3587 = vmatprep.subr.mxu0 0.0
    %3588 = vmatpush1.msra.mxu0 0.0
    %3589 = vmatprep.subr.mxu0 0.0
    %3590 = vmatpush1.msra.mxu0 0.0
    %3591 = vmatprep.subr.mxu0 0.0
    %3592 = vmatpush1.msra.mxu0 0.0
    %3593 = vmatprep.subr.mxu0 0.0
    %3594 = vmatpush1.msra.mxu0 0.0
    %3595 = vmatprep.subr.mxu0 0.0
    %3596 = vmatpush1.msra.mxu0 0.0
    %3597 = vmatprep.subr.mxu0 0.0
    %3598 = vmatpush1.msra.mxu0 0.0
    %3599 = vmatprep.subr.mxu0 0.0
    %3600 = vmatpush1.msra.mxu0 0.0
    %3601 = vmatprep.subr.mxu0 0.0
    %3602 = vmatpush1.msra.mxu0 0.0
    %3603 = vmatprep.subr.mxu0 0.0
    %3604 = vmatpush1.msra.mxu0 0.0
    %3605 = vmatprep.subr.mxu0 0.0
    %3606 = vmatpush1.msra.mxu0 0.0
    %3607 = vmatprep.subr.mxu0 0.0
    %3608 = vmatpush1.msra.mxu0 0.0
    %3609 = vmatprep.subr.mxu0 0.0
    %3610 = vmatpush1.msra.mxu0 0.0
    %3611 = vmatprep.subr.mxu0 0.0
    %3612 = vmatpush1.msra.mxu0 0.0
    %3613 = vmatprep.subr.mxu0 0.0
    %3614 = vmatpush1.msra.mxu0 0.0
    %3615 = vmatprep.subr.mxu0 0.0
    %3616 = vmatpush1.msra.mxu0 0.0
    %3617 = vmatprep.subr.mxu0 0.0
    %3618 = vmatpush1.msra.mxu0 0.0
    %3619 = vmatprep.subr.mxu0 0.0
    %3620 = vmatpush1.msra.mxu0 0.0
    %3621 = vmatprep.subr.mxu0 0.0
    %3622 = vmatpush1.msra.mxu0 0.0
    %3623 = vmatprep.subr.mxu0 0.0
    %3624 = vmatpush1.msra.mxu0 0.0
    %3625 = vmatprep.subr.mxu0 0.0
    %3626 = vmatpush1.msra.mxu0 0.0
    %3627 = vmatprep.subr.mxu0 0.0
    %3628 = vmatpush1.msra.mxu0 0.0
    %3629 = vmatprep.subr.mxu0 0.0
    %3630 = vmatpush1.msra.mxu0 0.0
    %3631 = vmatprep.subr.mxu0 0.0
    %3632 = vmatpush1.msra.mxu0 0.0
    %3633 = vmatprep.subr.mxu0 0.0
    %3634 = vmatpush1.msra.mxu0 0.0
    %3635 = vmatprep.mubr.f32.mxu0 0.0
    %3636 = vmatmul.mubr.f32.gmra.mrb[0].mxu0 %v2961
    %v3637 = vpop.f32.mrb[0].mxu0
    %v3638 = vadd.f32 0.0, %v3637
    %v3639 = vpop.f32.mrb[0].mxu0
    %3640 = vdwg.mxu0
    %v3641 = vadd.f32 %v328, %v3638
    %v3642 = vadd.f32 %v3641, %v362
    %v3643 = vxor.u32 %v3642, 2147483648
    %v3644 = vmul.f32 %v3643, 1.442695
    %v3645 = vpow.pop %v3644
    %v3646 = vadd.f32 %v3645, 1.0
    %v3647 = vrcp.pop %v3646
    %v3648 = vmul.f32 1.0, %v3647
    %3649 = vmatprep.subr.mxu0 0.0
    %3650 = vmatpush1.msra.mxu0 %v339
    %3651 = vmatprep.subr.mxu0 0.0
    %3652 = vmatpush1.msra.mxu0 %v340
    %3653 = vmatprep.subr.mxu0 0.0
    %3654 = vmatpush1.msra.mxu0 0.0
    %3655 = vmatprep.subr.mxu0 0.0
    %3656 = vmatpush1.msra.mxu0 0.0
    %3657 = vmatprep.subr.mxu0 0.0
    %3658 = vmatpush1.msra.mxu0 0.0
    %3659 = vmatprep.subr.mxu0 0.0
    %3660 = vmatpush1.msra.mxu0 0.0
    %3661 = vmatprep.subr.mxu0 0.0
    %3662 = vmatpush1.msra.mxu0 0.0
    %3663 = vmatprep.subr.mxu0 0.0
    %3664 = vmatpush1.msra.mxu0 0.0
    %3665 = vmatprep.subr.mxu0 0.0
    %3666 = vmatpush1.msra.mxu0 0.0
    %3667 = vmatprep.subr.mxu0 0.0
    %3668 = vmatpush1.msra.mxu0 0.0
    %3669 = vmatprep.subr.mxu0 0.0
    %3670 = vmatpush1.msra.mxu0 0.0
    %3671 = vmatprep.subr.mxu0 0.0
    %3672 = vmatpush1.msra.mxu0 0.0
    %3673 = vmatprep.subr.mxu0 0.0
    %3674 = vmatpush1.msra.mxu0 0.0
    %3675 = vmatprep.subr.mxu0 0.0
    %3676 = vmatpush1.msra.mxu0 0.0
    %3677 = vmatprep.subr.mxu0 0.0
    %3678 = vmatpush1.msra.mxu0 0.0
    %3679 = vmatprep.subr.mxu0 0.0
    %3680 = vmatpush1.msra.mxu0 0.0
    %3681 = vmatprep.subr.mxu0 0.0
    %3682 = vmatpush1.msra.mxu0 0.0
    %3683 = vmatprep.subr.mxu0 0.0
    %3684 = vmatpush1.msra.mxu0 0.0
    %3685 = vmatprep.subr.mxu0 0.0
    %3686 = vmatpush1.msra.mxu0 0.0
    %3687 = vmatprep.subr.mxu0 0.0
    %3688 = vmatpush1.msra.mxu0 0.0
    %3689 = vmatprep.subr.mxu0 0.0
    %3690 = vmatpush1.msra.mxu0 0.0
    %3691 = vmatprep.subr.mxu0 0.0
    %3692 = vmatpush1.msra.mxu0 0.0
    %3693 = vmatprep.subr.mxu0 0.0
    %3694 = vmatpush1.msra.mxu0 0.0
    %3695 = vmatprep.subr.mxu0 0.0
    %3696 = vmatpush1.msra.mxu0 0.0
    %3697 = vmatprep.subr.mxu0 0.0
    %3698 = vmatpush1.msra.mxu0 0.0
    %3699 = vmatprep.subr.mxu0 0.0
    %3700 = vmatpush1.msra.mxu0 0.0
    %3701 = vmatprep.subr.mxu0 0.0
    %3702 = vmatpush1.msra.mxu0 0.0
    %3703 = vmatprep.subr.mxu0 0.0
    %3704 = vmatpush1.msra.mxu0 0.0
    %3705 = vmatprep.subr.mxu0 0.0
    %3706 = vmatpush1.msra.mxu0 0.0
    %3707 = vmatprep.subr.mxu0 0.0
    %3708 = vmatpush1.msra.mxu0 0.0
    %3709 = vmatprep.subr.mxu0 0.0
    %3710 = vmatpush1.msra.mxu0 0.0
    %3711 = vmatprep.subr.mxu0 0.0
    %3712 = vmatpush1.msra.mxu0 0.0
    %3713 = vmatprep.mubr.f32.mxu0 0.0
    %3714 = vmatmul.mubr.f32.gmra.mrb[0].mxu0 %v2961
    %v3715 = vpop.f32.mrb[0].mxu0
    %v3716 = vadd.f32 %v385, %v3715
    %v3717 = vpop.f32.mrb[0].mxu0
    %3718 = vdwg.mxu0
    %v3719 = vmul.f32 %v3648, %v3716
    %3721 = vrot.lane.b32.xlu0 %v3719, 32
    %v3722 = vpop.permute.xlu0 %3721
    %v3724 = vadd.f32 %v328, %v3722
    %v3725 = vtanh.pop %v3724
    %v3726 = vsub.f32 1.0, %v3648
    %3728 = vrot.lane.b32.xlu0 %v3725, 112
    %v3729 = vpop.permute.xlu0 %3728
    %v3731 = vmul.f32 %v3726, %v3729
    %v3733 = vmul.f32 %v3648, %v2958
    %v3734 = vadd.f32 %v3731, %v3733
    %3736 = vrot.lane.b32.xlu0 %v3734, 112
    %v3737 = vpop.permute.xlu0 %3736
    %v3738 = vsel %vm249, %v3737, 0
    %3740 = vmatprep.subr.mxu0 0.0
    %3741 = vmatpush1.msra.mxu0 %v352
    %3742 = vmatprep.subr.mxu0 0.0
    %3743 = vmatpush1.msra.mxu0 %v353
    %3744 = vmatprep.subr.mxu0 0.0
    %3745 = vmatpush1.msra.mxu0 0.0
    %3746 = vmatprep.subr.mxu0 0.0
    %3747 = vmatpush1.msra.mxu0 0.0
    %3748 = vmatprep.subr.mxu0 0.0
    %3749 = vmatpush1.msra.mxu0 0.0
    %3750 = vmatprep.subr.mxu0 0.0
    %3751 = vmatpush1.msra.mxu0 0.0
    %3752 = vmatprep.subr.mxu0 0.0
    %3753 = vmatpush1.msra.mxu0 0.0
    %3754 = vmatprep.subr.mxu0 0.0
    %3755 = vmatpush1.msra.mxu0 0.0
    %3756 = vmatprep.subr.mxu0 0.0
    %3757 = vmatpush1.msra.mxu0 0.0
    %3758 = vmatprep.subr.mxu0 0.0
    %3759 = vmatpush1.msra.mxu0 0.0
    %3760 = vmatprep.subr.mxu0 0.0
    %3761 = vmatpush1.msra.mxu0 0.0
    %3762 = vmatprep.subr.mxu0 0.0
    %3763 = vmatpush1.msra.mxu0 0.0
    %3764 = vmatprep.subr.mxu0 0.0
    %3765 = vmatpush1.msra.mxu0 0.0
    %3766 = vmatprep.subr.mxu0 0.0
    %3767 = vmatpush1.msra.mxu0 0.0
    %3768 = vmatprep.subr.mxu0 0.0
    %3769 = vmatpush1.msra.mxu0 0.0
    %3770 = vmatprep.subr.mxu0 0.0
    %3771 = vmatpush1.msra.mxu0 0.0
    %3772 = vmatprep.subr.mxu0 0.0
    %3773 = vmatpush1.msra.mxu0 0.0
    %3774 = vmatprep.subr.mxu0 0.0
    %3775 = vmatpush1.msra.mxu0 0.0
    %3776 = vmatprep.subr.mxu0 0.0
    %3777 = vmatpush1.msra.mxu0 0.0
    %3778 = vmatprep.subr.mxu0 0.0
    %3779 = vmatpush1.msra.mxu0 0.0
    %3780 = vmatprep.subr.mxu0 0.0
    %3781 = vmatpush1.msra.mxu0 0.0
    %3782 = vmatprep.subr.mxu0 0.0
    %3783 = vmatpush1.msra.mxu0 0.0
    %3784 = vmatprep.subr.mxu0 0.0
    %3785 = vmatpush1.msra.mxu0 0.0
    %3786 = vmatprep.subr.mxu0 0.0
    %3787 = vmatpush1.msra.mxu0 0.0
    %3788 = vmatprep.subr.mxu0 0.0
    %3789 = vmatpush1.msra.mxu0 0.0
    %3790 = vmatprep.subr.mxu0 0.0
    %3791 = vmatpush1.msra.mxu0 0.0
    %3792 = vmatprep.subr.mxu0 0.0
    %3793 = vmatpush1.msra.mxu0 0.0
    %3794 = vmatprep.subr.mxu0 0.0
    %3795 = vmatpush1.msra.mxu0 0.0
    %3796 = vmatprep.subr.mxu0 0.0
    %3797 = vmatpush1.msra.mxu0 0.0
    %3798 = vmatprep.subr.mxu0 0.0
    %3799 = vmatpush1.msra.mxu0 0.0
    %3800 = vmatprep.subr.mxu0 0.0
    %3801 = vmatpush1.msra.mxu0 0.0
    %3802 = vmatprep.subr.mxu0 0.0
    %3803 = vmatpush1.msra.mxu0 0.0
    %3804 = vmatprep.mubr.f32.mxu0 0.0
    %3805 = vmatmul.mubr.f32.gmra.mrb[0].mxu0 %v3738
    %v3806 = vpop.f32.mrb[0].mxu0
    %v3807 = vadd.f32 %v408, %v3806
    %v3808 = vpop.f32.mrb[0].mxu0
    %3809 = vdwg.mxu0
    %3810 = vmatprep.subr.mxu0 0.0
    %3811 = vmatpush1.msra.mxu0 %v334
    %3812 = vmatprep.subr.mxu0 0.0
    %3813 = vmatpush1.msra.mxu0 %v335
    %3814 = vmatprep.subr.mxu0 0.0
    %3815 = vmatpush1.msra.mxu0 0.0
    %3816 = vmatprep.subr.mxu0 0.0
    %3817 = vmatpush1.msra.mxu0 0.0
    %3818 = vmatprep.subr.mxu0 0.0
    %3819 = vmatpush1.msra.mxu0 0.0
    %3820 = vmatprep.subr.mxu0 0.0
    %3821 = vmatpush1.msra.mxu0 0.0
    %3822 = vmatprep.subr.mxu0 0.0
    %3823 = vmatpush1.msra.mxu0 0.0
    %3824 = vmatprep.subr.mxu0 0.0
    %3825 = vmatpush1.msra.mxu0 0.0
    %3826 = vmatprep.subr.mxu0 0.0
    %3827 = vmatpush1.msra.mxu0 0.0
    %3828 = vmatprep.subr.mxu0 0.0
    %3829 = vmatpush1.msra.mxu0 0.0
    %3830 = vmatprep.subr.mxu0 0.0
    %3831 = vmatpush1.msra.mxu0 0.0
    %3832 = vmatprep.subr.mxu0 0.0
    %3833 = vmatpush1.msra.mxu0 0.0
    %3834 = vmatprep.subr.mxu0 0.0
    %3835 = vmatpush1.msra.mxu0 0.0
    %3836 = vmatprep.subr.mxu0 0.0
    %3837 = vmatpush1.msra.mxu0 0.0
    %3838 = vmatprep.subr.mxu0 0.0
    %3839 = vmatpush1.msra.mxu0 0.0
    %3840 = vmatprep.subr.mxu0 0.0
    %3841 = vmatpush1.msra.mxu0 0.0
    %3842 = vmatprep.subr.mxu0 0.0
    %3843 = vmatpush1.msra.mxu0 0.0
    %3844 = vmatprep.subr.mxu0 0.0
    %3845 = vmatpush1.msra.mxu0 0.0
    %3846 = vmatprep.subr.mxu0 0.0
    %3847 = vmatpush1.msra.mxu0 0.0
    %3848 = vmatprep.subr.mxu0 0.0
    %3849 = vmatpush1.msra.mxu0 0.0
    %3850 = vmatprep.subr.mxu0 0.0
    %3851 = vmatpush1.msra.mxu0 0.0
    %3852 = vmatprep.subr.mxu0 0.0
    %3853 = vmatpush1.msra.mxu0 0.0
    %3854 = vmatprep.subr.mxu0 0.0
    %3855 = vmatpush1.msra.mxu0 0.0
    %3856 = vmatprep.subr.mxu0 0.0
    %3857 = vmatpush1.msra.mxu0 0.0
    %3858 = vmatprep.subr.mxu0 0.0
    %3859 = vmatpush1.msra.mxu0 0.0
    %3860 = vmatprep.subr.mxu0 0.0
    %3861 = vmatpush1.msra.mxu0 0.0
    %3862 = vmatprep.subr.mxu0 0.0
    %3863 = vmatpush1.msra.mxu0 0.0
    %3864 = vmatprep.subr.mxu0 0.0
    %3865 = vmatpush1.msra.mxu0 0.0
    %3866 = vmatprep.subr.mxu0 0.0
    %3867 = vmatpush1.msra.mxu0 0.0
    %3868 = vmatprep.subr.mxu0 0.0
    %3869 = vmatpush1.msra.mxu0 0.0
    %3870 = vmatprep.subr.mxu0 0.0
    %3871 = vmatpush1.msra.mxu0 0.0
    %3872 = vmatprep.subr.mxu0 0.0
    %3873 = vmatpush1.msra.mxu0 0.0
    %3874 = vmatprep.mubr.f32.mxu0 0.0
    %3875 = vmatmul.mubr.f32.gmra.mrb[0].mxu0 %v3264
    %v3876 = vpop.f32.mrb[0].mxu0
    %v3877 = vadd.f32 0.0, %v3876
    %v3878 = vpop.f32.mrb[0].mxu0
    %3879 = vdwg.mxu0
    %3880 = vmatprep.subr.mxu0 0.0
    %3881 = vmatpush1.msra.mxu0 %v347
    %3882 = vmatprep.subr.mxu0 0.0
    %3883 = vmatpush1.msra.mxu0 %v348
    %3884 = vmatprep.subr.mxu0 0.0
    %3885 = vmatpush1.msra.mxu0 0.0
    %3886 = vmatprep.subr.mxu0 0.0
    %3887 = vmatpush1.msra.mxu0 0.0
    %3888 = vmatprep.subr.mxu0 0.0
    %3889 = vmatpush1.msra.mxu0 0.0
    %3890 = vmatprep.subr.mxu0 0.0
    %3891 = vmatpush1.msra.mxu0 0.0
    %3892 = vmatprep.subr.mxu0 0.0
    %3893 = vmatpush1.msra.mxu0 0.0
    %3894 = vmatprep.subr.mxu0 0.0
    %3895 = vmatpush1.msra.mxu0 0.0
    %3896 = vmatprep.subr.mxu0 0.0
    %3897 = vmatpush1.msra.mxu0 0.0
    %3898 = vmatprep.subr.mxu0 0.0
    %3899 = vmatpush1.msra.mxu0 0.0
    %3900 = vmatprep.subr.mxu0 0.0
    %3901 = vmatpush1.msra.mxu0 0.0
    %3902 = vmatprep.subr.mxu0 0.0
    %3903 = vmatpush1.msra.mxu0 0.0
    %3904 = vmatprep.subr.mxu0 0.0
    %3905 = vmatpush1.msra.mxu0 0.0
    %3906 = vmatprep.subr.mxu0 0.0
    %3907 = vmatpush1.msra.mxu0 0.0
    %3908 = vmatprep.subr.mxu0 0.0
    %3909 = vmatpush1.msra.mxu0 0.0
    %3910 = vmatprep.subr.mxu0 0.0
    %3911 = vmatpush1.msra.mxu0 0.0
    %3912 = vmatprep.subr.mxu0 0.0
    %3913 = vmatpush1.msra.mxu0 0.0
    %3914 = vmatprep.subr.mxu0 0.0
    %3915 = vmatpush1.msra.mxu0 0.0
    %3916 = vmatprep.subr.mxu0 0.0
    %3917 = vmatpush1.msra.mxu0 0.0
    %3918 = vmatprep.subr.mxu0 0.0
    %3919 = vmatpush1.msra.mxu0 0.0
    %3920 = vmatprep.subr.mxu0 0.0
    %3921 = vmatpush1.msra.mxu0 0.0
    %3922 = vmatprep.subr.mxu0 0.0
    %3923 = vmatpush1.msra.mxu0 0.0
    %3924 = vmatprep.subr.mxu0 0.0
    %3925 = vmatpush1.msra.mxu0 0.0
    %3926 = vmatprep.subr.mxu0 0.0
    %3927 = vmatpush1.msra.mxu0 0.0
    %3928 = vmatprep.subr.mxu0 0.0
    %3929 = vmatpush1.msra.mxu0 0.0
    %3930 = vmatprep.subr.mxu0 0.0
    %3931 = vmatpush1.msra.mxu0 0.0
    %3932 = vmatprep.subr.mxu0 0.0
    %3933 = vmatpush1.msra.mxu0 0.0
    %3934 = vmatprep.subr.mxu0 0.0
    %3935 = vmatpush1.msra.mxu0 0.0
    %3936 = vmatprep.subr.mxu0 0.0
    %3937 = vmatpush1.msra.mxu0 0.0
    %3938 = vmatprep.subr.mxu0 0.0
    %3939 = vmatpush1.msra.mxu0 0.0
    %3940 = vmatprep.subr.mxu0 0.0
    %3941 = vmatpush1.msra.mxu0 0.0
    %3942 = vmatprep.subr.mxu0 0.0
    %3943 = vmatpush1.msra.mxu0 0.0
    %3944 = vmatprep.mubr.f32.mxu0 0.0
    %3945 = vmatmul.mubr.f32.gmra.mrb[0].mxu0 %v3738
    %v3946 = vpop.f32.mrb[0].mxu0
    %v3947 = vadd.f32 %v3877, %v3946
    %v3948 = vpop.f32.mrb[0].mxu0
    %3949 = vdwg.mxu0
    %v3950 = vadd.f32 %v3947, %v370
    %v3951 = vxor.u32 %v3950, 2147483648
    %v3952 = vmul.f32 %v3951, 1.442695
    %v3953 = vpow.pop %v3952
    %v3954 = vadd.f32 %v3953, 1.0
    %v3955 = vrcp.pop %v3954
    %v3956 = vmul.f32 1.0, %v3955
    %3957 = vmatprep.subr.mxu0 0.0
    %3958 = vmatpush1.msra.mxu0 %v342
    %3959 = vmatprep.subr.mxu0 0.0
    %3960 = vmatpush1.msra.mxu0 %v343
    %3961 = vmatprep.subr.mxu0 0.0
    %3962 = vmatpush1.msra.mxu0 0.0
    %3963 = vmatprep.subr.mxu0 0.0
    %3964 = vmatpush1.msra.mxu0 0.0
    %3965 = vmatprep.subr.mxu0 0.0
    %3966 = vmatpush1.msra.mxu0 0.0
    %3967 = vmatprep.subr.mxu0 0.0
    %3968 = vmatpush1.msra.mxu0 0.0
    %3969 = vmatprep.subr.mxu0 0.0
    %3970 = vmatpush1.msra.mxu0 0.0
    %3971 = vmatprep.subr.mxu0 0.0
    %3972 = vmatpush1.msra.mxu0 0.0
    %3973 = vmatprep.subr.mxu0 0.0
    %3974 = vmatpush1.msra.mxu0 0.0
    %3975 = vmatprep.subr.mxu0 0.0
    %3976 = vmatpush1.msra.mxu0 0.0
    %3977 = vmatprep.subr.mxu0 0.0
    %3978 = vmatpush1.msra.mxu0 0.0
    %3979 = vmatprep.subr.mxu0 0.0
    %3980 = vmatpush1.msra.mxu0 0.0
    %3981 = vmatprep.subr.mxu0 0.0
    %3982 = vmatpush1.msra.mxu0 0.0
    %3983 = vmatprep.subr.mxu0 0.0
    %3984 = vmatpush1.msra.mxu0 0.0
    %3985 = vmatprep.subr.mxu0 0.0
    %3986 = vmatpush1.msra.mxu0 0.0
    %3987 = vmatprep.subr.mxu0 0.0
    %3988 = vmatpush1.msra.mxu0 0.0
    %3989 = vmatprep.subr.mxu0 0.0
    %3990 = vmatpush1.msra.mxu0 0.0
    %3991 = vmatprep.subr.mxu0 0.0
    %3992 = vmatpush1.msra.mxu0 0.0
    %3993 = vmatprep.subr.mxu0 0.0
    %3994 = vmatpush1.msra.mxu0 0.0
    %3995 = vmatprep.subr.mxu0 0.0
    %3996 = vmatpush1.msra.mxu0 0.0
    %3997 = vmatprep.subr.mxu0 0.0
    %3998 = vmatpush1.msra.mxu0 0.0
    %3999 = vmatprep.subr.mxu0 0.0
    %4000 = vmatpush1.msra.mxu0 0.0
    %4001 = vmatprep.subr.mxu0 0.0
    %4002 = vmatpush1.msra.mxu0 0.0
    %4003 = vmatprep.subr.mxu0 0.0
    %4004 = vmatpush1.msra.mxu0 0.0
    %4005 = vmatprep.subr.mxu0 0.0
    %4006 = vmatpush1.msra.mxu0 0.0
    %4007 = vmatprep.subr.mxu0 0.0
    %4008 = vmatpush1.msra.mxu0 0.0
    %4009 = vmatprep.subr.mxu0 0.0
    %4010 = vmatpush1.msra.mxu0 0.0
    %4011 = vmatprep.subr.mxu0 0.0
    %4012 = vmatpush1.msra.mxu0 0.0
    %4013 = vmatprep.subr.mxu0 0.0
    %4014 = vmatpush1.msra.mxu0 0.0
    %4015 = vmatprep.subr.mxu0 0.0
    %4016 = vmatpush1.msra.mxu0 0.0
    %4017 = vmatprep.subr.mxu0 0.0
    %4018 = vmatpush1.msra.mxu0 0.0
    %4019 = vmatprep.subr.mxu0 0.0
    %4020 = vmatpush1.msra.mxu0 0.0
    %4021 = vmatprep.mubr.f32.mxu0 0.0
    %4022 = vmatmul.mubr.f32.gmra.mrb[0].mxu0 %v3264
    %v4023 = vpop.f32.mrb[0].mxu0
    %v4024 = vadd.f32 %v393, %v4023
    %v4025 = vpop.f32.mrb[0].mxu0
    %4026 = vdwg.mxu0
    %v4027 = vmul.f32 %v3956, %v4024
    %v4028 = vadd.f32 %v3807, %v4027
    %v4029 = vtanh.pop %v4028
    %v4030 = vsub.f32 1.0, %v3956
    %4032 = vrot.lane.b32.xlu0 %v4029, 16
    %v4033 = vpop.permute.xlu0 %4032
    %v4035 = vmul.f32 %v4030, %v4033
    %v4036 = vmul.f32 %v3956, %v3260
    %v4037 = vadd.f32 %v4035, %v4036
    %4039 = vrot.lane.b32.xlu0 %v4037, 112
    %v4040 = vpop.permute.xlu0 %4039
    %v4041 = vsel %vm249, %v4040, 0
    %4043 = vmatprep.subr.mxu0 0.0
    %4044 = vmatpush1.msra.mxu0 %v355
    %4045 = vmatprep.subr.mxu0 0.0
    %4046 = vmatpush1.msra.mxu0 %v356
    %4047 = vmatprep.subr.mxu0 0.0
    %4048 = vmatpush1.msra.mxu0 0.0
    %4049 = vmatprep.subr.mxu0 0.0
    %4050 = vmatpush1.msra.mxu0 0.0
    %4051 = vmatprep.subr.mxu0 0.0
    %4052 = vmatpush1.msra.mxu0 0.0
    %4053 = vmatprep.subr.mxu0 0.0
    %4054 = vmatpush1.msra.mxu0 0.0
    %4055 = vmatprep.subr.mxu0 0.0
    %4056 = vmatpush1.msra.mxu0 0.0
    %4057 = vmatprep.subr.mxu0 0.0
    %4058 = vmatpush1.msra.mxu0 0.0
    %4059 = vmatprep.subr.mxu0 0.0
    %4060 = vmatpush1.msra.mxu0 0.0
    %4061 = vmatprep.subr.mxu0 0.0
    %4062 = vmatpush1.msra.mxu0 0.0
    %4063 = vmatprep.subr.mxu0 0.0
    %4064 = vmatpush1.msra.mxu0 0.0
    %4065 = vmatprep.subr.mxu0 0.0
    %4066 = vmatpush1.msra.mxu0 0.0
    %4067 = vmatprep.subr.mxu0 0.0
    %4068 = vmatpush1.msra.mxu0 0.0
    %4069 = vmatprep.subr.mxu0 0.0
    %4070 = vmatpush1.msra.mxu0 0.0
    %4071 = vmatprep.subr.mxu0 0.0
    %4072 = vmatpush1.msra.mxu0 0.0
    %4073 = vmatprep.subr.mxu0 0.0
    %4074 = vmatpush1.msra.mxu0 0.0
    %4075 = vmatprep.subr.mxu0 0.0
    %4076 = vmatpush1.msra.mxu0 0.0
    %4077 = vmatprep.subr.mxu0 0.0
    %4078 = vmatpush1.msra.mxu0 0.0
    %4079 = vmatprep.subr.mxu0 0.0
    %4080 = vmatpush1.msra.mxu0 0.0
    %4081 = vmatprep.subr.mxu0 0.0
    %4082 = vmatpush1.msra.mxu0 0.0
    %4083 = vmatprep.subr.mxu0 0.0
    %4084 = vmatpush1.msra.mxu0 0.0
    %4085 = vmatprep.subr.mxu0 0.0
    %4086 = vmatpush1.msra.mxu0 0.0
    %4087 = vmatprep.subr.mxu0 0.0
    %4088 = vmatpush1.msra.mxu0 0.0
    %4089 = vmatprep.subr.mxu0 0.0
    %4090 = vmatpush1.msra.mxu0 0.0
    %4091 = vmatprep.subr.mxu0 0.0
    %4092 = vmatpush1.msra.mxu0 0.0
    %4093 = vmatprep.subr.mxu0 0.0
    %4094 = vmatpush1.msra.mxu0 0.0
    %4095 = vmatprep.subr.mxu0 0.0
    %4096 = vmatpush1.msra.mxu0 0.0
    %4097 = vmatprep.subr.mxu0 0.0
    %4098 = vmatpush1.msra.mxu0 0.0
    %4099 = vmatprep.subr.mxu0 0.0
    %4100 = vmatpush1.msra.mxu0 0.0
    %4101 = vmatprep.subr.mxu0 0.0
    %4102 = vmatpush1.msra.mxu0 0.0
    %4103 = vmatprep.subr.mxu0 0.0
    %4104 = vmatpush1.msra.mxu0 0.0
    %4105 = vmatprep.subr.mxu0 0.0
    %4106 = vmatpush1.msra.mxu0 0.0
    %4107 = vmatprep.mubr.f32.mxu0 0.0
    %4108 = vmatmul.mubr.f32.gmra.mrb[0].mxu0 %v4041
    %v4109 = vpop.f32.mrb[0].mxu0
    %v4110 = vadd.f32 %v416, %v4109
    %v4111 = vpop.f32.mrb[0].mxu0
    %4112 = vdwg.mxu0
    %v4113 = vsel %vm249, %v3568, 0
    %4115 = vmatprep.subr.mxu0 0.0
    %4116 = vmatpush1.msra.mxu0 %v337
    %4117 = vmatprep.subr.mxu0 0.0
    %4118 = vmatpush1.msra.mxu0 %v338
    %4119 = vmatprep.subr.mxu0 0.0
    %4120 = vmatpush1.msra.mxu0 0.0
    %4121 = vmatprep.subr.mxu0 0.0
    %4122 = vmatpush1.msra.mxu0 0.0
    %4123 = vmatprep.subr.mxu0 0.0
    %4124 = vmatpush1.msra.mxu0 0.0
    %4125 = vmatprep.subr.mxu0 0.0
    %4126 = vmatpush1.msra.mxu0 0.0
    %4127 = vmatprep.subr.mxu0 0.0
    %4128 = vmatpush1.msra.mxu0 0.0
    %4129 = vmatprep.subr.mxu0 0.0
    %4130 = vmatpush1.msra.mxu0 0.0
    %4131 = vmatprep.subr.mxu0 0.0
    %4132 = vmatpush1.msra.mxu0 0.0
    %4133 = vmatprep.subr.mxu0 0.0
    %4134 = vmatpush1.msra.mxu0 0.0
    %4135 = vmatprep.subr.mxu0 0.0
    %4136 = vmatpush1.msra.mxu0 0.0
    %4137 = vmatprep.subr.mxu0 0.0
    %4138 = vmatpush1.msra.mxu0 0.0
    %4139 = vmatprep.subr.mxu0 0.0
    %4140 = vmatpush1.msra.mxu0 0.0
    %4141 = vmatprep.subr.mxu0 0.0
    %4142 = vmatpush1.msra.mxu0 0.0
    %4143 = vmatprep.subr.mxu0 0.0
    %4144 = vmatpush1.msra.mxu0 0.0
    %4145 = vmatprep.subr.mxu0 0.0
    %4146 = vmatpush1.msra.mxu0 0.0
    %4147 = vmatprep.subr.mxu0 0.0
    %4148 = vmatpush1.msra.mxu0 0.0
    %4149 = vmatprep.subr.mxu0 0.0
    %4150 = vmatpush1.msra.mxu0 0.0
    %4151 = vmatprep.subr.mxu0 0.0
    %4152 = vmatpush1.msra.mxu0 0.0
    %4153 = vmatprep.subr.mxu0 0.0
    %4154 = vmatpush1.msra.mxu0 0.0
    %4155 = vmatprep.subr.mxu0 0.0
    %4156 = vmatpush1.msra.mxu0 0.0
    %4157 = vmatprep.subr.mxu0 0.0
    %4158 = vmatpush1.msra.mxu0 0.0
    %4159 = vmatprep.subr.mxu0 0.0
    %4160 = vmatpush1.msra.mxu0 0.0
    %4161 = vmatprep.subr.mxu0 0.0
    %4162 = vmatpush1.msra.mxu0 0.0
    %4163 = vmatprep.subr.mxu0 0.0
    %4164 = vmatpush1.msra.mxu0 0.0
    %4165 = vmatprep.subr.mxu0 0.0
    %4166 = vmatpush1.msra.mxu0 0.0
    %4167 = vmatprep.subr.mxu0 0.0
    %4168 = vmatpush1.msra.mxu0 0.0
    %4169 = vmatprep.subr.mxu0 0.0
    %4170 = vmatpush1.msra.mxu0 0.0
    %4171 = vmatprep.subr.mxu0 0.0
    %4172 = vmatpush1.msra.mxu0 0.0
    %4173 = vmatprep.subr.mxu0 0.0
    %4174 = vmatpush1.msra.mxu0 0.0
    %4175 = vmatprep.subr.mxu0 0.0
    %4176 = vmatpush1.msra.mxu0 0.0
    %4177 = vmatprep.subr.mxu0 0.0
    %4178 = vmatpush1.msra.mxu0 0.0
    %4179 = vmatprep.mubr.f32.mxu0 0.0
    %4180 = vmatmul.mubr.f32.gmra.mrb[0].mxu0 %v4113
    %v4181 = vpop.f32.mrb[0].mxu0
    %v4182 = vadd.f32 0.0, %v4181
    %v4183 = vpop.f32.mrb[0].mxu0
    %4184 = vdwg.mxu0
    %4185 = vmatprep.subr.mxu0 0.0
    %4186 = vmatpush1.msra.mxu0 %v350
    %4187 = vmatprep.subr.mxu0 0.0
    %4188 = vmatpush1.msra.mxu0 %v351
    %4189 = vmatprep.subr.mxu0 0.0
    %4190 = vmatpush1.msra.mxu0 0.0
    %4191 = vmatprep.subr.mxu0 0.0
    %4192 = vmatpush1.msra.mxu0 0.0
    %4193 = vmatprep.subr.mxu0 0.0
    %4194 = vmatpush1.msra.mxu0 0.0
    %4195 = vmatprep.subr.mxu0 0.0
    %4196 = vmatpush1.msra.mxu0 0.0
    %4197 = vmatprep.subr.mxu0 0.0
    %4198 = vmatpush1.msra.mxu0 0.0
    %4199 = vmatprep.subr.mxu0 0.0
    %4200 = vmatpush1.msra.mxu0 0.0
    %4201 = vmatprep.subr.mxu0 0.0
    %4202 = vmatpush1.msra.mxu0 0.0
    %4203 = vmatprep.subr.mxu0 0.0
    %4204 = vmatpush1.msra.mxu0 0.0
    %4205 = vmatprep.subr.mxu0 0.0
    %4206 = vmatpush1.msra.mxu0 0.0
    %4207 = vmatprep.subr.mxu0 0.0
    %4208 = vmatpush1.msra.mxu0 0.0
    %4209 = vmatprep.subr.mxu0 0.0
    %4210 = vmatpush1.msra.mxu0 0.0
    %4211 = vmatprep.subr.mxu0 0.0
    %4212 = vmatpush1.msra.mxu0 0.0
    %4213 = vmatprep.subr.mxu0 0.0
    %4214 = vmatpush1.msra.mxu0 0.0
    %4215 = vmatprep.subr.mxu0 0.0
    %4216 = vmatpush1.msra.mxu0 0.0
    %4217 = vmatprep.subr.mxu0 0.0
    %4218 = vmatpush1.msra.mxu0 0.0
    %4219 = vmatprep.subr.mxu0 0.0
    %4220 = vmatpush1.msra.mxu0 0.0
    %4221 = vmatprep.subr.mxu0 0.0
    %4222 = vmatpush1.msra.mxu0 0.0
    %4223 = vmatprep.subr.mxu0 0.0
    %4224 = vmatpush1.msra.mxu0 0.0
    %4225 = vmatprep.subr.mxu0 0.0
    %4226 = vmatpush1.msra.mxu0 0.0
    %4227 = vmatprep.subr.mxu0 0.0
    %4228 = vmatpush1.msra.mxu0 0.0
    %4229 = vmatprep.subr.mxu0 0.0
    %4230 = vmatpush1.msra.mxu0 0.0
    %4231 = vmatprep.subr.mxu0 0.0
    %4232 = vmatpush1.msra.mxu0 0.0
    %4233 = vmatprep.subr.mxu0 0.0
    %4234 = vmatpush1.msra.mxu0 0.0
    %4235 = vmatprep.subr.mxu0 0.0
    %4236 = vmatpush1.msra.mxu0 0.0
    %4237 = vmatprep.subr.mxu0 0.0
    %4238 = vmatpush1.msra.mxu0 0.0
    %4239 = vmatprep.subr.mxu0 0.0
    %4240 = vmatpush1.msra.mxu0 0.0
    %4241 = vmatprep.subr.mxu0 0.0
    %4242 = vmatpush1.msra.mxu0 0.0
    %4243 = vmatprep.subr.mxu0 0.0
    %4244 = vmatpush1.msra.mxu0 0.0
    %4245 = vmatprep.subr.mxu0 0.0
    %4246 = vmatpush1.msra.mxu0 0.0
    %4247 = vmatprep.subr.mxu0 0.0
    %4248 = vmatpush1.msra.mxu0 0.0
    %4249 = vmatprep.mubr.f32.mxu0 0.0
    %4250 = vmatmul.mubr.f32.gmra.mrb[0].mxu0 %v4041
    %v4251 = vpop.f32.mrb[0].mxu0
    %v4252 = vadd.f32 %v4182, %v4251
    %v4253 = vpop.f32.mrb[0].mxu0
    %4254 = vdwg.mxu0
    %v4255 = vadd.f32 %v4252, %v378
    %v4256 = vxor.u32 %v4255, 2147483648
    %v4257 = vmul.f32 %v4256, 1.442695
    %v4258 = vpow.pop %v4257
    %v4259 = vadd.f32 %v4258, 1.0
    %v4260 = vrcp.pop %v4259
    %v4261 = vmul.f32 1.0, %v4260
    %4262 = vmatprep.subr.mxu0 0.0
    %4263 = vmatpush1.msra.mxu0 %v345
    %4264 = vmatprep.subr.mxu0 0.0
    %4265 = vmatpush1.msra.mxu0 %v346
    %4266 = vmatprep.subr.mxu0 0.0
    %4267 = vmatpush1.msra.mxu0 0.0
    %4268 = vmatprep.subr.mxu0 0.0
    %4269 = vmatpush1.msra.mxu0 0.0
    %4270 = vmatprep.subr.mxu0 0.0
    %4271 = vmatpush1.msra.mxu0 0.0
    %4272 = vmatprep.subr.mxu0 0.0
    %4273 = vmatpush1.msra.mxu0 0.0
    %4274 = vmatprep.subr.mxu0 0.0
    %4275 = vmatpush1.msra.mxu0 0.0
    %4276 = vmatprep.subr.mxu0 0.0
    %4277 = vmatpush1.msra.mxu0 0.0
    %4278 = vmatprep.subr.mxu0 0.0
    %4279 = vmatpush1.msra.mxu0 0.0
    %4280 = vmatprep.subr.mxu0 0.0
    %4281 = vmatpush1.msra.mxu0 0.0
    %4282 = vmatprep.subr.mxu0 0.0
    %4283 = vmatpush1.msra.mxu0 0.0
    %4284 = vmatprep.subr.mxu0 0.0
    %4285 = vmatpush1.msra.mxu0 0.0
    %4286 = vmatprep.subr.mxu0 0.0
    %4287 = vmatpush1.msra.mxu0 0.0
    %4288 = vmatprep.subr.mxu0 0.0
    %4289 = vmatpush1.msra.mxu0 0.0
    %4290 = vmatprep.subr.mxu0 0.0
    %4291 = vmatpush1.msra.mxu0 0.0
    %4292 = vmatprep.subr.mxu0 0.0
    %4293 = vmatpush1.msra.mxu0 0.0
    %4294 = vmatprep.subr.mxu0 0.0
    %4295 = vmatpush1.msra.mxu0 0.0
    %4296 = vmatprep.subr.mxu0 0.0
    %4297 = vmatpush1.msra.mxu0 0.0
    %4298 = vmatprep.subr.mxu0 0.0
    %4299 = vmatpush1.msra.mxu0 0.0
    %4300 = vmatprep.subr.mxu0 0.0
    %4301 = vmatpush1.msra.mxu0 0.0
    %4302 = vmatprep.subr.mxu0 0.0
    %4303 = vmatpush1.msra.mxu0 0.0
    %4304 = vmatprep.subr.mxu0 0.0
    %4305 = vmatpush1.msra.mxu0 0.0
    %4306 = vmatprep.subr.mxu0 0.0
    %4307 = vmatpush1.msra.mxu0 0.0
    %4308 = vmatprep.subr.mxu0 0.0
    %4309 = vmatpush1.msra.mxu0 0.0
    %4310 = vmatprep.subr.mxu0 0.0
    %4311 = vmatpush1.msra.mxu0 0.0
    %4312 = vmatprep.subr.mxu0 0.0
    %4313 = vmatpush1.msra.mxu0 0.0
    %4314 = vmatprep.subr.mxu0 0.0
    %4315 = vmatpush1.msra.mxu0 0.0
    %4316 = vmatprep.subr.mxu0 0.0
    %4317 = vmatpush1.msra.mxu0 0.0
    %4318 = vmatprep.subr.mxu0 0.0
    %4319 = vmatpush1.msra.mxu0 0.0
    %4320 = vmatprep.subr.mxu0 0.0
    %4321 = vmatpush1.msra.mxu0 0.0
    %4322 = vmatprep.subr.mxu0 0.0
    %4323 = vmatpush1.msra.mxu0 0.0
    %4324 = vmatprep.subr.mxu0 0.0
    %4325 = vmatpush1.msra.mxu0 0.0
    %4326 = vmatprep.mubr.f32.mxu0 0.0
    %4327 = vmatmul.mubr.f32.gmra.mrb[0].mxu0 %v4113
    %v4328 = vpop.f32.mrb[0].mxu0
    %v4329 = vadd.f32 %v401, %v4328
    %v4330 = vpop.f32.mrb[0].mxu0
    %4331 = vdwg.mxu0
    %v4332 = vmul.f32 %v4261, %v4329
    %v4333 = vadd.f32 %v4110, %v4332
    %v4334 = vtanh.pop %v4333
    %v4335 = vsub.f32 1.0, %v4261
    %4337 = vrot.lane.b32.xlu0 %v4334, 16
    %v4338 = vpop.permute.xlu0 %4337
    %v4340 = vmul.f32 %v4335, %v4338
    %v4341 = vmul.f32 %v4261, %v3565
    %v4342 = vadd.f32 %v4340, %v4341
    %4344 = vrot.lane.b32.xlu0 %v4342, 112
    %v4345 = vpop.permute.xlu0 %4344
    %4347 = vst.msk [vmem:[#allocation3 + $0x8] sm:$0x3] %vm1214, %v4345
    %4348 = vmatprep.subr.mxu0 0.0
    %4349 = vmatpush1.msra.mxu0 %v331
    %4350 = vmatprep.subr.mxu0 0.0
    %4351 = vmatpush1.msra.mxu0 %v332
    %4352 = vmatprep.subr.mxu0 0.0
    %4353 = vmatpush1.msra.mxu0 0.0
    %4354 = vmatprep.subr.mxu0 0.0
    %4355 = vmatpush1.msra.mxu0 0.0
    %4356 = vmatprep.subr.mxu0 0.0
    %4357 = vmatpush1.msra.mxu0 0.0
    %4358 = vmatprep.subr.mxu0 0.0
    %4359 = vmatpush1.msra.mxu0 0.0
    %4360 = vmatprep.subr.mxu0 0.0
    %4361 = vmatpush1.msra.mxu0 0.0
    %4362 = vmatprep.subr.mxu0 0.0
    %4363 = vmatpush1.msra.mxu0 0.0
    %4364 = vmatprep.subr.mxu0 0.0
    %4365 = vmatpush1.msra.mxu0 0.0
    %4366 = vmatprep.subr.mxu0 0.0
    %4367 = vmatpush1.msra.mxu0 0.0
    %4368 = vmatprep.subr.mxu0 0.0
    %4369 = vmatpush1.msra.mxu0 0.0
    %4370 = vmatprep.subr.mxu0 0.0
    %4371 = vmatpush1.msra.mxu0 0.0
    %4372 = vmatprep.subr.mxu0 0.0
    %4373 = vmatpush1.msra.mxu0 0.0
    %4374 = vmatprep.subr.mxu0 0.0
    %4375 = vmatpush1.msra.mxu0 0.0
    %4376 = vmatprep.subr.mxu0 0.0
    %4377 = vmatpush1.msra.mxu0 0.0
    %4378 = vmatprep.subr.mxu0 0.0
    %4379 = vmatpush1.msra.mxu0 0.0
    %4380 = vmatprep.subr.mxu0 0.0
    %4381 = vmatpush1.msra.mxu0 0.0
    %4382 = vmatprep.subr.mxu0 0.0
    %4383 = vmatpush1.msra.mxu0 0.0
    %4384 = vmatprep.subr.mxu0 0.0
    %4385 = vmatpush1.msra.mxu0 0.0
    %4386 = vmatprep.subr.mxu0 0.0
    %4387 = vmatpush1.msra.mxu0 0.0
    %4388 = vmatprep.subr.mxu0 0.0
    %4389 = vmatpush1.msra.mxu0 0.0
    %4390 = vmatprep.subr.mxu0 0.0
    %4391 = vmatpush1.msra.mxu0 0.0
    %4392 = vmatprep.subr.mxu0 0.0
    %4393 = vmatpush1.msra.mxu0 0.0
    %4394 = vmatprep.subr.mxu0 0.0
    %4395 = vmatpush1.msra.mxu0 0.0
    %4396 = vmatprep.subr.mxu0 0.0
    %4397 = vmatpush1.msra.mxu0 0.0
    %4398 = vmatprep.subr.mxu0 0.0
    %4399 = vmatpush1.msra.mxu0 0.0
    %4400 = vmatprep.subr.mxu0 0.0
    %4401 = vmatpush1.msra.mxu0 0.0
    %4402 = vmatprep.subr.mxu0 0.0
    %4403 = vmatpush1.msra.mxu0 0.0
    %4404 = vmatprep.subr.mxu0 0.0
    %4405 = vmatpush1.msra.mxu0 0.0
    %4406 = vmatprep.subr.mxu0 0.0
    %4407 = vmatpush1.msra.mxu0 0.0
    %4408 = vmatprep.subr.mxu0 0.0
    %4409 = vmatpush1.msra.mxu0 0.0
    %4410 = vmatprep.subr.mxu0 0.0
    %4411 = vmatpush1.msra.mxu0 0.0
    %4412 = vmatprep.mubr.f32.mxu0 0.0
    %4413 = vmatmul.mubr.f32.gmra.mrb[0].mxu0 %v3738
    %v4414 = vpop.f32.mrb[0].mxu0
    %v4415 = vadd.f32 0.0, %v4414
    %v4416 = vpop.f32.mrb[0].mxu0
    %4417 = vdwg.mxu0
    %v4419 = vrot.slane %v4415, 6
    %v4421 = vadd.f32 %v328, %v4419
    %v4422 = vadd.f32 %v4421, %v362
    %v4423 = vxor.u32 %v4422, 2147483648
    %v4424 = vmul.f32 %v4423, 1.442695
    %v4425 = vpow.pop %v4424
    %v4426 = vadd.f32 %v4425, 1.0
    %v4427 = vrcp.pop %v4426
    %v4428 = vmul.f32 1.0, %v4427
    %4429 = vmatprep.subr.mxu0 0.0
    %4430 = vmatpush1.msra.mxu0 %v339
    %4431 = vmatprep.subr.mxu0 0.0
    %4432 = vmatpush1.msra.mxu0 %v340
    %4433 = vmatprep.subr.mxu0 0.0
    %4434 = vmatpush1.msra.mxu0 0.0
    %4435 = vmatprep.subr.mxu0 0.0
    %4436 = vmatpush1.msra.mxu0 0.0
    %4437 = vmatprep.subr.mxu0 0.0
    %4438 = vmatpush1.msra.mxu0 0.0
    %4439 = vmatprep.subr.mxu0 0.0
    %4440 = vmatpush1.msra.mxu0 0.0
    %4441 = vmatprep.subr.mxu0 0.0
    %4442 = vmatpush1.msra.mxu0 0.0
    %4443 = vmatprep.subr.mxu0 0.0
    %4444 = vmatpush1.msra.mxu0 0.0
    %4445 = vmatprep.subr.mxu0 0.0
    %4446 = vmatpush1.msra.mxu0 0.0
    %4447 = vmatprep.subr.mxu0 0.0
    %4448 = vmatpush1.msra.mxu0 0.0
    %4449 = vmatprep.subr.mxu0 0.0
    %4450 = vmatpush1.msra.mxu0 0.0
    %4451 = vmatprep.subr.mxu0 0.0
    %4452 = vmatpush1.msra.mxu0 0.0
    %4453 = vmatprep.subr.mxu0 0.0
    %4454 = vmatpush1.msra.mxu0 0.0
    %4455 = vmatprep.subr.mxu0 0.0
    %4456 = vmatpush1.msra.mxu0 0.0
    %4457 = vmatprep.subr.mxu0 0.0
    %4458 = vmatpush1.msra.mxu0 0.0
    %4459 = vmatprep.subr.mxu0 0.0
    %4460 = vmatpush1.msra.mxu0 0.0
    %4461 = vmatprep.subr.mxu0 0.0
    %4462 = vmatpush1.msra.mxu0 0.0
    %4463 = vmatprep.subr.mxu0 0.0
    %4464 = vmatpush1.msra.mxu0 0.0
    %4465 = vmatprep.subr.mxu0 0.0
    %4466 = vmatpush1.msra.mxu0 0.0
    %4467 = vmatprep.subr.mxu0 0.0
    %4468 = vmatpush1.msra.mxu0 0.0
    %4469 = vmatprep.subr.mxu0 0.0
    %4470 = vmatpush1.msra.mxu0 0.0
    %4471 = vmatprep.subr.mxu0 0.0
    %4472 = vmatpush1.msra.mxu0 0.0
    %4473 = vmatprep.subr.mxu0 0.0
    %4474 = vmatpush1.msra.mxu0 0.0
    %4475 = vmatprep.subr.mxu0 0.0
    %4476 = vmatpush1.msra.mxu0 0.0
    %4477 = vmatprep.subr.mxu0 0.0
    %4478 = vmatpush1.msra.mxu0 0.0
    %4479 = vmatprep.subr.mxu0 0.0
    %4480 = vmatpush1.msra.mxu0 0.0
    %4481 = vmatprep.subr.mxu0 0.0
    %4482 = vmatpush1.msra.mxu0 0.0
    %4483 = vmatprep.subr.mxu0 0.0
    %4484 = vmatpush1.msra.mxu0 0.0
    %4485 = vmatprep.subr.mxu0 0.0
    %4486 = vmatpush1.msra.mxu0 0.0
    %4487 = vmatprep.subr.mxu0 0.0
    %4488 = vmatpush1.msra.mxu0 0.0
    %4489 = vmatprep.subr.mxu0 0.0
    %4490 = vmatpush1.msra.mxu0 0.0
    %4491 = vmatprep.subr.mxu0 0.0
    %4492 = vmatpush1.msra.mxu0 0.0
    %4493 = vmatprep.mubr.f32.mxu0 0.0
    %4494 = vmatmul.mubr.f32.gmra.mrb[0].mxu0 %v3738
    %v4495 = vpop.f32.mrb[0].mxu0
    %v4496 = vadd.f32 %v385, %v4495
    %v4497 = vpop.f32.mrb[0].mxu0
    %4498 = vdwg.mxu0
    %v4500 = vrot.slane %v4496, 6
    %v4502 = vmul.f32 %v4428, %v4500
    %4504 = vrot.lane.b32.xlu0 %v4502, 32
    %v4505 = vpop.permute.xlu0 %4504
    %v4507 = vadd.f32 %v328, %v4505
    %v4508 = vtanh.pop %v4507
    %v4509 = vsub.f32 1.0, %v4428
    %4511 = vrot.lane.b32.xlu0 %v4508, 112
    %v4512 = vpop.permute.xlu0 %4511
    %v4514 = vmul.f32 %v4509, %v4512
    %v4515 = vrot.slane %v3734, 6
    %v4517 = vmul.f32 %v4428, %v4515
    %v4518 = vadd.f32 %v4514, %v4517
    %v4520 = vrot.slane %v4518, 2
    %4521 = vrot.lane.b32.xlu0 %v4520, 112
    %v4522 = vpop.permute.xlu0 %4521
    %v4523 = vsel %vm249, %v4522, 0
    %4525 = vmatprep.subr.mxu0 0.0
    %4526 = vmatpush1.msra.mxu0 %v352
    %4527 = vmatprep.subr.mxu0 0.0
    %4528 = vmatpush1.msra.mxu0 %v353
    %4529 = vmatprep.subr.mxu0 0.0
    %4530 = vmatpush1.msra.mxu0 0.0
    %4531 = vmatprep.subr.mxu0 0.0
    %4532 = vmatpush1.msra.mxu0 0.0
    %4533 = vmatprep.subr.mxu0 0.0
    %4534 = vmatpush1.msra.mxu0 0.0
    %4535 = vmatprep.subr.mxu0 0.0
    %4536 = vmatpush1.msra.mxu0 0.0
    %4537 = vmatprep.subr.mxu0 0.0
    %4538 = vmatpush1.msra.mxu0 0.0
    %4539 = vmatprep.subr.mxu0 0.0
    %4540 = vmatpush1.msra.mxu0 0.0
    %4541 = vmatprep.subr.mxu0 0.0
    %4542 = vmatpush1.msra.mxu0 0.0
    %4543 = vmatprep.subr.mxu0 0.0
    %4544 = vmatpush1.msra.mxu0 0.0
    %4545 = vmatprep.subr.mxu0 0.0
    %4546 = vmatpush1.msra.mxu0 0.0
    %4547 = vmatprep.subr.mxu0 0.0
    %4548 = vmatpush1.msra.mxu0 0.0
    %4549 = vmatprep.subr.mxu0 0.0
    %4550 = vmatpush1.msra.mxu0 0.0
    %4551 = vmatprep.subr.mxu0 0.0
    %4552 = vmatpush1.msra.mxu0 0.0
    %4553 = vmatprep.subr.mxu0 0.0
    %4554 = vmatpush1.msra.mxu0 0.0
    %4555 = vmatprep.subr.mxu0 0.0
    %4556 = vmatpush1.msra.mxu0 0.0
    %4557 = vmatprep.subr.mxu0 0.0
    %4558 = vmatpush1.msra.mxu0 0.0
    %4559 = vmatprep.subr.mxu0 0.0
    %4560 = vmatpush1.msra.mxu0 0.0
    %4561 = vmatprep.subr.mxu0 0.0
    %4562 = vmatpush1.msra.mxu0 0.0
    %4563 = vmatprep.subr.mxu0 0.0
    %4564 = vmatpush1.msra.mxu0 0.0
    %4565 = vmatprep.subr.mxu0 0.0
    %4566 = vmatpush1.msra.mxu0 0.0
    %4567 = vmatprep.subr.mxu0 0.0
    %4568 = vmatpush1.msra.mxu0 0.0
    %4569 = vmatprep.subr.mxu0 0.0
    %4570 = vmatpush1.msra.mxu0 0.0
    %4571 = vmatprep.subr.mxu0 0.0
    %4572 = vmatpush1.msra.mxu0 0.0
    %4573 = vmatprep.subr.mxu0 0.0
    %4574 = vmatpush1.msra.mxu0 0.0
    %4575 = vmatprep.subr.mxu0 0.0
    %4576 = vmatpush1.msra.mxu0 0.0
    %4577 = vmatprep.subr.mxu0 0.0
    %4578 = vmatpush1.msra.mxu0 0.0
    %4579 = vmatprep.subr.mxu0 0.0
    %4580 = vmatpush1.msra.mxu0 0.0
    %4581 = vmatprep.subr.mxu0 0.0
    %4582 = vmatpush1.msra.mxu0 0.0
    %4583 = vmatprep.subr.mxu0 0.0
    %4584 = vmatpush1.msra.mxu0 0.0
    %4585 = vmatprep.subr.mxu0 0.0
    %4586 = vmatpush1.msra.mxu0 0.0
    %4587 = vmatprep.subr.mxu0 0.0
    %4588 = vmatpush1.msra.mxu0 0.0
    %4589 = vmatprep.mubr.f32.mxu0 0.0
    %4590 = vmatmul.mubr.f32.gmra.mrb[0].mxu0 %v4523
    %v4591 = vpop.f32.mrb[0].mxu0
    %v4592 = vadd.f32 %v408, %v4591
    %v4593 = vpop.f32.mrb[0].mxu0
    %4594 = vdwg.mxu0
    %4595 = vmatprep.subr.mxu0 0.0
    %4596 = vmatpush1.msra.mxu0 %v334
    %4597 = vmatprep.subr.mxu0 0.0
    %4598 = vmatpush1.msra.mxu0 %v335
    %4599 = vmatprep.subr.mxu0 0.0
    %4600 = vmatpush1.msra.mxu0 0.0
    %4601 = vmatprep.subr.mxu0 0.0
    %4602 = vmatpush1.msra.mxu0 0.0
    %4603 = vmatprep.subr.mxu0 0.0
    %4604 = vmatpush1.msra.mxu0 0.0
    %4605 = vmatprep.subr.mxu0 0.0
    %4606 = vmatpush1.msra.mxu0 0.0
    %4607 = vmatprep.subr.mxu0 0.0
    %4608 = vmatpush1.msra.mxu0 0.0
    %4609 = vmatprep.subr.mxu0 0.0
    %4610 = vmatpush1.msra.mxu0 0.0
    %4611 = vmatprep.subr.mxu0 0.0
    %4612 = vmatpush1.msra.mxu0 0.0
    %4613 = vmatprep.subr.mxu0 0.0
    %4614 = vmatpush1.msra.mxu0 0.0
    %4615 = vmatprep.subr.mxu0 0.0
    %4616 = vmatpush1.msra.mxu0 0.0
    %4617 = vmatprep.subr.mxu0 0.0
    %4618 = vmatpush1.msra.mxu0 0.0
    %4619 = vmatprep.subr.mxu0 0.0
    %4620 = vmatpush1.msra.mxu0 0.0
    %4621 = vmatprep.subr.mxu0 0.0
    %4622 = vmatpush1.msra.mxu0 0.0
    %4623 = vmatprep.subr.mxu0 0.0
    %4624 = vmatpush1.msra.mxu0 0.0
    %4625 = vmatprep.subr.mxu0 0.0
    %4626 = vmatpush1.msra.mxu0 0.0
    %4627 = vmatprep.subr.mxu0 0.0
    %4628 = vmatpush1.msra.mxu0 0.0
    %4629 = vmatprep.subr.mxu0 0.0
    %4630 = vmatpush1.msra.mxu0 0.0
    %4631 = vmatprep.subr.mxu0 0.0
    %4632 = vmatpush1.msra.mxu0 0.0
    %4633 = vmatprep.subr.mxu0 0.0
    %4634 = vmatpush1.msra.mxu0 0.0
    %4635 = vmatprep.subr.mxu0 0.0
    %4636 = vmatpush1.msra.mxu0 0.0
    %4637 = vmatprep.subr.mxu0 0.0
    %4638 = vmatpush1.msra.mxu0 0.0
    %4639 = vmatprep.subr.mxu0 0.0
    %4640 = vmatpush1.msra.mxu0 0.0
    %4641 = vmatprep.subr.mxu0 0.0
    %4642 = vmatpush1.msra.mxu0 0.0
    %4643 = vmatprep.subr.mxu0 0.0
    %4644 = vmatpush1.msra.mxu0 0.0
    %4645 = vmatprep.subr.mxu0 0.0
    %4646 = vmatpush1.msra.mxu0 0.0
    %4647 = vmatprep.subr.mxu0 0.0
    %4648 = vmatpush1.msra.mxu0 0.0
    %4649 = vmatprep.subr.mxu0 0.0
    %4650 = vmatpush1.msra.mxu0 0.0
    %4651 = vmatprep.subr.mxu0 0.0
    %4652 = vmatpush1.msra.mxu0 0.0
    %4653 = vmatprep.subr.mxu0 0.0
    %4654 = vmatpush1.msra.mxu0 0.0
    %4655 = vmatprep.subr.mxu0 0.0
    %4656 = vmatpush1.msra.mxu0 0.0
    %4657 = vmatprep.subr.mxu0 0.0
    %4658 = vmatpush1.msra.mxu0 0.0
    %4659 = vmatprep.mubr.f32.mxu0 0.0
    %4660 = vmatmul.mubr.f32.gmra.mrb[0].mxu0 %v4041
    %v4661 = vpop.f32.mrb[0].mxu0
    %v4662 = vadd.f32 0.0, %v4661
    %v4663 = vpop.f32.mrb[0].mxu0
    %4664 = vdwg.mxu0
    %4665 = vmatprep.subr.mxu0 0.0
    %4666 = vmatpush1.msra.mxu0 %v347
    %4667 = vmatprep.subr.mxu0 0.0
    %4668 = vmatpush1.msra.mxu0 %v348
    %4669 = vmatprep.subr.mxu0 0.0
    %4670 = vmatpush1.msra.mxu0 0.0
    %4671 = vmatprep.subr.mxu0 0.0
    %4672 = vmatpush1.msra.mxu0 0.0
    %4673 = vmatprep.subr.mxu0 0.0
    %4674 = vmatpush1.msra.mxu0 0.0
    %4675 = vmatprep.subr.mxu0 0.0
    %4676 = vmatpush1.msra.mxu0 0.0
    %4677 = vmatprep.subr.mxu0 0.0
    %4678 = vmatpush1.msra.mxu0 0.0
    %4679 = vmatprep.subr.mxu0 0.0
    %4680 = vmatpush1.msra.mxu0 0.0
    %4681 = vmatprep.subr.mxu0 0.0
    %4682 = vmatpush1.msra.mxu0 0.0
    %4683 = vmatprep.subr.mxu0 0.0
    %4684 = vmatpush1.msra.mxu0 0.0
    %4685 = vmatprep.subr.mxu0 0.0
    %4686 = vmatpush1.msra.mxu0 0.0
    %4687 = vmatprep.subr.mxu0 0.0
    %4688 = vmatpush1.msra.mxu0 0.0
    %4689 = vmatprep.subr.mxu0 0.0
    %4690 = vmatpush1.msra.mxu0 0.0
    %4691 = vmatprep.subr.mxu0 0.0
    %4692 = vmatpush1.msra.mxu0 0.0
    %4693 = vmatprep.subr.mxu0 0.0
    %4694 = vmatpush1.msra.mxu0 0.0
    %4695 = vmatprep.subr.mxu0 0.0
    %4696 = vmatpush1.msra.mxu0 0.0
    %4697 = vmatprep.subr.mxu0 0.0
    %4698 = vmatpush1.msra.mxu0 0.0
    %4699 = vmatprep.subr.mxu0 0.0
    %4700 = vmatpush1.msra.mxu0 0.0
    %4701 = vmatprep.subr.mxu0 0.0
    %4702 = vmatpush1.msra.mxu0 0.0
    %4703 = vmatprep.subr.mxu0 0.0
    %4704 = vmatpush1.msra.mxu0 0.0
    %4705 = vmatprep.subr.mxu0 0.0
    %4706 = vmatpush1.msra.mxu0 0.0
    %4707 = vmatprep.subr.mxu0 0.0
    %4708 = vmatpush1.msra.mxu0 0.0
    %4709 = vmatprep.subr.mxu0 0.0
    %4710 = vmatpush1.msra.mxu0 0.0
    %4711 = vmatprep.subr.mxu0 0.0
    %4712 = vmatpush1.msra.mxu0 0.0
    %4713 = vmatprep.subr.mxu0 0.0
    %4714 = vmatpush1.msra.mxu0 0.0
    %4715 = vmatprep.subr.mxu0 0.0
    %4716 = vmatpush1.msra.mxu0 0.0
    %4717 = vmatprep.subr.mxu0 0.0
    %4718 = vmatpush1.msra.mxu0 0.0
    %4719 = vmatprep.subr.mxu0 0.0
    %4720 = vmatpush1.msra.mxu0 0.0
    %4721 = vmatprep.subr.mxu0 0.0
    %4722 = vmatpush1.msra.mxu0 0.0
    %4723 = vmatprep.subr.mxu0 0.0
    %4724 = vmatpush1.msra.mxu0 0.0
    %4725 = vmatprep.subr.mxu0 0.0
    %4726 = vmatpush1.msra.mxu0 0.0
    %4727 = vmatprep.subr.mxu0 0.0
    %4728 = vmatpush1.msra.mxu0 0.0
    %4729 = vmatprep.mubr.f32.mxu0 0.0
    %4730 = vmatmul.mubr.f32.gmra.mrb[0].mxu0 %v4523
    %v4731 = vpop.f32.mrb[0].mxu0
    %v4732 = vadd.f32 %v4662, %v4731
    %v4733 = vpop.f32.mrb[0].mxu0
    %4734 = vdwg.mxu0
    %v4735 = vadd.f32 %v4732, %v370
    %v4736 = vxor.u32 %v4735, 2147483648
    %v4737 = vmul.f32 %v4736, 1.442695
    %v4738 = vpow.pop %v4737
    %v4739 = vadd.f32 %v4738, 1.0
    %v4740 = vrcp.pop %v4739
    %v4741 = vmul.f32 1.0, %v4740
    %4742 = vmatprep.subr.mxu0 0.0
    %4743 = vmatpush1.msra.mxu0 %v342
    %4744 = vmatprep.subr.mxu0 0.0
    %4745 = vmatpush1.msra.mxu0 %v343
    %4746 = vmatprep.subr.mxu0 0.0
    %4747 = vmatpush1.msra.mxu0 0.0
    %4748 = vmatprep.subr.mxu0 0.0
    %4749 = vmatpush1.msra.mxu0 0.0
    %4750 = vmatprep.subr.mxu0 0.0
    %4751 = vmatpush1.msra.mxu0 0.0
    %4752 = vmatprep.subr.mxu0 0.0
    %4753 = vmatpush1.msra.mxu0 0.0
    %4754 = vmatprep.subr.mxu0 0.0
    %4755 = vmatpush1.msra.mxu0 0.0
    %4756 = vmatprep.subr.mxu0 0.0
    %4757 = vmatpush1.msra.mxu0 0.0
    %4758 = vmatprep.subr.mxu0 0.0
    %4759 = vmatpush1.msra.mxu0 0.0
    %4760 = vmatprep.subr.mxu0 0.0
    %4761 = vmatpush1.msra.mxu0 0.0
    %4762 = vmatprep.subr.mxu0 0.0
    %4763 = vmatpush1.msra.mxu0 0.0
    %4764 = vmatprep.subr.mxu0 0.0
    %4765 = vmatpush1.msra.mxu0 0.0
    %4766 = vmatprep.subr.mxu0 0.0
    %4767 = vmatpush1.msra.mxu0 0.0
    %4768 = vmatprep.subr.mxu0 0.0
    %4769 = vmatpush1.msra.mxu0 0.0
    %4770 = vmatprep.subr.mxu0 0.0
    %4771 = vmatpush1.msra.mxu0 0.0
    %4772 = vmatprep.subr.mxu0 0.0
    %4773 = vmatpush1.msra.mxu0 0.0
    %4774 = vmatprep.subr.mxu0 0.0
    %4775 = vmatpush1.msra.mxu0 0.0
    %4776 = vmatprep.subr.mxu0 0.0
    %4777 = vmatpush1.msra.mxu0 0.0
    %4778 = vmatprep.subr.mxu0 0.0
    %4779 = vmatpush1.msra.mxu0 0.0
    %4780 = vmatprep.subr.mxu0 0.0
    %4781 = vmatpush1.msra.mxu0 0.0
    %4782 = vmatprep.subr.mxu0 0.0
    %4783 = vmatpush1.msra.mxu0 0.0
    %4784 = vmatprep.subr.mxu0 0.0
    %4785 = vmatpush1.msra.mxu0 0.0
    %4786 = vmatprep.subr.mxu0 0.0
    %4787 = vmatpush1.msra.mxu0 0.0
    %4788 = vmatprep.subr.mxu0 0.0
    %4789 = vmatpush1.msra.mxu0 0.0
    %4790 = vmatprep.subr.mxu0 0.0
    %4791 = vmatpush1.msra.mxu0 0.0
    %4792 = vmatprep.subr.mxu0 0.0
    %4793 = vmatpush1.msra.mxu0 0.0
    %4794 = vmatprep.subr.mxu0 0.0
    %4795 = vmatpush1.msra.mxu0 0.0
    %4796 = vmatprep.subr.mxu0 0.0
    %4797 = vmatpush1.msra.mxu0 0.0
    %4798 = vmatprep.subr.mxu0 0.0
    %4799 = vmatpush1.msra.mxu0 0.0
    %4800 = vmatprep.subr.mxu0 0.0
    %4801 = vmatpush1.msra.mxu0 0.0
    %4802 = vmatprep.subr.mxu0 0.0
    %4803 = vmatpush1.msra.mxu0 0.0
    %4804 = vmatprep.subr.mxu0 0.0
    %4805 = vmatpush1.msra.mxu0 0.0
    %4806 = vmatprep.mubr.f32.mxu0 0.0
    %4807 = vmatmul.mubr.f32.gmra.mrb[0].mxu0 %v4041
    %v4808 = vpop.f32.mrb[0].mxu0
    %v4809 = vadd.f32 %v393, %v4808
    %v4810 = vpop.f32.mrb[0].mxu0
    %4811 = vdwg.mxu0
    %v4812 = vmul.f32 %v4741, %v4809
    %v4813 = vadd.f32 %v4592, %v4812
    %v4814 = vtanh.pop %v4813
    %v4815 = vsub.f32 1.0, %v4741
    %4817 = vrot.lane.b32.xlu0 %v4814, 16
    %v4818 = vpop.permute.xlu0 %4817
    %v4820 = vmul.f32 %v4815, %v4818
    %v4821 = vmul.f32 %v4741, %v4037
    %v4822 = vadd.f32 %v4820, %v4821
    %4824 = vrot.lane.b32.xlu0 %v4822, 112
    %v4825 = vpop.permute.xlu0 %4824
    %v4826 = vsel %vm249, %v4825, 0
    %4828 = vmatprep.subr.mxu0 0.0
    %4829 = vmatpush1.msra.mxu0 %v355
    %4830 = vmatprep.subr.mxu0 0.0
    %4831 = vmatpush1.msra.mxu0 %v356
    %4832 = vmatprep.subr.mxu0 0.0
    %4833 = vmatpush1.msra.mxu0 0.0
    %4834 = vmatprep.subr.mxu0 0.0
    %4835 = vmatpush1.msra.mxu0 0.0
    %4836 = vmatprep.subr.mxu0 0.0
    %4837 = vmatpush1.msra.mxu0 0.0
    %4838 = vmatprep.subr.mxu0 0.0
    %4839 = vmatpush1.msra.mxu0 0.0
    %4840 = vmatprep.subr.mxu0 0.0
    %4841 = vmatpush1.msra.mxu0 0.0
    %4842 = vmatprep.subr.mxu0 0.0
    %4843 = vmatpush1.msra.mxu0 0.0
    %4844 = vmatprep.subr.mxu0 0.0
    %4845 = vmatpush1.msra.mxu0 0.0
    %4846 = vmatprep.subr.mxu0 0.0
    %4847 = vmatpush1.msra.mxu0 0.0
    %4848 = vmatprep.subr.mxu0 0.0
    %4849 = vmatpush1.msra.mxu0 0.0
    %4850 = vmatprep.subr.mxu0 0.0
    %4851 = vmatpush1.msra.mxu0 0.0
    %4852 = vmatprep.subr.mxu0 0.0
    %4853 = vmatpush1.msra.mxu0 0.0
    %4854 = vmatprep.subr.mxu0 0.0
    %4855 = vmatpush1.msra.mxu0 0.0
    %4856 = vmatprep.subr.mxu0 0.0
    %4857 = vmatpush1.msra.mxu0 0.0
    %4858 = vmatprep.subr.mxu0 0.0
    %4859 = vmatpush1.msra.mxu0 0.0
    %4860 = vmatprep.subr.mxu0 0.0
    %4861 = vmatpush1.msra.mxu0 0.0
    %4862 = vmatprep.subr.mxu0 0.0
    %4863 = vmatpush1.msra.mxu0 0.0
    %4864 = vmatprep.subr.mxu0 0.0
    %4865 = vmatpush1.msra.mxu0 0.0
    %4866 = vmatprep.subr.mxu0 0.0
    %4867 = vmatpush1.msra.mxu0 0.0
    %4868 = vmatprep.subr.mxu0 0.0
    %4869 = vmatpush1.msra.mxu0 0.0
    %4870 = vmatprep.subr.mxu0 0.0
    %4871 = vmatpush1.msra.mxu0 0.0
    %4872 = vmatprep.subr.mxu0 0.0
    %4873 = vmatpush1.msra.mxu0 0.0
    %4874 = vmatprep.subr.mxu0 0.0
    %4875 = vmatpush1.msra.mxu0 0.0
    %4876 = vmatprep.subr.mxu0 0.0
    %4877 = vmatpush1.msra.mxu0 0.0
    %4878 = vmatprep.subr.mxu0 0.0
    %4879 = vmatpush1.msra.mxu0 0.0
    %4880 = vmatprep.subr.mxu0 0.0
    %4881 = vmatpush1.msra.mxu0 0.0
    %4882 = vmatprep.subr.mxu0 0.0
    %4883 = vmatpush1.msra.mxu0 0.0
    %4884 = vmatprep.subr.mxu0 0.0
    %4885 = vmatpush1.msra.mxu0 0.0
    %4886 = vmatprep.subr.mxu0 0.0
    %4887 = vmatpush1.msra.mxu0 0.0
    %4888 = vmatprep.subr.mxu0 0.0
    %4889 = vmatpush1.msra.mxu0 0.0
    %4890 = vmatprep.subr.mxu0 0.0
    %4891 = vmatpush1.msra.mxu0 0.0
    %4892 = vmatprep.mubr.f32.mxu0 0.0
    %4893 = vmatmul.mubr.f32.gmra.mrb[0].mxu0 %v4826
    %v4894 = vpop.f32.mrb[0].mxu0
    %v4895 = vadd.f32 %v416, %v4894
    %v4896 = vpop.f32.mrb[0].mxu0
    %4897 = vdwg.mxu0
    %v4898 = vsel %vm249, %v4345, 0
    %4900 = vmatprep.subr.mxu0 0.0
    %4901 = vmatpush1.msra.mxu0 %v337
    %4902 = vmatprep.subr.mxu0 0.0
    %4903 = vmatpush1.msra.mxu0 %v338
    %4904 = vmatprep.subr.mxu0 0.0
    %4905 = vmatpush1.msra.mxu0 0.0
    %4906 = vmatprep.subr.mxu0 0.0
    %4907 = vmatpush1.msra.mxu0 0.0
    %4908 = vmatprep.subr.mxu0 0.0
    %4909 = vmatpush1.msra.mxu0 0.0
    %4910 = vmatprep.subr.mxu0 0.0
    %4911 = vmatpush1.msra.mxu0 0.0
    %4912 = vmatprep.subr.mxu0 0.0
    %4913 = vmatpush1.msra.mxu0 0.0
    %4914 = vmatprep.subr.mxu0 0.0
    %4915 = vmatpush1.msra.mxu0 0.0
    %4916 = vmatprep.subr.mxu0 0.0
    %4917 = vmatpush1.msra.mxu0 0.0
    %4918 = vmatprep.subr.mxu0 0.0
    %4919 = vmatpush1.msra.mxu0 0.0
    %4920 = vmatprep.subr.mxu0 0.0
    %4921 = vmatpush1.msra.mxu0 0.0
    %4922 = vmatprep.subr.mxu0 0.0
    %4923 = vmatpush1.msra.mxu0 0.0
    %4924 = vmatprep.subr.mxu0 0.0
    %4925 = vmatpush1.msra.mxu0 0.0
    %4926 = vmatprep.subr.mxu0 0.0
    %4927 = vmatpush1.msra.mxu0 0.0
    %4928 = vmatprep.subr.mxu0 0.0
    %4929 = vmatpush1.msra.mxu0 0.0
    %4930 = vmatprep.subr.mxu0 0.0
    %4931 = vmatpush1.msra.mxu0 0.0
    %4932 = vmatprep.subr.mxu0 0.0
    %4933 = vmatpush1.msra.mxu0 0.0
    %4934 = vmatprep.subr.mxu0 0.0
    %4935 = vmatpush1.msra.mxu0 0.0
    %4936 = vmatprep.subr.mxu0 0.0
    %4937 = vmatpush1.msra.mxu0 0.0
    %4938 = vmatprep.subr.mxu0 0.0
    %4939 = vmatpush1.msra.mxu0 0.0
    %4940 = vmatprep.subr.mxu0 0.0
    %4941 = vmatpush1.msra.mxu0 0.0
    %4942 = vmatprep.subr.mxu0 0.0
    %4943 = vmatpush1.msra.mxu0 0.0
    %4944 = vmatprep.subr.mxu0 0.0
    %4945 = vmatpush1.msra.mxu0 0.0
    %4946 = vmatprep.subr.mxu0 0.0
    %4947 = vmatpush1.msra.mxu0 0.0
    %4948 = vmatprep.subr.mxu0 0.0
    %4949 = vmatpush1.msra.mxu0 0.0
    %4950 = vmatprep.subr.mxu0 0.0
    %4951 = vmatpush1.msra.mxu0 0.0
    %4952 = vmatprep.subr.mxu0 0.0
    %4953 = vmatpush1.msra.mxu0 0.0
    %4954 = vmatprep.subr.mxu0 0.0
    %4955 = vmatpush1.msra.mxu0 0.0
    %4956 = vmatprep.subr.mxu0 0.0
    %4957 = vmatpush1.msra.mxu0 0.0
    %4958 = vmatprep.subr.mxu0 0.0
    %4959 = vmatpush1.msra.mxu0 0.0
    %4960 = vmatprep.subr.mxu0 0.0
    %4961 = vmatpush1.msra.mxu0 0.0
    %4962 = vmatprep.subr.mxu0 0.0
    %4963 = vmatpush1.msra.mxu0 0.0
    %4964 = vmatprep.mubr.f32.mxu0 0.0
    %4965 = vmatmul.mubr.f32.gmra.mrb[0].mxu0 %v4898
    %v4966 = vpop.f32.mrb[0].mxu0
    %v4967 = vadd.f32 0.0, %v4966
    %v4968 = vpop.f32.mrb[0].mxu0
    %4969 = vdwg.mxu0
    %4970 = vmatprep.subr.mxu0 0.0
    %4971 = vmatpush1.msra.mxu0 %v350
    %4972 = vmatprep.subr.mxu0 0.0
    %4973 = vmatpush1.msra.mxu0 %v351
    %4974 = vmatprep.subr.mxu0 0.0
    %4975 = vmatpush1.msra.mxu0 0.0
    %4976 = vmatprep.subr.mxu0 0.0
    %4977 = vmatpush1.msra.mxu0 0.0
    %4978 = vmatprep.subr.mxu0 0.0
    %4979 = vmatpush1.msra.mxu0 0.0
    %4980 = vmatprep.subr.mxu0 0.0
    %4981 = vmatpush1.msra.mxu0 0.0
    %4982 = vmatprep.subr.mxu0 0.0
    %4983 = vmatpush1.msra.mxu0 0.0
    %4984 = vmatprep.subr.mxu0 0.0
    %4985 = vmatpush1.msra.mxu0 0.0
    %4986 = vmatprep.subr.mxu0 0.0
    %4987 = vmatpush1.msra.mxu0 0.0
    %4988 = vmatprep.subr.mxu0 0.0
    %4989 = vmatpush1.msra.mxu0 0.0
    %4990 = vmatprep.subr.mxu0 0.0
    %4991 = vmatpush1.msra.mxu0 0.0
    %4992 = vmatprep.subr.mxu0 0.0
    %4993 = vmatpush1.msra.mxu0 0.0
    %4994 = vmatprep.subr.mxu0 0.0
    %4995 = vmatpush1.msra.mxu0 0.0
    %4996 = vmatprep.subr.mxu0 0.0
    %4997 = vmatpush1.msra.mxu0 0.0
    %4998 = vmatprep.subr.mxu0 0.0
    %4999 = vmatpush1.msra.mxu0 0.0
    %5000 = vmatprep.subr.mxu0 0.0
    %5001 = vmatpush1.msra.mxu0 0.0
    %5002 = vmatprep.subr.mxu0 0.0
    %5003 = vmatpush1.msra.mxu0 0.0
    %5004 = vmatprep.subr.mxu0 0.0
    %5005 = vmatpush1.msra.mxu0 0.0
    %5006 = vmatprep.subr.mxu0 0.0
    %5007 = vmatpush1.msra.mxu0 0.0
    %5008 = vmatprep.subr.mxu0 0.0
    %5009 = vmatpush1.msra.mxu0 0.0
    %5010 = vmatprep.subr.mxu0 0.0
    %5011 = vmatpush1.msra.mxu0 0.0
    %5012 = vmatprep.subr.mxu0 0.0
    %5013 = vmatpush1.msra.mxu0 0.0
    %5014 = vmatprep.subr.mxu0 0.0
    %5015 = vmatpush1.msra.mxu0 0.0
    %5016 = vmatprep.subr.mxu0 0.0
    %5017 = vmatpush1.msra.mxu0 0.0
    %5018 = vmatprep.subr.mxu0 0.0
    %5019 = vmatpush1.msra.mxu0 0.0
    %5020 = vmatprep.subr.mxu0 0.0
    %5021 = vmatpush1.msra.mxu0 0.0
    %5022 = vmatprep.subr.mxu0 0.0
    %5023 = vmatpush1.msra.mxu0 0.0
    %5024 = vmatprep.subr.mxu0 0.0
    %5025 = vmatpush1.msra.mxu0 0.0
    %5026 = vmatprep.subr.mxu0 0.0
    %5027 = vmatpush1.msra.mxu0 0.0
    %5028 = vmatprep.subr.mxu0 0.0
    %5029 = vmatpush1.msra.mxu0 0.0
    %5030 = vmatprep.subr.mxu0 0.0
    %5031 = vmatpush1.msra.mxu0 0.0
    %5032 = vmatprep.subr.mxu0 0.0
    %5033 = vmatpush1.msra.mxu0 0.0
    %5034 = vmatprep.mubr.f32.mxu0 0.0
    %5035 = vmatmul.mubr.f32.gmra.mrb[0].mxu0 %v4826
    %v5036 = vpop.f32.mrb[0].mxu0
    %v5037 = vadd.f32 %v4967, %v5036
    %v5038 = vpop.f32.mrb[0].mxu0
    %5039 = vdwg.mxu0
    %v5040 = vadd.f32 %v5037, %v378
    %v5041 = vxor.u32 %v5040, 2147483648
    %v5042 = vmul.f32 %v5041, 1.442695
    %v5043 = vpow.pop %v5042
    %v5044 = vadd.f32 %v5043, 1.0
    %v5045 = vrcp.pop %v5044
    %v5046 = vmul.f32 1.0, %v5045
    %5047 = vmatprep.subr.mxu0 0.0
    %5048 = vmatpush1.msra.mxu0 %v345
    %5049 = vmatprep.subr.mxu0 0.0
    %5050 = vmatpush1.msra.mxu0 %v346
    %5051 = vmatprep.subr.mxu0 0.0
    %5052 = vmatpush1.msra.mxu0 0.0
    %5053 = vmatprep.subr.mxu0 0.0
    %5054 = vmatpush1.msra.mxu0 0.0
    %5055 = vmatprep.subr.mxu0 0.0
    %5056 = vmatpush1.msra.mxu0 0.0
    %5057 = vmatprep.subr.mxu0 0.0
    %5058 = vmatpush1.msra.mxu0 0.0
    %5059 = vmatprep.subr.mxu0 0.0
    %5060 = vmatpush1.msra.mxu0 0.0
    %5061 = vmatprep.subr.mxu0 0.0
    %5062 = vmatpush1.msra.mxu0 0.0
    %5063 = vmatprep.subr.mxu0 0.0
    %5064 = vmatpush1.msra.mxu0 0.0
    %5065 = vmatprep.subr.mxu0 0.0
    %5066 = vmatpush1.msra.mxu0 0.0
    %5067 = vmatprep.subr.mxu0 0.0
    %5068 = vmatpush1.msra.mxu0 0.0
    %5069 = vmatprep.subr.mxu0 0.0
    %5070 = vmatpush1.msra.mxu0 0.0
    %5071 = vmatprep.subr.mxu0 0.0
    %5072 = vmatpush1.msra.mxu0 0.0
    %5073 = vmatprep.subr.mxu0 0.0
    %5074 = vmatpush1.msra.mxu0 0.0
    %5075 = vmatprep.subr.mxu0 0.0
    %5076 = vmatpush1.msra.mxu0 0.0
    %5077 = vmatprep.subr.mxu0 0.0
    %5078 = vmatpush1.msra.mxu0 0.0
    %5079 = vmatprep.subr.mxu0 0.0
    %5080 = vmatpush1.msra.mxu0 0.0
    %5081 = vmatprep.subr.mxu0 0.0
    %5082 = vmatpush1.msra.mxu0 0.0
    %5083 = vmatprep.subr.mxu0 0.0
    %5084 = vmatpush1.msra.mxu0 0.0
    %5085 = vmatprep.subr.mxu0 0.0
    %5086 = vmatpush1.msra.mxu0 0.0
    %5087 = vmatprep.subr.mxu0 0.0
    %5088 = vmatpush1.msra.mxu0 0.0
    %5089 = vmatprep.subr.mxu0 0.0
    %5090 = vmatpush1.msra.mxu0 0.0
    %5091 = vmatprep.subr.mxu0 0.0
    %5092 = vmatpush1.msra.mxu0 0.0
    %5093 = vmatprep.subr.mxu0 0.0
    %5094 = vmatpush1.msra.mxu0 0.0
    %5095 = vmatprep.subr.mxu0 0.0
    %5096 = vmatpush1.msra.mxu0 0.0
    %5097 = vmatprep.subr.mxu0 0.0
    %5098 = vmatpush1.msra.mxu0 0.0
    %5099 = vmatprep.subr.mxu0 0.0
    %5100 = vmatpush1.msra.mxu0 0.0
    %5101 = vmatprep.subr.mxu0 0.0
    %5102 = vmatpush1.msra.mxu0 0.0
    %5103 = vmatprep.subr.mxu0 0.0
    %5104 = vmatpush1.msra.mxu0 0.0
    %5105 = vmatprep.subr.mxu0 0.0
    %5106 = vmatpush1.msra.mxu0 0.0
    %5107 = vmatprep.subr.mxu0 0.0
    %5108 = vmatpush1.msra.mxu0 0.0
    %5109 = vmatprep.subr.mxu0 0.0
    %5110 = vmatpush1.msra.mxu0 0.0
    %5111 = vmatprep.mubr.f32.mxu0 0.0
    %5112 = vmatmul.mubr.f32.gmra.mrb[0].mxu0 %v4898
    %v5113 = vpop.f32.mrb[0].mxu0
    %v5114 = vadd.f32 %v401, %v5113
    %v5115 = vpop.f32.mrb[0].mxu0
    %5116 = vdwg.mxu0
    %v5117 = vmul.f32 %v5046, %v5114
    %v5118 = vadd.f32 %v4895, %v5117
    %v5119 = vtanh.pop %v5118
    %v5120 = vsub.f32 1.0, %v5046
    %5122 = vrot.lane.b32.xlu0 %v5119, 16
    %v5123 = vpop.permute.xlu0 %5122
    %v5125 = vmul.f32 %v5120, %v5123
    %v5126 = vmul.f32 %v5046, %v4342
    %v5127 = vadd.f32 %v5125, %v5126
    %5129 = vrot.lane.b32.xlu0 %v5127, 112
    %v5130 = vpop.permute.xlu0 %5129
    %5132 = vst.msk [vmem:[#allocation3 + $0xa] sm:$0x3] %vm1214, %v5130
    %5133 = vmatprep.subr.mxu0 0.0
    %5134 = vmatpush1.msra.mxu0 %v331
    %5135 = vmatprep.subr.mxu0 0.0
    %5136 = vmatpush1.msra.mxu0 %v332
    %5137 = vmatprep.subr.mxu0 0.0
    %5138 = vmatpush1.msra.mxu0 0.0
    %5139 = vmatprep.subr.mxu0 0.0
    %5140 = vmatpush1.msra.mxu0 0.0
    %5141 = vmatprep.subr.mxu0 0.0
    %5142 = vmatpush1.msra.mxu0 0.0
    %5143 = vmatprep.subr.mxu0 0.0
    %5144 = vmatpush1.msra.mxu0 0.0
    %5145 = vmatprep.subr.mxu0 0.0
    %5146 = vmatpush1.msra.mxu0 0.0
    %5147 = vmatprep.subr.mxu0 0.0
    %5148 = vmatpush1.msra.mxu0 0.0
    %5149 = vmatprep.subr.mxu0 0.0
    %5150 = vmatpush1.msra.mxu0 0.0
    %5151 = vmatprep.subr.mxu0 0.0
    %5152 = vmatpush1.msra.mxu0 0.0
    %5153 = vmatprep.subr.mxu0 0.0
    %5154 = vmatpush1.msra.mxu0 0.0
    %5155 = vmatprep.subr.mxu0 0.0
    %5156 = vmatpush1.msra.mxu0 0.0
    %5157 = vmatprep.subr.mxu0 0.0
    %5158 = vmatpush1.msra.mxu0 0.0
    %5159 = vmatprep.subr.mxu0 0.0
    %5160 = vmatpush1.msra.mxu0 0.0
    %5161 = vmatprep.subr.mxu0 0.0
    %5162 = vmatpush1.msra.mxu0 0.0
    %5163 = vmatprep.subr.mxu0 0.0
    %5164 = vmatpush1.msra.mxu0 0.0
    %5165 = vmatprep.subr.mxu0 0.0
    %5166 = vmatpush1.msra.mxu0 0.0
    %5167 = vmatprep.subr.mxu0 0.0
    %5168 = vmatpush1.msra.mxu0 0.0
    %5169 = vmatprep.subr.mxu0 0.0
    %5170 = vmatpush1.msra.mxu0 0.0
    %5171 = vmatprep.subr.mxu0 0.0
    %5172 = vmatpush1.msra.mxu0 0.0
    %5173 = vmatprep.subr.mxu0 0.0
    %5174 = vmatpush1.msra.mxu0 0.0
    %5175 = vmatprep.subr.mxu0 0.0
    %5176 = vmatpush1.msra.mxu0 0.0
    %5177 = vmatprep.subr.mxu0 0.0
    %5178 = vmatpush1.msra.mxu0 0.0
    %5179 = vmatprep.subr.mxu0 0.0
    %5180 = vmatpush1.msra.mxu0 0.0
    %5181 = vmatprep.subr.mxu0 0.0
    %5182 = vmatpush1.msra.mxu0 0.0
    %5183 = vmatprep.subr.mxu0 0.0
    %5184 = vmatpush1.msra.mxu0 0.0
    %5185 = vmatprep.subr.mxu0 0.0
    %5186 = vmatpush1.msra.mxu0 0.0
    %5187 = vmatprep.subr.mxu0 0.0
    %5188 = vmatpush1.msra.mxu0 0.0
    %5189 = vmatprep.subr.mxu0 0.0
    %5190 = vmatpush1.msra.mxu0 0.0
    %5191 = vmatprep.subr.mxu0 0.0
    %5192 = vmatpush1.msra.mxu0 0.0
    %5193 = vmatprep.subr.mxu0 0.0
    %5194 = vmatpush1.msra.mxu0 0.0
    %5195 = vmatprep.subr.mxu0 0.0
    %5196 = vmatpush1.msra.mxu0 0.0
    %5197 = vmatprep.mubr.f32.mxu0 0.0
    %5198 = vmatmul.mubr.f32.gmra.mrb[0].mxu0 %v4523
    %v5199 = vpop.f32.mrb[0].mxu0
    %v5200 = vadd.f32 0.0, %v5199
    %v5201 = vpop.f32.mrb[0].mxu0
    %5202 = vdwg.mxu0
    %v5204 = vrot.slane %v5200, 4
    %v5206 = vadd.f32 %v328, %v5204
    %v5207 = vadd.f32 %v5206, %v362
    %v5208 = vxor.u32 %v5207, 2147483648
    %v5209 = vmul.f32 %v5208, 1.442695
    %v5210 = vpow.pop %v5209
    %v5211 = vadd.f32 %v5210, 1.0
    %v5212 = vrcp.pop %v5211
    %v5213 = vmul.f32 1.0, %v5212
    %5214 = vmatprep.subr.mxu0 0.0
    %5215 = vmatpush1.msra.mxu0 %v339
    %5216 = vmatprep.subr.mxu0 0.0
    %5217 = vmatpush1.msra.mxu0 %v340
    %5218 = vmatprep.subr.mxu0 0.0
    %5219 = vmatpush1.msra.mxu0 0.0
    %5220 = vmatprep.subr.mxu0 0.0
    %5221 = vmatpush1.msra.mxu0 0.0
    %5222 = vmatprep.subr.mxu0 0.0
    %5223 = vmatpush1.msra.mxu0 0.0
    %5224 = vmatprep.subr.mxu0 0.0
    %5225 = vmatpush1.msra.mxu0 0.0
    %5226 = vmatprep.subr.mxu0 0.0
    %5227 = vmatpush1.msra.mxu0 0.0
    %5228 = vmatprep.subr.mxu0 0.0
    %5229 = vmatpush1.msra.mxu0 0.0
    %5230 = vmatprep.subr.mxu0 0.0
    %5231 = vmatpush1.msra.mxu0 0.0
    %5232 = vmatprep.subr.mxu0 0.0
    %5233 = vmatpush1.msra.mxu0 0.0
    %5234 = vmatprep.subr.mxu0 0.0
    %5235 = vmatpush1.msra.mxu0 0.0
    %5236 = vmatprep.subr.mxu0 0.0
    %5237 = vmatpush1.msra.mxu0 0.0
    %5238 = vmatprep.subr.mxu0 0.0
    %5239 = vmatpush1.msra.mxu0 0.0
    %5240 = vmatprep.subr.mxu0 0.0
    %5241 = vmatpush1.msra.mxu0 0.0
    %5242 = vmatprep.subr.mxu0 0.0
    %5243 = vmatpush1.msra.mxu0 0.0
    %5244 = vmatprep.subr.mxu0 0.0
    %5245 = vmatpush1.msra.mxu0 0.0
    %5246 = vmatprep.subr.mxu0 0.0
    %5247 = vmatpush1.msra.mxu0 0.0
    %5248 = vmatprep.subr.mxu0 0.0
    %5249 = vmatpush1.msra.mxu0 0.0
    %5250 = vmatprep.subr.mxu0 0.0
    %5251 = vmatpush1.msra.mxu0 0.0
    %5252 = vmatprep.subr.mxu0 0.0
    %5253 = vmatpush1.msra.mxu0 0.0
    %5254 = vmatprep.subr.mxu0 0.0
    %5255 = vmatpush1.msra.mxu0 0.0
    %5256 = vmatprep.subr.mxu0 0.0
    %5257 = vmatpush1.msra.mxu0 0.0
    %5258 = vmatprep.subr.mxu0 0.0
    %5259 = vmatpush1.msra.mxu0 0.0
    %5260 = vmatprep.subr.mxu0 0.0
    %5261 = vmatpush1.msra.mxu0 0.0
    %5262 = vmatprep.subr.mxu0 0.0
    %5263 = vmatpush1.msra.mxu0 0.0
    %5264 = vmatprep.subr.mxu0 0.0
    %5265 = vmatpush1.msra.mxu0 0.0
    %5266 = vmatprep.subr.mxu0 0.0
    %5267 = vmatpush1.msra.mxu0 0.0
    %5268 = vmatprep.subr.mxu0 0.0
    %5269 = vmatpush1.msra.mxu0 0.0
    %5270 = vmatprep.subr.mxu0 0.0
    %5271 = vmatpush1.msra.mxu0 0.0
    %5272 = vmatprep.subr.mxu0 0.0
    %5273 = vmatpush1.msra.mxu0 0.0
    %5274 = vmatprep.subr.mxu0 0.0
    %5275 = vmatpush1.msra.mxu0 0.0
    %5276 = vmatprep.subr.mxu0 0.0
    %5277 = vmatpush1.msra.mxu0 0.0
    %5278 = vmatprep.mubr.f32.mxu0 0.0
    %5279 = vmatmul.mubr.f32.gmra.mrb[0].mxu0 %v4523
    %v5280 = vpop.f32.mrb[0].mxu0
    %v5281 = vadd.f32 %v385, %v5280
    %v5282 = vpop.f32.mrb[0].mxu0
    %5283 = vdwg.mxu0
    %v5285 = vrot.slane %v5281, 4
    %v5287 = vmul.f32 %v5213, %v5285
    %5289 = vrot.lane.b32.xlu0 %v5287, 32
    %v5290 = vpop.permute.xlu0 %5289
    %v5292 = vadd.f32 %v328, %v5290
    %v5293 = vtanh.pop %v5292
    %v5294 = vsub.f32 1.0, %v5213
    %5296 = vrot.lane.b32.xlu0 %v5293, 112
    %v5297 = vpop.permute.xlu0 %5296
    %v5299 = vmul.f32 %v5294, %v5297
    %v5300 = vrot.slane %v4518, 6
    %v5302 = vmul.f32 %v5213, %v5300
    %v5303 = vadd.f32 %v5299, %v5302
    %v5305 = vrot.slane %v5303, 4
    %5306 = vrot.lane.b32.xlu0 %v5305, 112
    %v5307 = vpop.permute.xlu0 %5306
    %v5308 = vsel %vm249, %v5307, 0
    %5310 = vmatprep.subr.mxu0 0.0
    %5311 = vmatpush1.msra.mxu0 %v352
    %5312 = vmatprep.subr.mxu0 0.0
    %5313 = vmatpush1.msra.mxu0 %v353
    %5314 = vmatprep.subr.mxu0 0.0
    %5315 = vmatpush1.msra.mxu0 0.0
    %5316 = vmatprep.subr.mxu0 0.0
    %5317 = vmatpush1.msra.mxu0 0.0
    %5318 = vmatprep.subr.mxu0 0.0
    %5319 = vmatpush1.msra.mxu0 0.0
    %5320 = vmatprep.subr.mxu0 0.0
    %5321 = vmatpush1.msra.mxu0 0.0
    %5322 = vmatprep.subr.mxu0 0.0
    %5323 = vmatpush1.msra.mxu0 0.0
    %5324 = vmatprep.subr.mxu0 0.0
    %5325 = vmatpush1.msra.mxu0 0.0
    %5326 = vmatprep.subr.mxu0 0.0
    %5327 = vmatpush1.msra.mxu0 0.0
    %5328 = vmatprep.subr.mxu0 0.0
    %5329 = vmatpush1.msra.mxu0 0.0
    %5330 = vmatprep.subr.mxu0 0.0
    %5331 = vmatpush1.msra.mxu0 0.0
    %5332 = vmatprep.subr.mxu0 0.0
    %5333 = vmatpush1.msra.mxu0 0.0
    %5334 = vmatprep.subr.mxu0 0.0
    %5335 = vmatpush1.msra.mxu0 0.0
    %5336 = vmatprep.subr.mxu0 0.0
    %5337 = vmatpush1.msra.mxu0 0.0
    %5338 = vmatprep.subr.mxu0 0.0
    %5339 = vmatpush1.msra.mxu0 0.0
    %5340 = vmatprep.subr.mxu0 0.0
    %5341 = vmatpush1.msra.mxu0 0.0
    %5342 = vmatprep.subr.mxu0 0.0
    %5343 = vmatpush1.msra.mxu0 0.0
    %5344 = vmatprep.subr.mxu0 0.0
    %5345 = vmatpush1.msra.mxu0 0.0
    %5346 = vmatprep.subr.mxu0 0.0
    %5347 = vmatpush1.msra.mxu0 0.0
    %5348 = vmatprep.subr.mxu0 0.0
    %5349 = vmatpush1.msra.mxu0 0.0
    %5350 = vmatprep.subr.mxu0 0.0
    %5351 = vmatpush1.msra.mxu0 0.0
    %5352 = vmatprep.subr.mxu0 0.0
    %5353 = vmatpush1.msra.mxu0 0.0
    %5354 = vmatprep.subr.mxu0 0.0
    %5355 = vmatpush1.msra.mxu0 0.0
    %5356 = vmatprep.subr.mxu0 0.0
    %5357 = vmatpush1.msra.mxu0 0.0
    %5358 = vmatprep.subr.mxu0 0.0
    %5359 = vmatpush1.msra.mxu0 0.0
    %5360 = vmatprep.subr.mxu0 0.0
    %5361 = vmatpush1.msra.mxu0 0.0
    %5362 = vmatprep.subr.mxu0 0.0
    %5363 = vmatpush1.msra.mxu0 0.0
    %5364 = vmatprep.subr.mxu0 0.0
    %5365 = vmatpush1.msra.mxu0 0.0
    %5366 = vmatprep.subr.mxu0 0.0
    %5367 = vmatpush1.msra.mxu0 0.0
    %5368 = vmatprep.subr.mxu0 0.0
    %5369 = vmatpush1.msra.mxu0 0.0
    %5370 = vmatprep.subr.mxu0 0.0
    %5371 = vmatpush1.msra.mxu0 0.0
    %5372 = vmatprep.subr.mxu0 0.0
    %5373 = vmatpush1.msra.mxu0 0.0
    %5374 = vmatprep.mubr.f32.mxu0 0.0
    %5375 = vmatmul.mubr.f32.gmra.mrb[0].mxu0 %v5308
    %v5376 = vpop.f32.mrb[0].mxu0
    %v5377 = vadd.f32 %v408, %v5376
    %v5378 = vpop.f32.mrb[0].mxu0
    %5379 = vdwg.mxu0
    %5380 = vmatprep.subr.mxu0 0.0
    %5381 = vmatpush1.msra.mxu0 %v334
    %5382 = vmatprep.subr.mxu0 0.0
    %5383 = vmatpush1.msra.mxu0 %v335
    %5384 = vmatprep.subr.mxu0 0.0
    %5385 = vmatpush1.msra.mxu0 0.0
    %5386 = vmatprep.subr.mxu0 0.0
    %5387 = vmatpush1.msra.mxu0 0.0
    %5388 = vmatprep.subr.mxu0 0.0
    %5389 = vmatpush1.msra.mxu0 0.0
    %5390 = vmatprep.subr.mxu0 0.0
    %5391 = vmatpush1.msra.mxu0 0.0
    %5392 = vmatprep.subr.mxu0 0.0
    %5393 = vmatpush1.msra.mxu0 0.0
    %5394 = vmatprep.subr.mxu0 0.0
    %5395 = vmatpush1.msra.mxu0 0.0
    %5396 = vmatprep.subr.mxu0 0.0
    %5397 = vmatpush1.msra.mxu0 0.0
    %5398 = vmatprep.subr.mxu0 0.0
    %5399 = vmatpush1.msra.mxu0 0.0
    %5400 = vmatprep.subr.mxu0 0.0
    %5401 = vmatpush1.msra.mxu0 0.0
    %5402 = vmatprep.subr.mxu0 0.0
    %5403 = vmatpush1.msra.mxu0 0.0
    %5404 = vmatprep.subr.mxu0 0.0
    %5405 = vmatpush1.msra.mxu0 0.0
    %5406 = vmatprep.subr.mxu0 0.0
    %5407 = vmatpush1.msra.mxu0 0.0
    %5408 = vmatprep.subr.mxu0 0.0
    %5409 = vmatpush1.msra.mxu0 0.0
    %5410 = vmatprep.subr.mxu0 0.0
    %5411 = vmatpush1.msra.mxu0 0.0
    %5412 = vmatprep.subr.mxu0 0.0
    %5413 = vmatpush1.msra.mxu0 0.0
    %5414 = vmatprep.subr.mxu0 0.0
    %5415 = vmatpush1.msra.mxu0 0.0
    %5416 = vmatprep.subr.mxu0 0.0
    %5417 = vmatpush1.msra.mxu0 0.0
    %5418 = vmatprep.subr.mxu0 0.0
    %5419 = vmatpush1.msra.mxu0 0.0
    %5420 = vmatprep.subr.mxu0 0.0
    %5421 = vmatpush1.msra.mxu0 0.0
    %5422 = vmatprep.subr.mxu0 0.0
    %5423 = vmatpush1.msra.mxu0 0.0
    %5424 = vmatprep.subr.mxu0 0.0
    %5425 = vmatpush1.msra.mxu0 0.0
    %5426 = vmatprep.subr.mxu0 0.0
    %5427 = vmatpush1.msra.mxu0 0.0
    %5428 = vmatprep.subr.mxu0 0.0
    %5429 = vmatpush1.msra.mxu0 0.0
    %5430 = vmatprep.subr.mxu0 0.0
    %5431 = vmatpush1.msra.mxu0 0.0
    %5432 = vmatprep.subr.mxu0 0.0
    %5433 = vmatpush1.msra.mxu0 0.0
    %5434 = vmatprep.subr.mxu0 0.0
    %5435 = vmatpush1.msra.mxu0 0.0
    %5436 = vmatprep.subr.mxu0 0.0
    %5437 = vmatpush1.msra.mxu0 0.0
    %5438 = vmatprep.subr.mxu0 0.0
    %5439 = vmatpush1.msra.mxu0 0.0
    %5440 = vmatprep.subr.mxu0 0.0
    %5441 = vmatpush1.msra.mxu0 0.0
    %5442 = vmatprep.subr.mxu0 0.0
    %5443 = vmatpush1.msra.mxu0 0.0
    %5444 = vmatprep.mubr.f32.mxu0 0.0
    %5445 = vmatmul.mubr.f32.gmra.mrb[0].mxu0 %v4826
    %v5446 = vpop.f32.mrb[0].mxu0
    %v5447 = vadd.f32 0.0, %v5446
    %v5448 = vpop.f32.mrb[0].mxu0
    %5449 = vdwg.mxu0
    %5450 = vmatprep.subr.mxu0 0.0
    %5451 = vmatpush1.msra.mxu0 %v347
    %5452 = vmatprep.subr.mxu0 0.0
    %5453 = vmatpush1.msra.mxu0 %v348
    %5454 = vmatprep.subr.mxu0 0.0
    %5455 = vmatpush1.msra.mxu0 0.0
    %5456 = vmatprep.subr.mxu0 0.0
    %5457 = vmatpush1.msra.mxu0 0.0
    %5458 = vmatprep.subr.mxu0 0.0
    %5459 = vmatpush1.msra.mxu0 0.0
    %5460 = vmatprep.subr.mxu0 0.0
    %5461 = vmatpush1.msra.mxu0 0.0
    %5462 = vmatprep.subr.mxu0 0.0
    %5463 = vmatpush1.msra.mxu0 0.0
    %5464 = vmatprep.subr.mxu0 0.0
    %5465 = vmatpush1.msra.mxu0 0.0
    %5466 = vmatprep.subr.mxu0 0.0
    %5467 = vmatpush1.msra.mxu0 0.0
    %5468 = vmatprep.subr.mxu0 0.0
    %5469 = vmatpush1.msra.mxu0 0.0
    %5470 = vmatprep.subr.mxu0 0.0
    %5471 = vmatpush1.msra.mxu0 0.0
    %5472 = vmatprep.subr.mxu0 0.0
    %5473 = vmatpush1.msra.mxu0 0.0
    %5474 = vmatprep.subr.mxu0 0.0
    %5475 = vmatpush1.msra.mxu0 0.0
    %5476 = vmatprep.subr.mxu0 0.0
    %5477 = vmatpush1.msra.mxu0 0.0
    %5478 = vmatprep.subr.mxu0 0.0
    %5479 = vmatpush1.msra.mxu0 0.0
    %5480 = vmatprep.subr.mxu0 0.0
    %5481 = vmatpush1.msra.mxu0 0.0
    %5482 = vmatprep.subr.mxu0 0.0
    %5483 = vmatpush1.msra.mxu0 0.0
    %5484 = vmatprep.subr.mxu0 0.0
    %5485 = vmatpush1.msra.mxu0 0.0
    %5486 = vmatprep.subr.mxu0 0.0
    %5487 = vmatpush1.msra.mxu0 0.0
    %5488 = vmatprep.subr.mxu0 0.0
    %5489 = vmatpush1.msra.mxu0 0.0
    %5490 = vmatprep.subr.mxu0 0.0
    %5491 = vmatpush1.msra.mxu0 0.0
    %5492 = vmatprep.subr.mxu0 0.0
    %5493 = vmatpush1.msra.mxu0 0.0
    %5494 = vmatprep.subr.mxu0 0.0
    %5495 = vmatpush1.msra.mxu0 0.0
    %5496 = vmatprep.subr.mxu0 0.0
    %5497 = vmatpush1.msra.mxu0 0.0
    %5498 = vmatprep.subr.mxu0 0.0
    %5499 = vmatpush1.msra.mxu0 0.0
    %5500 = vmatprep.subr.mxu0 0.0
    %5501 = vmatpush1.msra.mxu0 0.0
    %5502 = vmatprep.subr.mxu0 0.0
    %5503 = vmatpush1.msra.mxu0 0.0
    %5504 = vmatprep.subr.mxu0 0.0
    %5505 = vmatpush1.msra.mxu0 0.0
    %5506 = vmatprep.subr.mxu0 0.0
    %5507 = vmatpush1.msra.mxu0 0.0
    %5508 = vmatprep.subr.mxu0 0.0
    %5509 = vmatpush1.msra.mxu0 0.0
    %5510 = vmatprep.subr.mxu0 0.0
    %5511 = vmatpush1.msra.mxu0 0.0
    %5512 = vmatprep.subr.mxu0 0.0
    %5513 = vmatpush1.msra.mxu0 0.0
    %5514 = vmatprep.mubr.f32.mxu0 0.0
    %5515 = vmatmul.mubr.f32.gmra.mrb[0].mxu0 %v5308
    %v5516 = vpop.f32.mrb[0].mxu0
    %v5517 = vadd.f32 %v5447, %v5516
    %v5518 = vpop.f32.mrb[0].mxu0
    %5519 = vdwg.mxu0
    %v5520 = vadd.f32 %v5517, %v370
    %v5521 = vxor.u32 %v5520, 2147483648
    %v5522 = vmul.f32 %v5521, 1.442695
    %v5523 = vpow.pop %v5522
    %v5524 = vadd.f32 %v5523, 1.0
    %v5525 = vrcp.pop %v5524
    %v5526 = vmul.f32 1.0, %v5525
    %5527 = vmatprep.subr.mxu0 0.0
    %5528 = vmatpush1.msra.mxu0 %v342
    %5529 = vmatprep.subr.mxu0 0.0
    %5530 = vmatpush1.msra.mxu0 %v343
    %5531 = vmatprep.subr.mxu0 0.0
    %5532 = vmatpush1.msra.mxu0 0.0
    %5533 = vmatprep.subr.mxu0 0.0
    %5534 = vmatpush1.msra.mxu0 0.0
    %5535 = vmatprep.subr.mxu0 0.0
    %5536 = vmatpush1.msra.mxu0 0.0
    %5537 = vmatprep.subr.mxu0 0.0
    %5538 = vmatpush1.msra.mxu0 0.0
    %5539 = vmatprep.subr.mxu0 0.0
    %5540 = vmatpush1.msra.mxu0 0.0
    %5541 = vmatprep.subr.mxu0 0.0
    %5542 = vmatpush1.msra.mxu0 0.0
    %5543 = vmatprep.subr.mxu0 0.0
    %5544 = vmatpush1.msra.mxu0 0.0
    %5545 = vmatprep.subr.mxu0 0.0
    %5546 = vmatpush1.msra.mxu0 0.0
    %5547 = vmatprep.subr.mxu0 0.0
    %5548 = vmatpush1.msra.mxu0 0.0
    %5549 = vmatprep.subr.mxu0 0.0
    %5550 = vmatpush1.msra.mxu0 0.0
    %5551 = vmatprep.subr.mxu0 0.0
    %5552 = vmatpush1.msra.mxu0 0.0
    %5553 = vmatprep.subr.mxu0 0.0
    %5554 = vmatpush1.msra.mxu0 0.0
    %5555 = vmatprep.subr.mxu0 0.0
    %5556 = vmatpush1.msra.mxu0 0.0
    %5557 = vmatprep.subr.mxu0 0.0
    %5558 = vmatpush1.msra.mxu0 0.0
    %5559 = vmatprep.subr.mxu0 0.0
    %5560 = vmatpush1.msra.mxu0 0.0
    %5561 = vmatprep.subr.mxu0 0.0
    %5562 = vmatpush1.msra.mxu0 0.0
    %5563 = vmatprep.subr.mxu0 0.0
    %5564 = vmatpush1.msra.mxu0 0.0
    %5565 = vmatprep.subr.mxu0 0.0
    %5566 = vmatpush1.msra.mxu0 0.0
    %5567 = vmatprep.subr.mxu0 0.0
    %5568 = vmatpush1.msra.mxu0 0.0
    %5569 = vmatprep.subr.mxu0 0.0
    %5570 = vmatpush1.msra.mxu0 0.0
    %5571 = vmatprep.subr.mxu0 0.0
    %5572 = vmatpush1.msra.mxu0 0.0
    %5573 = vmatprep.subr.mxu0 0.0
    %5574 = vmatpush1.msra.mxu0 0.0
    %5575 = vmatprep.subr.mxu0 0.0
    %5576 = vmatpush1.msra.mxu0 0.0
    %5577 = vmatprep.subr.mxu0 0.0
    %5578 = vmatpush1.msra.mxu0 0.0
    %5579 = vmatprep.subr.mxu0 0.0
    %5580 = vmatpush1.msra.mxu0 0.0
    %5581 = vmatprep.subr.mxu0 0.0
    %5582 = vmatpush1.msra.mxu0 0.0
    %5583 = vmatprep.subr.mxu0 0.0
    %5584 = vmatpush1.msra.mxu0 0.0
    %5585 = vmatprep.subr.mxu0 0.0
    %5586 = vmatpush1.msra.mxu0 0.0
    %5587 = vmatprep.subr.mxu0 0.0
    %5588 = vmatpush1.msra.mxu0 0.0
    %5589 = vmatprep.subr.mxu0 0.0
    %5590 = vmatpush1.msra.mxu0 0.0
    %5591 = vmatprep.mubr.f32.mxu0 0.0
    %5592 = vmatmul.mubr.f32.gmra.mrb[0].mxu0 %v4826
    %v5593 = vpop.f32.mrb[0].mxu0
    %v5594 = vadd.f32 %v393, %v5593
    %v5595 = vpop.f32.mrb[0].mxu0
    %5596 = vdwg.mxu0
    %v5597 = vmul.f32 %v5526, %v5594
    %v5598 = vadd.f32 %v5377, %v5597
    %v5599 = vtanh.pop %v5598
    %v5600 = vsub.f32 1.0, %v5526
    %5602 = vrot.lane.b32.xlu0 %v5599, 16
    %v5603 = vpop.permute.xlu0 %5602
    %v5605 = vmul.f32 %v5600, %v5603
    %v5606 = vmul.f32 %v5526, %v4822
    %v5607 = vadd.f32 %v5605, %v5606
    %5609 = vrot.lane.b32.xlu0 %v5607, 112
    %v5610 = vpop.permute.xlu0 %5609
    %v5611 = vsel %vm249, %v5610, 0
    %5613 = vmatprep.subr.mxu0 0.0
    %5614 = vmatpush1.msra.mxu0 %v355
    %5615 = vmatprep.subr.mxu0 0.0
    %5616 = vmatpush1.msra.mxu0 %v356
    %5617 = vmatprep.subr.mxu0 0.0
    %5618 = vmatpush1.msra.mxu0 0.0
    %5619 = vmatprep.subr.mxu0 0.0
    %5620 = vmatpush1.msra.mxu0 0.0
    %5621 = vmatprep.subr.mxu0 0.0
    %5622 = vmatpush1.msra.mxu0 0.0
    %5623 = vmatprep.subr.mxu0 0.0
    %5624 = vmatpush1.msra.mxu0 0.0
    %5625 = vmatprep.subr.mxu0 0.0
    %5626 = vmatpush1.msra.mxu0 0.0
    %5627 = vmatprep.subr.mxu0 0.0
    %5628 = vmatpush1.msra.mxu0 0.0
    %5629 = vmatprep.subr.mxu0 0.0
    %5630 = vmatpush1.msra.mxu0 0.0
    %5631 = vmatprep.subr.mxu0 0.0
    %5632 = vmatpush1.msra.mxu0 0.0
    %5633 = vmatprep.subr.mxu0 0.0
    %5634 = vmatpush1.msra.mxu0 0.0
    %5635 = vmatprep.subr.mxu0 0.0
    %5636 = vmatpush1.msra.mxu0 0.0
    %5637 = vmatprep.subr.mxu0 0.0
    %5638 = vmatpush1.msra.mxu0 0.0
    %5639 = vmatprep.subr.mxu0 0.0
    %5640 = vmatpush1.msra.mxu0 0.0
    %5641 = vmatprep.subr.mxu0 0.0
    %5642 = vmatpush1.msra.mxu0 0.0
    %5643 = vmatprep.subr.mxu0 0.0
    %5644 = vmatpush1.msra.mxu0 0.0
    %5645 = vmatprep.subr.mxu0 0.0
    %5646 = vmatpush1.msra.mxu0 0.0
    %5647 = vmatprep.subr.mxu0 0.0
    %5648 = vmatpush1.msra.mxu0 0.0
    %5649 = vmatprep.subr.mxu0 0.0
    %5650 = vmatpush1.msra.mxu0 0.0
    %5651 = vmatprep.subr.mxu0 0.0
    %5652 = vmatpush1.msra.mxu0 0.0
    %5653 = vmatprep.subr.mxu0 0.0
    %5654 = vmatpush1.msra.mxu0 0.0
    %5655 = vmatprep.subr.mxu0 0.0
    %5656 = vmatpush1.msra.mxu0 0.0
    %5657 = vmatprep.subr.mxu0 0.0
    %5658 = vmatpush1.msra.mxu0 0.0
    %5659 = vmatprep.subr.mxu0 0.0
    %5660 = vmatpush1.msra.mxu0 0.0
    %5661 = vmatprep.subr.mxu0 0.0
    %5662 = vmatpush1.msra.mxu0 0.0
    %5663 = vmatprep.subr.mxu0 0.0
    %5664 = vmatpush1.msra.mxu0 0.0
    %5665 = vmatprep.subr.mxu0 0.0
    %5666 = vmatpush1.msra.mxu0 0.0
    %5667 = vmatprep.subr.mxu0 0.0
    %5668 = vmatpush1.msra.mxu0 0.0
    %5669 = vmatprep.subr.mxu0 0.0
    %5670 = vmatpush1.msra.mxu0 0.0
    %5671 = vmatprep.subr.mxu0 0.0
    %5672 = vmatpush1.msra.mxu0 0.0
    %5673 = vmatprep.subr.mxu0 0.0
    %5674 = vmatpush1.msra.mxu0 0.0
    %5675 = vmatprep.subr.mxu0 0.0
    %5676 = vmatpush1.msra.mxu0 0.0
    %5677 = vmatprep.mubr.f32.mxu0 0.0
    %5678 = vmatmul.mubr.f32.gmra.mrb[0].mxu0 %v5611
    %v5679 = vpop.f32.mrb[0].mxu0
    %v5680 = vadd.f32 %v416, %v5679
    %v5681 = vpop.f32.mrb[0].mxu0
    %5682 = vdwg.mxu0
    %v5683 = vsel %vm249, %v5130, 0
    %5685 = vmatprep.subr.mxu0 0.0
    %5686 = vmatpush1.msra.mxu0 %v337
    %5687 = vmatprep.subr.mxu0 0.0
    %5688 = vmatpush1.msra.mxu0 %v338
    %5689 = vmatprep.subr.mxu0 0.0
    %5690 = vmatpush1.msra.mxu0 0.0
    %5691 = vmatprep.subr.mxu0 0.0
    %5692 = vmatpush1.msra.mxu0 0.0
    %5693 = vmatprep.subr.mxu0 0.0
    %5694 = vmatpush1.msra.mxu0 0.0
    %5695 = vmatprep.subr.mxu0 0.0
    %5696 = vmatpush1.msra.mxu0 0.0
    %5697 = vmatprep.subr.mxu0 0.0
    %5698 = vmatpush1.msra.mxu0 0.0
    %5699 = vmatprep.subr.mxu0 0.0
    %5700 = vmatpush1.msra.mxu0 0.0
    %5701 = vmatprep.subr.mxu0 0.0
    %5702 = vmatpush1.msra.mxu0 0.0
    %5703 = vmatprep.subr.mxu0 0.0
    %5704 = vmatpush1.msra.mxu0 0.0
    %5705 = vmatprep.subr.mxu0 0.0
    %5706 = vmatpush1.msra.mxu0 0.0
    %5707 = vmatprep.subr.mxu0 0.0
    %5708 = vmatpush1.msra.mxu0 0.0
    %5709 = vmatprep.subr.mxu0 0.0
    %5710 = vmatpush1.msra.mxu0 0.0
    %5711 = vmatprep.subr.mxu0 0.0
    %5712 = vmatpush1.msra.mxu0 0.0
    %5713 = vmatprep.subr.mxu0 0.0
    %5714 = vmatpush1.msra.mxu0 0.0
    %5715 = vmatprep.subr.mxu0 0.0
    %5716 = vmatpush1.msra.mxu0 0.0
    %5717 = vmatprep.subr.mxu0 0.0
    %5718 = vmatpush1.msra.mxu0 0.0
    %5719 = vmatprep.subr.mxu0 0.0
    %5720 = vmatpush1.msra.mxu0 0.0
    %5721 = vmatprep.subr.mxu0 0.0
    %5722 = vmatpush1.msra.mxu0 0.0
    %5723 = vmatprep.subr.mxu0 0.0
    %5724 = vmatpush1.msra.mxu0 0.0
    %5725 = vmatprep.subr.mxu0 0.0
    %5726 = vmatpush1.msra.mxu0 0.0
    %5727 = vmatprep.subr.mxu0 0.0
    %5728 = vmatpush1.msra.mxu0 0.0
    %5729 = vmatprep.subr.mxu0 0.0
    %5730 = vmatpush1.msra.mxu0 0.0
    %5731 = vmatprep.subr.mxu0 0.0
    %5732 = vmatpush1.msra.mxu0 0.0
    %5733 = vmatprep.subr.mxu0 0.0
    %5734 = vmatpush1.msra.mxu0 0.0
    %5735 = vmatprep.subr.mxu0 0.0
    %5736 = vmatpush1.msra.mxu0 0.0
    %5737 = vmatprep.subr.mxu0 0.0
    %5738 = vmatpush1.msra.mxu0 0.0
    %5739 = vmatprep.subr.mxu0 0.0
    %5740 = vmatpush1.msra.mxu0 0.0
    %5741 = vmatprep.subr.mxu0 0.0
    %5742 = vmatpush1.msra.mxu0 0.0
    %5743 = vmatprep.subr.mxu0 0.0
    %5744 = vmatpush1.msra.mxu0 0.0
    %5745 = vmatprep.subr.mxu0 0.0
    %5746 = vmatpush1.msra.mxu0 0.0
    %5747 = vmatprep.subr.mxu0 0.0
    %5748 = vmatpush1.msra.mxu0 0.0
    %5749 = vmatprep.mubr.f32.mxu0 0.0
    %5750 = vmatmul.mubr.f32.gmra.mrb[0].mxu0 %v5683
    %v5751 = vpop.f32.mrb[0].mxu0
    %v5752 = vadd.f32 0.0, %v5751
    %v5753 = vpop.f32.mrb[0].mxu0
    %5754 = vdwg.mxu0
    %5755 = vmatprep.subr.mxu0 0.0
    %5756 = vmatpush1.msra.mxu0 %v350
    %5757 = vmatprep.subr.mxu0 0.0
    %5758 = vmatpush1.msra.mxu0 %v351
    %5759 = vmatprep.subr.mxu0 0.0
    %5760 = vmatpush1.msra.mxu0 0.0
    %5761 = vmatprep.subr.mxu0 0.0
    %5762 = vmatpush1.msra.mxu0 0.0
    %5763 = vmatprep.subr.mxu0 0.0
    %5764 = vmatpush1.msra.mxu0 0.0
    %5765 = vmatprep.subr.mxu0 0.0
    %5766 = vmatpush1.msra.mxu0 0.0
    %5767 = vmatprep.subr.mxu0 0.0
    %5768 = vmatpush1.msra.mxu0 0.0
    %5769 = vmatprep.subr.mxu0 0.0
    %5770 = vmatpush1.msra.mxu0 0.0
    %5771 = vmatprep.subr.mxu0 0.0
    %5772 = vmatpush1.msra.mxu0 0.0
    %5773 = vmatprep.subr.mxu0 0.0
    %5774 = vmatpush1.msra.mxu0 0.0
    %5775 = vmatprep.subr.mxu0 0.0
    %5776 = vmatpush1.msra.mxu0 0.0
    %5777 = vmatprep.subr.mxu0 0.0
    %5778 = vmatpush1.msra.mxu0 0.0
    %5779 = vmatprep.subr.mxu0 0.0
    %5780 = vmatpush1.msra.mxu0 0.0
    %5781 = vmatprep.subr.mxu0 0.0
    %5782 = vmatpush1.msra.mxu0 0.0
    %5783 = vmatprep.subr.mxu0 0.0
    %5784 = vmatpush1.msra.mxu0 0.0
    %5785 = vmatprep.subr.mxu0 0.0
    %5786 = vmatpush1.msra.mxu0 0.0
    %5787 = vmatprep.subr.mxu0 0.0
    %5788 = vmatpush1.msra.mxu0 0.0
    %5789 = vmatprep.subr.mxu0 0.0
    %5790 = vmatpush1.msra.mxu0 0.0
    %5791 = vmatprep.subr.mxu0 0.0
    %5792 = vmatpush1.msra.mxu0 0.0
    %5793 = vmatprep.subr.mxu0 0.0
    %5794 = vmatpush1.msra.mxu0 0.0
    %5795 = vmatprep.subr.mxu0 0.0
    %5796 = vmatpush1.msra.mxu0 0.0
    %5797 = vmatprep.subr.mxu0 0.0
    %5798 = vmatpush1.msra.mxu0 0.0
    %5799 = vmatprep.subr.mxu0 0.0
    %5800 = vmatpush1.msra.mxu0 0.0
    %5801 = vmatprep.subr.mxu0 0.0
    %5802 = vmatpush1.msra.mxu0 0.0
    %5803 = vmatprep.subr.mxu0 0.0
    %5804 = vmatpush1.msra.mxu0 0.0
    %5805 = vmatprep.subr.mxu0 0.0
    %5806 = vmatpush1.msra.mxu0 0.0
    %5807 = vmatprep.subr.mxu0 0.0
    %5808 = vmatpush1.msra.mxu0 0.0
    %5809 = vmatprep.subr.mxu0 0.0
    %5810 = vmatpush1.msra.mxu0 0.0
    %5811 = vmatprep.subr.mxu0 0.0
    %5812 = vmatpush1.msra.mxu0 0.0
    %5813 = vmatprep.subr.mxu0 0.0
    %5814 = vmatpush1.msra.mxu0 0.0
    %5815 = vmatprep.subr.mxu0 0.0
    %5816 = vmatpush1.msra.mxu0 0.0
    %5817 = vmatprep.subr.mxu0 0.0
    %5818 = vmatpush1.msra.mxu0 0.0
    %5819 = vmatprep.mubr.f32.mxu0 0.0
    %5820 = vmatmul.mubr.f32.gmra.mrb[0].mxu0 %v5611
    %v5821 = vpop.f32.mrb[0].mxu0
    %v5822 = vadd.f32 %v5752, %v5821
    %v5823 = vpop.f32.mrb[0].mxu0
    %5824 = vdwg.mxu0
    %v5825 = vadd.f32 %v5822, %v378
    %v5826 = vxor.u32 %v5825, 2147483648
    %v5827 = vmul.f32 %v5826, 1.442695
    %v5828 = vpow.pop %v5827
    %v5829 = vadd.f32 %v5828, 1.0
    %v5830 = vrcp.pop %v5829
    %v5831 = vmul.f32 1.0, %v5830
    %5832 = vmatprep.subr.mxu0 0.0
    %5833 = vmatpush1.msra.mxu0 %v345
    %5834 = vmatprep.subr.mxu0 0.0
    %5835 = vmatpush1.msra.mxu0 %v346
    %5836 = vmatprep.subr.mxu0 0.0
    %5837 = vmatpush1.msra.mxu0 0.0
    %5838 = vmatprep.subr.mxu0 0.0
    %5839 = vmatpush1.msra.mxu0 0.0
    %5840 = vmatprep.subr.mxu0 0.0
    %5841 = vmatpush1.msra.mxu0 0.0
    %5842 = vmatprep.subr.mxu0 0.0
    %5843 = vmatpush1.msra.mxu0 0.0
    %5844 = vmatprep.subr.mxu0 0.0
    %5845 = vmatpush1.msra.mxu0 0.0
    %5846 = vmatprep.subr.mxu0 0.0
    %5847 = vmatpush1.msra.mxu0 0.0
    %5848 = vmatprep.subr.mxu0 0.0
    %5849 = vmatpush1.msra.mxu0 0.0
    %5850 = vmatprep.subr.mxu0 0.0
    %5851 = vmatpush1.msra.mxu0 0.0
    %5852 = vmatprep.subr.mxu0 0.0
    %5853 = vmatpush1.msra.mxu0 0.0
    %5854 = vmatprep.subr.mxu0 0.0
    %5855 = vmatpush1.msra.mxu0 0.0
    %5856 = vmatprep.subr.mxu0 0.0
    %5857 = vmatpush1.msra.mxu0 0.0
    %5858 = vmatprep.subr.mxu0 0.0
    %5859 = vmatpush1.msra.mxu0 0.0
    %5860 = vmatprep.subr.mxu0 0.0
    %5861 = vmatpush1.msra.mxu0 0.0
    %5862 = vmatprep.subr.mxu0 0.0
    %5863 = vmatpush1.msra.mxu0 0.0
    %5864 = vmatprep.subr.mxu0 0.0
    %5865 = vmatpush1.msra.mxu0 0.0
    %5866 = vmatprep.subr.mxu0 0.0
    %5867 = vmatpush1.msra.mxu0 0.0
    %5868 = vmatprep.subr.mxu0 0.0
    %5869 = vmatpush1.msra.mxu0 0.0
    %5870 = vmatprep.subr.mxu0 0.0
    %5871 = vmatpush1.msra.mxu0 0.0
    %5872 = vmatprep.subr.mxu0 0.0
    %5873 = vmatpush1.msra.mxu0 0.0
    %5874 = vmatprep.subr.mxu0 0.0
    %5875 = vmatpush1.msra.mxu0 0.0
    %5876 = vmatprep.subr.mxu0 0.0
    %5877 = vmatpush1.msra.mxu0 0.0
    %5878 = vmatprep.subr.mxu0 0.0
    %5879 = vmatpush1.msra.mxu0 0.0
    %5880 = vmatprep.subr.mxu0 0.0
    %5881 = vmatpush1.msra.mxu0 0.0
    %5882 = vmatprep.subr.mxu0 0.0
    %5883 = vmatpush1.msra.mxu0 0.0
    %5884 = vmatprep.subr.mxu0 0.0
    %5885 = vmatpush1.msra.mxu0 0.0
    %5886 = vmatprep.subr.mxu0 0.0
    %5887 = vmatpush1.msra.mxu0 0.0
    %5888 = vmatprep.subr.mxu0 0.0
    %5889 = vmatpush1.msra.mxu0 0.0
    %5890 = vmatprep.subr.mxu0 0.0
    %5891 = vmatpush1.msra.mxu0 0.0
    %5892 = vmatprep.subr.mxu0 0.0
    %5893 = vmatpush1.msra.mxu0 0.0
    %5894 = vmatprep.subr.mxu0 0.0
    %5895 = vmatpush1.msra.mxu0 0.0
    %5896 = vmatprep.mubr.f32.mxu0 0.0
    %5897 = vmatmul.mubr.f32.gmra.mrb[0].mxu0 %v5683
    %v5898 = vpop.f32.mrb[0].mxu0
    %v5899 = vadd.f32 %v401, %v5898
    %v5900 = vpop.f32.mrb[0].mxu0
    %5901 = vdwg.mxu0
    %v5902 = vmul.f32 %v5831, %v5899
    %v5903 = vadd.f32 %v5680, %v5902
    %v5904 = vtanh.pop %v5903
    %v5905 = vsub.f32 1.0, %v5831
    %5907 = vrot.lane.b32.xlu0 %v5904, 16
    %v5908 = vpop.permute.xlu0 %5907
    %v5910 = vmul.f32 %v5905, %v5908
    %v5911 = vmul.f32 %v5831, %v5127
    %v5912 = vadd.f32 %v5910, %v5911
    %5914 = vrot.lane.b32.xlu0 %v5912, 112
    %v5915 = vpop.permute.xlu0 %5914
    %5917 = vst.msk [vmem:[#allocation3 + $0xc] sm:$0x3] %vm1214, %v5915
    %5918 = vmatprep.subr.mxu0 0.0
    %5919 = vmatpush1.msra.mxu0 %v331
    %5920 = vmatprep.subr.mxu0 0.0
    %5921 = vmatpush1.msra.mxu0 %v332
    %5922 = vmatprep.subr.mxu0 0.0
    %5923 = vmatpush1.msra.mxu0 0.0
    %5924 = vmatprep.subr.mxu0 0.0
    %5925 = vmatpush1.msra.mxu0 0.0
    %5926 = vmatprep.subr.mxu0 0.0
    %5927 = vmatpush1.msra.mxu0 0.0
    %5928 = vmatprep.subr.mxu0 0.0
    %5929 = vmatpush1.msra.mxu0 0.0
    %5930 = vmatprep.subr.mxu0 0.0
    %5931 = vmatpush1.msra.mxu0 0.0
    %5932 = vmatprep.subr.mxu0 0.0
    %5933 = vmatpush1.msra.mxu0 0.0
    %5934 = vmatprep.subr.mxu0 0.0
    %5935 = vmatpush1.msra.mxu0 0.0
    %5936 = vmatprep.subr.mxu0 0.0
    %5937 = vmatpush1.msra.mxu0 0.0
    %5938 = vmatprep.subr.mxu0 0.0
    %5939 = vmatpush1.msra.mxu0 0.0
    %5940 = vmatprep.subr.mxu0 0.0
    %5941 = vmatpush1.msra.mxu0 0.0
    %5942 = vmatprep.subr.mxu0 0.0
    %5943 = vmatpush1.msra.mxu0 0.0
    %5944 = vmatprep.subr.mxu0 0.0
    %5945 = vmatpush1.msra.mxu0 0.0
    %5946 = vmatprep.subr.mxu0 0.0
    %5947 = vmatpush1.msra.mxu0 0.0
    %5948 = vmatprep.subr.mxu0 0.0
    %5949 = vmatpush1.msra.mxu0 0.0
    %5950 = vmatprep.subr.mxu0 0.0
    %5951 = vmatpush1.msra.mxu0 0.0
    %5952 = vmatprep.subr.mxu0 0.0
    %5953 = vmatpush1.msra.mxu0 0.0
    %5954 = vmatprep.subr.mxu0 0.0
    %5955 = vmatpush1.msra.mxu0 0.0
    %5956 = vmatprep.subr.mxu0 0.0
    %5957 = vmatpush1.msra.mxu0 0.0
    %5958 = vmatprep.subr.mxu0 0.0
    %5959 = vmatpush1.msra.mxu0 0.0
    %5960 = vmatprep.subr.mxu0 0.0
    %5961 = vmatpush1.msra.mxu0 0.0
    %5962 = vmatprep.subr.mxu0 0.0
    %5963 = vmatpush1.msra.mxu0 0.0
    %5964 = vmatprep.subr.mxu0 0.0
    %5965 = vmatpush1.msra.mxu0 0.0
    %5966 = vmatprep.subr.mxu0 0.0
    %5967 = vmatpush1.msra.mxu0 0.0
    %5968 = vmatprep.subr.mxu0 0.0
    %5969 = vmatpush1.msra.mxu0 0.0
    %5970 = vmatprep.subr.mxu0 0.0
    %5971 = vmatpush1.msra.mxu0 0.0
    %5972 = vmatprep.subr.mxu0 0.0
    %5973 = vmatpush1.msra.mxu0 0.0
    %5974 = vmatprep.subr.mxu0 0.0
    %5975 = vmatpush1.msra.mxu0 0.0
    %5976 = vmatprep.subr.mxu0 0.0
    %5977 = vmatpush1.msra.mxu0 0.0
    %5978 = vmatprep.subr.mxu0 0.0
    %5979 = vmatpush1.msra.mxu0 0.0
    %5980 = vmatprep.subr.mxu0 0.0
    %5981 = vmatpush1.msra.mxu0 0.0
    %5982 = vmatprep.mubr.f32.mxu0 0.0
    %5983 = vmatmul.mubr.f32.gmra.mrb[0].mxu0 %v5308
    %v5984 = vpop.f32.mrb[0].mxu0
    %v5985 = vadd.f32 0.0, %v5984
    %v5986 = vpop.f32.mrb[0].mxu0
    %5987 = vdwg.mxu0
    %v5989 = vrot.slane %v5985, 2
    %v5991 = vadd.f32 %v328, %v5989
    %v5992 = vadd.f32 %v5991, %v362
    %v5993 = vxor.u32 %v5992, 2147483648
    %v5994 = vmul.f32 %v5993, 1.442695
    %v5995 = vpow.pop %v5994
    %v5996 = vadd.f32 %v5995, 1.0
    %v5997 = vrcp.pop %v5996
    %v5998 = vmul.f32 1.0, %v5997
    %5999 = vmatprep.subr.mxu0 0.0
    %6000 = vmatpush1.msra.mxu0 %v339
    %6001 = vmatprep.subr.mxu0 0.0
    %6002 = vmatpush1.msra.mxu0 %v340
    %6003 = vmatprep.subr.mxu0 0.0
    %6004 = vmatpush1.msra.mxu0 0.0
    %6005 = vmatprep.subr.mxu0 0.0
    %6006 = vmatpush1.msra.mxu0 0.0
    %6007 = vmatprep.subr.mxu0 0.0
    %6008 = vmatpush1.msra.mxu0 0.0
    %6009 = vmatprep.subr.mxu0 0.0
    %6010 = vmatpush1.msra.mxu0 0.0
    %6011 = vmatprep.subr.mxu0 0.0
    %6012 = vmatpush1.msra.mxu0 0.0
    %6013 = vmatprep.subr.mxu0 0.0
    %6014 = vmatpush1.msra.mxu0 0.0
    %6015 = vmatprep.subr.mxu0 0.0
    %6016 = vmatpush1.msra.mxu0 0.0
    %6017 = vmatprep.subr.mxu0 0.0
    %6018 = vmatpush1.msra.mxu0 0.0
    %6019 = vmatprep.subr.mxu0 0.0
    %6020 = vmatpush1.msra.mxu0 0.0
    %6021 = vmatprep.subr.mxu0 0.0
    %6022 = vmatpush1.msra.mxu0 0.0
    %6023 = vmatprep.subr.mxu0 0.0
    %6024 = vmatpush1.msra.mxu0 0.0
    %6025 = vmatprep.subr.mxu0 0.0
    %6026 = vmatpush1.msra.mxu0 0.0
    %6027 = vmatprep.subr.mxu0 0.0
    %6028 = vmatpush1.msra.mxu0 0.0
    %6029 = vmatprep.subr.mxu0 0.0
    %6030 = vmatpush1.msra.mxu0 0.0
    %6031 = vmatprep.subr.mxu0 0.0
    %6032 = vmatpush1.msra.mxu0 0.0
    %6033 = vmatprep.subr.mxu0 0.0
    %6034 = vmatpush1.msra.mxu0 0.0
    %6035 = vmatprep.subr.mxu0 0.0
    %6036 = vmatpush1.msra.mxu0 0.0
    %6037 = vmatprep.subr.mxu0 0.0
    %6038 = vmatpush1.msra.mxu0 0.0
    %6039 = vmatprep.subr.mxu0 0.0
    %6040 = vmatpush1.msra.mxu0 0.0
    %6041 = vmatprep.subr.mxu0 0.0
    %6042 = vmatpush1.msra.mxu0 0.0
    %6043 = vmatprep.subr.mxu0 0.0
    %6044 = vmatpush1.msra.mxu0 0.0
    %6045 = vmatprep.subr.mxu0 0.0
    %6046 = vmatpush1.msra.mxu0 0.0
    %6047 = vmatprep.subr.mxu0 0.0
    %6048 = vmatpush1.msra.mxu0 0.0
    %6049 = vmatprep.subr.mxu0 0.0
    %6050 = vmatpush1.msra.mxu0 0.0
    %6051 = vmatprep.subr.mxu0 0.0
    %6052 = vmatpush1.msra.mxu0 0.0
    %6053 = vmatprep.subr.mxu0 0.0
    %6054 = vmatpush1.msra.mxu0 0.0
    %6055 = vmatprep.subr.mxu0 0.0
    %6056 = vmatpush1.msra.mxu0 0.0
    %6057 = vmatprep.subr.mxu0 0.0
    %6058 = vmatpush1.msra.mxu0 0.0
    %6059 = vmatprep.subr.mxu0 0.0
    %6060 = vmatpush1.msra.mxu0 0.0
    %6061 = vmatprep.subr.mxu0 0.0
    %6062 = vmatpush1.msra.mxu0 0.0
    %6063 = vmatprep.mubr.f32.mxu0 0.0
    %6064 = vmatmul.mubr.f32.gmra.mrb[0].mxu0 %v5308
    %v6065 = vpop.f32.mrb[0].mxu0
    %v6066 = vadd.f32 %v385, %v6065
    %v6067 = vpop.f32.mrb[0].mxu0
    %6068 = vdwg.mxu0
    %v6070 = vrot.slane %v6066, 2
    %v6072 = vmul.f32 %v5998, %v6070
    %6074 = vrot.lane.b32.xlu0 %v6072, 32
    %v6075 = vpop.permute.xlu0 %6074
    %v6077 = vadd.f32 %v328, %v6075
    %v6078 = vtanh.pop %v6077
    %v6079 = vsub.f32 1.0, %v5998
    %6081 = vrot.lane.b32.xlu0 %v6078, 112
    %v6082 = vpop.permute.xlu0 %6081
    %v6084 = vmul.f32 %v6079, %v6082
    %v6085 = vrot.slane %v5303, 6
    %v6087 = vmul.f32 %v5998, %v6085
    %v6088 = vadd.f32 %v6084, %v6087
    %v6090 = vrot.slane %v6088, 6
    %6091 = vrot.lane.b32.xlu0 %v6090, 112
    %v6092 = vpop.permute.xlu0 %6091
    %v6093 = vsel %vm249, %v6092, 0
    %6095 = vmatprep.subr.mxu0 0.0
    %6096 = vmatpush1.msra.mxu0 %v352
    %6097 = vmatprep.subr.mxu0 0.0
    %6098 = vmatpush1.msra.mxu0 %v353
    %6099 = vmatprep.subr.mxu0 0.0
    %6100 = vmatpush1.msra.mxu0 0.0
    %6101 = vmatprep.subr.mxu0 0.0
    %6102 = vmatpush1.msra.mxu0 0.0
    %6103 = vmatprep.subr.mxu0 0.0
    %6104 = vmatpush1.msra.mxu0 0.0
    %6105 = vmatprep.subr.mxu0 0.0
    %6106 = vmatpush1.msra.mxu0 0.0
    %6107 = vmatprep.subr.mxu0 0.0
    %6108 = vmatpush1.msra.mxu0 0.0
    %6109 = vmatprep.subr.mxu0 0.0
    %6110 = vmatpush1.msra.mxu0 0.0
    %6111 = vmatprep.subr.mxu0 0.0
    %6112 = vmatpush1.msra.mxu0 0.0
    %6113 = vmatprep.subr.mxu0 0.0
    %6114 = vmatpush1.msra.mxu0 0.0
    %6115 = vmatprep.subr.mxu0 0.0
    %6116 = vmatpush1.msra.mxu0 0.0
    %6117 = vmatprep.subr.mxu0 0.0
    %6118 = vmatpush1.msra.mxu0 0.0
    %6119 = vmatprep.subr.mxu0 0.0
    %6120 = vmatpush1.msra.mxu0 0.0
    %6121 = vmatprep.subr.mxu0 0.0
    %6122 = vmatpush1.msra.mxu0 0.0
    %6123 = vmatprep.subr.mxu0 0.0
    %6124 = vmatpush1.msra.mxu0 0.0
    %6125 = vmatprep.subr.mxu0 0.0
    %6126 = vmatpush1.msra.mxu0 0.0
    %6127 = vmatprep.subr.mxu0 0.0
    %6128 = vmatpush1.msra.mxu0 0.0
    %6129 = vmatprep.subr.mxu0 0.0
    %6130 = vmatpush1.msra.mxu0 0.0
    %6131 = vmatprep.subr.mxu0 0.0
    %6132 = vmatpush1.msra.mxu0 0.0
    %6133 = vmatprep.subr.mxu0 0.0
    %6134 = vmatpush1.msra.mxu0 0.0
    %6135 = vmatprep.subr.mxu0 0.0
    %6136 = vmatpush1.msra.mxu0 0.0
    %6137 = vmatprep.subr.mxu0 0.0
    %6138 = vmatpush1.msra.mxu0 0.0
    %6139 = vmatprep.subr.mxu0 0.0
    %6140 = vmatpush1.msra.mxu0 0.0
    %6141 = vmatprep.subr.mxu0 0.0
    %6142 = vmatpush1.msra.mxu0 0.0
    %6143 = vmatprep.subr.mxu0 0.0
    %6144 = vmatpush1.msra.mxu0 0.0
    %6145 = vmatprep.subr.mxu0 0.0
    %6146 = vmatpush1.msra.mxu0 0.0
    %6147 = vmatprep.subr.mxu0 0.0
    %6148 = vmatpush1.msra.mxu0 0.0
    %6149 = vmatprep.subr.mxu0 0.0
    %6150 = vmatpush1.msra.mxu0 0.0
    %6151 = vmatprep.subr.mxu0 0.0
    %6152 = vmatpush1.msra.mxu0 0.0
    %6153 = vmatprep.subr.mxu0 0.0
    %6154 = vmatpush1.msra.mxu0 0.0
    %6155 = vmatprep.subr.mxu0 0.0
    %6156 = vmatpush1.msra.mxu0 0.0
    %6157 = vmatprep.subr.mxu0 0.0
    %6158 = vmatpush1.msra.mxu0 0.0
    %6159 = vmatprep.mubr.f32.mxu0 0.0
    %6160 = vmatmul.mubr.f32.gmra.mrb[0].mxu0 %v6093
    %v6161 = vpop.f32.mrb[0].mxu0
    %v6162 = vadd.f32 %v408, %v6161
    %v6163 = vpop.f32.mrb[0].mxu0
    %6164 = vdwg.mxu0
    %6165 = vmatprep.subr.mxu0 0.0
    %6166 = vmatpush1.msra.mxu0 %v334
    %6167 = vmatprep.subr.mxu0 0.0
    %6168 = vmatpush1.msra.mxu0 %v335
    %6169 = vmatprep.subr.mxu0 0.0
    %6170 = vmatpush1.msra.mxu0 0.0
    %6171 = vmatprep.subr.mxu0 0.0
    %6172 = vmatpush1.msra.mxu0 0.0
    %6173 = vmatprep.subr.mxu0 0.0
    %6174 = vmatpush1.msra.mxu0 0.0
    %6175 = vmatprep.subr.mxu0 0.0
    %6176 = vmatpush1.msra.mxu0 0.0
    %6177 = vmatprep.subr.mxu0 0.0
    %6178 = vmatpush1.msra.mxu0 0.0
    %6179 = vmatprep.subr.mxu0 0.0
    %6180 = vmatpush1.msra.mxu0 0.0
    %6181 = vmatprep.subr.mxu0 0.0
    %6182 = vmatpush1.msra.mxu0 0.0
    %6183 = vmatprep.subr.mxu0 0.0
    %6184 = vmatpush1.msra.mxu0 0.0
    %6185 = vmatprep.subr.mxu0 0.0
    %6186 = vmatpush1.msra.mxu0 0.0
    %6187 = vmatprep.subr.mxu0 0.0
    %6188 = vmatpush1.msra.mxu0 0.0
    %6189 = vmatprep.subr.mxu0 0.0
    %6190 = vmatpush1.msra.mxu0 0.0
    %6191 = vmatprep.subr.mxu0 0.0
    %6192 = vmatpush1.msra.mxu0 0.0
    %6193 = vmatprep.subr.mxu0 0.0
    %6194 = vmatpush1.msra.mxu0 0.0
    %6195 = vmatprep.subr.mxu0 0.0
    %6196 = vmatpush1.msra.mxu0 0.0
    %6197 = vmatprep.subr.mxu0 0.0
    %6198 = vmatpush1.msra.mxu0 0.0
    %6199 = vmatprep.subr.mxu0 0.0
    %6200 = vmatpush1.msra.mxu0 0.0
    %6201 = vmatprep.subr.mxu0 0.0
    %6202 = vmatpush1.msra.mxu0 0.0
    %6203 = vmatprep.subr.mxu0 0.0
    %6204 = vmatpush1.msra.mxu0 0.0
    %6205 = vmatprep.subr.mxu0 0.0
    %6206 = vmatpush1.msra.mxu0 0.0
    %6207 = vmatprep.subr.mxu0 0.0
    %6208 = vmatpush1.msra.mxu0 0.0
    %6209 = vmatprep.subr.mxu0 0.0
    %6210 = vmatpush1.msra.mxu0 0.0
    %6211 = vmatprep.subr.mxu0 0.0
    %6212 = vmatpush1.msra.mxu0 0.0
    %6213 = vmatprep.subr.mxu0 0.0
    %6214 = vmatpush1.msra.mxu0 0.0
    %6215 = vmatprep.subr.mxu0 0.0
    %6216 = vmatpush1.msra.mxu0 0.0
    %6217 = vmatprep.subr.mxu0 0.0
    %6218 = vmatpush1.msra.mxu0 0.0
    %6219 = vmatprep.subr.mxu0 0.0
    %6220 = vmatpush1.msra.mxu0 0.0
    %6221 = vmatprep.subr.mxu0 0.0
    %6222 = vmatpush1.msra.mxu0 0.0
    %6223 = vmatprep.subr.mxu0 0.0
    %6224 = vmatpush1.msra.mxu0 0.0
    %6225 = vmatprep.subr.mxu0 0.0
    %6226 = vmatpush1.msra.mxu0 0.0
    %6227 = vmatprep.subr.mxu0 0.0
    %6228 = vmatpush1.msra.mxu0 0.0
    %6229 = vmatprep.mubr.f32.mxu0 0.0
    %6230 = vmatmul.mubr.f32.gmra.mrb[0].mxu0 %v5611
    %v6231 = vpop.f32.mrb[0].mxu0
    %v6232 = vadd.f32 0.0, %v6231
    %v6233 = vpop.f32.mrb[0].mxu0
    %6234 = vdwg.mxu0
    %6235 = vmatprep.subr.mxu0 0.0
    %6236 = vmatpush1.msra.mxu0 %v347
    %6237 = vmatprep.subr.mxu0 0.0
    %6238 = vmatpush1.msra.mxu0 %v348
    %6239 = vmatprep.subr.mxu0 0.0
    %6240 = vmatpush1.msra.mxu0 0.0
    %6241 = vmatprep.subr.mxu0 0.0
    %6242 = vmatpush1.msra.mxu0 0.0
    %6243 = vmatprep.subr.mxu0 0.0
    %6244 = vmatpush1.msra.mxu0 0.0
    %6245 = vmatprep.subr.mxu0 0.0
    %6246 = vmatpush1.msra.mxu0 0.0
    %6247 = vmatprep.subr.mxu0 0.0
    %6248 = vmatpush1.msra.mxu0 0.0
    %6249 = vmatprep.subr.mxu0 0.0
    %6250 = vmatpush1.msra.mxu0 0.0
    %6251 = vmatprep.subr.mxu0 0.0
    %6252 = vmatpush1.msra.mxu0 0.0
    %6253 = vmatprep.subr.mxu0 0.0
    %6254 = vmatpush1.msra.mxu0 0.0
    %6255 = vmatprep.subr.mxu0 0.0
    %6256 = vmatpush1.msra.mxu0 0.0
    %6257 = vmatprep.subr.mxu0 0.0
    %6258 = vmatpush1.msra.mxu0 0.0
    %6259 = vmatprep.subr.mxu0 0.0
    %6260 = vmatpush1.msra.mxu0 0.0
    %6261 = vmatprep.subr.mxu0 0.0
    %6262 = vmatpush1.msra.mxu0 0.0
    %6263 = vmatprep.subr.mxu0 0.0
    %6264 = vmatpush1.msra.mxu0 0.0
    %6265 = vmatprep.subr.mxu0 0.0
    %6266 = vmatpush1.msra.mxu0 0.0
    %6267 = vmatprep.subr.mxu0 0.0
    %6268 = vmatpush1.msra.mxu0 0.0
    %6269 = vmatprep.subr.mxu0 0.0
    %6270 = vmatpush1.msra.mxu0 0.0
    %6271 = vmatprep.subr.mxu0 0.0
    %6272 = vmatpush1.msra.mxu0 0.0
    %6273 = vmatprep.subr.mxu0 0.0
    %6274 = vmatpush1.msra.mxu0 0.0
    %6275 = vmatprep.subr.mxu0 0.0
    %6276 = vmatpush1.msra.mxu0 0.0
    %6277 = vmatprep.subr.mxu0 0.0
    %6278 = vmatpush1.msra.mxu0 0.0
    %6279 = vmatprep.subr.mxu0 0.0
    %6280 = vmatpush1.msra.mxu0 0.0
    %6281 = vmatprep.subr.mxu0 0.0
    %6282 = vmatpush1.msra.mxu0 0.0
    %6283 = vmatprep.subr.mxu0 0.0
    %6284 = vmatpush1.msra.mxu0 0.0
    %6285 = vmatprep.subr.mxu0 0.0
    %6286 = vmatpush1.msra.mxu0 0.0
    %6287 = vmatprep.subr.mxu0 0.0
    %6288 = vmatpush1.msra.mxu0 0.0
    %6289 = vmatprep.subr.mxu0 0.0
    %6290 = vmatpush1.msra.mxu0 0.0
    %6291 = vmatprep.subr.mxu0 0.0
    %6292 = vmatpush1.msra.mxu0 0.0
    %6293 = vmatprep.subr.mxu0 0.0
    %6294 = vmatpush1.msra.mxu0 0.0
    %6295 = vmatprep.subr.mxu0 0.0
    %6296 = vmatpush1.msra.mxu0 0.0
    %6297 = vmatprep.subr.mxu0 0.0
    %6298 = vmatpush1.msra.mxu0 0.0
    %6299 = vmatprep.mubr.f32.mxu0 0.0
    %6300 = vmatmul.mubr.f32.gmra.mrb[0].mxu0 %v6093
    %v6301 = vpop.f32.mrb[0].mxu0
    %v6302 = vadd.f32 %v6232, %v6301
    %v6303 = vpop.f32.mrb[0].mxu0
    %6304 = vdwg.mxu0
    %v6305 = vadd.f32 %v6302, %v370
    %v6306 = vxor.u32 %v6305, 2147483648
    %v6307 = vmul.f32 %v6306, 1.442695
    %v6308 = vpow.pop %v6307
    %v6309 = vadd.f32 %v6308, 1.0
    %v6310 = vrcp.pop %v6309
    %v6311 = vmul.f32 1.0, %v6310
    %6312 = vmatprep.subr.mxu0 0.0
    %6313 = vmatpush1.msra.mxu0 %v342
    %6314 = vmatprep.subr.mxu0 0.0
    %6315 = vmatpush1.msra.mxu0 %v343
    %6316 = vmatprep.subr.mxu0 0.0
    %6317 = vmatpush1.msra.mxu0 0.0
    %6318 = vmatprep.subr.mxu0 0.0
    %6319 = vmatpush1.msra.mxu0 0.0
    %6320 = vmatprep.subr.mxu0 0.0
    %6321 = vmatpush1.msra.mxu0 0.0
    %6322 = vmatprep.subr.mxu0 0.0
    %6323 = vmatpush1.msra.mxu0 0.0
    %6324 = vmatprep.subr.mxu0 0.0
    %6325 = vmatpush1.msra.mxu0 0.0
    %6326 = vmatprep.subr.mxu0 0.0
    %6327 = vmatpush1.msra.mxu0 0.0
    %6328 = vmatprep.subr.mxu0 0.0
    %6329 = vmatpush1.msra.mxu0 0.0
    %6330 = vmatprep.subr.mxu0 0.0
    %6331 = vmatpush1.msra.mxu0 0.0
    %6332 = vmatprep.subr.mxu0 0.0
    %6333 = vmatpush1.msra.mxu0 0.0
    %6334 = vmatprep.subr.mxu0 0.0
    %6335 = vmatpush1.msra.mxu0 0.0
    %6336 = vmatprep.subr.mxu0 0.0
    %6337 = vmatpush1.msra.mxu0 0.0
    %6338 = vmatprep.subr.mxu0 0.0
    %6339 = vmatpush1.msra.mxu0 0.0
    %6340 = vmatprep.subr.mxu0 0.0
    %6341 = vmatpush1.msra.mxu0 0.0
    %6342 = vmatprep.subr.mxu0 0.0
    %6343 = vmatpush1.msra.mxu0 0.0
    %6344 = vmatprep.subr.mxu0 0.0
    %6345 = vmatpush1.msra.mxu0 0.0
    %6346 = vmatprep.subr.mxu0 0.0
    %6347 = vmatpush1.msra.mxu0 0.0
    %6348 = vmatprep.subr.mxu0 0.0
    %6349 = vmatpush1.msra.mxu0 0.0
    %6350 = vmatprep.subr.mxu0 0.0
    %6351 = vmatpush1.msra.mxu0 0.0
    %6352 = vmatprep.subr.mxu0 0.0
    %6353 = vmatpush1.msra.mxu0 0.0
    %6354 = vmatprep.subr.mxu0 0.0
    %6355 = vmatpush1.msra.mxu0 0.0
    %6356 = vmatprep.subr.mxu0 0.0
    %6357 = vmatpush1.msra.mxu0 0.0
    %6358 = vmatprep.subr.mxu0 0.0
    %6359 = vmatpush1.msra.mxu0 0.0
    %6360 = vmatprep.subr.mxu0 0.0
    %6361 = vmatpush1.msra.mxu0 0.0
    %6362 = vmatprep.subr.mxu0 0.0
    %6363 = vmatpush1.msra.mxu0 0.0
    %6364 = vmatprep.subr.mxu0 0.0
    %6365 = vmatpush1.msra.mxu0 0.0
    %6366 = vmatprep.subr.mxu0 0.0
    %6367 = vmatpush1.msra.mxu0 0.0
    %6368 = vmatprep.subr.mxu0 0.0
    %6369 = vmatpush1.msra.mxu0 0.0
    %6370 = vmatprep.subr.mxu0 0.0
    %6371 = vmatpush1.msra.mxu0 0.0
    %6372 = vmatprep.subr.mxu0 0.0
    %6373 = vmatpush1.msra.mxu0 0.0
    %6374 = vmatprep.subr.mxu0 0.0
    %6375 = vmatpush1.msra.mxu0 0.0
    %6376 = vmatprep.mubr.f32.mxu0 0.0
    %6377 = vmatmul.mubr.f32.gmra.mrb[0].mxu0 %v5611
    %v6378 = vpop.f32.mrb[0].mxu0
    %v6379 = vadd.f32 %v393, %v6378
    %v6380 = vpop.f32.mrb[0].mxu0
    %6381 = vdwg.mxu0
    %v6382 = vmul.f32 %v6311, %v6379
    %v6383 = vadd.f32 %v6162, %v6382
    %v6384 = vtanh.pop %v6383
    %v6385 = vsub.f32 1.0, %v6311
    %6387 = vrot.lane.b32.xlu0 %v6384, 16
    %v6388 = vpop.permute.xlu0 %6387
    %v6390 = vmul.f32 %v6385, %v6388
    %v6391 = vmul.f32 %v6311, %v5607
    %v6392 = vadd.f32 %v6390, %v6391
    %6394 = vrot.lane.b32.xlu0 %v6392, 112
    %v6395 = vpop.permute.xlu0 %6394
    %v6396 = vsel %vm249, %v6395, 0
    %6398 = vmatprep.subr.mxu0 0.0
    %6399 = vmatpush1.msra.mxu0 %v355
    %6400 = vmatprep.subr.mxu0 0.0
    %6401 = vmatpush1.msra.mxu0 %v356
    %6402 = vmatprep.subr.mxu0 0.0
    %6403 = vmatpush1.msra.mxu0 0.0
    %6404 = vmatprep.subr.mxu0 0.0
    %6405 = vmatpush1.msra.mxu0 0.0
    %6406 = vmatprep.subr.mxu0 0.0
    %6407 = vmatpush1.msra.mxu0 0.0
    %6408 = vmatprep.subr.mxu0 0.0
    %6409 = vmatpush1.msra.mxu0 0.0
    %6410 = vmatprep.subr.mxu0 0.0
    %6411 = vmatpush1.msra.mxu0 0.0
    %6412 = vmatprep.subr.mxu0 0.0
    %6413 = vmatpush1.msra.mxu0 0.0
    %6414 = vmatprep.subr.mxu0 0.0
    %6415 = vmatpush1.msra.mxu0 0.0
    %6416 = vmatprep.subr.mxu0 0.0
    %6417 = vmatpush1.msra.mxu0 0.0
    %6418 = vmatprep.subr.mxu0 0.0
    %6419 = vmatpush1.msra.mxu0 0.0
    %6420 = vmatprep.subr.mxu0 0.0
    %6421 = vmatpush1.msra.mxu0 0.0
    %6422 = vmatprep.subr.mxu0 0.0
    %6423 = vmatpush1.msra.mxu0 0.0
    %6424 = vmatprep.subr.mxu0 0.0
    %6425 = vmatpush1.msra.mxu0 0.0
    %6426 = vmatprep.subr.mxu0 0.0
    %6427 = vmatpush1.msra.mxu0 0.0
    %6428 = vmatprep.subr.mxu0 0.0
    %6429 = vmatpush1.msra.mxu0 0.0
    %6430 = vmatprep.subr.mxu0 0.0
    %6431 = vmatpush1.msra.mxu0 0.0
    %6432 = vmatprep.subr.mxu0 0.0
    %6433 = vmatpush1.msra.mxu0 0.0
    %6434 = vmatprep.subr.mxu0 0.0
    %6435 = vmatpush1.msra.mxu0 0.0
    %6436 = vmatprep.subr.mxu0 0.0
    %6437 = vmatpush1.msra.mxu0 0.0
    %6438 = vmatprep.subr.mxu0 0.0
    %6439 = vmatpush1.msra.mxu0 0.0
    %6440 = vmatprep.subr.mxu0 0.0
    %6441 = vmatpush1.msra.mxu0 0.0
    %6442 = vmatprep.subr.mxu0 0.0
    %6443 = vmatpush1.msra.mxu0 0.0
    %6444 = vmatprep.subr.mxu0 0.0
    %6445 = vmatpush1.msra.mxu0 0.0
    %6446 = vmatprep.subr.mxu0 0.0
    %6447 = vmatpush1.msra.mxu0 0.0
    %6448 = vmatprep.subr.mxu0 0.0
    %6449 = vmatpush1.msra.mxu0 0.0
    %6450 = vmatprep.subr.mxu0 0.0
    %6451 = vmatpush1.msra.mxu0 0.0
    %6452 = vmatprep.subr.mxu0 0.0
    %6453 = vmatpush1.msra.mxu0 0.0
    %6454 = vmatprep.subr.mxu0 0.0
    %6455 = vmatpush1.msra.mxu0 0.0
    %6456 = vmatprep.subr.mxu0 0.0
    %6457 = vmatpush1.msra.mxu0 0.0
    %6458 = vmatprep.subr.mxu0 0.0
    %6459 = vmatpush1.msra.mxu0 0.0
    %6460 = vmatprep.subr.mxu0 0.0
    %6461 = vmatpush1.msra.mxu0 0.0
    %6462 = vmatprep.mubr.f32.mxu0 0.0
    %6463 = vmatmul.mubr.f32.gmra.mrb[0].mxu0 %v6396
    %v6464 = vpop.f32.mrb[0].mxu0
    %v6465 = vadd.f32 %v416, %v6464
    %v6466 = vpop.f32.mrb[0].mxu0
    %6467 = vdwg.mxu0
    %v6468 = vsel %vm249, %v5915, 0
    %6470 = vmatprep.subr.mxu0 0.0
    %6471 = vmatpush1.msra.mxu0 %v337
    %6472 = vmatprep.subr.mxu0 0.0
    %6473 = vmatpush1.msra.mxu0 %v338
    %6474 = vmatprep.subr.mxu0 0.0
    %6475 = vmatpush1.msra.mxu0 0.0
    %6476 = vmatprep.subr.mxu0 0.0
    %6477 = vmatpush1.msra.mxu0 0.0
    %6478 = vmatprep.subr.mxu0 0.0
    %6479 = vmatpush1.msra.mxu0 0.0
    %6480 = vmatprep.subr.mxu0 0.0
    %6481 = vmatpush1.msra.mxu0 0.0
    %6482 = vmatprep.subr.mxu0 0.0
    %6483 = vmatpush1.msra.mxu0 0.0
    %6484 = vmatprep.subr.mxu0 0.0
    %6485 = vmatpush1.msra.mxu0 0.0
    %6486 = vmatprep.subr.mxu0 0.0
    %6487 = vmatpush1.msra.mxu0 0.0
    %6488 = vmatprep.subr.mxu0 0.0
    %6489 = vmatpush1.msra.mxu0 0.0
    %6490 = vmatprep.subr.mxu0 0.0
    %6491 = vmatpush1.msra.mxu0 0.0
    %6492 = vmatprep.subr.mxu0 0.0
    %6493 = vmatpush1.msra.mxu0 0.0
    %6494 = vmatprep.subr.mxu0 0.0
    %6495 = vmatpush1.msra.mxu0 0.0
    %6496 = vmatprep.subr.mxu0 0.0
    %6497 = vmatpush1.msra.mxu0 0.0
    %6498 = vmatprep.subr.mxu0 0.0
    %6499 = vmatpush1.msra.mxu0 0.0
    %6500 = vmatprep.subr.mxu0 0.0
    %6501 = vmatpush1.msra.mxu0 0.0
    %6502 = vmatprep.subr.mxu0 0.0
    %6503 = vmatpush1.msra.mxu0 0.0
    %6504 = vmatprep.subr.mxu0 0.0
    %6505 = vmatpush1.msra.mxu0 0.0
    %6506 = vmatprep.subr.mxu0 0.0
    %6507 = vmatpush1.msra.mxu0 0.0
    %6508 = vmatprep.subr.mxu0 0.0
    %6509 = vmatpush1.msra.mxu0 0.0
    %6510 = vmatprep.subr.mxu0 0.0
    %6511 = vmatpush1.msra.mxu0 0.0
    %6512 = vmatprep.subr.mxu0 0.0
    %6513 = vmatpush1.msra.mxu0 0.0
    %6514 = vmatprep.subr.mxu0 0.0
    %6515 = vmatpush1.msra.mxu0 0.0
    %6516 = vmatprep.subr.mxu0 0.0
    %6517 = vmatpush1.msra.mxu0 0.0
    %6518 = vmatprep.subr.mxu0 0.0
    %6519 = vmatpush1.msra.mxu0 0.0
    %6520 = vmatprep.subr.mxu0 0.0
    %6521 = vmatpush1.msra.mxu0 0.0
    %6522 = vmatprep.subr.mxu0 0.0
    %6523 = vmatpush1.msra.mxu0 0.0
    %6524 = vmatprep.subr.mxu0 0.0
    %6525 = vmatpush1.msra.mxu0 0.0
    %6526 = vmatprep.subr.mxu0 0.0
    %6527 = vmatpush1.msra.mxu0 0.0
    %6528 = vmatprep.subr.mxu0 0.0
    %6529 = vmatpush1.msra.mxu0 0.0
    %6530 = vmatprep.subr.mxu0 0.0
    %6531 = vmatpush1.msra.mxu0 0.0
    %6532 = vmatprep.subr.mxu0 0.0
    %6533 = vmatpush1.msra.mxu0 0.0
    %6534 = vmatprep.mubr.f32.mxu0 0.0
    %6535 = vmatmul.mubr.f32.gmra.mrb[0].mxu0 %v6468
    %v6536 = vpop.f32.mrb[0].mxu0
    %v6537 = vadd.f32 0.0, %v6536
    %v6538 = vpop.f32.mrb[0].mxu0
    %6539 = vdwg.mxu0
    %6540 = vmatprep.subr.mxu0 0.0
    %6541 = vmatpush1.msra.mxu0 %v350
    %6542 = vmatprep.subr.mxu0 0.0
    %6543 = vmatpush1.msra.mxu0 %v351
    %6544 = vmatprep.subr.mxu0 0.0
    %6545 = vmatpush1.msra.mxu0 0.0
    %6546 = vmatprep.subr.mxu0 0.0
    %6547 = vmatpush1.msra.mxu0 0.0
    %6548 = vmatprep.subr.mxu0 0.0
    %6549 = vmatpush1.msra.mxu0 0.0
    %6550 = vmatprep.subr.mxu0 0.0
    %6551 = vmatpush1.msra.mxu0 0.0
    %6552 = vmatprep.subr.mxu0 0.0
    %6553 = vmatpush1.msra.mxu0 0.0
    %6554 = vmatprep.subr.mxu0 0.0
    %6555 = vmatpush1.msra.mxu0 0.0
    %6556 = vmatprep.subr.mxu0 0.0
    %6557 = vmatpush1.msra.mxu0 0.0
    %6558 = vmatprep.subr.mxu0 0.0
    %6559 = vmatpush1.msra.mxu0 0.0
    %6560 = vmatprep.subr.mxu0 0.0
    %6561 = vmatpush1.msra.mxu0 0.0
    %6562 = vmatprep.subr.mxu0 0.0
    %6563 = vmatpush1.msra.mxu0 0.0
    %6564 = vmatprep.subr.mxu0 0.0
    %6565 = vmatpush1.msra.mxu0 0.0
    %6566 = vmatprep.subr.mxu0 0.0
    %6567 = vmatpush1.msra.mxu0 0.0
    %6568 = vmatprep.subr.mxu0 0.0
    %6569 = vmatpush1.msra.mxu0 0.0
    %6570 = vmatprep.subr.mxu0 0.0
    %6571 = vmatpush1.msra.mxu0 0.0
    %6572 = vmatprep.subr.mxu0 0.0
    %6573 = vmatpush1.msra.mxu0 0.0
    %6574 = vmatprep.subr.mxu0 0.0
    %6575 = vmatpush1.msra.mxu0 0.0
    %6576 = vmatprep.subr.mxu0 0.0
    %6577 = vmatpush1.msra.mxu0 0.0
    %6578 = vmatprep.subr.mxu0 0.0
    %6579 = vmatpush1.msra.mxu0 0.0
    %6580 = vmatprep.subr.mxu0 0.0
    %6581 = vmatpush1.msra.mxu0 0.0
    %6582 = vmatprep.subr.mxu0 0.0
    %6583 = vmatpush1.msra.mxu0 0.0
    %6584 = vmatprep.subr.mxu0 0.0
    %6585 = vmatpush1.msra.mxu0 0.0
    %6586 = vmatprep.subr.mxu0 0.0
    %6587 = vmatpush1.msra.mxu0 0.0
    %6588 = vmatprep.subr.mxu0 0.0
    %6589 = vmatpush1.msra.mxu0 0.0
    %6590 = vmatprep.subr.mxu0 0.0
    %6591 = vmatpush1.msra.mxu0 0.0
    %6592 = vmatprep.subr.mxu0 0.0
    %6593 = vmatpush1.msra.mxu0 0.0
    %6594 = vmatprep.subr.mxu0 0.0
    %6595 = vmatpush1.msra.mxu0 0.0
    %6596 = vmatprep.subr.mxu0 0.0
    %6597 = vmatpush1.msra.mxu0 0.0
    %6598 = vmatprep.subr.mxu0 0.0
    %6599 = vmatpush1.msra.mxu0 0.0
    %6600 = vmatprep.subr.mxu0 0.0
    %6601 = vmatpush1.msra.mxu0 0.0
    %6602 = vmatprep.subr.mxu0 0.0
    %6603 = vmatpush1.msra.mxu0 0.0
    %6604 = vmatprep.mubr.f32.mxu0 0.0
    %6605 = vmatmul.mubr.f32.gmra.mrb[0].mxu0 %v6396
    %v6606 = vpop.f32.mrb[0].mxu0
    %v6607 = vadd.f32 %v6537, %v6606
    %v6608 = vpop.f32.mrb[0].mxu0
    %6609 = vdwg.mxu0
    %v6610 = vadd.f32 %v6607, %v378
    %v6611 = vxor.u32 %v6610, 2147483648
    %v6612 = vmul.f32 %v6611, 1.442695
    %v6613 = vpow.pop %v6612
    %v6614 = vadd.f32 %v6613, 1.0
    %v6615 = vrcp.pop %v6614
    %v6616 = vmul.f32 1.0, %v6615
    %6617 = vmatprep.subr.mxu0 0.0
    %6618 = vmatpush1.msra.mxu0 %v345
    %6619 = vmatprep.subr.mxu0 0.0
    %6620 = vmatpush1.msra.mxu0 %v346
    %6621 = vmatprep.subr.mxu0 0.0
    %6622 = vmatpush1.msra.mxu0 0.0
    %6623 = vmatprep.subr.mxu0 0.0
    %6624 = vmatpush1.msra.mxu0 0.0
    %6625 = vmatprep.subr.mxu0 0.0
    %6626 = vmatpush1.msra.mxu0 0.0
    %6627 = vmatprep.subr.mxu0 0.0
    %6628 = vmatpush1.msra.mxu0 0.0
    %6629 = vmatprep.subr.mxu0 0.0
    %6630 = vmatpush1.msra.mxu0 0.0
    %6631 = vmatprep.subr.mxu0 0.0
    %6632 = vmatpush1.msra.mxu0 0.0
    %6633 = vmatprep.subr.mxu0 0.0
    %6634 = vmatpush1.msra.mxu0 0.0
    %6635 = vmatprep.subr.mxu0 0.0
    %6636 = vmatpush1.msra.mxu0 0.0
    %6637 = vmatprep.subr.mxu0 0.0
    %6638 = vmatpush1.msra.mxu0 0.0
    %6639 = vmatprep.subr.mxu0 0.0
    %6640 = vmatpush1.msra.mxu0 0.0
    %6641 = vmatprep.subr.mxu0 0.0
    %6642 = vmatpush1.msra.mxu0 0.0
    %6643 = vmatprep.subr.mxu0 0.0
    %6644 = vmatpush1.msra.mxu0 0.0
    %6645 = vmatprep.subr.mxu0 0.0
    %6646 = vmatpush1.msra.mxu0 0.0
    %6647 = vmatprep.subr.mxu0 0.0
    %6648 = vmatpush1.msra.mxu0 0.0
    %6649 = vmatprep.subr.mxu0 0.0
    %6650 = vmatpush1.msra.mxu0 0.0
    %6651 = vmatprep.subr.mxu0 0.0
    %6652 = vmatpush1.msra.mxu0 0.0
    %6653 = vmatprep.subr.mxu0 0.0
    %6654 = vmatpush1.msra.mxu0 0.0
    %6655 = vmatprep.subr.mxu0 0.0
    %6656 = vmatpush1.msra.mxu0 0.0
    %6657 = vmatprep.subr.mxu0 0.0
    %6658 = vmatpush1.msra.mxu0 0.0
    %6659 = vmatprep.subr.mxu0 0.0
    %6660 = vmatpush1.msra.mxu0 0.0
    %6661 = vmatprep.subr.mxu0 0.0
    %6662 = vmatpush1.msra.mxu0 0.0
    %6663 = vmatprep.subr.mxu0 0.0
    %6664 = vmatpush1.msra.mxu0 0.0
    %6665 = vmatprep.subr.mxu0 0.0
    %6666 = vmatpush1.msra.mxu0 0.0
    %6667 = vmatprep.subr.mxu0 0.0
    %6668 = vmatpush1.msra.mxu0 0.0
    %6669 = vmatprep.subr.mxu0 0.0
    %6670 = vmatpush1.msra.mxu0 0.0
    %6671 = vmatprep.subr.mxu0 0.0
    %6672 = vmatpush1.msra.mxu0 0.0
    %6673 = vmatprep.subr.mxu0 0.0
    %6674 = vmatpush1.msra.mxu0 0.0
    %6675 = vmatprep.subr.mxu0 0.0
    %6676 = vmatpush1.msra.mxu0 0.0
    %6677 = vmatprep.subr.mxu0 0.0
    %6678 = vmatpush1.msra.mxu0 0.0
    %6679 = vmatprep.subr.mxu0 0.0
    %6680 = vmatpush1.msra.mxu0 0.0
    %6681 = vmatprep.mubr.f32.mxu0 0.0
    %6682 = vmatmul.mubr.f32.gmra.mrb[0].mxu0 %v6468
    %v6683 = vpop.f32.mrb[0].mxu0
    %v6684 = vadd.f32 %v401, %v6683
    %v6685 = vpop.f32.mrb[0].mxu0
    %6686 = vdwg.mxu0
    %v6687 = vmul.f32 %v6616, %v6684
    %v6688 = vadd.f32 %v6465, %v6687
    %v6689 = vtanh.pop %v6688
    %v6690 = vsub.f32 1.0, %v6616
    %6692 = vrot.lane.b32.xlu0 %v6689, 16
    %v6693 = vpop.permute.xlu0 %6692
    %v6695 = vmul.f32 %v6690, %v6693
    %v6696 = vmul.f32 %v6616, %v5912
    %v6697 = vadd.f32 %v6695, %v6696
    %6699 = vrot.lane.b32.xlu0 %v6697, 112
    %v6700 = vpop.permute.xlu0 %6699
    %6702 = vst.msk [vmem:[#allocation3 + $0xe] sm:$0x3] %vm1214, %v6700
    %6703 = vrot.lane.b32.xlu0 %v6088, 112
    %v6704 = vpop.permute.xlu0 %6703
    %vm6706 = vcmask 130054
    %6707 = vst.msk [vmem:[#allocation2 - $0x6] sm:$0xc0] %vm6706, %v6704
    %6709 = vst.msk [vmem:[%s419] sm:$0x3] %vm1214, %v6395
    %6710 = vst.msk [vmem:[%s421] sm:$0x3] %vm1214, %v6700
    %v6711 = vld [vmem:[#allocation3] sm:$0xff]
    %v6712 = vld [vmem:[#allocation3 + $0x8] sm:$0xff]
    %v6713 = vld [vmem:[%s13] sm:$0xff]
    %v6714 = vld [vmem:[%s13 + $0x8] sm:$0xff]
    %v6715 = vld [vmem:[%s14] sm:$0x1]
    %v6717 = vlaneseq
    %v6718 = vshrl.u32 %v6717, 7
    %v6719 = vsub.s32 0, %v6718
    %v6720 = vrot.slane %v6715, %v6719
    %v6723 = vsel %vm249, %v6711, 0
    %v6726 = vsel %vm249, %v6712, 0
    %6728 = vmatprep.subr.mxu0 0.0
    %6729 = vmatpush1.msra.mxu0 %v6713
    %6730 = vmatprep.subr.mxu0 0.0
    %6731 = vmatpush1.msra.mxu0 %v6714
    %6732 = vmatprep.subr.mxu0 0.0
    %6733 = vmatpush1.msra.mxu0 0.0
    %6734 = vmatprep.subr.mxu0 0.0
    %6735 = vmatpush1.msra.mxu0 0.0
    %6736 = vmatprep.subr.mxu0 0.0
    %6737 = vmatpush1.msra.mxu0 0.0
    %6738 = vmatprep.subr.mxu0 0.0
    %6739 = vmatpush1.msra.mxu0 0.0
    %6740 = vmatprep.subr.mxu0 0.0
    %6741 = vmatpush1.msra.mxu0 0.0
    %6742 = vmatprep.subr.mxu0 0.0
    %6743 = vmatpush1.msra.mxu0 0.0
    %6744 = vmatprep.subr.mxu0 0.0
    %6745 = vmatpush1.msra.mxu0 0.0
    %6746 = vmatprep.subr.mxu0 0.0
    %6747 = vmatpush1.msra.mxu0 0.0
    %6748 = vmatprep.subr.mxu0 0.0
    %6749 = vmatpush1.msra.mxu0 0.0
    %6750 = vmatprep.subr.mxu0 0.0
    %6751 = vmatpush1.msra.mxu0 0.0
    %6752 = vmatprep.subr.mxu0 0.0
    %6753 = vmatpush1.msra.mxu0 0.0
    %6754 = vmatprep.subr.mxu0 0.0
    %6755 = vmatpush1.msra.mxu0 0.0
    %6756 = vmatprep.subr.mxu0 0.0
    %6757 = vmatpush1.msra.mxu0 0.0
    %6758 = vmatprep.subr.mxu0 0.0
    %6759 = vmatpush1.msra.mxu0 0.0
    %6760 = vmatprep.subr.mxu0 0.0
    %6761 = vmatpush1.msra.mxu0 0.0
    %6762 = vmatprep.subr.mxu0 0.0
    %6763 = vmatpush1.msra.mxu0 0.0
    %6764 = vmatprep.subr.mxu0 0.0
    %6765 = vmatpush1.msra.mxu0 0.0
    %6766 = vmatprep.subr.mxu0 0.0
    %6767 = vmatpush1.msra.mxu0 0.0
    %6768 = vmatprep.subr.mxu0 0.0
    %6769 = vmatpush1.msra.mxu0 0.0
    %6770 = vmatprep.subr.mxu0 0.0
    %6771 = vmatpush1.msra.mxu0 0.0
    %6772 = vmatprep.subr.mxu0 0.0
    %6773 = vmatpush1.msra.mxu0 0.0
    %6774 = vmatprep.subr.mxu0 0.0
    %6775 = vmatpush1.msra.mxu0 0.0
    %6776 = vmatprep.subr.mxu0 0.0
    %6777 = vmatpush1.msra.mxu0 0.0
    %6778 = vmatprep.subr.mxu0 0.0
    %6779 = vmatpush1.msra.mxu0 0.0
    %6780 = vmatprep.subr.mxu0 0.0
    %6781 = vmatpush1.msra.mxu0 0.0
    %6782 = vmatprep.subr.mxu0 0.0
    %6783 = vmatpush1.msra.mxu0 0.0
    %6784 = vmatprep.subr.mxu0 0.0
    %6785 = vmatpush1.msra.mxu0 0.0
    %6786 = vmatprep.subr.mxu0 0.0
    %6787 = vmatpush1.msra.mxu0 0.0
    %6788 = vmatprep.subr.mxu0 0.0
    %6789 = vmatpush1.msra.mxu0 0.0
    %6790 = vmatprep.subr.mxu0 0.0
    %6791 = vmatpush1.msra.mxu0 0.0
    %6792 = vmatprep.mubr.f32.mxu0 0.0
    %6793 = vmatmul.mubr.f32.gmra.mrb[0].mxu0 %v6723
    %v6794 = vpop.f32.mrb[0].mxu0
    %v6795 = vadd.f32 %v6720, %v6794
    %v6796 = vpop.f32.mrb[0].mxu0
    %6797 = vmatprep.mubr.f32.mxu0 0.0
    %6798 = vmatmul.mubr.f32.gmra.mrb[0].mxu0 %v6726
    %v6799 = vpop.f32.mrb[0].mxu0
    %v6800 = vadd.f32 %v6720, %v6799
    %v6801 = vpop.f32.mrb[0].mxu0
    %6802 = vdwg.mxu0
    %vm6803 = vcmask 15360
    %6804 = vst.msk [vmem:[%s15] sm:$0xff] %vm6803, %v6795
    %6805 = vst.msk [vmem:[%s15 + $0x8] sm:$0xff] %vm6803, %v6800
    // Predicated region
    $region90: #{tpu_custom_call.1} parent=1 // pred_check
      %p6806 = pneg %p131
    $region91: #{tpu_custom_call.1} parent=1 // pred_check_branch
      %6808 = sbr.rel (%p6806) target = $region93
    $region92: #{tpu_custom_call.1} parent=1 // pred_region
      %v6809 = vld [vmem:[#allocation2] sm:$0x3]
      %v6810 = vld [vmem:[#allocation2 + $0x2] sm:$0x3]
      %v6811 = vld [vmem:[#allocation2 + $0x4] sm:$0x3]
      %6812 = vst.msk [vmem:[#allocation15] sm:$0x3] %vm1214, %v6809
      %6813 = vst.msk [vmem:[#allocation15 + $0x2] sm:$0x3] %vm1214, %v6810
      %6814 = vst.msk [vmem:[#allocation15 + $0x4] sm:$0x3] %vm1214, %v6811
    $region93: #{tpu_custom_call.1} parent=1 // pred_fallthru
      _
    // Predicated region
    $region94: #{tpu_custom_call.1} parent=1 // pred_check
      _
    $region95: #{tpu_custom_call.1} parent=1 // pred_check_branch
      %6816 = sbr.rel (0) target = $region97
    $region96: #{tpu_custom_call.1} parent=1 // pred_region
      _
    $region97: #{tpu_custom_call.1} parent=1 // pred_fallthru
      _
    // Predicated region
    $region98: #{tpu_custom_call.1} parent=1 // pred_check
      _
    $region99: #{tpu_custom_call.1} parent=1 // pred_check_branch
      %6818 = sbr.rel (0) target = $region101
    $region100: #{tpu_custom_call.1} parent=1 // pred_region
      %s6820 = ssub.s32 96, 96
      %6821 = vsyncadd [#allocation6], %s6820
      %s6822 = sshll.u32 [#allocation15], 4
      %s6823 = int_to_ptr.vmem [resolvable:$true] %s6822
      %6828 = dma.vmem_to_hbm [thread:$0]  %s6823, 96, %s16, [#allocation6], 32, 32, 2
    $region101: #{tpu_custom_call.1} parent=1 // pred_fallthru
      _
    // Predicated region
    $region102: #{tpu_custom_call.1} parent=1 // pred_check
      _
    $region103: #{tpu_custom_call.1} parent=1 // pred_check_branch
      %6830 = sbr.rel (0) target = $region105
    $region104: #{tpu_custom_call.1} parent=1 // pred_region
      _
    $region105: #{tpu_custom_call.1} parent=1 // pred_fallthru
      _
    // Predicated region
    $region106: #{tpu_custom_call.1} parent=1 // pred_check
      _
    $region107: #{tpu_custom_call.1} parent=1 // pred_check_branch
      %6832 = sbr.rel (0) target = $region109
    $region108: #{tpu_custom_call.1} parent=1 // pred_region
      %6833 = dma.done [#allocation6], 96
    $region109: #{tpu_custom_call.1} parent=1 // pred_fallthru
      _
    %6834 = vsyncpa [#allocation5], 1
    %6835 = vsyncpa [#allocation8], 1
    %6836 = vsyncpa [#allocation11], 1
    %6837 = vsyncpa [#allocation14], 1
    %6838 = vsyncpa [#allocation6], 1

</llo_original>
